<compile_context>
chip_gen: v7x
topology: tpu7x:2x2x1
jax: 0.10.0
libtpu: 0.0.40
codegen_flags: <defaults>
</compile_context>

<pallas_src>
import functools

import jax
import jax.numpy as jnp
from jax.experimental import pallas as pl
from jax.experimental.pallas import tpu as pltpu

_LANE = 128
_SUBLANE = 8
_NUM_LSTM_LAYERS = 4


def _round_up(x, m):
    return ((x + m - 1) // m) * m


def _sigmoid(x):
    # Exact identity sigmoid(x) = 0.5*tanh(0.5*x) + 0.5 -> single EUP push.
    return 0.5 * jnp.tanh(0.5 * x) + 0.5


# ----------------------------------------------------------------------------
# Fused Pallas kernel: enc_rnn1 -> enc_rnn2 -> dec_rnn1 -> dec_rnn2 -> Linear
# ----------------------------------------------------------------------------
def _fused_autoencoder_kernel(
    x_ref,
    wc1_ref, b1_ref,
    wc2_ref, b2_ref,
    wc3_ref, b3_ref,
    wc4_ref, b4_ref,
    wout_ref, bout_ref,
    out_ref,
    h3_slab,
    *, seq_len, bp, hidden_sizes,
):
    """All dims pre-padded so every tile / slice / store is lane aligned.

    x_ref    : (S*Bp, Dp0)      time-major, batch+lane padded input slab
    wcK_ref  : (DpK + HpK, Gk)  [W_ih^T ; W_hh^T] stacked; padded rows are zero
    bK_ref   : (1, Gk)          b_ih + b_hh, packed gates at lanes [0, 4H)
    wout_ref : (Hp3, Fp)        padded W_out^T,  bout_ref: (1, Fp)
    out_ref  : (S*Bp, Fp)       lane-dense output slab (written once)
    h3_slab  : (S*Bp, Hp3)      VMEM scratch holding dec_rnn2 hidden states
    """
    wc_refs = (wc1_ref, wc2_ref, wc3_ref, wc4_ref)
    b_refs = (b1_ref, b2_ref, b3_ref, b4_ref)

    hps = tuple(_round_up(h, _LANE) for h in hidden_sizes)      # padded hidden
    gws = tuple(b_refs[l].shape[1] for l in range(_NUM_LSTM_LAYERS))  # packed 4H

    # Trace-time layout invariants (documents the padding contract).
    dps = (x_ref.shape[1],) + hps[:-1]
    for l in range(_NUM_LSTM_LAYERS):
        assert wc_refs[l].shape == (dps[l] + hps[l], gws[l])
    assert wout_ref.shape[0] == hps[-1]
    assert h3_slab.shape == (seq_len * bp, hps[-1])

    # Hoisted per-layer constants (broadcasts are NOT recreated in the loop).
    biases = [jnp.broadcast_to(b_refs[l][...], (bp, gws[l]))
              for l in range(_NUM_LSTM_LAYERS)]
    hmask = [jax.lax.broadcasted_iota(jnp.int32, (bp, gws[l]), 1) < hidden_sizes[l]
             for l in range(_NUM_LSTM_LAYERS)]

    # Recurrent state, kept in registers as full (bp, lane) vregs.
    h = [jnp.zeros((bp, hps[l]), jnp.float32) for l in range(_NUM_LSTM_LAYERS)]
    c = [jnp.zeros((bp, gws[l]), jnp.float32) for l in range(_NUM_LSTM_LAYERS)]

    # Wavefront schedule: at wave w, layer l processes timestep t = w - l; all
    # reads come from wave w-1, so the active layer-steps within a wave are
    # independent (ILP for MXU / EUP / VPU).  The schedule is irregular, so it
    # is a static (trace-time) Python loop; the live state is only ~12 vregs,
    # so full unrolling does not blow the vreg file.
    n_waves = seq_len + _NUM_LSTM_LAYERS - 1
    for w in range(n_waves):
        new_h = list(h)
        new_c = list(c)
        for l in range(_NUM_LSTM_LAYERS):
            t = w - l
            if t < 0 or t >= seq_len:
                continue
            hdim = hidden_sizes[l]
            gw = gws[l]
            # Layer input at time t: raw input slab for layer 0, otherwise the
            # previous layer's hidden state produced at wave w-1.
            if l == 0:
                x_t = x_ref[t * bp:(t + 1) * bp, :]
            else:
                x_t = h[l - 1]
            xh = jnp.concatenate([x_t, h[l]], axis=1)            # (bp, Dp+Hp)
            # Single fused matmul per layer-step; weight streamed from VMEM
            # (never bound to a long-lived register value).
            g = jnp.dot(xh, wc_refs[l][...],
                        preferred_element_type=jnp.float32) + biases[l]
            # Packed gates [i | f | g | o] at lane offsets k*hdim.  Align each
            # gate to lane 0 with an XLU roll; junk above lane hdim is bounded
            # (post-sigmoid/tanh) and masked off before reaching h, and the
            # padded W_cat rows are zero, so it never contaminates real lanes.
            i_g = _sigmoid(g)
            f_g = _sigmoid(pltpu.roll(g, gw - hdim, axis=1))
            g_g = jnp.tanh(pltpu.roll(g, gw - 2 * hdim, axis=1))
            o_g = _sigmoid(pltpu.roll(g, gw - 3 * hdim, axis=1))
            c_new = f_g * c[l] + i_g * g_g
            h_new = jnp.where(hmask[l], o_g * jnp.tanh(c_new), 0.0)
            if gw > hps[l]:                       # general case; no-op here
                h_new = h_new[:, :hps[l]]
            new_c[l] = c_new
            new_h[l] = h_new
            if l == _NUM_LSTM_LAYERS - 1:
                h3_slab[t * bp:(t + 1) * bp, :] = h_new          # (8,128) store
        h = new_h
        c = new_c

    # Output Linear fused as epilogue: one MXU matmul over the whole sequence
    # and a single lane-dense (S*Bp, Fp) store.
    out_ref[...] = (
        jnp.dot(h3_slab[...], wout_ref[...], preferred_element_type=jnp.float32)
        + bout_ref[...]
    )


# ----------------------------------------------------------------------------
# One-time weight packing (hoisted out of the per-call path)
# ----------------------------------------------------------------------------
def prepare_autoencoder_params(params):
    """Pack/pad weights once: returns (weight_ops, hidden_sizes)."""
    ops = []
    hidden_sizes = []
    for name in ("enc_rnn1", "enc_rnn2", "dec_rnn1", "dec_rnn2"):
        p = params[name]
        w_ih = jnp.asarray(p["w_ih"], jnp.float32)            # (4H, D)
        w_hh = jnp.asarray(p["w_hh"], jnp.float32)            # (4H, H)
        b = jnp.asarray(p["b_ih"], jnp.float32) + jnp.asarray(p["b_hh"], jnp.float32)
        four_h, d = w_ih.shape
        hdim = four_h // 4
        dp = _round_up(d, _LANE)
        hp = _round_up(hdim, _LANE)
        gw = _round_up(four_h, _LANE)
        wcat = jnp.zeros((dp + hp, gw), jnp.float32)
        wcat = wcat.at[:d, :four_h].set(w_ih.T)                # input rows
        wcat = wcat.at[dp:dp + hdim, :four_h].set(w_hh.T)      # recurrent rows
        bias = jnp.zeros((1, gw), jnp.float32).at[0, :four_h].set(b)
        ops += [wcat, bias]
        hidden_sizes.append(hdim)

    w = jnp.asarray(params["out"]["w"], jnp.float32)           # (F, 2E)
    b = jnp.asarray(params["out"]["b"], jnp.float32)           # (F,)
    f_out, d_in = w.shape
    hp_out = _round_up(d_in, _LANE)
    fp = _round_up(f_out, _LANE)
    wout = jnp.zeros((hp_out, fp), jnp.float32).at[:d_in, :f_out].set(w.T)
    bout = jnp.zeros((1, fp), jnp.float32).at[0, :f_out].set(b)
    ops += [wout, bout]
    return tuple(ops), tuple(hidden_sizes)


# ----------------------------------------------------------------------------
# Jitted forward
# ----------------------------------------------------------------------------
def _forward_padded(weight_ops, x_bsf, *, hidden_sizes):
    (wc1, b1, wc2, b2, wc3, b3, wc4, b4, wout, bout) = weight_ops
    x = x_bsf.astype(jnp.float32)
    batch, seq, feat = x.shape
    bp = _round_up(batch, _SUBLANE)
    dp0 = _round_up(feat, _LANE)
    hp3 = _round_up(hidden_sizes[-1], _LANE)
    fp = wout.shape[1]

    # Time-major, batch/lane padded input slab: (S*Bp, Dp0).
    x_slab = jnp.pad(jnp.transpose(x, (1, 0, 2)),
                     ((0, 0), (0, bp - batch), (0, dp0 - feat)))
    x_slab = x_slab.reshape(seq * bp, dp0)

    operands = (x_slab, wc1, b1, wc2, b2, wc3, b3, wc4, b4, wout, bout)

    kernel = functools.partial(
        _fused_autoencoder_kernel,
        seq_len=seq, bp=bp, hidden_sizes=hidden_sizes)

    y_slab = pl.pallas_call(
        kernel,
        out_shape=jax.ShapeDtypeStruct((seq * bp, fp), jnp.float32),
        grid_spec=pltpu.PrefetchScalarGridSpec(
            num_scalar_prefetch=0,
            grid=(1,),
            in_specs=[pl.BlockSpec(op.shape, lambda i: (0, 0)) for op in operands],
            out_specs=pl.BlockSpec((seq * bp, fp), lambda i: (0, 0)),
            scratch_shapes=[
                pltpu.VMEM((seq * bp, hp3), jnp.float32),   # dec_rnn2 hidden slab
            ],
        ),
        compiler_params=pltpu.CompilerParams(
            dimension_semantics=("arbitrary",),
            vmem_limit_bytes=16 * 1024 * 1024,
        ),
    )(*operands)

    y = y_slab.reshape(seq, bp, fp)[:, :batch, :feat]          # strip padding
    return jnp.transpose(y, (1, 0, 2))                          # (B, S, F)


def make_lstm_autoencoder_forward(params):
    """Build a jitted forward(x) with weight packing done exactly once."""
    weight_ops, hidden_sizes = prepare_autoencoder_params(params)
    fwd = jax.jit(functools.partial(_forward_padded, hidden_sizes=hidden_sizes))

    def forward(x_bsf):
        return fwd(weight_ops, x_bsf)

    return forward


# ----------------------------------------------------------------------------
# Parameter construction (deterministic, PyTorch-style uniform init)
# ----------------------------------------------------------------------------
def _lstm_params(key, input_size, hidden_size):
    k = 1.0 / jnp.sqrt(hidden_size)
    ks = jax.random.split(key, 4)
    return dict(
        w_ih=jax.random.uniform(ks[0], (4 * hidden_size, input_size), jnp.float32, -k, k),
        w_hh=jax.random.uniform(ks[1], (4 * hidden_size, hidden_size), jnp.float32, -k, k),
        b_ih=jax.random.uniform(ks[2], (4 * hidden_size,), jnp.float32, -k, k),
        b_hh=jax.random.uniform(ks[3], (4 * hidden_size,), jnp.float32, -k, k),
    )


def _linear_params(key, in_features, out_features):
    k = 1.0 / jnp.sqrt(in_features)
    ks = jax.random.split(key, 2)
    return dict(
        w=jax.random.uniform(ks[0], (out_features, in_features), jnp.float32, -k, k),
        b=jax.random.uniform(ks[1], (out_features,), jnp.float32, -k, k),
    )


def make_lstm_autoencoder_params(key, seq_len, n_features, embedding_dim):
    del seq_len
    ks = jax.random.split(key, 5)
    hid = 2 * embedding_dim
    return dict(
        enc_rnn1=_lstm_params(ks[0], n_features, hid),               # F  -> 2E
        enc_rnn2=_lstm_params(ks[1], hid, embedding_dim),            # 2E -> E
        dec_rnn1=_lstm_params(ks[2], embedding_dim, embedding_dim),  # E  -> E
        dec_rnn2=_lstm_params(ks[3], embedding_dim, hid),            # E  -> 2E
        out=_linear_params(ks[4], hid, n_features),                  # 2E -> F
    )


# ----------------------------------------------------------------------------
# Pure-JAX reference (correctness check)
# ----------------------------------------------------------------------------
def _lstm_ref(x_bsf, p):
    B, S, D = x_bsf.shape
    H = p["w_hh"].shape[1]
    wih_t, whh_t = p["w_ih"].T, p["w_hh"].T
    b = p["b_ih"] + p["b_hh"]

    def step(carry, x_t):
        h, c = carry
        g = x_t @ wih_t + h @ whh_t + b
        i = jax.nn.sigmoid(g[:, 0 * H:1 * H])
        f = jax.nn.sigmoid(g[:, 1 * H:2 * H])
        gg = jnp.tanh(g[:, 2 * H:3 * H])
        o = jax.nn.sigmoid(g[:, 3 * H:4 * H])
        c = f * c + i * gg
        h = o * jnp.tanh(c)
        return (h, c), h

    init = (jnp.zeros((B, H), jnp.float32), jnp.zeros((B, H), jnp.float32))
    _, ys = jax.lax.scan(step, init, jnp.transpose(x_bsf, (1, 0, 2)))
    return jnp.transpose(ys, (1, 0, 2))


def _ref_forward(params, x_bsf):
    x = _lstm_ref(x_bsf, params["enc_rnn1"])
    x = _lstm_ref(x, params["enc_rnn2"])
    x = _lstm_ref(x, params["dec_rnn1"])
    x = _lstm_ref(x, params["dec_rnn2"])
    return x @ params["out"]["w"].T + params["out"]["b"]


# ----------------------------------------------------------------------------
if __name__ == "__main__":
    batch, seq_len, n_features, embedding_dim = 2, 8, 4, 8

    key = jax.random.PRNGKey(0)
    k_params, k_x = jax.random.split(key)
    params = make_lstm_autoencoder_params(k_params, seq_len, n_features, embedding_dim)
    x = jax.random.normal(k_x, (batch, seq_len, n_features), jnp.float32)

    forward = make_lstm_autoencoder_forward(params)   # one-time weight packing
    y = jax.block_until_ready(forward(x))
    y_ref = jax.block_until_ready(_ref_forward(params, x))

    assert y.shape == (batch, seq_len, n_features)
    assert jnp.allclose(y, y_ref, atol=1e-3, rtol=1e-3), "mismatch vs JAX reference"

    print("KERNEL_OK")
</pallas_src>

<mosaic_0001>
module attributes {stable_mosaic.version = 11 : i64} {
  func.func @_fused_autoencoder_kernel(%arg0: i32, %arg1: memref<64x128xf32, #tpu.memory_space<vmem>>, %arg2: memref<256x128xf32, #tpu.memory_space<vmem>>, %arg3: memref<1x128xf32, #tpu.memory_space<vmem>>, %arg4: memref<256x128xf32, #tpu.memory_space<vmem>>, %arg5: memref<1x128xf32, #tpu.memory_space<vmem>>, %arg6: memref<256x128xf32, #tpu.memory_space<vmem>>, %arg7: memref<1x128xf32, #tpu.memory_space<vmem>>, %arg8: memref<256x128xf32, #tpu.memory_space<vmem>>, %arg9: memref<1x128xf32, #tpu.memory_space<vmem>>, %arg10: memref<128x128xf32, #tpu.memory_space<vmem>>, %arg11: memref<1x128xf32, #tpu.memory_space<vmem>>, %arg12: memref<64x128xf32, #tpu.memory_space<vmem>>, %arg13: memref<64x128xf32, #tpu.memory_space<vmem>>) attributes {dimension_semantics = [#tpu.dimension_semantics<arbitrary>], iteration_bounds = array<i64: 1>, scalar_prefetch = 0 : i64, scratch_operands = 1 : i64, tpu.core_type = #tpu.core_type<tc>, window_params = [{pipeline_mode = #tpu.pipeline_mode<synchronous>, transform_indices = @transform_0, window_bounds = array<i64: 64, 128>}, {pipeline_mode = #tpu.pipeline_mode<synchronous>, transform_indices = @transform_1, window_bounds = array<i64: 256, 128>}, {pipeline_mode = #tpu.pipeline_mode<synchronous>, transform_indices = @transform_2, window_bounds = array<i64: 1, 128>}, {pipeline_mode = #tpu.pipeline_mode<synchronous>, transform_indices = @transform_3, window_bounds = array<i64: 256, 128>}, {pipeline_mode = #tpu.pipeline_mode<synchronous>, transform_indices = @transform_4, window_bounds = array<i64: 1, 128>}, {pipeline_mode = #tpu.pipeline_mode<synchronous>, transform_indices = @transform_5, window_bounds = array<i64: 256, 128>}, {pipeline_mode = #tpu.pipeline_mode<synchronous>, transform_indices = @transform_6, window_bounds = array<i64: 1, 128>}, {pipeline_mode = #tpu.pipeline_mode<synchronous>, transform_indices = @transform_7, window_bounds = array<i64: 256, 128>}, {pipeline_mode = #tpu.pipeline_mode<synchronous>, transform_indices = @transform_8, window_bounds = array<i64: 1, 128>}, {pipeline_mode = #tpu.pipeline_mode<synchronous>, transform_indices = @transform_9, window_bounds = array<i64: 128, 128>}, {pipeline_mode = #tpu.pipeline_mode<synchronous>, transform_indices = @transform_10, window_bounds = array<i64: 1, 128>}, {pipeline_mode = #tpu.pipeline_mode<synchronous>, transform_indices = @transform_11, window_bounds = array<i64: 64, 128>}]} {
    %c0 = arith.constant 0 : index
    %c0_0 = arith.constant 0 : index
    %0 = vector.load %arg3[%c0, %c0_0] : memref<1x128xf32, #tpu.memory_space<vmem>>, vector<1x128xf32>
    %1 = vector.shape_cast %0 : vector<1x128xf32> to vector<1x128xf32>
    %2 = vector.broadcast %1 : vector<1x128xf32> to vector<8x128xf32>
    %c0_1 = arith.constant 0 : index
    %c0_2 = arith.constant 0 : index
    %3 = vector.load %arg5[%c0_1, %c0_2] : memref<1x128xf32, #tpu.memory_space<vmem>>, vector<1x128xf32>
    %4 = vector.shape_cast %3 : vector<1x128xf32> to vector<1x128xf32>
    %5 = vector.broadcast %4 : vector<1x128xf32> to vector<8x128xf32>
    %c0_3 = arith.constant 0 : index
    %c0_4 = arith.constant 0 : index
    %6 = vector.load %arg7[%c0_3, %c0_4] : memref<1x128xf32, #tpu.memory_space<vmem>>, vector<1x128xf32>
    %7 = vector.shape_cast %6 : vector<1x128xf32> to vector<1x128xf32>
    %8 = vector.broadcast %7 : vector<1x128xf32> to vector<8x128xf32>
    %c0_5 = arith.constant 0 : index
    %c0_6 = arith.constant 0 : index
    %9 = vector.load %arg9[%c0_5, %c0_6] : memref<1x128xf32, #tpu.memory_space<vmem>>, vector<1x128xf32>
    %10 = vector.shape_cast %9 : vector<1x128xf32> to vector<1x128xf32>
    %11 = vector.broadcast %10 : vector<1x128xf32> to vector<8x128xf32>
    %12 = tpu.iota {dimensions = array<i32: 1>} : vector<8x128xi32>
    %c16_i32 = arith.constant 16 : i32
    %13 = vector.broadcast %c16_i32 : i32 to vector<8x128xi32>
    %14 = arith.cmpi slt, %12, %13 : vector<8x128xi32>
    %15 = tpu.iota {dimensions = array<i32: 1>} : vector<8x128xi32>
    %c8_i32 = arith.constant 8 : i32
    %16 = vector.broadcast %c8_i32 : i32 to vector<8x128xi32>
    %17 = arith.cmpi slt, %15, %16 : vector<8x128xi32>
    %18 = tpu.iota {dimensions = array<i32: 1>} : vector<8x128xi32>
    %c8_i32_7 = arith.constant 8 : i32
    %19 = vector.broadcast %c8_i32_7 : i32 to vector<8x128xi32>
    %20 = arith.cmpi slt, %18, %19 : vector<8x128xi32>
    %21 = tpu.iota {dimensions = array<i32: 1>} : vector<8x128xi32>
    %c16_i32_8 = arith.constant 16 : i32
    %22 = vector.broadcast %c16_i32_8 : i32 to vector<8x128xi32>
    %23 = arith.cmpi slt, %21, %22 : vector<8x128xi32>
    %cst = arith.constant 0.000000e+00 : f32
    %24 = vector.broadcast %cst : f32 to vector<8x128xf32>
    %cst_9 = arith.constant 0.000000e+00 : f32
    %25 = vector.broadcast %cst_9 : f32 to vector<8x128xf32>
    %cst_10 = arith.constant 0.000000e+00 : f32
    %26 = vector.broadcast %cst_10 : f32 to vector<8x128xf32>
    %cst_11 = arith.constant 0.000000e+00 : f32
    %27 = vector.broadcast %cst_11 : f32 to vector<8x128xf32>
    %cst_12 = arith.constant 0.000000e+00 : f32
    %28 = vector.broadcast %cst_12 : f32 to vector<8x128xf32>
    %cst_13 = arith.constant 0.000000e+00 : f32
    %29 = vector.broadcast %cst_13 : f32 to vector<8x128xf32>
    %cst_14 = arith.constant 0.000000e+00 : f32
    %30 = vector.broadcast %cst_14 : f32 to vector<8x128xf32>
    %cst_15 = arith.constant 0.000000e+00 : f32
    %31 = vector.broadcast %cst_15 : f32 to vector<8x128xf32>
    %c0_16 = arith.constant 0 : index
    %c0_17 = arith.constant 0 : index
    %32 = vector.load %arg1[%c0_16, %c0_17] : memref<64x128xf32, #tpu.memory_space<vmem>>, vector<8x128xf32>
    %33 = tpu.concatenate %32, %24 in 1 : vector<8x128xf32>, vector<8x128xf32> -> vector<8x256xf32>
    %c0_18 = arith.constant 0 : index
    %c0_19 = arith.constant 0 : index
    %34 = vector.load %arg2[%c0_18, %c0_19] : memref<256x128xf32, #tpu.memory_space<vmem>>, vector<256x128xf32>
    %cst_20 = arith.constant dense<0.000000e+00> : vector<8x128xf32>
    %35 = tpu.matmul %33, %34, %cst_20 {dimension_numbers = #tpu.dot_dimension_numbers<[1], [0], [0], [1], [0, 0, 1, 1], [], []>} : vector<8x256xf32>, vector<256x128xf32>, vector<8x128xf32> -> vector<8x128xf32>
    %36 = arith.addf %35, %2 : vector<8x128xf32>
    %cst_21 = arith.constant 5.000000e-01 : f32
    %37 = vector.broadcast %cst_21 : f32 to vector<8x128xf32>
    %38 = arith.mulf %37, %36 : vector<8x128xf32>
    %39 = math.tanh %38 : vector<8x128xf32>
    %cst_22 = arith.constant 5.000000e-01 : f32
    %40 = vector.broadcast %cst_22 : f32 to vector<8x128xf32>
    %41 = arith.mulf %40, %39 : vector<8x128xf32>
    %cst_23 = arith.constant 5.000000e-01 : f32
    %42 = vector.broadcast %cst_23 : f32 to vector<8x128xf32>
    %43 = arith.addf %41, %42 : vector<8x128xf32>
    %c112_i32 = arith.constant 112 : i32
    %44 = tpu.dynamic_rotate %36 by %c112_i32 dim 1 : vector<8x128xf32>, i32 -> vector<8x128xf32>
    %cst_24 = arith.constant 5.000000e-01 : f32
    %45 = vector.broadcast %cst_24 : f32 to vector<8x128xf32>
    %46 = arith.mulf %45, %44 : vector<8x128xf32>
    %47 = math.tanh %46 : vector<8x128xf32>
    %cst_25 = arith.constant 5.000000e-01 : f32
    %48 = vector.broadcast %cst_25 : f32 to vector<8x128xf32>
    %49 = arith.mulf %48, %47 : vector<8x128xf32>
    %cst_26 = arith.constant 5.000000e-01 : f32
    %50 = vector.broadcast %cst_26 : f32 to vector<8x128xf32>
    %51 = arith.addf %49, %50 : vector<8x128xf32>
    %c96_i32 = arith.constant 96 : i32
    %52 = tpu.dynamic_rotate %36 by %c96_i32 dim 1 : vector<8x128xf32>, i32 -> vector<8x128xf32>
    %53 = math.tanh %52 : vector<8x128xf32>
    %c80_i32 = arith.constant 80 : i32
    %54 = tpu.dynamic_rotate %36 by %c80_i32 dim 1 : vector<8x128xf32>, i32 -> vector<8x128xf32>
    %cst_27 = arith.constant 5.000000e-01 : f32
    %55 = vector.broadcast %cst_27 : f32 to vector<8x128xf32>
    %56 = arith.mulf %55, %54 : vector<8x128xf32>
    %57 = math.tanh %56 : vector<8x128xf32>
    %cst_28 = arith.constant 5.000000e-01 : f32
    %58 = vector.broadcast %cst_28 : f32 to vector<8x128xf32>
    %59 = arith.mulf %58, %57 : vector<8x128xf32>
    %cst_29 = arith.constant 5.000000e-01 : f32
    %60 = vector.broadcast %cst_29 : f32 to vector<8x128xf32>
    %61 = arith.addf %59, %60 : vector<8x128xf32>
    %62 = arith.mulf %51, %28 : vector<8x128xf32>
    %63 = arith.mulf %43, %53 : vector<8x128xf32>
    %64 = arith.addf %62, %63 : vector<8x128xf32>
    %65 = math.tanh %64 : vector<8x128xf32>
    %66 = arith.mulf %61, %65 : vector<8x128xf32>
    %cst_30 = arith.constant 0.000000e+00 : f32
    %67 = vector.broadcast %cst_30 : f32 to vector<8x128xf32>
    %68 = arith.select %14, %66, %67 : vector<8x128xi1>, vector<8x128xf32>
    %c8 = arith.constant 8 : index
    %c0_31 = arith.constant 0 : index
    %69 = vector.load %arg1[%c8, %c0_31] : memref<64x128xf32, #tpu.memory_space<vmem>>, vector<8x128xf32>
    %70 = tpu.concatenate %69, %68 in 1 : vector<8x128xf32>, vector<8x128xf32> -> vector<8x256xf32>
    %c0_32 = arith.constant 0 : index
    %c0_33 = arith.constant 0 : index
    %71 = vector.load %arg2[%c0_32, %c0_33] : memref<256x128xf32, #tpu.memory_space<vmem>>, vector<256x128xf32>
    %cst_34 = arith.constant dense<0.000000e+00> : vector<8x128xf32>
    %72 = tpu.matmul %70, %71, %cst_34 {dimension_numbers = #tpu.dot_dimension_numbers<[1], [0], [0], [1], [0, 0, 1, 1], [], []>} : vector<8x256xf32>, vector<256x128xf32>, vector<8x128xf32> -> vector<8x128xf32>
    %73 = arith.addf %72, %2 : vector<8x128xf32>
    %cst_35 = arith.constant 5.000000e-01 : f32
    %74 = vector.broadcast %cst_35 : f32 to vector<8x128xf32>
    %75 = arith.mulf %74, %73 : vector<8x128xf32>
    %76 = math.tanh %75 : vector<8x128xf32>
    %cst_36 = arith.constant 5.000000e-01 : f32
    %77 = vector.broadcast %cst_36 : f32 to vector<8x128xf32>
    %78 = arith.mulf %77, %76 : vector<8x128xf32>
    %cst_37 = arith.constant 5.000000e-01 : f32
    %79 = vector.broadcast %cst_37 : f32 to vector<8x128xf32>
    %80 = arith.addf %78, %79 : vector<8x128xf32>
    %c112_i32_38 = arith.constant 112 : i32
    %81 = tpu.dynamic_rotate %73 by %c112_i32_38 dim 1 : vector<8x128xf32>, i32 -> vector<8x128xf32>
    %cst_39 = arith.constant 5.000000e-01 : f32
    %82 = vector.broadcast %cst_39 : f32 to vector<8x128xf32>
    %83 = arith.mulf %82, %81 : vector<8x128xf32>
    %84 = math.tanh %83 : vector<8x128xf32>
    %cst_40 = arith.constant 5.000000e-01 : f32
    %85 = vector.broadcast %cst_40 : f32 to vector<8x128xf32>
    %86 = arith.mulf %85, %84 : vector<8x128xf32>
    %cst_41 = arith.constant 5.000000e-01 : f32
    %87 = vector.broadcast %cst_41 : f32 to vector<8x128xf32>
    %88 = arith.addf %86, %87 : vector<8x128xf32>
    %c96_i32_42 = arith.constant 96 : i32
    %89 = tpu.dynamic_rotate %73 by %c96_i32_42 dim 1 : vector<8x128xf32>, i32 -> vector<8x128xf32>
    %90 = math.tanh %89 : vector<8x128xf32>
    %c80_i32_43 = arith.constant 80 : i32
    %91 = tpu.dynamic_rotate %73 by %c80_i32_43 dim 1 : vector<8x128xf32>, i32 -> vector<8x128xf32>
    %cst_44 = arith.constant 5.000000e-01 : f32
    %92 = vector.broadcast %cst_44 : f32 to vector<8x128xf32>
    %93 = arith.mulf %92, %91 : vector<8x128xf32>
    %94 = math.tanh %93 : vector<8x128xf32>
    %cst_45 = arith.constant 5.000000e-01 : f32
    %95 = vector.broadcast %cst_45 : f32 to vector<8x128xf32>
    %96 = arith.mulf %95, %94 : vector<8x128xf32>
    %cst_46 = arith.constant 5.000000e-01 : f32
    %97 = vector.broadcast %cst_46 : f32 to vector<8x128xf32>
    %98 = arith.addf %96, %97 : vector<8x128xf32>
    %99 = arith.mulf %88, %64 : vector<8x128xf32>
    %100 = arith.mulf %80, %90 : vector<8x128xf32>
    %101 = arith.addf %99, %100 : vector<8x128xf32>
    %102 = math.tanh %101 : vector<8x128xf32>
    %103 = arith.mulf %98, %102 : vector<8x128xf32>
    %cst_47 = arith.constant 0.000000e+00 : f32
    %104 = vector.broadcast %cst_47 : f32 to vector<8x128xf32>
    %105 = arith.select %14, %103, %104 : vector<8x128xi1>, vector<8x128xf32>
    %106 = tpu.concatenate %68, %25 in 1 : vector<8x128xf32>, vector<8x128xf32> -> vector<8x256xf32>
    %c0_48 = arith.constant 0 : index
    %c0_49 = arith.constant 0 : index
    %107 = vector.load %arg4[%c0_48, %c0_49] : memref<256x128xf32, #tpu.memory_space<vmem>>, vector<256x128xf32>
    %cst_50 = arith.constant dense<0.000000e+00> : vector<8x128xf32>
    %108 = tpu.matmul %106, %107, %cst_50 {dimension_numbers = #tpu.dot_dimension_numbers<[1], [0], [0], [1], [0, 0, 1, 1], [], []>} : vector<8x256xf32>, vector<256x128xf32>, vector<8x128xf32> -> vector<8x128xf32>
    %109 = arith.addf %108, %5 : vector<8x128xf32>
    %cst_51 = arith.constant 5.000000e-01 : f32
    %110 = vector.broadcast %cst_51 : f32 to vector<8x128xf32>
    %111 = arith.mulf %110, %109 : vector<8x128xf32>
    %112 = math.tanh %111 : vector<8x128xf32>
    %cst_52 = arith.constant 5.000000e-01 : f32
    %113 = vector.broadcast %cst_52 : f32 to vector<8x128xf32>
    %114 = arith.mulf %113, %112 : vector<8x128xf32>
    %cst_53 = arith.constant 5.000000e-01 : f32
    %115 = vector.broadcast %cst_53 : f32 to vector<8x128xf32>
    %116 = arith.addf %114, %115 : vector<8x128xf32>
    %c120_i32 = arith.constant 120 : i32
    %117 = tpu.dynamic_rotate %109 by %c120_i32 dim 1 : vector<8x128xf32>, i32 -> vector<8x128xf32>
    %cst_54 = arith.constant 5.000000e-01 : f32
    %118 = vector.broadcast %cst_54 : f32 to vector<8x128xf32>
    %119 = arith.mulf %118, %117 : vector<8x128xf32>
    %120 = math.tanh %119 : vector<8x128xf32>
    %cst_55 = arith.constant 5.000000e-01 : f32
    %121 = vector.broadcast %cst_55 : f32 to vector<8x128xf32>
    %122 = arith.mulf %121, %120 : vector<8x128xf32>
    %cst_56 = arith.constant 5.000000e-01 : f32
    %123 = vector.broadcast %cst_56 : f32 to vector<8x128xf32>
    %124 = arith.addf %122, %123 : vector<8x128xf32>
    %c112_i32_57 = arith.constant 112 : i32
    %125 = tpu.dynamic_rotate %109 by %c112_i32_57 dim 1 : vector<8x128xf32>, i32 -> vector<8x128xf32>
    %126 = math.tanh %125 : vector<8x128xf32>
    %c104_i32 = arith.constant 104 : i32
    %127 = tpu.dynamic_rotate %109 by %c104_i32 dim 1 : vector<8x128xf32>, i32 -> vector<8x128xf32>
    %cst_58 = arith.constant 5.000000e-01 : f32
    %128 = vector.broadcast %cst_58 : f32 to vector<8x128xf32>
    %129 = arith.mulf %128, %127 : vector<8x128xf32>
    %130 = math.tanh %129 : vector<8x128xf32>
    %cst_59 = arith.constant 5.000000e-01 : f32
    %131 = vector.broadcast %cst_59 : f32 to vector<8x128xf32>
    %132 = arith.mulf %131, %130 : vector<8x128xf32>
    %cst_60 = arith.constant 5.000000e-01 : f32
    %133 = vector.broadcast %cst_60 : f32 to vector<8x128xf32>
    %134 = arith.addf %132, %133 : vector<8x128xf32>
    %135 = arith.mulf %124, %29 : vector<8x128xf32>
    %136 = arith.mulf %116, %126 : vector<8x128xf32>
    %137 = arith.addf %135, %136 : vector<8x128xf32>
    %138 = math.tanh %137 : vector<8x128xf32>
    %139 = arith.mulf %134, %138 : vector<8x128xf32>
    %cst_61 = arith.constant 0.000000e+00 : f32
    %140 = vector.broadcast %cst_61 : f32 to vector<8x128xf32>
    %141 = arith.select %17, %139, %140 : vector<8x128xi1>, vector<8x128xf32>
    %c16 = arith.constant 16 : index
    %c0_62 = arith.constant 0 : index
    %142 = vector.load %arg1[%c16, %c0_62] : memref<64x128xf32, #tpu.memory_space<vmem>>, vector<8x128xf32>
    %143 = tpu.concatenate %142, %105 in 1 : vector<8x128xf32>, vector<8x128xf32> -> vector<8x256xf32>
    %c0_63 = arith.constant 0 : index
    %c0_64 = arith.constant 0 : index
    %144 = vector.load %arg2[%c0_63, %c0_64] : memref<256x128xf32, #tpu.memory_space<vmem>>, vector<256x128xf32>
    %cst_65 = arith.constant dense<0.000000e+00> : vector<8x128xf32>
    %145 = tpu.matmul %143, %144, %cst_65 {dimension_numbers = #tpu.dot_dimension_numbers<[1], [0], [0], [1], [0, 0, 1, 1], [], []>} : vector<8x256xf32>, vector<256x128xf32>, vector<8x128xf32> -> vector<8x128xf32>
    %146 = arith.addf %145, %2 : vector<8x128xf32>
    %cst_66 = arith.constant 5.000000e-01 : f32
    %147 = vector.broadcast %cst_66 : f32 to vector<8x128xf32>
    %148 = arith.mulf %147, %146 : vector<8x128xf32>
    %149 = math.tanh %148 : vector<8x128xf32>
    %cst_67 = arith.constant 5.000000e-01 : f32
    %150 = vector.broadcast %cst_67 : f32 to vector<8x128xf32>
    %151 = arith.mulf %150, %149 : vector<8x128xf32>
    %cst_68 = arith.constant 5.000000e-01 : f32
    %152 = vector.broadcast %cst_68 : f32 to vector<8x128xf32>
    %153 = arith.addf %151, %152 : vector<8x128xf32>
    %c112_i32_69 = arith.constant 112 : i32
    %154 = tpu.dynamic_rotate %146 by %c112_i32_69 dim 1 : vector<8x128xf32>, i32 -> vector<8x128xf32>
    %cst_70 = arith.constant 5.000000e-01 : f32
    %155 = vector.broadcast %cst_70 : f32 to vector<8x128xf32>
    %156 = arith.mulf %155, %154 : vector<8x128xf32>
    %157 = math.tanh %156 : vector<8x128xf32>
    %cst_71 = arith.constant 5.000000e-01 : f32
    %158 = vector.broadcast %cst_71 : f32 to vector<8x128xf32>
    %159 = arith.mulf %158, %157 : vector<8x128xf32>
    %cst_72 = arith.constant 5.000000e-01 : f32
    %160 = vector.broadcast %cst_72 : f32 to vector<8x128xf32>
    %161 = arith.addf %159, %160 : vector<8x128xf32>
    %c96_i32_73 = arith.constant 96 : i32
    %162 = tpu.dynamic_rotate %146 by %c96_i32_73 dim 1 : vector<8x128xf32>, i32 -> vector<8x128xf32>
    %163 = math.tanh %162 : vector<8x128xf32>
    %c80_i32_74 = arith.constant 80 : i32
    %164 = tpu.dynamic_rotate %146 by %c80_i32_74 dim 1 : vector<8x128xf32>, i32 -> vector<8x128xf32>
    %cst_75 = arith.constant 5.000000e-01 : f32
    %165 = vector.broadcast %cst_75 : f32 to vector<8x128xf32>
    %166 = arith.mulf %165, %164 : vector<8x128xf32>
    %167 = math.tanh %166 : vector<8x128xf32>
    %cst_76 = arith.constant 5.000000e-01 : f32
    %168 = vector.broadcast %cst_76 : f32 to vector<8x128xf32>
    %169 = arith.mulf %168, %167 : vector<8x128xf32>
    %cst_77 = arith.constant 5.000000e-01 : f32
    %170 = vector.broadcast %cst_77 : f32 to vector<8x128xf32>
    %171 = arith.addf %169, %170 : vector<8x128xf32>
    %172 = arith.mulf %161, %101 : vector<8x128xf32>
    %173 = arith.mulf %153, %163 : vector<8x128xf32>
    %174 = arith.addf %172, %173 : vector<8x128xf32>
    %175 = math.tanh %174 : vector<8x128xf32>
    %176 = arith.mulf %171, %175 : vector<8x128xf32>
    %cst_78 = arith.constant 0.000000e+00 : f32
    %177 = vector.broadcast %cst_78 : f32 to vector<8x128xf32>
    %178 = arith.select %14, %176, %177 : vector<8x128xi1>, vector<8x128xf32>
    %179 = tpu.concatenate %105, %141 in 1 : vector<8x128xf32>, vector<8x128xf32> -> vector<8x256xf32>
    %c0_79 = arith.constant 0 : index
    %c0_80 = arith.constant 0 : index
    %180 = vector.load %arg4[%c0_79, %c0_80] : memref<256x128xf32, #tpu.memory_space<vmem>>, vector<256x128xf32>
    %cst_81 = arith.constant dense<0.000000e+00> : vector<8x128xf32>
    %181 = tpu.matmul %179, %180, %cst_81 {dimension_numbers = #tpu.dot_dimension_numbers<[1], [0], [0], [1], [0, 0, 1, 1], [], []>} : vector<8x256xf32>, vector<256x128xf32>, vector<8x128xf32> -> vector<8x128xf32>
    %182 = arith.addf %181, %5 : vector<8x128xf32>
    %cst_82 = arith.constant 5.000000e-01 : f32
    %183 = vector.broadcast %cst_82 : f32 to vector<8x128xf32>
    %184 = arith.mulf %183, %182 : vector<8x128xf32>
    %185 = math.tanh %184 : vector<8x128xf32>
    %cst_83 = arith.constant 5.000000e-01 : f32
    %186 = vector.broadcast %cst_83 : f32 to vector<8x128xf32>
    %187 = arith.mulf %186, %185 : vector<8x128xf32>
    %cst_84 = arith.constant 5.000000e-01 : f32
    %188 = vector.broadcast %cst_84 : f32 to vector<8x128xf32>
    %189 = arith.addf %187, %188 : vector<8x128xf32>
    %c120_i32_85 = arith.constant 120 : i32
    %190 = tpu.dynamic_rotate %182 by %c120_i32_85 dim 1 : vector<8x128xf32>, i32 -> vector<8x128xf32>
    %cst_86 = arith.constant 5.000000e-01 : f32
    %191 = vector.broadcast %cst_86 : f32 to vector<8x128xf32>
    %192 = arith.mulf %191, %190 : vector<8x128xf32>
    %193 = math.tanh %192 : vector<8x128xf32>
    %cst_87 = arith.constant 5.000000e-01 : f32
    %194 = vector.broadcast %cst_87 : f32 to vector<8x128xf32>
    %195 = arith.mulf %194, %193 : vector<8x128xf32>
    %cst_88 = arith.constant 5.000000e-01 : f32
    %196 = vector.broadcast %cst_88 : f32 to vector<8x128xf32>
    %197 = arith.addf %195, %196 : vector<8x128xf32>
    %c112_i32_89 = arith.constant 112 : i32
    %198 = tpu.dynamic_rotate %182 by %c112_i32_89 dim 1 : vector<8x128xf32>, i32 -> vector<8x128xf32>
    %199 = math.tanh %198 : vector<8x128xf32>
    %c104_i32_90 = arith.constant 104 : i32
    %200 = tpu.dynamic_rotate %182 by %c104_i32_90 dim 1 : vector<8x128xf32>, i32 -> vector<8x128xf32>
    %cst_91 = arith.constant 5.000000e-01 : f32
    %201 = vector.broadcast %cst_91 : f32 to vector<8x128xf32>
    %202 = arith.mulf %201, %200 : vector<8x128xf32>
    %203 = math.tanh %202 : vector<8x128xf32>
    %cst_92 = arith.constant 5.000000e-01 : f32
    %204 = vector.broadcast %cst_92 : f32 to vector<8x128xf32>
    %205 = arith.mulf %204, %203 : vector<8x128xf32>
    %cst_93 = arith.constant 5.000000e-01 : f32
    %206 = vector.broadcast %cst_93 : f32 to vector<8x128xf32>
    %207 = arith.addf %205, %206 : vector<8x128xf32>
    %208 = arith.mulf %197, %137 : vector<8x128xf32>
    %209 = arith.mulf %189, %199 : vector<8x128xf32>
    %210 = arith.addf %208, %209 : vector<8x128xf32>
    %211 = math.tanh %210 : vector<8x128xf32>
    %212 = arith.mulf %207, %211 : vector<8x128xf32>
    %cst_94 = arith.constant 0.000000e+00 : f32
    %213 = vector.broadcast %cst_94 : f32 to vector<8x128xf32>
    %214 = arith.select %17, %212, %213 : vector<8x128xi1>, vector<8x128xf32>
    %215 = tpu.concatenate %141, %26 in 1 : vector<8x128xf32>, vector<8x128xf32> -> vector<8x256xf32>
    %c0_95 = arith.constant 0 : index
    %c0_96 = arith.constant 0 : index
    %216 = vector.load %arg6[%c0_95, %c0_96] : memref<256x128xf32, #tpu.memory_space<vmem>>, vector<256x128xf32>
    %cst_97 = arith.constant dense<0.000000e+00> : vector<8x128xf32>
    %217 = tpu.matmul %215, %216, %cst_97 {dimension_numbers = #tpu.dot_dimension_numbers<[1], [0], [0], [1], [0, 0, 1, 1], [], []>} : vector<8x256xf32>, vector<256x128xf32>, vector<8x128xf32> -> vector<8x128xf32>
    %218 = arith.addf %217, %8 : vector<8x128xf32>
    %cst_98 = arith.constant 5.000000e-01 : f32
    %219 = vector.broadcast %cst_98 : f32 to vector<8x128xf32>
    %220 = arith.mulf %219, %218 : vector<8x128xf32>
    %221 = math.tanh %220 : vector<8x128xf32>
    %cst_99 = arith.constant 5.000000e-01 : f32
    %222 = vector.broadcast %cst_99 : f32 to vector<8x128xf32>
    %223 = arith.mulf %222, %221 : vector<8x128xf32>
    %cst_100 = arith.constant 5.000000e-01 : f32
    %224 = vector.broadcast %cst_100 : f32 to vector<8x128xf32>
    %225 = arith.addf %223, %224 : vector<8x128xf32>
    %c120_i32_101 = arith.constant 120 : i32
    %226 = tpu.dynamic_rotate %218 by %c120_i32_101 dim 1 : vector<8x128xf32>, i32 -> vector<8x128xf32>
    %cst_102 = arith.constant 5.000000e-01 : f32
    %227 = vector.broadcast %cst_102 : f32 to vector<8x128xf32>
    %228 = arith.mulf %227, %226 : vector<8x128xf32>
    %229 = math.tanh %228 : vector<8x128xf32>
    %cst_103 = arith.constant 5.000000e-01 : f32
    %230 = vector.broadcast %cst_103 : f32 to vector<8x128xf32>
    %231 = arith.mulf %230, %229 : vector<8x128xf32>
    %cst_104 = arith.constant 5.000000e-01 : f32
    %232 = vector.broadcast %cst_104 : f32 to vector<8x128xf32>
    %233 = arith.addf %231, %232 : vector<8x128xf32>
    %c112_i32_105 = arith.constant 112 : i32
    %234 = tpu.dynamic_rotate %218 by %c112_i32_105 dim 1 : vector<8x128xf32>, i32 -> vector<8x128xf32>
    %235 = math.tanh %234 : vector<8x128xf32>
    %c104_i32_106 = arith.constant 104 : i32
    %236 = tpu.dynamic_rotate %218 by %c104_i32_106 dim 1 : vector<8x128xf32>, i32 -> vector<8x128xf32>
    %cst_107 = arith.constant 5.000000e-01 : f32
    %237 = vector.broadcast %cst_107 : f32 to vector<8x128xf32>
    %238 = arith.mulf %237, %236 : vector<8x128xf32>
    %239 = math.tanh %238 : vector<8x128xf32>
    %cst_108 = arith.constant 5.000000e-01 : f32
    %240 = vector.broadcast %cst_108 : f32 to vector<8x128xf32>
    %241 = arith.mulf %240, %239 : vector<8x128xf32>
    %cst_109 = arith.constant 5.000000e-01 : f32
    %242 = vector.broadcast %cst_109 : f32 to vector<8x128xf32>
    %243 = arith.addf %241, %242 : vector<8x128xf32>
    %244 = arith.mulf %233, %30 : vector<8x128xf32>
    %245 = arith.mulf %225, %235 : vector<8x128xf32>
    %246 = arith.addf %244, %245 : vector<8x128xf32>
    %247 = math.tanh %246 : vector<8x128xf32>
    %248 = arith.mulf %243, %247 : vector<8x128xf32>
    %cst_110 = arith.constant 0.000000e+00 : f32
    %249 = vector.broadcast %cst_110 : f32 to vector<8x128xf32>
    %250 = arith.select %20, %248, %249 : vector<8x128xi1>, vector<8x128xf32>
    %c24 = arith.constant 24 : index
    %c0_111 = arith.constant 0 : index
    %251 = vector.load %arg1[%c24, %c0_111] : memref<64x128xf32, #tpu.memory_space<vmem>>, vector<8x128xf32>
    %252 = tpu.concatenate %251, %178 in 1 : vector<8x128xf32>, vector<8x128xf32> -> vector<8x256xf32>
    %c0_112 = arith.constant 0 : index
    %c0_113 = arith.constant 0 : index
    %253 = vector.load %arg2[%c0_112, %c0_113] : memref<256x128xf32, #tpu.memory_space<vmem>>, vector<256x128xf32>
    %cst_114 = arith.constant dense<0.000000e+00> : vector<8x128xf32>
    %254 = tpu.matmul %252, %253, %cst_114 {dimension_numbers = #tpu.dot_dimension_numbers<[1], [0], [0], [1], [0, 0, 1, 1], [], []>} : vector<8x256xf32>, vector<256x128xf32>, vector<8x128xf32> -> vector<8x128xf32>
    %255 = arith.addf %254, %2 : vector<8x128xf32>
    %cst_115 = arith.constant 5.000000e-01 : f32
    %256 = vector.broadcast %cst_115 : f32 to vector<8x128xf32>
    %257 = arith.mulf %256, %255 : vector<8x128xf32>
    %258 = math.tanh %257 : vector<8x128xf32>
    %cst_116 = arith.constant 5.000000e-01 : f32
    %259 = vector.broadcast %cst_116 : f32 to vector<8x128xf32>
    %260 = arith.mulf %259, %258 : vector<8x128xf32>
    %cst_117 = arith.constant 5.000000e-01 : f32
    %261 = vector.broadcast %cst_117 : f32 to vector<8x128xf32>
    %262 = arith.addf %260, %261 : vector<8x128xf32>
    %c112_i32_118 = arith.constant 112 : i32
    %263 = tpu.dynamic_rotate %255 by %c112_i32_118 dim 1 : vector<8x128xf32>, i32 -> vector<8x128xf32>
    %cst_119 = arith.constant 5.000000e-01 : f32
    %264 = vector.broadcast %cst_119 : f32 to vector<8x128xf32>
    %265 = arith.mulf %264, %263 : vector<8x128xf32>
    %266 = math.tanh %265 : vector<8x128xf32>
    %cst_120 = arith.constant 5.000000e-01 : f32
    %267 = vector.broadcast %cst_120 : f32 to vector<8x128xf32>
    %268 = arith.mulf %267, %266 : vector<8x128xf32>
    %cst_121 = arith.constant 5.000000e-01 : f32
    %269 = vector.broadcast %cst_121 : f32 to vector<8x128xf32>
    %270 = arith.addf %268, %269 : vector<8x128xf32>
    %c96_i32_122 = arith.constant 96 : i32
    %271 = tpu.dynamic_rotate %255 by %c96_i32_122 dim 1 : vector<8x128xf32>, i32 -> vector<8x128xf32>
    %272 = math.tanh %271 : vector<8x128xf32>
    %c80_i32_123 = arith.constant 80 : i32
    %273 = tpu.dynamic_rotate %255 by %c80_i32_123 dim 1 : vector<8x128xf32>, i32 -> vector<8x128xf32>
    %cst_124 = arith.constant 5.000000e-01 : f32
    %274 = vector.broadcast %cst_124 : f32 to vector<8x128xf32>
    %275 = arith.mulf %274, %273 : vector<8x128xf32>
    %276 = math.tanh %275 : vector<8x128xf32>
    %cst_125 = arith.constant 5.000000e-01 : f32
    %277 = vector.broadcast %cst_125 : f32 to vector<8x128xf32>
    %278 = arith.mulf %277, %276 : vector<8x128xf32>
    %cst_126 = arith.constant 5.000000e-01 : f32
    %279 = vector.broadcast %cst_126 : f32 to vector<8x128xf32>
    %280 = arith.addf %278, %279 : vector<8x128xf32>
    %281 = arith.mulf %270, %174 : vector<8x128xf32>
    %282 = arith.mulf %262, %272 : vector<8x128xf32>
    %283 = arith.addf %281, %282 : vector<8x128xf32>
    %284 = math.tanh %283 : vector<8x128xf32>
    %285 = arith.mulf %280, %284 : vector<8x128xf32>
    %cst_127 = arith.constant 0.000000e+00 : f32
    %286 = vector.broadcast %cst_127 : f32 to vector<8x128xf32>
    %287 = arith.select %14, %285, %286 : vector<8x128xi1>, vector<8x128xf32>
    %288 = tpu.concatenate %178, %214 in 1 : vector<8x128xf32>, vector<8x128xf32> -> vector<8x256xf32>
    %c0_128 = arith.constant 0 : index
    %c0_129 = arith.constant 0 : index
    %289 = vector.load %arg4[%c0_128, %c0_129] : memref<256x128xf32, #tpu.memory_space<vmem>>, vector<256x128xf32>
    %cst_130 = arith.constant dense<0.000000e+00> : vector<8x128xf32>
    %290 = tpu.matmul %288, %289, %cst_130 {dimension_numbers = #tpu.dot_dimension_numbers<[1], [0], [0], [1], [0, 0, 1, 1], [], []>} : vector<8x256xf32>, vector<256x128xf32>, vector<8x128xf32> -> vector<8x128xf32>
    %291 = arith.addf %290, %5 : vector<8x128xf32>
    %cst_131 = arith.constant 5.000000e-01 : f32
    %292 = vector.broadcast %cst_131 : f32 to vector<8x128xf32>
    %293 = arith.mulf %292, %291 : vector<8x128xf32>
    %294 = math.tanh %293 : vector<8x128xf32>
    %cst_132 = arith.constant 5.000000e-01 : f32
    %295 = vector.broadcast %cst_132 : f32 to vector<8x128xf32>
    %296 = arith.mulf %295, %294 : vector<8x128xf32>
    %cst_133 = arith.constant 5.000000e-01 : f32
    %297 = vector.broadcast %cst_133 : f32 to vector<8x128xf32>
    %298 = arith.addf %296, %297 : vector<8x128xf32>
    %c120_i32_134 = arith.constant 120 : i32
    %299 = tpu.dynamic_rotate %291 by %c120_i32_134 dim 1 : vector<8x128xf32>, i32 -> vector<8x128xf32>
    %cst_135 = arith.constant 5.000000e-01 : f32
    %300 = vector.broadcast %cst_135 : f32 to vector<8x128xf32>
    %301 = arith.mulf %300, %299 : vector<8x128xf32>
    %302 = math.tanh %301 : vector<8x128xf32>
    %cst_136 = arith.constant 5.000000e-01 : f32
    %303 = vector.broadcast %cst_136 : f32 to vector<8x128xf32>
    %304 = arith.mulf %303, %302 : vector<8x128xf32>
    %cst_137 = arith.constant 5.000000e-01 : f32
    %305 = vector.broadcast %cst_137 : f32 to vector<8x128xf32>
    %306 = arith.addf %304, %305 : vector<8x128xf32>
    %c112_i32_138 = arith.constant 112 : i32
    %307 = tpu.dynamic_rotate %291 by %c112_i32_138 dim 1 : vector<8x128xf32>, i32 -> vector<8x128xf32>
    %308 = math.tanh %307 : vector<8x128xf32>
    %c104_i32_139 = arith.constant 104 : i32
    %309 = tpu.dynamic_rotate %291 by %c104_i32_139 dim 1 : vector<8x128xf32>, i32 -> vector<8x128xf32>
    %cst_140 = arith.constant 5.000000e-01 : f32
    %310 = vector.broadcast %cst_140 : f32 to vector<8x128xf32>
    %311 = arith.mulf %310, %309 : vector<8x128xf32>
    %312 = math.tanh %311 : vector<8x128xf32>
    %cst_141 = arith.constant 5.000000e-01 : f32
    %313 = vector.broadcast %cst_141 : f32 to vector<8x128xf32>
    %314 = arith.mulf %313, %312 : vector<8x128xf32>
    %cst_142 = arith.constant 5.000000e-01 : f32
    %315 = vector.broadcast %cst_142 : f32 to vector<8x128xf32>
    %316 = arith.addf %314, %315 : vector<8x128xf32>
    %317 = arith.mulf %306, %210 : vector<8x128xf32>
    %318 = arith.mulf %298, %308 : vector<8x128xf32>
    %319 = arith.addf %317, %318 : vector<8x128xf32>
    %320 = math.tanh %319 : vector<8x128xf32>
    %321 = arith.mulf %316, %320 : vector<8x128xf32>
    %cst_143 = arith.constant 0.000000e+00 : f32
    %322 = vector.broadcast %cst_143 : f32 to vector<8x128xf32>
    %323 = arith.select %17, %321, %322 : vector<8x128xi1>, vector<8x128xf32>
    %324 = tpu.concatenate %214, %250 in 1 : vector<8x128xf32>, vector<8x128xf32> -> vector<8x256xf32>
    %c0_144 = arith.constant 0 : index
    %c0_145 = arith.constant 0 : index
    %325 = vector.load %arg6[%c0_144, %c0_145] : memref<256x128xf32, #tpu.memory_space<vmem>>, vector<256x128xf32>
    %cst_146 = arith.constant dense<0.000000e+00> : vector<8x128xf32>
    %326 = tpu.matmul %324, %325, %cst_146 {dimension_numbers = #tpu.dot_dimension_numbers<[1], [0], [0], [1], [0, 0, 1, 1], [], []>} : vector<8x256xf32>, vector<256x128xf32>, vector<8x128xf32> -> vector<8x128xf32>
    %327 = arith.addf %326, %8 : vector<8x128xf32>
    %cst_147 = arith.constant 5.000000e-01 : f32
    %328 = vector.broadcast %cst_147 : f32 to vector<8x128xf32>
    %329 = arith.mulf %328, %327 : vector<8x128xf32>
    %330 = math.tanh %329 : vector<8x128xf32>
    %cst_148 = arith.constant 5.000000e-01 : f32
    %331 = vector.broadcast %cst_148 : f32 to vector<8x128xf32>
    %332 = arith.mulf %331, %330 : vector<8x128xf32>
    %cst_149 = arith.constant 5.000000e-01 : f32
    %333 = vector.broadcast %cst_149 : f32 to vector<8x128xf32>
    %334 = arith.addf %332, %333 : vector<8x128xf32>
    %c120_i32_150 = arith.constant 120 : i32
    %335 = tpu.dynamic_rotate %327 by %c120_i32_150 dim 1 : vector<8x128xf32>, i32 -> vector<8x128xf32>
    %cst_151 = arith.constant 5.000000e-01 : f32
    %336 = vector.broadcast %cst_151 : f32 to vector<8x128xf32>
    %337 = arith.mulf %336, %335 : vector<8x128xf32>
    %338 = math.tanh %337 : vector<8x128xf32>
    %cst_152 = arith.constant 5.000000e-01 : f32
    %339 = vector.broadcast %cst_152 : f32 to vector<8x128xf32>
    %340 = arith.mulf %339, %338 : vector<8x128xf32>
    %cst_153 = arith.constant 5.000000e-01 : f32
    %341 = vector.broadcast %cst_153 : f32 to vector<8x128xf32>
    %342 = arith.addf %340, %341 : vector<8x128xf32>
    %c112_i32_154 = arith.constant 112 : i32
    %343 = tpu.dynamic_rotate %327 by %c112_i32_154 dim 1 : vector<8x128xf32>, i32 -> vector<8x128xf32>
    %344 = math.tanh %343 : vector<8x128xf32>
    %c104_i32_155 = arith.constant 104 : i32
    %345 = tpu.dynamic_rotate %327 by %c104_i32_155 dim 1 : vector<8x128xf32>, i32 -> vector<8x128xf32>
    %cst_156 = arith.constant 5.000000e-01 : f32
    %346 = vector.broadcast %cst_156 : f32 to vector<8x128xf32>
    %347 = arith.mulf %346, %345 : vector<8x128xf32>
    %348 = math.tanh %347 : vector<8x128xf32>
    %cst_157 = arith.constant 5.000000e-01 : f32
    %349 = vector.broadcast %cst_157 : f32 to vector<8x128xf32>
    %350 = arith.mulf %349, %348 : vector<8x128xf32>
    %cst_158 = arith.constant 5.000000e-01 : f32
    %351 = vector.broadcast %cst_158 : f32 to vector<8x128xf32>
    %352 = arith.addf %350, %351 : vector<8x128xf32>
    %353 = arith.mulf %342, %246 : vector<8x128xf32>
    %354 = arith.mulf %334, %344 : vector<8x128xf32>
    %355 = arith.addf %353, %354 : vector<8x128xf32>
    %356 = math.tanh %355 : vector<8x128xf32>
    %357 = arith.mulf %352, %356 : vector<8x128xf32>
    %cst_159 = arith.constant 0.000000e+00 : f32
    %358 = vector.broadcast %cst_159 : f32 to vector<8x128xf32>
    %359 = arith.select %20, %357, %358 : vector<8x128xi1>, vector<8x128xf32>
    %360 = tpu.concatenate %250, %27 in 1 : vector<8x128xf32>, vector<8x128xf32> -> vector<8x256xf32>
    %c0_160 = arith.constant 0 : index
    %c0_161 = arith.constant 0 : index
    %361 = vector.load %arg8[%c0_160, %c0_161] : memref<256x128xf32, #tpu.memory_space<vmem>>, vector<256x128xf32>
    %cst_162 = arith.constant dense<0.000000e+00> : vector<8x128xf32>
    %362 = tpu.matmul %360, %361, %cst_162 {dimension_numbers = #tpu.dot_dimension_numbers<[1], [0], [0], [1], [0, 0, 1, 1], [], []>} : vector<8x256xf32>, vector<256x128xf32>, vector<8x128xf32> -> vector<8x128xf32>
    %363 = arith.addf %362, %11 : vector<8x128xf32>
    %cst_163 = arith.constant 5.000000e-01 : f32
    %364 = vector.broadcast %cst_163 : f32 to vector<8x128xf32>
    %365 = arith.mulf %364, %363 : vector<8x128xf32>
    %366 = math.tanh %365 : vector<8x128xf32>
    %cst_164 = arith.constant 5.000000e-01 : f32
    %367 = vector.broadcast %cst_164 : f32 to vector<8x128xf32>
    %368 = arith.mulf %367, %366 : vector<8x128xf32>
    %cst_165 = arith.constant 5.000000e-01 : f32
    %369 = vector.broadcast %cst_165 : f32 to vector<8x128xf32>
    %370 = arith.addf %368, %369 : vector<8x128xf32>
    %c112_i32_166 = arith.constant 112 : i32
    %371 = tpu.dynamic_rotate %363 by %c112_i32_166 dim 1 : vector<8x128xf32>, i32 -> vector<8x128xf32>
    %cst_167 = arith.constant 5.000000e-01 : f32
    %372 = vector.broadcast %cst_167 : f32 to vector<8x128xf32>
    %373 = arith.mulf %372, %371 : vector<8x128xf32>
    %374 = math.tanh %373 : vector<8x128xf32>
    %cst_168 = arith.constant 5.000000e-01 : f32
    %375 = vector.broadcast %cst_168 : f32 to vector<8x128xf32>
    %376 = arith.mulf %375, %374 : vector<8x128xf32>
    %cst_169 = arith.constant 5.000000e-01 : f32
    %377 = vector.broadcast %cst_169 : f32 to vector<8x128xf32>
    %378 = arith.addf %376, %377 : vector<8x128xf32>
    %c96_i32_170 = arith.constant 96 : i32
    %379 = tpu.dynamic_rotate %363 by %c96_i32_170 dim 1 : vector<8x128xf32>, i32 -> vector<8x128xf32>
    %380 = math.tanh %379 : vector<8x128xf32>
    %c80_i32_171 = arith.constant 80 : i32
    %381 = tpu.dynamic_rotate %363 by %c80_i32_171 dim 1 : vector<8x128xf32>, i32 -> vector<8x128xf32>
    %cst_172 = arith.constant 5.000000e-01 : f32
    %382 = vector.broadcast %cst_172 : f32 to vector<8x128xf32>
    %383 = arith.mulf %382, %381 : vector<8x128xf32>
    %384 = math.tanh %383 : vector<8x128xf32>
    %cst_173 = arith.constant 5.000000e-01 : f32
    %385 = vector.broadcast %cst_173 : f32 to vector<8x128xf32>
    %386 = arith.mulf %385, %384 : vector<8x128xf32>
    %cst_174 = arith.constant 5.000000e-01 : f32
    %387 = vector.broadcast %cst_174 : f32 to vector<8x128xf32>
    %388 = arith.addf %386, %387 : vector<8x128xf32>
    %389 = arith.mulf %378, %31 : vector<8x128xf32>
    %390 = arith.mulf %370, %380 : vector<8x128xf32>
    %391 = arith.addf %389, %390 : vector<8x128xf32>
    %392 = math.tanh %391 : vector<8x128xf32>
    %393 = arith.mulf %388, %392 : vector<8x128xf32>
    %cst_175 = arith.constant 0.000000e+00 : f32
    %394 = vector.broadcast %cst_175 : f32 to vector<8x128xf32>
    %395 = arith.select %23, %393, %394 : vector<8x128xi1>, vector<8x128xf32>
    %c0_176 = arith.constant 0 : index
    %c0_177 = arith.constant 0 : index
    %396 = vector.load %arg13[%c0_176, %c0_177] : memref<64x128xf32, #tpu.memory_space<vmem>>, vector<8x128xf32>
    tpu.vector_store %arg13[%c0_176, %c0_177], %395 {strides = array<i32>} : memref<64x128xf32, #tpu.memory_space<vmem>>, vector<8x128xf32>,
    %c32 = arith.constant 32 : index
    %c0_178 = arith.constant 0 : index
    %397 = vector.load %arg1[%c32, %c0_178] : memref<64x128xf32, #tpu.memory_space<vmem>>, vector<8x128xf32>
    %398 = tpu.concatenate %397, %287 in 1 : vector<8x128xf32>, vector<8x128xf32> -> vector<8x256xf32>
    %c0_179 = arith.constant 0 : index
    %c0_180 = arith.constant 0 : index
    %399 = vector.load %arg2[%c0_179, %c0_180] : memref<256x128xf32, #tpu.memory_space<vmem>>, vector<256x128xf32>
    %cst_181 = arith.constant dense<0.000000e+00> : vector<8x128xf32>
    %400 = tpu.matmul %398, %399, %cst_181 {dimension_numbers = #tpu.dot_dimension_numbers<[1], [0], [0], [1], [0, 0, 1, 1], [], []>} : vector<8x256xf32>, vector<256x128xf32>, vector<8x128xf32> -> vector<8x128xf32>
    %401 = arith.addf %400, %2 : vector<8x128xf32>
    %cst_182 = arith.constant 5.000000e-01 : f32
    %402 = vector.broadcast %cst_182 : f32 to vector<8x128xf32>
    %403 = arith.mulf %402, %401 : vector<8x128xf32>
    %404 = math.tanh %403 : vector<8x128xf32>
    %cst_183 = arith.constant 5.000000e-01 : f32
    %405 = vector.broadcast %cst_183 : f32 to vector<8x128xf32>
    %406 = arith.mulf %405, %404 : vector<8x128xf32>
    %cst_184 = arith.constant 5.000000e-01 : f32
    %407 = vector.broadcast %cst_184 : f32 to vector<8x128xf32>
    %408 = arith.addf %406, %407 : vector<8x128xf32>
    %c112_i32_185 = arith.constant 112 : i32
    %409 = tpu.dynamic_rotate %401 by %c112_i32_185 dim 1 : vector<8x128xf32>, i32 -> vector<8x128xf32>
    %cst_186 = arith.constant 5.000000e-01 : f32
    %410 = vector.broadcast %cst_186 : f32 to vector<8x128xf32>
    %411 = arith.mulf %410, %409 : vector<8x128xf32>
    %412 = math.tanh %411 : vector<8x128xf32>
    %cst_187 = arith.constant 5.000000e-01 : f32
    %413 = vector.broadcast %cst_187 : f32 to vector<8x128xf32>
    %414 = arith.mulf %413, %412 : vector<8x128xf32>
    %cst_188 = arith.constant 5.000000e-01 : f32
    %415 = vector.broadcast %cst_188 : f32 to vector<8x128xf32>
    %416 = arith.addf %414, %415 : vector<8x128xf32>
    %c96_i32_189 = arith.constant 96 : i32
    %417 = tpu.dynamic_rotate %401 by %c96_i32_189 dim 1 : vector<8x128xf32>, i32 -> vector<8x128xf32>
    %418 = math.tanh %417 : vector<8x128xf32>
    %c80_i32_190 = arith.constant 80 : i32
    %419 = tpu.dynamic_rotate %401 by %c80_i32_190 dim 1 : vector<8x128xf32>, i32 -> vector<8x128xf32>
    %cst_191 = arith.constant 5.000000e-01 : f32
    %420 = vector.broadcast %cst_191 : f32 to vector<8x128xf32>
    %421 = arith.mulf %420, %419 : vector<8x128xf32>
    %422 = math.tanh %421 : vector<8x128xf32>
    %cst_192 = arith.constant 5.000000e-01 : f32
    %423 = vector.broadcast %cst_192 : f32 to vector<8x128xf32>
    %424 = arith.mulf %423, %422 : vector<8x128xf32>
    %cst_193 = arith.constant 5.000000e-01 : f32
    %425 = vector.broadcast %cst_193 : f32 to vector<8x128xf32>
    %426 = arith.addf %424, %425 : vector<8x128xf32>
    %427 = arith.mulf %416, %283 : vector<8x128xf32>
    %428 = arith.mulf %408, %418 : vector<8x128xf32>
    %429 = arith.addf %427, %428 : vector<8x128xf32>
    %430 = math.tanh %429 : vector<8x128xf32>
    %431 = arith.mulf %426, %430 : vector<8x128xf32>
    %cst_194 = arith.constant 0.000000e+00 : f32
    %432 = vector.broadcast %cst_194 : f32 to vector<8x128xf32>
    %433 = arith.select %14, %431, %432 : vector<8x128xi1>, vector<8x128xf32>
    %434 = tpu.concatenate %287, %323 in 1 : vector<8x128xf32>, vector<8x128xf32> -> vector<8x256xf32>
    %c0_195 = arith.constant 0 : index
    %c0_196 = arith.constant 0 : index
    %435 = vector.load %arg4[%c0_195, %c0_196] : memref<256x128xf32, #tpu.memory_space<vmem>>, vector<256x128xf32>
    %cst_197 = arith.constant dense<0.000000e+00> : vector<8x128xf32>
    %436 = tpu.matmul %434, %435, %cst_197 {dimension_numbers = #tpu.dot_dimension_numbers<[1], [0], [0], [1], [0, 0, 1, 1], [], []>} : vector<8x256xf32>, vector<256x128xf32>, vector<8x128xf32> -> vector<8x128xf32>
    %437 = arith.addf %436, %5 : vector<8x128xf32>
    %cst_198 = arith.constant 5.000000e-01 : f32
    %438 = vector.broadcast %cst_198 : f32 to vector<8x128xf32>
    %439 = arith.mulf %438, %437 : vector<8x128xf32>
    %440 = math.tanh %439 : vector<8x128xf32>
    %cst_199 = arith.constant 5.000000e-01 : f32
    %441 = vector.broadcast %cst_199 : f32 to vector<8x128xf32>
    %442 = arith.mulf %441, %440 : vector<8x128xf32>
    %cst_200 = arith.constant 5.000000e-01 : f32
    %443 = vector.broadcast %cst_200 : f32 to vector<8x128xf32>
    %444 = arith.addf %442, %443 : vector<8x128xf32>
    %c120_i32_201 = arith.constant 120 : i32
    %445 = tpu.dynamic_rotate %437 by %c120_i32_201 dim 1 : vector<8x128xf32>, i32 -> vector<8x128xf32>
    %cst_202 = arith.constant 5.000000e-01 : f32
    %446 = vector.broadcast %cst_202 : f32 to vector<8x128xf32>
    %447 = arith.mulf %446, %445 : vector<8x128xf32>
    %448 = math.tanh %447 : vector<8x128xf32>
    %cst_203 = arith.constant 5.000000e-01 : f32
    %449 = vector.broadcast %cst_203 : f32 to vector<8x128xf32>
    %450 = arith.mulf %449, %448 : vector<8x128xf32>
    %cst_204 = arith.constant 5.000000e-01 : f32
    %451 = vector.broadcast %cst_204 : f32 to vector<8x128xf32>
    %452 = arith.addf %450, %451 : vector<8x128xf32>
    %c112_i32_205 = arith.constant 112 : i32
    %453 = tpu.dynamic_rotate %437 by %c112_i32_205 dim 1 : vector<8x128xf32>, i32 -> vector<8x128xf32>
    %454 = math.tanh %453 : vector<8x128xf32>
    %c104_i32_206 = arith.constant 104 : i32
    %455 = tpu.dynamic_rotate %437 by %c104_i32_206 dim 1 : vector<8x128xf32>, i32 -> vector<8x128xf32>
    %cst_207 = arith.constant 5.000000e-01 : f32
    %456 = vector.broadcast %cst_207 : f32 to vector<8x128xf32>
    %457 = arith.mulf %456, %455 : vector<8x128xf32>
    %458 = math.tanh %457 : vector<8x128xf32>
    %cst_208 = arith.constant 5.000000e-01 : f32
    %459 = vector.broadcast %cst_208 : f32 to vector<8x128xf32>
    %460 = arith.mulf %459, %458 : vector<8x128xf32>
    %cst_209 = arith.constant 5.000000e-01 : f32
    %461 = vector.broadcast %cst_209 : f32 to vector<8x128xf32>
    %462 = arith.addf %460, %461 : vector<8x128xf32>
    %463 = arith.mulf %452, %319 : vector<8x128xf32>
    %464 = arith.mulf %444, %454 : vector<8x128xf32>
    %465 = arith.addf %463, %464 : vector<8x128xf32>
    %466 = math.tanh %465 : vector<8x128xf32>
    %467 = arith.mulf %462, %466 : vector<8x128xf32>
    %cst_210 = arith.constant 0.000000e+00 : f32
    %468 = vector.broadcast %cst_210 : f32 to vector<8x128xf32>
    %469 = arith.select %17, %467, %468 : vector<8x128xi1>, vector<8x128xf32>
    %470 = tpu.concatenate %323, %359 in 1 : vector<8x128xf32>, vector<8x128xf32> -> vector<8x256xf32>
    %c0_211 = arith.constant 0 : index
    %c0_212 = arith.constant 0 : index
    %471 = vector.load %arg6[%c0_211, %c0_212] : memref<256x128xf32, #tpu.memory_space<vmem>>, vector<256x128xf32>
    %cst_213 = arith.constant dense<0.000000e+00> : vector<8x128xf32>
    %472 = tpu.matmul %470, %471, %cst_213 {dimension_numbers = #tpu.dot_dimension_numbers<[1], [0], [0], [1], [0, 0, 1, 1], [], []>} : vector<8x256xf32>, vector<256x128xf32>, vector<8x128xf32> -> vector<8x128xf32>
    %473 = arith.addf %472, %8 : vector<8x128xf32>
    %cst_214 = arith.constant 5.000000e-01 : f32
    %474 = vector.broadcast %cst_214 : f32 to vector<8x128xf32>
    %475 = arith.mulf %474, %473 : vector<8x128xf32>
    %476 = math.tanh %475 : vector<8x128xf32>
    %cst_215 = arith.constant 5.000000e-01 : f32
    %477 = vector.broadcast %cst_215 : f32 to vector<8x128xf32>
    %478 = arith.mulf %477, %476 : vector<8x128xf32>
    %cst_216 = arith.constant 5.000000e-01 : f32
    %479 = vector.broadcast %cst_216 : f32 to vector<8x128xf32>
    %480 = arith.addf %478, %479 : vector<8x128xf32>
    %c120_i32_217 = arith.constant 120 : i32
    %481 = tpu.dynamic_rotate %473 by %c120_i32_217 dim 1 : vector<8x128xf32>, i32 -> vector<8x128xf32>
    %cst_218 = arith.constant 5.000000e-01 : f32
    %482 = vector.broadcast %cst_218 : f32 to vector<8x128xf32>
    %483 = arith.mulf %482, %481 : vector<8x128xf32>
    %484 = math.tanh %483 : vector<8x128xf32>
    %cst_219 = arith.constant 5.000000e-01 : f32
    %485 = vector.broadcast %cst_219 : f32 to vector<8x128xf32>
    %486 = arith.mulf %485, %484 : vector<8x128xf32>
    %cst_220 = arith.constant 5.000000e-01 : f32
    %487 = vector.broadcast %cst_220 : f32 to vector<8x128xf32>
    %488 = arith.addf %486, %487 : vector<8x128xf32>
    %c112_i32_221 = arith.constant 112 : i32
    %489 = tpu.dynamic_rotate %473 by %c112_i32_221 dim 1 : vector<8x128xf32>, i32 -> vector<8x128xf32>
    %490 = math.tanh %489 : vector<8x128xf32>
    %c104_i32_222 = arith.constant 104 : i32
    %491 = tpu.dynamic_rotate %473 by %c104_i32_222 dim 1 : vector<8x128xf32>, i32 -> vector<8x128xf32>
    %cst_223 = arith.constant 5.000000e-01 : f32
    %492 = vector.broadcast %cst_223 : f32 to vector<8x128xf32>
    %493 = arith.mulf %492, %491 : vector<8x128xf32>
    %494 = math.tanh %493 : vector<8x128xf32>
    %cst_224 = arith.constant 5.000000e-01 : f32
    %495 = vector.broadcast %cst_224 : f32 to vector<8x128xf32>
    %496 = arith.mulf %495, %494 : vector<8x128xf32>
    %cst_225 = arith.constant 5.000000e-01 : f32
    %497 = vector.broadcast %cst_225 : f32 to vector<8x128xf32>
    %498 = arith.addf %496, %497 : vector<8x128xf32>
    %499 = arith.mulf %488, %355 : vector<8x128xf32>
    %500 = arith.mulf %480, %490 : vector<8x128xf32>
    %501 = arith.addf %499, %500 : vector<8x128xf32>
    %502 = math.tanh %501 : vector<8x128xf32>
    %503 = arith.mulf %498, %502 : vector<8x128xf32>
    %cst_226 = arith.constant 0.000000e+00 : f32
    %504 = vector.broadcast %cst_226 : f32 to vector<8x128xf32>
    %505 = arith.select %20, %503, %504 : vector<8x128xi1>, vector<8x128xf32>
    %506 = tpu.concatenate %359, %395 in 1 : vector<8x128xf32>, vector<8x128xf32> -> vector<8x256xf32>
    %c0_227 = arith.constant 0 : index
    %c0_228 = arith.constant 0 : index
    %507 = vector.load %arg8[%c0_227, %c0_228] : memref<256x128xf32, #tpu.memory_space<vmem>>, vector<256x128xf32>
    %cst_229 = arith.constant dense<0.000000e+00> : vector<8x128xf32>
    %508 = tpu.matmul %506, %507, %cst_229 {dimension_numbers = #tpu.dot_dimension_numbers<[1], [0], [0], [1], [0, 0, 1, 1], [], []>} : vector<8x256xf32>, vector<256x128xf32>, vector<8x128xf32> -> vector<8x128xf32>
    %509 = arith.addf %508, %11 : vector<8x128xf32>
    %cst_230 = arith.constant 5.000000e-01 : f32
    %510 = vector.broadcast %cst_230 : f32 to vector<8x128xf32>
    %511 = arith.mulf %510, %509 : vector<8x128xf32>
    %512 = math.tanh %511 : vector<8x128xf32>
    %cst_231 = arith.constant 5.000000e-01 : f32
    %513 = vector.broadcast %cst_231 : f32 to vector<8x128xf32>
    %514 = arith.mulf %513, %512 : vector<8x128xf32>
    %cst_232 = arith.constant 5.000000e-01 : f32
    %515 = vector.broadcast %cst_232 : f32 to vector<8x128xf32>
    %516 = arith.addf %514, %515 : vector<8x128xf32>
    %c112_i32_233 = arith.constant 112 : i32
    %517 = tpu.dynamic_rotate %509 by %c112_i32_233 dim 1 : vector<8x128xf32>, i32 -> vector<8x128xf32>
    %cst_234 = arith.constant 5.000000e-01 : f32
    %518 = vector.broadcast %cst_234 : f32 to vector<8x128xf32>
    %519 = arith.mulf %518, %517 : vector<8x128xf32>
    %520 = math.tanh %519 : vector<8x128xf32>
    %cst_235 = arith.constant 5.000000e-01 : f32
    %521 = vector.broadcast %cst_235 : f32 to vector<8x128xf32>
    %522 = arith.mulf %521, %520 : vector<8x128xf32>
    %cst_236 = arith.constant 5.000000e-01 : f32
    %523 = vector.broadcast %cst_236 : f32 to vector<8x128xf32>
    %524 = arith.addf %522, %523 : vector<8x128xf32>
    %c96_i32_237 = arith.constant 96 : i32
    %525 = tpu.dynamic_rotate %509 by %c96_i32_237 dim 1 : vector<8x128xf32>, i32 -> vector<8x128xf32>
    %526 = math.tanh %525 : vector<8x128xf32>
    %c80_i32_238 = arith.constant 80 : i32
    %527 = tpu.dynamic_rotate %509 by %c80_i32_238 dim 1 : vector<8x128xf32>, i32 -> vector<8x128xf32>
    %cst_239 = arith.constant 5.000000e-01 : f32
    %528 = vector.broadcast %cst_239 : f32 to vector<8x128xf32>
    %529 = arith.mulf %528, %527 : vector<8x128xf32>
    %530 = math.tanh %529 : vector<8x128xf32>
    %cst_240 = arith.constant 5.000000e-01 : f32
    %531 = vector.broadcast %cst_240 : f32 to vector<8x128xf32>
    %532 = arith.mulf %531, %530 : vector<8x128xf32>
    %cst_241 = arith.constant 5.000000e-01 : f32
    %533 = vector.broadcast %cst_241 : f32 to vector<8x128xf32>
    %534 = arith.addf %532, %533 : vector<8x128xf32>
    %535 = arith.mulf %524, %391 : vector<8x128xf32>
    %536 = arith.mulf %516, %526 : vector<8x128xf32>
    %537 = arith.addf %535, %536 : vector<8x128xf32>
    %538 = math.tanh %537 : vector<8x128xf32>
    %539 = arith.mulf %534, %538 : vector<8x128xf32>
    %cst_242 = arith.constant 0.000000e+00 : f32
    %540 = vector.broadcast %cst_242 : f32 to vector<8x128xf32>
    %541 = arith.select %23, %539, %540 : vector<8x128xi1>, vector<8x128xf32>
    %c8_243 = arith.constant 8 : index
    %c0_244 = arith.constant 0 : index
    %542 = vector.load %arg13[%c8_243, %c0_244] : memref<64x128xf32, #tpu.memory_space<vmem>>, vector<8x128xf32>
    tpu.vector_store %arg13[%c8_243, %c0_244], %541 {strides = array<i32>} : memref<64x128xf32, #tpu.memory_space<vmem>>, vector<8x128xf32>,
    %c40 = arith.constant 40 : index
    %c0_245 = arith.constant 0 : index
    %543 = vector.load %arg1[%c40, %c0_245] : memref<64x128xf32, #tpu.memory_space<vmem>>, vector<8x128xf32>
    %544 = tpu.concatenate %543, %433 in 1 : vector<8x128xf32>, vector<8x128xf32> -> vector<8x256xf32>
    %c0_246 = arith.constant 0 : index
    %c0_247 = arith.constant 0 : index
    %545 = vector.load %arg2[%c0_246, %c0_247] : memref<256x128xf32, #tpu.memory_space<vmem>>, vector<256x128xf32>
    %cst_248 = arith.constant dense<0.000000e+00> : vector<8x128xf32>
    %546 = tpu.matmul %544, %545, %cst_248 {dimension_numbers = #tpu.dot_dimension_numbers<[1], [0], [0], [1], [0, 0, 1, 1], [], []>} : vector<8x256xf32>, vector<256x128xf32>, vector<8x128xf32> -> vector<8x128xf32>
    %547 = arith.addf %546, %2 : vector<8x128xf32>
    %cst_249 = arith.constant 5.000000e-01 : f32
    %548 = vector.broadcast %cst_249 : f32 to vector<8x128xf32>
    %549 = arith.mulf %548, %547 : vector<8x128xf32>
    %550 = math.tanh %549 : vector<8x128xf32>
    %cst_250 = arith.constant 5.000000e-01 : f32
    %551 = vector.broadcast %cst_250 : f32 to vector<8x128xf32>
    %552 = arith.mulf %551, %550 : vector<8x128xf32>
    %cst_251 = arith.constant 5.000000e-01 : f32
    %553 = vector.broadcast %cst_251 : f32 to vector<8x128xf32>
    %554 = arith.addf %552, %553 : vector<8x128xf32>
    %c112_i32_252 = arith.constant 112 : i32
    %555 = tpu.dynamic_rotate %547 by %c112_i32_252 dim 1 : vector<8x128xf32>, i32 -> vector<8x128xf32>
    %cst_253 = arith.constant 5.000000e-01 : f32
    %556 = vector.broadcast %cst_253 : f32 to vector<8x128xf32>
    %557 = arith.mulf %556, %555 : vector<8x128xf32>
    %558 = math.tanh %557 : vector<8x128xf32>
    %cst_254 = arith.constant 5.000000e-01 : f32
    %559 = vector.broadcast %cst_254 : f32 to vector<8x128xf32>
    %560 = arith.mulf %559, %558 : vector<8x128xf32>
    %cst_255 = arith.constant 5.000000e-01 : f32
    %561 = vector.broadcast %cst_255 : f32 to vector<8x128xf32>
    %562 = arith.addf %560, %561 : vector<8x128xf32>
    %c96_i32_256 = arith.constant 96 : i32
    %563 = tpu.dynamic_rotate %547 by %c96_i32_256 dim 1 : vector<8x128xf32>, i32 -> vector<8x128xf32>
    %564 = math.tanh %563 : vector<8x128xf32>
    %c80_i32_257 = arith.constant 80 : i32
    %565 = tpu.dynamic_rotate %547 by %c80_i32_257 dim 1 : vector<8x128xf32>, i32 -> vector<8x128xf32>
    %cst_258 = arith.constant 5.000000e-01 : f32
    %566 = vector.broadcast %cst_258 : f32 to vector<8x128xf32>
    %567 = arith.mulf %566, %565 : vector<8x128xf32>
    %568 = math.tanh %567 : vector<8x128xf32>
    %cst_259 = arith.constant 5.000000e-01 : f32
    %569 = vector.broadcast %cst_259 : f32 to vector<8x128xf32>
    %570 = arith.mulf %569, %568 : vector<8x128xf32>
    %cst_260 = arith.constant 5.000000e-01 : f32
    %571 = vector.broadcast %cst_260 : f32 to vector<8x128xf32>
    %572 = arith.addf %570, %571 : vector<8x128xf32>
    %573 = arith.mulf %562, %429 : vector<8x128xf32>
    %574 = arith.mulf %554, %564 : vector<8x128xf32>
    %575 = arith.addf %573, %574 : vector<8x128xf32>
    %576 = math.tanh %575 : vector<8x128xf32>
    %577 = arith.mulf %572, %576 : vector<8x128xf32>
    %cst_261 = arith.constant 0.000000e+00 : f32
    %578 = vector.broadcast %cst_261 : f32 to vector<8x128xf32>
    %579 = arith.select %14, %577, %578 : vector<8x128xi1>, vector<8x128xf32>
    %580 = tpu.concatenate %433, %469 in 1 : vector<8x128xf32>, vector<8x128xf32> -> vector<8x256xf32>
    %c0_262 = arith.constant 0 : index
    %c0_263 = arith.constant 0 : index
    %581 = vector.load %arg4[%c0_262, %c0_263] : memref<256x128xf32, #tpu.memory_space<vmem>>, vector<256x128xf32>
    %cst_264 = arith.constant dense<0.000000e+00> : vector<8x128xf32>
    %582 = tpu.matmul %580, %581, %cst_264 {dimension_numbers = #tpu.dot_dimension_numbers<[1], [0], [0], [1], [0, 0, 1, 1], [], []>} : vector<8x256xf32>, vector<256x128xf32>, vector<8x128xf32> -> vector<8x128xf32>
    %583 = arith.addf %582, %5 : vector<8x128xf32>
    %cst_265 = arith.constant 5.000000e-01 : f32
    %584 = vector.broadcast %cst_265 : f32 to vector<8x128xf32>
    %585 = arith.mulf %584, %583 : vector<8x128xf32>
    %586 = math.tanh %585 : vector<8x128xf32>
    %cst_266 = arith.constant 5.000000e-01 : f32
    %587 = vector.broadcast %cst_266 : f32 to vector<8x128xf32>
    %588 = arith.mulf %587, %586 : vector<8x128xf32>
    %cst_267 = arith.constant 5.000000e-01 : f32
    %589 = vector.broadcast %cst_267 : f32 to vector<8x128xf32>
    %590 = arith.addf %588, %589 : vector<8x128xf32>
    %c120_i32_268 = arith.constant 120 : i32
    %591 = tpu.dynamic_rotate %583 by %c120_i32_268 dim 1 : vector<8x128xf32>, i32 -> vector<8x128xf32>
    %cst_269 = arith.constant 5.000000e-01 : f32
    %592 = vector.broadcast %cst_269 : f32 to vector<8x128xf32>
    %593 = arith.mulf %592, %591 : vector<8x128xf32>
    %594 = math.tanh %593 : vector<8x128xf32>
    %cst_270 = arith.constant 5.000000e-01 : f32
    %595 = vector.broadcast %cst_270 : f32 to vector<8x128xf32>
    %596 = arith.mulf %595, %594 : vector<8x128xf32>
    %cst_271 = arith.constant 5.000000e-01 : f32
    %597 = vector.broadcast %cst_271 : f32 to vector<8x128xf32>
    %598 = arith.addf %596, %597 : vector<8x128xf32>
    %c112_i32_272 = arith.constant 112 : i32
    %599 = tpu.dynamic_rotate %583 by %c112_i32_272 dim 1 : vector<8x128xf32>, i32 -> vector<8x128xf32>
    %600 = math.tanh %599 : vector<8x128xf32>
    %c104_i32_273 = arith.constant 104 : i32
    %601 = tpu.dynamic_rotate %583 by %c104_i32_273 dim 1 : vector<8x128xf32>, i32 -> vector<8x128xf32>
    %cst_274 = arith.constant 5.000000e-01 : f32
    %602 = vector.broadcast %cst_274 : f32 to vector<8x128xf32>
    %603 = arith.mulf %602, %601 : vector<8x128xf32>
    %604 = math.tanh %603 : vector<8x128xf32>
    %cst_275 = arith.constant 5.000000e-01 : f32
    %605 = vector.broadcast %cst_275 : f32 to vector<8x128xf32>
    %606 = arith.mulf %605, %604 : vector<8x128xf32>
    %cst_276 = arith.constant 5.000000e-01 : f32
    %607 = vector.broadcast %cst_276 : f32 to vector<8x128xf32>
    %608 = arith.addf %606, %607 : vector<8x128xf32>
    %609 = arith.mulf %598, %465 : vector<8x128xf32>
    %610 = arith.mulf %590, %600 : vector<8x128xf32>
    %611 = arith.addf %609, %610 : vector<8x128xf32>
    %612 = math.tanh %611 : vector<8x128xf32>
    %613 = arith.mulf %608, %612 : vector<8x128xf32>
    %cst_277 = arith.constant 0.000000e+00 : f32
    %614 = vector.broadcast %cst_277 : f32 to vector<8x128xf32>
    %615 = arith.select %17, %613, %614 : vector<8x128xi1>, vector<8x128xf32>
    %616 = tpu.concatenate %469, %505 in 1 : vector<8x128xf32>, vector<8x128xf32> -> vector<8x256xf32>
    %c0_278 = arith.constant 0 : index
    %c0_279 = arith.constant 0 : index
    %617 = vector.load %arg6[%c0_278, %c0_279] : memref<256x128xf32, #tpu.memory_space<vmem>>, vector<256x128xf32>
    %cst_280 = arith.constant dense<0.000000e+00> : vector<8x128xf32>
    %618 = tpu.matmul %616, %617, %cst_280 {dimension_numbers = #tpu.dot_dimension_numbers<[1], [0], [0], [1], [0, 0, 1, 1], [], []>} : vector<8x256xf32>, vector<256x128xf32>, vector<8x128xf32> -> vector<8x128xf32>
    %619 = arith.addf %618, %8 : vector<8x128xf32>
    %cst_281 = arith.constant 5.000000e-01 : f32
    %620 = vector.broadcast %cst_281 : f32 to vector<8x128xf32>
    %621 = arith.mulf %620, %619 : vector<8x128xf32>
    %622 = math.tanh %621 : vector<8x128xf32>
    %cst_282 = arith.constant 5.000000e-01 : f32
    %623 = vector.broadcast %cst_282 : f32 to vector<8x128xf32>
    %624 = arith.mulf %623, %622 : vector<8x128xf32>
    %cst_283 = arith.constant 5.000000e-01 : f32
    %625 = vector.broadcast %cst_283 : f32 to vector<8x128xf32>
    %626 = arith.addf %624, %625 : vector<8x128xf32>
    %c120_i32_284 = arith.constant 120 : i32
    %627 = tpu.dynamic_rotate %619 by %c120_i32_284 dim 1 : vector<8x128xf32>, i32 -> vector<8x128xf32>
    %cst_285 = arith.constant 5.000000e-01 : f32
    %628 = vector.broadcast %cst_285 : f32 to vector<8x128xf32>
    %629 = arith.mulf %628, %627 : vector<8x128xf32>
    %630 = math.tanh %629 : vector<8x128xf32>
    %cst_286 = arith.constant 5.000000e-01 : f32
    %631 = vector.broadcast %cst_286 : f32 to vector<8x128xf32>
    %632 = arith.mulf %631, %630 : vector<8x128xf32>
    %cst_287 = arith.constant 5.000000e-01 : f32
    %633 = vector.broadcast %cst_287 : f32 to vector<8x128xf32>
    %634 = arith.addf %632, %633 : vector<8x128xf32>
    %c112_i32_288 = arith.constant 112 : i32
    %635 = tpu.dynamic_rotate %619 by %c112_i32_288 dim 1 : vector<8x128xf32>, i32 -> vector<8x128xf32>
    %636 = math.tanh %635 : vector<8x128xf32>
    %c104_i32_289 = arith.constant 104 : i32
    %637 = tpu.dynamic_rotate %619 by %c104_i32_289 dim 1 : vector<8x128xf32>, i32 -> vector<8x128xf32>
    %cst_290 = arith.constant 5.000000e-01 : f32
    %638 = vector.broadcast %cst_290 : f32 to vector<8x128xf32>
    %639 = arith.mulf %638, %637 : vector<8x128xf32>
    %640 = math.tanh %639 : vector<8x128xf32>
    %cst_291 = arith.constant 5.000000e-01 : f32
    %641 = vector.broadcast %cst_291 : f32 to vector<8x128xf32>
    %642 = arith.mulf %641, %640 : vector<8x128xf32>
    %cst_292 = arith.constant 5.000000e-01 : f32
    %643 = vector.broadcast %cst_292 : f32 to vector<8x128xf32>
    %644 = arith.addf %642, %643 : vector<8x128xf32>
    %645 = arith.mulf %634, %501 : vector<8x128xf32>
    %646 = arith.mulf %626, %636 : vector<8x128xf32>
    %647 = arith.addf %645, %646 : vector<8x128xf32>
    %648 = math.tanh %647 : vector<8x128xf32>
    %649 = arith.mulf %644, %648 : vector<8x128xf32>
    %cst_293 = arith.constant 0.000000e+00 : f32
    %650 = vector.broadcast %cst_293 : f32 to vector<8x128xf32>
    %651 = arith.select %20, %649, %650 : vector<8x128xi1>, vector<8x128xf32>
    %652 = tpu.concatenate %505, %541 in 1 : vector<8x128xf32>, vector<8x128xf32> -> vector<8x256xf32>
    %c0_294 = arith.constant 0 : index
    %c0_295 = arith.constant 0 : index
    %653 = vector.load %arg8[%c0_294, %c0_295] : memref<256x128xf32, #tpu.memory_space<vmem>>, vector<256x128xf32>
    %cst_296 = arith.constant dense<0.000000e+00> : vector<8x128xf32>
    %654 = tpu.matmul %652, %653, %cst_296 {dimension_numbers = #tpu.dot_dimension_numbers<[1], [0], [0], [1], [0, 0, 1, 1], [], []>} : vector<8x256xf32>, vector<256x128xf32>, vector<8x128xf32> -> vector<8x128xf32>
    %655 = arith.addf %654, %11 : vector<8x128xf32>
    %cst_297 = arith.constant 5.000000e-01 : f32
    %656 = vector.broadcast %cst_297 : f32 to vector<8x128xf32>
    %657 = arith.mulf %656, %655 : vector<8x128xf32>
    %658 = math.tanh %657 : vector<8x128xf32>
    %cst_298 = arith.constant 5.000000e-01 : f32
    %659 = vector.broadcast %cst_298 : f32 to vector<8x128xf32>
    %660 = arith.mulf %659, %658 : vector<8x128xf32>
    %cst_299 = arith.constant 5.000000e-01 : f32
    %661 = vector.broadcast %cst_299 : f32 to vector<8x128xf32>
    %662 = arith.addf %660, %661 : vector<8x128xf32>
    %c112_i32_300 = arith.constant 112 : i32
    %663 = tpu.dynamic_rotate %655 by %c112_i32_300 dim 1 : vector<8x128xf32>, i32 -> vector<8x128xf32>
    %cst_301 = arith.constant 5.000000e-01 : f32
    %664 = vector.broadcast %cst_301 : f32 to vector<8x128xf32>
    %665 = arith.mulf %664, %663 : vector<8x128xf32>
    %666 = math.tanh %665 : vector<8x128xf32>
    %cst_302 = arith.constant 5.000000e-01 : f32
    %667 = vector.broadcast %cst_302 : f32 to vector<8x128xf32>
    %668 = arith.mulf %667, %666 : vector<8x128xf32>
    %cst_303 = arith.constant 5.000000e-01 : f32
    %669 = vector.broadcast %cst_303 : f32 to vector<8x128xf32>
    %670 = arith.addf %668, %669 : vector<8x128xf32>
    %c96_i32_304 = arith.constant 96 : i32
    %671 = tpu.dynamic_rotate %655 by %c96_i32_304 dim 1 : vector<8x128xf32>, i32 -> vector<8x128xf32>
    %672 = math.tanh %671 : vector<8x128xf32>
    %c80_i32_305 = arith.constant 80 : i32
    %673 = tpu.dynamic_rotate %655 by %c80_i32_305 dim 1 : vector<8x128xf32>, i32 -> vector<8x128xf32>
    %cst_306 = arith.constant 5.000000e-01 : f32
    %674 = vector.broadcast %cst_306 : f32 to vector<8x128xf32>
    %675 = arith.mulf %674, %673 : vector<8x128xf32>
    %676 = math.tanh %675 : vector<8x128xf32>
    %cst_307 = arith.constant 5.000000e-01 : f32
    %677 = vector.broadcast %cst_307 : f32 to vector<8x128xf32>
    %678 = arith.mulf %677, %676 : vector<8x128xf32>
    %cst_308 = arith.constant 5.000000e-01 : f32
    %679 = vector.broadcast %cst_308 : f32 to vector<8x128xf32>
    %680 = arith.addf %678, %679 : vector<8x128xf32>
    %681 = arith.mulf %670, %537 : vector<8x128xf32>
    %682 = arith.mulf %662, %672 : vector<8x128xf32>
    %683 = arith.addf %681, %682 : vector<8x128xf32>
    %684 = math.tanh %683 : vector<8x128xf32>
    %685 = arith.mulf %680, %684 : vector<8x128xf32>
    %cst_309 = arith.constant 0.000000e+00 : f32
    %686 = vector.broadcast %cst_309 : f32 to vector<8x128xf32>
    %687 = arith.select %23, %685, %686 : vector<8x128xi1>, vector<8x128xf32>
    %c16_310 = arith.constant 16 : index
    %c0_311 = arith.constant 0 : index
    %688 = vector.load %arg13[%c16_310, %c0_311] : memref<64x128xf32, #tpu.memory_space<vmem>>, vector<8x128xf32>
    tpu.vector_store %arg13[%c16_310, %c0_311], %687 {strides = array<i32>} : memref<64x128xf32, #tpu.memory_space<vmem>>, vector<8x128xf32>,
    %c48 = arith.constant 48 : index
    %c0_312 = arith.constant 0 : index
    %689 = vector.load %arg1[%c48, %c0_312] : memref<64x128xf32, #tpu.memory_space<vmem>>, vector<8x128xf32>
    %690 = tpu.concatenate %689, %579 in 1 : vector<8x128xf32>, vector<8x128xf32> -> vector<8x256xf32>
    %c0_313 = arith.constant 0 : index
    %c0_314 = arith.constant 0 : index
    %691 = vector.load %arg2[%c0_313, %c0_314] : memref<256x128xf32, #tpu.memory_space<vmem>>, vector<256x128xf32>
    %cst_315 = arith.constant dense<0.000000e+00> : vector<8x128xf32>
    %692 = tpu.matmul %690, %691, %cst_315 {dimension_numbers = #tpu.dot_dimension_numbers<[1], [0], [0], [1], [0, 0, 1, 1], [], []>} : vector<8x256xf32>, vector<256x128xf32>, vector<8x128xf32> -> vector<8x128xf32>
    %693 = arith.addf %692, %2 : vector<8x128xf32>
    %cst_316 = arith.constant 5.000000e-01 : f32
    %694 = vector.broadcast %cst_316 : f32 to vector<8x128xf32>
    %695 = arith.mulf %694, %693 : vector<8x128xf32>
    %696 = math.tanh %695 : vector<8x128xf32>
    %cst_317 = arith.constant 5.000000e-01 : f32
    %697 = vector.broadcast %cst_317 : f32 to vector<8x128xf32>
    %698 = arith.mulf %697, %696 : vector<8x128xf32>
    %cst_318 = arith.constant 5.000000e-01 : f32
    %699 = vector.broadcast %cst_318 : f32 to vector<8x128xf32>
    %700 = arith.addf %698, %699 : vector<8x128xf32>
    %c112_i32_319 = arith.constant 112 : i32
    %701 = tpu.dynamic_rotate %693 by %c112_i32_319 dim 1 : vector<8x128xf32>, i32 -> vector<8x128xf32>
    %cst_320 = arith.constant 5.000000e-01 : f32
    %702 = vector.broadcast %cst_320 : f32 to vector<8x128xf32>
    %703 = arith.mulf %702, %701 : vector<8x128xf32>
    %704 = math.tanh %703 : vector<8x128xf32>
    %cst_321 = arith.constant 5.000000e-01 : f32
    %705 = vector.broadcast %cst_321 : f32 to vector<8x128xf32>
    %706 = arith.mulf %705, %704 : vector<8x128xf32>
    %cst_322 = arith.constant 5.000000e-01 : f32
    %707 = vector.broadcast %cst_322 : f32 to vector<8x128xf32>
    %708 = arith.addf %706, %707 : vector<8x128xf32>
    %c96_i32_323 = arith.constant 96 : i32
    %709 = tpu.dynamic_rotate %693 by %c96_i32_323 dim 1 : vector<8x128xf32>, i32 -> vector<8x128xf32>
    %710 = math.tanh %709 : vector<8x128xf32>
    %c80_i32_324 = arith.constant 80 : i32
    %711 = tpu.dynamic_rotate %693 by %c80_i32_324 dim 1 : vector<8x128xf32>, i32 -> vector<8x128xf32>
    %cst_325 = arith.constant 5.000000e-01 : f32
    %712 = vector.broadcast %cst_325 : f32 to vector<8x128xf32>
    %713 = arith.mulf %712, %711 : vector<8x128xf32>
    %714 = math.tanh %713 : vector<8x128xf32>
    %cst_326 = arith.constant 5.000000e-01 : f32
    %715 = vector.broadcast %cst_326 : f32 to vector<8x128xf32>
    %716 = arith.mulf %715, %714 : vector<8x128xf32>
    %cst_327 = arith.constant 5.000000e-01 : f32
    %717 = vector.broadcast %cst_327 : f32 to vector<8x128xf32>
    %718 = arith.addf %716, %717 : vector<8x128xf32>
    %719 = arith.mulf %708, %575 : vector<8x128xf32>
    %720 = arith.mulf %700, %710 : vector<8x128xf32>
    %721 = arith.addf %719, %720 : vector<8x128xf32>
    %722 = math.tanh %721 : vector<8x128xf32>
    %723 = arith.mulf %718, %722 : vector<8x128xf32>
    %cst_328 = arith.constant 0.000000e+00 : f32
    %724 = vector.broadcast %cst_328 : f32 to vector<8x128xf32>
    %725 = arith.select %14, %723, %724 : vector<8x128xi1>, vector<8x128xf32>
    %726 = tpu.concatenate %579, %615 in 1 : vector<8x128xf32>, vector<8x128xf32> -> vector<8x256xf32>
    %c0_329 = arith.constant 0 : index
    %c0_330 = arith.constant 0 : index
    %727 = vector.load %arg4[%c0_329, %c0_330] : memref<256x128xf32, #tpu.memory_space<vmem>>, vector<256x128xf32>
    %cst_331 = arith.constant dense<0.000000e+00> : vector<8x128xf32>
    %728 = tpu.matmul %726, %727, %cst_331 {dimension_numbers = #tpu.dot_dimension_numbers<[1], [0], [0], [1], [0, 0, 1, 1], [], []>} : vector<8x256xf32>, vector<256x128xf32>, vector<8x128xf32> -> vector<8x128xf32>
    %729 = arith.addf %728, %5 : vector<8x128xf32>
    %cst_332 = arith.constant 5.000000e-01 : f32
    %730 = vector.broadcast %cst_332 : f32 to vector<8x128xf32>
    %731 = arith.mulf %730, %729 : vector<8x128xf32>
    %732 = math.tanh %731 : vector<8x128xf32>
    %cst_333 = arith.constant 5.000000e-01 : f32
    %733 = vector.broadcast %cst_333 : f32 to vector<8x128xf32>
    %734 = arith.mulf %733, %732 : vector<8x128xf32>
    %cst_334 = arith.constant 5.000000e-01 : f32
    %735 = vector.broadcast %cst_334 : f32 to vector<8x128xf32>
    %736 = arith.addf %734, %735 : vector<8x128xf32>
    %c120_i32_335 = arith.constant 120 : i32
    %737 = tpu.dynamic_rotate %729 by %c120_i32_335 dim 1 : vector<8x128xf32>, i32 -> vector<8x128xf32>
    %cst_336 = arith.constant 5.000000e-01 : f32
    %738 = vector.broadcast %cst_336 : f32 to vector<8x128xf32>
    %739 = arith.mulf %738, %737 : vector<8x128xf32>
    %740 = math.tanh %739 : vector<8x128xf32>
    %cst_337 = arith.constant 5.000000e-01 : f32
    %741 = vector.broadcast %cst_337 : f32 to vector<8x128xf32>
    %742 = arith.mulf %741, %740 : vector<8x128xf32>
    %cst_338 = arith.constant 5.000000e-01 : f32
    %743 = vector.broadcast %cst_338 : f32 to vector<8x128xf32>
    %744 = arith.addf %742, %743 : vector<8x128xf32>
    %c112_i32_339 = arith.constant 112 : i32
    %745 = tpu.dynamic_rotate %729 by %c112_i32_339 dim 1 : vector<8x128xf32>, i32 -> vector<8x128xf32>
    %746 = math.tanh %745 : vector<8x128xf32>
    %c104_i32_340 = arith.constant 104 : i32
    %747 = tpu.dynamic_rotate %729 by %c104_i32_340 dim 1 : vector<8x128xf32>, i32 -> vector<8x128xf32>
    %cst_341 = arith.constant 5.000000e-01 : f32
    %748 = vector.broadcast %cst_341 : f32 to vector<8x128xf32>
    %749 = arith.mulf %748, %747 : vector<8x128xf32>
    %750 = math.tanh %749 : vector<8x128xf32>
    %cst_342 = arith.constant 5.000000e-01 : f32
    %751 = vector.broadcast %cst_342 : f32 to vector<8x128xf32>
    %752 = arith.mulf %751, %750 : vector<8x128xf32>
    %cst_343 = arith.constant 5.000000e-01 : f32
    %753 = vector.broadcast %cst_343 : f32 to vector<8x128xf32>
    %754 = arith.addf %752, %753 : vector<8x128xf32>
    %755 = arith.mulf %744, %611 : vector<8x128xf32>
    %756 = arith.mulf %736, %746 : vector<8x128xf32>
    %757 = arith.addf %755, %756 : vector<8x128xf32>
    %758 = math.tanh %757 : vector<8x128xf32>
    %759 = arith.mulf %754, %758 : vector<8x128xf32>
    %cst_344 = arith.constant 0.000000e+00 : f32
    %760 = vector.broadcast %cst_344 : f32 to vector<8x128xf32>
    %761 = arith.select %17, %759, %760 : vector<8x128xi1>, vector<8x128xf32>
    %762 = tpu.concatenate %615, %651 in 1 : vector<8x128xf32>, vector<8x128xf32> -> vector<8x256xf32>
    %c0_345 = arith.constant 0 : index
    %c0_346 = arith.constant 0 : index
    %763 = vector.load %arg6[%c0_345, %c0_346] : memref<256x128xf32, #tpu.memory_space<vmem>>, vector<256x128xf32>
    %cst_347 = arith.constant dense<0.000000e+00> : vector<8x128xf32>
    %764 = tpu.matmul %762, %763, %cst_347 {dimension_numbers = #tpu.dot_dimension_numbers<[1], [0], [0], [1], [0, 0, 1, 1], [], []>} : vector<8x256xf32>, vector<256x128xf32>, vector<8x128xf32> -> vector<8x128xf32>
    %765 = arith.addf %764, %8 : vector<8x128xf32>
    %cst_348 = arith.constant 5.000000e-01 : f32
    %766 = vector.broadcast %cst_348 : f32 to vector<8x128xf32>
    %767 = arith.mulf %766, %765 : vector<8x128xf32>
    %768 = math.tanh %767 : vector<8x128xf32>
    %cst_349 = arith.constant 5.000000e-01 : f32
    %769 = vector.broadcast %cst_349 : f32 to vector<8x128xf32>
    %770 = arith.mulf %769, %768 : vector<8x128xf32>
    %cst_350 = arith.constant 5.000000e-01 : f32
    %771 = vector.broadcast %cst_350 : f32 to vector<8x128xf32>
    %772 = arith.addf %770, %771 : vector<8x128xf32>
    %c120_i32_351 = arith.constant 120 : i32
    %773 = tpu.dynamic_rotate %765 by %c120_i32_351 dim 1 : vector<8x128xf32>, i32 -> vector<8x128xf32>
    %cst_352 = arith.constant 5.000000e-01 : f32
    %774 = vector.broadcast %cst_352 : f32 to vector<8x128xf32>
    %775 = arith.mulf %774, %773 : vector<8x128xf32>
    %776 = math.tanh %775 : vector<8x128xf32>
    %cst_353 = arith.constant 5.000000e-01 : f32
    %777 = vector.broadcast %cst_353 : f32 to vector<8x128xf32>
    %778 = arith.mulf %777, %776 : vector<8x128xf32>
    %cst_354 = arith.constant 5.000000e-01 : f32
    %779 = vector.broadcast %cst_354 : f32 to vector<8x128xf32>
    %780 = arith.addf %778, %779 : vector<8x128xf32>
    %c112_i32_355 = arith.constant 112 : i32
    %781 = tpu.dynamic_rotate %765 by %c112_i32_355 dim 1 : vector<8x128xf32>, i32 -> vector<8x128xf32>
    %782 = math.tanh %781 : vector<8x128xf32>
    %c104_i32_356 = arith.constant 104 : i32
    %783 = tpu.dynamic_rotate %765 by %c104_i32_356 dim 1 : vector<8x128xf32>, i32 -> vector<8x128xf32>
    %cst_357 = arith.constant 5.000000e-01 : f32
    %784 = vector.broadcast %cst_357 : f32 to vector<8x128xf32>
    %785 = arith.mulf %784, %783 : vector<8x128xf32>
    %786 = math.tanh %785 : vector<8x128xf32>
    %cst_358 = arith.constant 5.000000e-01 : f32
    %787 = vector.broadcast %cst_358 : f32 to vector<8x128xf32>
    %788 = arith.mulf %787, %786 : vector<8x128xf32>
    %cst_359 = arith.constant 5.000000e-01 : f32
    %789 = vector.broadcast %cst_359 : f32 to vector<8x128xf32>
    %790 = arith.addf %788, %789 : vector<8x128xf32>
    %791 = arith.mulf %780, %647 : vector<8x128xf32>
    %792 = arith.mulf %772, %782 : vector<8x128xf32>
    %793 = arith.addf %791, %792 : vector<8x128xf32>
    %794 = math.tanh %793 : vector<8x128xf32>
    %795 = arith.mulf %790, %794 : vector<8x128xf32>
    %cst_360 = arith.constant 0.000000e+00 : f32
    %796 = vector.broadcast %cst_360 : f32 to vector<8x128xf32>
    %797 = arith.select %20, %795, %796 : vector<8x128xi1>, vector<8x128xf32>
    %798 = tpu.concatenate %651, %687 in 1 : vector<8x128xf32>, vector<8x128xf32> -> vector<8x256xf32>
    %c0_361 = arith.constant 0 : index
    %c0_362 = arith.constant 0 : index
    %799 = vector.load %arg8[%c0_361, %c0_362] : memref<256x128xf32, #tpu.memory_space<vmem>>, vector<256x128xf32>
    %cst_363 = arith.constant dense<0.000000e+00> : vector<8x128xf32>
    %800 = tpu.matmul %798, %799, %cst_363 {dimension_numbers = #tpu.dot_dimension_numbers<[1], [0], [0], [1], [0, 0, 1, 1], [], []>} : vector<8x256xf32>, vector<256x128xf32>, vector<8x128xf32> -> vector<8x128xf32>
    %801 = arith.addf %800, %11 : vector<8x128xf32>
    %cst_364 = arith.constant 5.000000e-01 : f32
    %802 = vector.broadcast %cst_364 : f32 to vector<8x128xf32>
    %803 = arith.mulf %802, %801 : vector<8x128xf32>
    %804 = math.tanh %803 : vector<8x128xf32>
    %cst_365 = arith.constant 5.000000e-01 : f32
    %805 = vector.broadcast %cst_365 : f32 to vector<8x128xf32>
    %806 = arith.mulf %805, %804 : vector<8x128xf32>
    %cst_366 = arith.constant 5.000000e-01 : f32
    %807 = vector.broadcast %cst_366 : f32 to vector<8x128xf32>
    %808 = arith.addf %806, %807 : vector<8x128xf32>
    %c112_i32_367 = arith.constant 112 : i32
    %809 = tpu.dynamic_rotate %801 by %c112_i32_367 dim 1 : vector<8x128xf32>, i32 -> vector<8x128xf32>
    %cst_368 = arith.constant 5.000000e-01 : f32
    %810 = vector.broadcast %cst_368 : f32 to vector<8x128xf32>
    %811 = arith.mulf %810, %809 : vector<8x128xf32>
    %812 = math.tanh %811 : vector<8x128xf32>
    %cst_369 = arith.constant 5.000000e-01 : f32
    %813 = vector.broadcast %cst_369 : f32 to vector<8x128xf32>
    %814 = arith.mulf %813, %812 : vector<8x128xf32>
    %cst_370 = arith.constant 5.000000e-01 : f32
    %815 = vector.broadcast %cst_370 : f32 to vector<8x128xf32>
    %816 = arith.addf %814, %815 : vector<8x128xf32>
    %c96_i32_371 = arith.constant 96 : i32
    %817 = tpu.dynamic_rotate %801 by %c96_i32_371 dim 1 : vector<8x128xf32>, i32 -> vector<8x128xf32>
    %818 = math.tanh %817 : vector<8x128xf32>
    %c80_i32_372 = arith.constant 80 : i32
    %819 = tpu.dynamic_rotate %801 by %c80_i32_372 dim 1 : vector<8x128xf32>, i32 -> vector<8x128xf32>
    %cst_373 = arith.constant 5.000000e-01 : f32
    %820 = vector.broadcast %cst_373 : f32 to vector<8x128xf32>
    %821 = arith.mulf %820, %819 : vector<8x128xf32>
    %822 = math.tanh %821 : vector<8x128xf32>
    %cst_374 = arith.constant 5.000000e-01 : f32
    %823 = vector.broadcast %cst_374 : f32 to vector<8x128xf32>
    %824 = arith.mulf %823, %822 : vector<8x128xf32>
    %cst_375 = arith.constant 5.000000e-01 : f32
    %825 = vector.broadcast %cst_375 : f32 to vector<8x128xf32>
    %826 = arith.addf %824, %825 : vector<8x128xf32>
    %827 = arith.mulf %816, %683 : vector<8x128xf32>
    %828 = arith.mulf %808, %818 : vector<8x128xf32>
    %829 = arith.addf %827, %828 : vector<8x128xf32>
    %830 = math.tanh %829 : vector<8x128xf32>
    %831 = arith.mulf %826, %830 : vector<8x128xf32>
    %cst_376 = arith.constant 0.000000e+00 : f32
    %832 = vector.broadcast %cst_376 : f32 to vector<8x128xf32>
    %833 = arith.select %23, %831, %832 : vector<8x128xi1>, vector<8x128xf32>
    %c24_377 = arith.constant 24 : index
    %c0_378 = arith.constant 0 : index
    %834 = vector.load %arg13[%c24_377, %c0_378] : memref<64x128xf32, #tpu.memory_space<vmem>>, vector<8x128xf32>
    tpu.vector_store %arg13[%c24_377, %c0_378], %833 {strides = array<i32>} : memref<64x128xf32, #tpu.memory_space<vmem>>, vector<8x128xf32>,
    %c56 = arith.constant 56 : index
    %c0_379 = arith.constant 0 : index
    %835 = vector.load %arg1[%c56, %c0_379] : memref<64x128xf32, #tpu.memory_space<vmem>>, vector<8x128xf32>
    %836 = tpu.concatenate %835, %725 in 1 : vector<8x128xf32>, vector<8x128xf32> -> vector<8x256xf32>
    %c0_380 = arith.constant 0 : index
    %c0_381 = arith.constant 0 : index
    %837 = vector.load %arg2[%c0_380, %c0_381] : memref<256x128xf32, #tpu.memory_space<vmem>>, vector<256x128xf32>
    %cst_382 = arith.constant dense<0.000000e+00> : vector<8x128xf32>
    %838 = tpu.matmul %836, %837, %cst_382 {dimension_numbers = #tpu.dot_dimension_numbers<[1], [0], [0], [1], [0, 0, 1, 1], [], []>} : vector<8x256xf32>, vector<256x128xf32>, vector<8x128xf32> -> vector<8x128xf32>
    %839 = arith.addf %838, %2 : vector<8x128xf32>
    %cst_383 = arith.constant 5.000000e-01 : f32
    %840 = vector.broadcast %cst_383 : f32 to vector<8x128xf32>
    %841 = arith.mulf %840, %839 : vector<8x128xf32>
    %842 = math.tanh %841 : vector<8x128xf32>
    %cst_384 = arith.constant 5.000000e-01 : f32
    %843 = vector.broadcast %cst_384 : f32 to vector<8x128xf32>
    %844 = arith.mulf %843, %842 : vector<8x128xf32>
    %cst_385 = arith.constant 5.000000e-01 : f32
    %845 = vector.broadcast %cst_385 : f32 to vector<8x128xf32>
    %846 = arith.addf %844, %845 : vector<8x128xf32>
    %c112_i32_386 = arith.constant 112 : i32
    %847 = tpu.dynamic_rotate %839 by %c112_i32_386 dim 1 : vector<8x128xf32>, i32 -> vector<8x128xf32>
    %cst_387 = arith.constant 5.000000e-01 : f32
    %848 = vector.broadcast %cst_387 : f32 to vector<8x128xf32>
    %849 = arith.mulf %848, %847 : vector<8x128xf32>
    %850 = math.tanh %849 : vector<8x128xf32>
    %cst_388 = arith.constant 5.000000e-01 : f32
    %851 = vector.broadcast %cst_388 : f32 to vector<8x128xf32>
    %852 = arith.mulf %851, %850 : vector<8x128xf32>
    %cst_389 = arith.constant 5.000000e-01 : f32
    %853 = vector.broadcast %cst_389 : f32 to vector<8x128xf32>
    %854 = arith.addf %852, %853 : vector<8x128xf32>
    %c96_i32_390 = arith.constant 96 : i32
    %855 = tpu.dynamic_rotate %839 by %c96_i32_390 dim 1 : vector<8x128xf32>, i32 -> vector<8x128xf32>
    %856 = math.tanh %855 : vector<8x128xf32>
    %c80_i32_391 = arith.constant 80 : i32
    %857 = tpu.dynamic_rotate %839 by %c80_i32_391 dim 1 : vector<8x128xf32>, i32 -> vector<8x128xf32>
    %cst_392 = arith.constant 5.000000e-01 : f32
    %858 = vector.broadcast %cst_392 : f32 to vector<8x128xf32>
    %859 = arith.mulf %858, %857 : vector<8x128xf32>
    %860 = math.tanh %859 : vector<8x128xf32>
    %cst_393 = arith.constant 5.000000e-01 : f32
    %861 = vector.broadcast %cst_393 : f32 to vector<8x128xf32>
    %862 = arith.mulf %861, %860 : vector<8x128xf32>
    %cst_394 = arith.constant 5.000000e-01 : f32
    %863 = vector.broadcast %cst_394 : f32 to vector<8x128xf32>
    %864 = arith.addf %862, %863 : vector<8x128xf32>
    %865 = arith.mulf %854, %721 : vector<8x128xf32>
    %866 = arith.mulf %846, %856 : vector<8x128xf32>
    %867 = arith.addf %865, %866 : vector<8x128xf32>
    %868 = math.tanh %867 : vector<8x128xf32>
    %869 = arith.mulf %864, %868 : vector<8x128xf32>
    %cst_395 = arith.constant 0.000000e+00 : f32
    %870 = vector.broadcast %cst_395 : f32 to vector<8x128xf32>
    %871 = arith.select %14, %869, %870 : vector<8x128xi1>, vector<8x128xf32>
    %872 = tpu.concatenate %725, %761 in 1 : vector<8x128xf32>, vector<8x128xf32> -> vector<8x256xf32>
    %c0_396 = arith.constant 0 : index
    %c0_397 = arith.constant 0 : index
    %873 = vector.load %arg4[%c0_396, %c0_397] : memref<256x128xf32, #tpu.memory_space<vmem>>, vector<256x128xf32>
    %cst_398 = arith.constant dense<0.000000e+00> : vector<8x128xf32>
    %874 = tpu.matmul %872, %873, %cst_398 {dimension_numbers = #tpu.dot_dimension_numbers<[1], [0], [0], [1], [0, 0, 1, 1], [], []>} : vector<8x256xf32>, vector<256x128xf32>, vector<8x128xf32> -> vector<8x128xf32>
    %875 = arith.addf %874, %5 : vector<8x128xf32>
    %cst_399 = arith.constant 5.000000e-01 : f32
    %876 = vector.broadcast %cst_399 : f32 to vector<8x128xf32>
    %877 = arith.mulf %876, %875 : vector<8x128xf32>
    %878 = math.tanh %877 : vector<8x128xf32>
    %cst_400 = arith.constant 5.000000e-01 : f32
    %879 = vector.broadcast %cst_400 : f32 to vector<8x128xf32>
    %880 = arith.mulf %879, %878 : vector<8x128xf32>
    %cst_401 = arith.constant 5.000000e-01 : f32
    %881 = vector.broadcast %cst_401 : f32 to vector<8x128xf32>
    %882 = arith.addf %880, %881 : vector<8x128xf32>
    %c120_i32_402 = arith.constant 120 : i32
    %883 = tpu.dynamic_rotate %875 by %c120_i32_402 dim 1 : vector<8x128xf32>, i32 -> vector<8x128xf32>
    %cst_403 = arith.constant 5.000000e-01 : f32
    %884 = vector.broadcast %cst_403 : f32 to vector<8x128xf32>
    %885 = arith.mulf %884, %883 : vector<8x128xf32>
    %886 = math.tanh %885 : vector<8x128xf32>
    %cst_404 = arith.constant 5.000000e-01 : f32
    %887 = vector.broadcast %cst_404 : f32 to vector<8x128xf32>
    %888 = arith.mulf %887, %886 : vector<8x128xf32>
    %cst_405 = arith.constant 5.000000e-01 : f32
    %889 = vector.broadcast %cst_405 : f32 to vector<8x128xf32>
    %890 = arith.addf %888, %889 : vector<8x128xf32>
    %c112_i32_406 = arith.constant 112 : i32
    %891 = tpu.dynamic_rotate %875 by %c112_i32_406 dim 1 : vector<8x128xf32>, i32 -> vector<8x128xf32>
    %892 = math.tanh %891 : vector<8x128xf32>
    %c104_i32_407 = arith.constant 104 : i32
    %893 = tpu.dynamic_rotate %875 by %c104_i32_407 dim 1 : vector<8x128xf32>, i32 -> vector<8x128xf32>
    %cst_408 = arith.constant 5.000000e-01 : f32
    %894 = vector.broadcast %cst_408 : f32 to vector<8x128xf32>
    %895 = arith.mulf %894, %893 : vector<8x128xf32>
    %896 = math.tanh %895 : vector<8x128xf32>
    %cst_409 = arith.constant 5.000000e-01 : f32
    %897 = vector.broadcast %cst_409 : f32 to vector<8x128xf32>
    %898 = arith.mulf %897, %896 : vector<8x128xf32>
    %cst_410 = arith.constant 5.000000e-01 : f32
    %899 = vector.broadcast %cst_410 : f32 to vector<8x128xf32>
    %900 = arith.addf %898, %899 : vector<8x128xf32>
    %901 = arith.mulf %890, %757 : vector<8x128xf32>
    %902 = arith.mulf %882, %892 : vector<8x128xf32>
    %903 = arith.addf %901, %902 : vector<8x128xf32>
    %904 = math.tanh %903 : vector<8x128xf32>
    %905 = arith.mulf %900, %904 : vector<8x128xf32>
    %cst_411 = arith.constant 0.000000e+00 : f32
    %906 = vector.broadcast %cst_411 : f32 to vector<8x128xf32>
    %907 = arith.select %17, %905, %906 : vector<8x128xi1>, vector<8x128xf32>
    %908 = tpu.concatenate %761, %797 in 1 : vector<8x128xf32>, vector<8x128xf32> -> vector<8x256xf32>
    %c0_412 = arith.constant 0 : index
    %c0_413 = arith.constant 0 : index
    %909 = vector.load %arg6[%c0_412, %c0_413] : memref<256x128xf32, #tpu.memory_space<vmem>>, vector<256x128xf32>
    %cst_414 = arith.constant dense<0.000000e+00> : vector<8x128xf32>
    %910 = tpu.matmul %908, %909, %cst_414 {dimension_numbers = #tpu.dot_dimension_numbers<[1], [0], [0], [1], [0, 0, 1, 1], [], []>} : vector<8x256xf32>, vector<256x128xf32>, vector<8x128xf32> -> vector<8x128xf32>
    %911 = arith.addf %910, %8 : vector<8x128xf32>
    %cst_415 = arith.constant 5.000000e-01 : f32
    %912 = vector.broadcast %cst_415 : f32 to vector<8x128xf32>
    %913 = arith.mulf %912, %911 : vector<8x128xf32>
    %914 = math.tanh %913 : vector<8x128xf32>
    %cst_416 = arith.constant 5.000000e-01 : f32
    %915 = vector.broadcast %cst_416 : f32 to vector<8x128xf32>
    %916 = arith.mulf %915, %914 : vector<8x128xf32>
    %cst_417 = arith.constant 5.000000e-01 : f32
    %917 = vector.broadcast %cst_417 : f32 to vector<8x128xf32>
    %918 = arith.addf %916, %917 : vector<8x128xf32>
    %c120_i32_418 = arith.constant 120 : i32
    %919 = tpu.dynamic_rotate %911 by %c120_i32_418 dim 1 : vector<8x128xf32>, i32 -> vector<8x128xf32>
    %cst_419 = arith.constant 5.000000e-01 : f32
    %920 = vector.broadcast %cst_419 : f32 to vector<8x128xf32>
    %921 = arith.mulf %920, %919 : vector<8x128xf32>
    %922 = math.tanh %921 : vector<8x128xf32>
    %cst_420 = arith.constant 5.000000e-01 : f32
    %923 = vector.broadcast %cst_420 : f32 to vector<8x128xf32>
    %924 = arith.mulf %923, %922 : vector<8x128xf32>
    %cst_421 = arith.constant 5.000000e-01 : f32
    %925 = vector.broadcast %cst_421 : f32 to vector<8x128xf32>
    %926 = arith.addf %924, %925 : vector<8x128xf32>
    %c112_i32_422 = arith.constant 112 : i32
    %927 = tpu.dynamic_rotate %911 by %c112_i32_422 dim 1 : vector<8x128xf32>, i32 -> vector<8x128xf32>
    %928 = math.tanh %927 : vector<8x128xf32>
    %c104_i32_423 = arith.constant 104 : i32
    %929 = tpu.dynamic_rotate %911 by %c104_i32_423 dim 1 : vector<8x128xf32>, i32 -> vector<8x128xf32>
    %cst_424 = arith.constant 5.000000e-01 : f32
    %930 = vector.broadcast %cst_424 : f32 to vector<8x128xf32>
    %931 = arith.mulf %930, %929 : vector<8x128xf32>
    %932 = math.tanh %931 : vector<8x128xf32>
    %cst_425 = arith.constant 5.000000e-01 : f32
    %933 = vector.broadcast %cst_425 : f32 to vector<8x128xf32>
    %934 = arith.mulf %933, %932 : vector<8x128xf32>
    %cst_426 = arith.constant 5.000000e-01 : f32
    %935 = vector.broadcast %cst_426 : f32 to vector<8x128xf32>
    %936 = arith.addf %934, %935 : vector<8x128xf32>
    %937 = arith.mulf %926, %793 : vector<8x128xf32>
    %938 = arith.mulf %918, %928 : vector<8x128xf32>
    %939 = arith.addf %937, %938 : vector<8x128xf32>
    %940 = math.tanh %939 : vector<8x128xf32>
    %941 = arith.mulf %936, %940 : vector<8x128xf32>
    %cst_427 = arith.constant 0.000000e+00 : f32
    %942 = vector.broadcast %cst_427 : f32 to vector<8x128xf32>
    %943 = arith.select %20, %941, %942 : vector<8x128xi1>, vector<8x128xf32>
    %944 = tpu.concatenate %797, %833 in 1 : vector<8x128xf32>, vector<8x128xf32> -> vector<8x256xf32>
    %c0_428 = arith.constant 0 : index
    %c0_429 = arith.constant 0 : index
    %945 = vector.load %arg8[%c0_428, %c0_429] : memref<256x128xf32, #tpu.memory_space<vmem>>, vector<256x128xf32>
    %cst_430 = arith.constant dense<0.000000e+00> : vector<8x128xf32>
    %946 = tpu.matmul %944, %945, %cst_430 {dimension_numbers = #tpu.dot_dimension_numbers<[1], [0], [0], [1], [0, 0, 1, 1], [], []>} : vector<8x256xf32>, vector<256x128xf32>, vector<8x128xf32> -> vector<8x128xf32>
    %947 = arith.addf %946, %11 : vector<8x128xf32>
    %cst_431 = arith.constant 5.000000e-01 : f32
    %948 = vector.broadcast %cst_431 : f32 to vector<8x128xf32>
    %949 = arith.mulf %948, %947 : vector<8x128xf32>
    %950 = math.tanh %949 : vector<8x128xf32>
    %cst_432 = arith.constant 5.000000e-01 : f32
    %951 = vector.broadcast %cst_432 : f32 to vector<8x128xf32>
    %952 = arith.mulf %951, %950 : vector<8x128xf32>
    %cst_433 = arith.constant 5.000000e-01 : f32
    %953 = vector.broadcast %cst_433 : f32 to vector<8x128xf32>
    %954 = arith.addf %952, %953 : vector<8x128xf32>
    %c112_i32_434 = arith.constant 112 : i32
    %955 = tpu.dynamic_rotate %947 by %c112_i32_434 dim 1 : vector<8x128xf32>, i32 -> vector<8x128xf32>
    %cst_435 = arith.constant 5.000000e-01 : f32
    %956 = vector.broadcast %cst_435 : f32 to vector<8x128xf32>
    %957 = arith.mulf %956, %955 : vector<8x128xf32>
    %958 = math.tanh %957 : vector<8x128xf32>
    %cst_436 = arith.constant 5.000000e-01 : f32
    %959 = vector.broadcast %cst_436 : f32 to vector<8x128xf32>
    %960 = arith.mulf %959, %958 : vector<8x128xf32>
    %cst_437 = arith.constant 5.000000e-01 : f32
    %961 = vector.broadcast %cst_437 : f32 to vector<8x128xf32>
    %962 = arith.addf %960, %961 : vector<8x128xf32>
    %c96_i32_438 = arith.constant 96 : i32
    %963 = tpu.dynamic_rotate %947 by %c96_i32_438 dim 1 : vector<8x128xf32>, i32 -> vector<8x128xf32>
    %964 = math.tanh %963 : vector<8x128xf32>
    %c80_i32_439 = arith.constant 80 : i32
    %965 = tpu.dynamic_rotate %947 by %c80_i32_439 dim 1 : vector<8x128xf32>, i32 -> vector<8x128xf32>
    %cst_440 = arith.constant 5.000000e-01 : f32
    %966 = vector.broadcast %cst_440 : f32 to vector<8x128xf32>
    %967 = arith.mulf %966, %965 : vector<8x128xf32>
    %968 = math.tanh %967 : vector<8x128xf32>
    %cst_441 = arith.constant 5.000000e-01 : f32
    %969 = vector.broadcast %cst_441 : f32 to vector<8x128xf32>
    %970 = arith.mulf %969, %968 : vector<8x128xf32>
    %cst_442 = arith.constant 5.000000e-01 : f32
    %971 = vector.broadcast %cst_442 : f32 to vector<8x128xf32>
    %972 = arith.addf %970, %971 : vector<8x128xf32>
    %973 = arith.mulf %962, %829 : vector<8x128xf32>
    %974 = arith.mulf %954, %964 : vector<8x128xf32>
    %975 = arith.addf %973, %974 : vector<8x128xf32>
    %976 = math.tanh %975 : vector<8x128xf32>
    %977 = arith.mulf %972, %976 : vector<8x128xf32>
    %cst_443 = arith.constant 0.000000e+00 : f32
    %978 = vector.broadcast %cst_443 : f32 to vector<8x128xf32>
    %979 = arith.select %23, %977, %978 : vector<8x128xi1>, vector<8x128xf32>
    %c32_444 = arith.constant 32 : index
    %c0_445 = arith.constant 0 : index
    %980 = vector.load %arg13[%c32_444, %c0_445] : memref<64x128xf32, #tpu.memory_space<vmem>>, vector<8x128xf32>
    tpu.vector_store %arg13[%c32_444, %c0_445], %979 {strides = array<i32>} : memref<64x128xf32, #tpu.memory_space<vmem>>, vector<8x128xf32>,
    %981 = tpu.concatenate %871, %907 in 1 : vector<8x128xf32>, vector<8x128xf32> -> vector<8x256xf32>
    %c0_446 = arith.constant 0 : index
    %c0_447 = arith.constant 0 : index
    %982 = vector.load %arg4[%c0_446, %c0_447] : memref<256x128xf32, #tpu.memory_space<vmem>>, vector<256x128xf32>
    %cst_448 = arith.constant dense<0.000000e+00> : vector<8x128xf32>
    %983 = tpu.matmul %981, %982, %cst_448 {dimension_numbers = #tpu.dot_dimension_numbers<[1], [0], [0], [1], [0, 0, 1, 1], [], []>} : vector<8x256xf32>, vector<256x128xf32>, vector<8x128xf32> -> vector<8x128xf32>
    %984 = arith.addf %983, %5 : vector<8x128xf32>
    %cst_449 = arith.constant 5.000000e-01 : f32
    %985 = vector.broadcast %cst_449 : f32 to vector<8x128xf32>
    %986 = arith.mulf %985, %984 : vector<8x128xf32>
    %987 = math.tanh %986 : vector<8x128xf32>
    %cst_450 = arith.constant 5.000000e-01 : f32
    %988 = vector.broadcast %cst_450 : f32 to vector<8x128xf32>
    %989 = arith.mulf %988, %987 : vector<8x128xf32>
    %cst_451 = arith.constant 5.000000e-01 : f32
    %990 = vector.broadcast %cst_451 : f32 to vector<8x128xf32>
    %991 = arith.addf %989, %990 : vector<8x128xf32>
    %c120_i32_452 = arith.constant 120 : i32
    %992 = tpu.dynamic_rotate %984 by %c120_i32_452 dim 1 : vector<8x128xf32>, i32 -> vector<8x128xf32>
    %cst_453 = arith.constant 5.000000e-01 : f32
    %993 = vector.broadcast %cst_453 : f32 to vector<8x128xf32>
    %994 = arith.mulf %993, %992 : vector<8x128xf32>
    %995 = math.tanh %994 : vector<8x128xf32>
    %cst_454 = arith.constant 5.000000e-01 : f32
    %996 = vector.broadcast %cst_454 : f32 to vector<8x128xf32>
    %997 = arith.mulf %996, %995 : vector<8x128xf32>
    %cst_455 = arith.constant 5.000000e-01 : f32
    %998 = vector.broadcast %cst_455 : f32 to vector<8x128xf32>
    %999 = arith.addf %997, %998 : vector<8x128xf32>
    %c112_i32_456 = arith.constant 112 : i32
    %1000 = tpu.dynamic_rotate %984 by %c112_i32_456 dim 1 : vector<8x128xf32>, i32 -> vector<8x128xf32>
    %1001 = math.tanh %1000 : vector<8x128xf32>
    %c104_i32_457 = arith.constant 104 : i32
    %1002 = tpu.dynamic_rotate %984 by %c104_i32_457 dim 1 : vector<8x128xf32>, i32 -> vector<8x128xf32>
    %cst_458 = arith.constant 5.000000e-01 : f32
    %1003 = vector.broadcast %cst_458 : f32 to vector<8x128xf32>
    %1004 = arith.mulf %1003, %1002 : vector<8x128xf32>
    %1005 = math.tanh %1004 : vector<8x128xf32>
    %cst_459 = arith.constant 5.000000e-01 : f32
    %1006 = vector.broadcast %cst_459 : f32 to vector<8x128xf32>
    %1007 = arith.mulf %1006, %1005 : vector<8x128xf32>
    %cst_460 = arith.constant 5.000000e-01 : f32
    %1008 = vector.broadcast %cst_460 : f32 to vector<8x128xf32>
    %1009 = arith.addf %1007, %1008 : vector<8x128xf32>
    %1010 = arith.mulf %999, %903 : vector<8x128xf32>
    %1011 = arith.mulf %991, %1001 : vector<8x128xf32>
    %1012 = arith.addf %1010, %1011 : vector<8x128xf32>
    %1013 = math.tanh %1012 : vector<8x128xf32>
    %1014 = arith.mulf %1009, %1013 : vector<8x128xf32>
    %cst_461 = arith.constant 0.000000e+00 : f32
    %1015 = vector.broadcast %cst_461 : f32 to vector<8x128xf32>
    %1016 = arith.select %17, %1014, %1015 : vector<8x128xi1>, vector<8x128xf32>
    %1017 = tpu.concatenate %907, %943 in 1 : vector<8x128xf32>, vector<8x128xf32> -> vector<8x256xf32>
    %c0_462 = arith.constant 0 : index
    %c0_463 = arith.constant 0 : index
    %1018 = vector.load %arg6[%c0_462, %c0_463] : memref<256x128xf32, #tpu.memory_space<vmem>>, vector<256x128xf32>
    %cst_464 = arith.constant dense<0.000000e+00> : vector<8x128xf32>
    %1019 = tpu.matmul %1017, %1018, %cst_464 {dimension_numbers = #tpu.dot_dimension_numbers<[1], [0], [0], [1], [0, 0, 1, 1], [], []>} : vector<8x256xf32>, vector<256x128xf32>, vector<8x128xf32> -> vector<8x128xf32>
    %1020 = arith.addf %1019, %8 : vector<8x128xf32>
    %cst_465 = arith.constant 5.000000e-01 : f32
    %1021 = vector.broadcast %cst_465 : f32 to vector<8x128xf32>
    %1022 = arith.mulf %1021, %1020 : vector<8x128xf32>
    %1023 = math.tanh %1022 : vector<8x128xf32>
    %cst_466 = arith.constant 5.000000e-01 : f32
    %1024 = vector.broadcast %cst_466 : f32 to vector<8x128xf32>
    %1025 = arith.mulf %1024, %1023 : vector<8x128xf32>
    %cst_467 = arith.constant 5.000000e-01 : f32
    %1026 = vector.broadcast %cst_467 : f32 to vector<8x128xf32>
    %1027 = arith.addf %1025, %1026 : vector<8x128xf32>
    %c120_i32_468 = arith.constant 120 : i32
    %1028 = tpu.dynamic_rotate %1020 by %c120_i32_468 dim 1 : vector<8x128xf32>, i32 -> vector<8x128xf32>
    %cst_469 = arith.constant 5.000000e-01 : f32
    %1029 = vector.broadcast %cst_469 : f32 to vector<8x128xf32>
    %1030 = arith.mulf %1029, %1028 : vector<8x128xf32>
    %1031 = math.tanh %1030 : vector<8x128xf32>
    %cst_470 = arith.constant 5.000000e-01 : f32
    %1032 = vector.broadcast %cst_470 : f32 to vector<8x128xf32>
    %1033 = arith.mulf %1032, %1031 : vector<8x128xf32>
    %cst_471 = arith.constant 5.000000e-01 : f32
    %1034 = vector.broadcast %cst_471 : f32 to vector<8x128xf32>
    %1035 = arith.addf %1033, %1034 : vector<8x128xf32>
    %c112_i32_472 = arith.constant 112 : i32
    %1036 = tpu.dynamic_rotate %1020 by %c112_i32_472 dim 1 : vector<8x128xf32>, i32 -> vector<8x128xf32>
    %1037 = math.tanh %1036 : vector<8x128xf32>
    %c104_i32_473 = arith.constant 104 : i32
    %1038 = tpu.dynamic_rotate %1020 by %c104_i32_473 dim 1 : vector<8x128xf32>, i32 -> vector<8x128xf32>
    %cst_474 = arith.constant 5.000000e-01 : f32
    %1039 = vector.broadcast %cst_474 : f32 to vector<8x128xf32>
    %1040 = arith.mulf %1039, %1038 : vector<8x128xf32>
    %1041 = math.tanh %1040 : vector<8x128xf32>
    %cst_475 = arith.constant 5.000000e-01 : f32
    %1042 = vector.broadcast %cst_475 : f32 to vector<8x128xf32>
    %1043 = arith.mulf %1042, %1041 : vector<8x128xf32>
    %cst_476 = arith.constant 5.000000e-01 : f32
    %1044 = vector.broadcast %cst_476 : f32 to vector<8x128xf32>
    %1045 = arith.addf %1043, %1044 : vector<8x128xf32>
    %1046 = arith.mulf %1035, %939 : vector<8x128xf32>
    %1047 = arith.mulf %1027, %1037 : vector<8x128xf32>
    %1048 = arith.addf %1046, %1047 : vector<8x128xf32>
    %1049 = math.tanh %1048 : vector<8x128xf32>
    %1050 = arith.mulf %1045, %1049 : vector<8x128xf32>
    %cst_477 = arith.constant 0.000000e+00 : f32
    %1051 = vector.broadcast %cst_477 : f32 to vector<8x128xf32>
    %1052 = arith.select %20, %1050, %1051 : vector<8x128xi1>, vector<8x128xf32>
    %1053 = tpu.concatenate %943, %979 in 1 : vector<8x128xf32>, vector<8x128xf32> -> vector<8x256xf32>
    %c0_478 = arith.constant 0 : index
    %c0_479 = arith.constant 0 : index
    %1054 = vector.load %arg8[%c0_478, %c0_479] : memref<256x128xf32, #tpu.memory_space<vmem>>, vector<256x128xf32>
    %cst_480 = arith.constant dense<0.000000e+00> : vector<8x128xf32>
    %1055 = tpu.matmul %1053, %1054, %cst_480 {dimension_numbers = #tpu.dot_dimension_numbers<[1], [0], [0], [1], [0, 0, 1, 1], [], []>} : vector<8x256xf32>, vector<256x128xf32>, vector<8x128xf32> -> vector<8x128xf32>
    %1056 = arith.addf %1055, %11 : vector<8x128xf32>
    %cst_481 = arith.constant 5.000000e-01 : f32
    %1057 = vector.broadcast %cst_481 : f32 to vector<8x128xf32>
    %1058 = arith.mulf %1057, %1056 : vector<8x128xf32>
    %1059 = math.tanh %1058 : vector<8x128xf32>
    %cst_482 = arith.constant 5.000000e-01 : f32
    %1060 = vector.broadcast %cst_482 : f32 to vector<8x128xf32>
    %1061 = arith.mulf %1060, %1059 : vector<8x128xf32>
    %cst_483 = arith.constant 5.000000e-01 : f32
    %1062 = vector.broadcast %cst_483 : f32 to vector<8x128xf32>
    %1063 = arith.addf %1061, %1062 : vector<8x128xf32>
    %c112_i32_484 = arith.constant 112 : i32
    %1064 = tpu.dynamic_rotate %1056 by %c112_i32_484 dim 1 : vector<8x128xf32>, i32 -> vector<8x128xf32>
    %cst_485 = arith.constant 5.000000e-01 : f32
    %1065 = vector.broadcast %cst_485 : f32 to vector<8x128xf32>
    %1066 = arith.mulf %1065, %1064 : vector<8x128xf32>
    %1067 = math.tanh %1066 : vector<8x128xf32>
    %cst_486 = arith.constant 5.000000e-01 : f32
    %1068 = vector.broadcast %cst_486 : f32 to vector<8x128xf32>
    %1069 = arith.mulf %1068, %1067 : vector<8x128xf32>
    %cst_487 = arith.constant 5.000000e-01 : f32
    %1070 = vector.broadcast %cst_487 : f32 to vector<8x128xf32>
    %1071 = arith.addf %1069, %1070 : vector<8x128xf32>
    %c96_i32_488 = arith.constant 96 : i32
    %1072 = tpu.dynamic_rotate %1056 by %c96_i32_488 dim 1 : vector<8x128xf32>, i32 -> vector<8x128xf32>
    %1073 = math.tanh %1072 : vector<8x128xf32>
    %c80_i32_489 = arith.constant 80 : i32
    %1074 = tpu.dynamic_rotate %1056 by %c80_i32_489 dim 1 : vector<8x128xf32>, i32 -> vector<8x128xf32>
    %cst_490 = arith.constant 5.000000e-01 : f32
    %1075 = vector.broadcast %cst_490 : f32 to vector<8x128xf32>
    %1076 = arith.mulf %1075, %1074 : vector<8x128xf32>
    %1077 = math.tanh %1076 : vector<8x128xf32>
    %cst_491 = arith.constant 5.000000e-01 : f32
    %1078 = vector.broadcast %cst_491 : f32 to vector<8x128xf32>
    %1079 = arith.mulf %1078, %1077 : vector<8x128xf32>
    %cst_492 = arith.constant 5.000000e-01 : f32
    %1080 = vector.broadcast %cst_492 : f32 to vector<8x128xf32>
    %1081 = arith.addf %1079, %1080 : vector<8x128xf32>
    %1082 = arith.mulf %1071, %975 : vector<8x128xf32>
    %1083 = arith.mulf %1063, %1073 : vector<8x128xf32>
    %1084 = arith.addf %1082, %1083 : vector<8x128xf32>
    %1085 = math.tanh %1084 : vector<8x128xf32>
    %1086 = arith.mulf %1081, %1085 : vector<8x128xf32>
    %cst_493 = arith.constant 0.000000e+00 : f32
    %1087 = vector.broadcast %cst_493 : f32 to vector<8x128xf32>
    %1088 = arith.select %23, %1086, %1087 : vector<8x128xi1>, vector<8x128xf32>
    %c40_494 = arith.constant 40 : index
    %c0_495 = arith.constant 0 : index
    %1089 = vector.load %arg13[%c40_494, %c0_495] : memref<64x128xf32, #tpu.memory_space<vmem>>, vector<8x128xf32>
    tpu.vector_store %arg13[%c40_494, %c0_495], %1088 {strides = array<i32>} : memref<64x128xf32, #tpu.memory_space<vmem>>, vector<8x128xf32>,
    %1090 = tpu.concatenate %1016, %1052 in 1 : vector<8x128xf32>, vector<8x128xf32> -> vector<8x256xf32>
    %c0_496 = arith.constant 0 : index
    %c0_497 = arith.constant 0 : index
    %1091 = vector.load %arg6[%c0_496, %c0_497] : memref<256x128xf32, #tpu.memory_space<vmem>>, vector<256x128xf32>
    %cst_498 = arith.constant dense<0.000000e+00> : vector<8x128xf32>
    %1092 = tpu.matmul %1090, %1091, %cst_498 {dimension_numbers = #tpu.dot_dimension_numbers<[1], [0], [0], [1], [0, 0, 1, 1], [], []>} : vector<8x256xf32>, vector<256x128xf32>, vector<8x128xf32> -> vector<8x128xf32>
    %1093 = arith.addf %1092, %8 : vector<8x128xf32>
    %cst_499 = arith.constant 5.000000e-01 : f32
    %1094 = vector.broadcast %cst_499 : f32 to vector<8x128xf32>
    %1095 = arith.mulf %1094, %1093 : vector<8x128xf32>
    %1096 = math.tanh %1095 : vector<8x128xf32>
    %cst_500 = arith.constant 5.000000e-01 : f32
    %1097 = vector.broadcast %cst_500 : f32 to vector<8x128xf32>
    %1098 = arith.mulf %1097, %1096 : vector<8x128xf32>
    %cst_501 = arith.constant 5.000000e-01 : f32
    %1099 = vector.broadcast %cst_501 : f32 to vector<8x128xf32>
    %1100 = arith.addf %1098, %1099 : vector<8x128xf32>
    %c120_i32_502 = arith.constant 120 : i32
    %1101 = tpu.dynamic_rotate %1093 by %c120_i32_502 dim 1 : vector<8x128xf32>, i32 -> vector<8x128xf32>
    %cst_503 = arith.constant 5.000000e-01 : f32
    %1102 = vector.broadcast %cst_503 : f32 to vector<8x128xf32>
    %1103 = arith.mulf %1102, %1101 : vector<8x128xf32>
    %1104 = math.tanh %1103 : vector<8x128xf32>
    %cst_504 = arith.constant 5.000000e-01 : f32
    %1105 = vector.broadcast %cst_504 : f32 to vector<8x128xf32>
    %1106 = arith.mulf %1105, %1104 : vector<8x128xf32>
    %cst_505 = arith.constant 5.000000e-01 : f32
    %1107 = vector.broadcast %cst_505 : f32 to vector<8x128xf32>
    %1108 = arith.addf %1106, %1107 : vector<8x128xf32>
    %c112_i32_506 = arith.constant 112 : i32
    %1109 = tpu.dynamic_rotate %1093 by %c112_i32_506 dim 1 : vector<8x128xf32>, i32 -> vector<8x128xf32>
    %1110 = math.tanh %1109 : vector<8x128xf32>
    %c104_i32_507 = arith.constant 104 : i32
    %1111 = tpu.dynamic_rotate %1093 by %c104_i32_507 dim 1 : vector<8x128xf32>, i32 -> vector<8x128xf32>
    %cst_508 = arith.constant 5.000000e-01 : f32
    %1112 = vector.broadcast %cst_508 : f32 to vector<8x128xf32>
    %1113 = arith.mulf %1112, %1111 : vector<8x128xf32>
    %1114 = math.tanh %1113 : vector<8x128xf32>
    %cst_509 = arith.constant 5.000000e-01 : f32
    %1115 = vector.broadcast %cst_509 : f32 to vector<8x128xf32>
    %1116 = arith.mulf %1115, %1114 : vector<8x128xf32>
    %cst_510 = arith.constant 5.000000e-01 : f32
    %1117 = vector.broadcast %cst_510 : f32 to vector<8x128xf32>
    %1118 = arith.addf %1116, %1117 : vector<8x128xf32>
    %1119 = arith.mulf %1108, %1048 : vector<8x128xf32>
    %1120 = arith.mulf %1100, %1110 : vector<8x128xf32>
    %1121 = arith.addf %1119, %1120 : vector<8x128xf32>
    %1122 = math.tanh %1121 : vector<8x128xf32>
    %1123 = arith.mulf %1118, %1122 : vector<8x128xf32>
    %cst_511 = arith.constant 0.000000e+00 : f32
    %1124 = vector.broadcast %cst_511 : f32 to vector<8x128xf32>
    %1125 = arith.select %20, %1123, %1124 : vector<8x128xi1>, vector<8x128xf32>
    %1126 = tpu.concatenate %1052, %1088 in 1 : vector<8x128xf32>, vector<8x128xf32> -> vector<8x256xf32>
    %c0_512 = arith.constant 0 : index
    %c0_513 = arith.constant 0 : index
    %1127 = vector.load %arg8[%c0_512, %c0_513] : memref<256x128xf32, #tpu.memory_space<vmem>>, vector<256x128xf32>
    %cst_514 = arith.constant dense<0.000000e+00> : vector<8x128xf32>
    %1128 = tpu.matmul %1126, %1127, %cst_514 {dimension_numbers = #tpu.dot_dimension_numbers<[1], [0], [0], [1], [0, 0, 1, 1], [], []>} : vector<8x256xf32>, vector<256x128xf32>, vector<8x128xf32> -> vector<8x128xf32>
    %1129 = arith.addf %1128, %11 : vector<8x128xf32>
    %cst_515 = arith.constant 5.000000e-01 : f32
    %1130 = vector.broadcast %cst_515 : f32 to vector<8x128xf32>
    %1131 = arith.mulf %1130, %1129 : vector<8x128xf32>
    %1132 = math.tanh %1131 : vector<8x128xf32>
    %cst_516 = arith.constant 5.000000e-01 : f32
    %1133 = vector.broadcast %cst_516 : f32 to vector<8x128xf32>
    %1134 = arith.mulf %1133, %1132 : vector<8x128xf32>
    %cst_517 = arith.constant 5.000000e-01 : f32
    %1135 = vector.broadcast %cst_517 : f32 to vector<8x128xf32>
    %1136 = arith.addf %1134, %1135 : vector<8x128xf32>
    %c112_i32_518 = arith.constant 112 : i32
    %1137 = tpu.dynamic_rotate %1129 by %c112_i32_518 dim 1 : vector<8x128xf32>, i32 -> vector<8x128xf32>
    %cst_519 = arith.constant 5.000000e-01 : f32
    %1138 = vector.broadcast %cst_519 : f32 to vector<8x128xf32>
    %1139 = arith.mulf %1138, %1137 : vector<8x128xf32>
    %1140 = math.tanh %1139 : vector<8x128xf32>
    %cst_520 = arith.constant 5.000000e-01 : f32
    %1141 = vector.broadcast %cst_520 : f32 to vector<8x128xf32>
    %1142 = arith.mulf %1141, %1140 : vector<8x128xf32>
    %cst_521 = arith.constant 5.000000e-01 : f32
    %1143 = vector.broadcast %cst_521 : f32 to vector<8x128xf32>
    %1144 = arith.addf %1142, %1143 : vector<8x128xf32>
    %c96_i32_522 = arith.constant 96 : i32
    %1145 = tpu.dynamic_rotate %1129 by %c96_i32_522 dim 1 : vector<8x128xf32>, i32 -> vector<8x128xf32>
    %1146 = math.tanh %1145 : vector<8x128xf32>
    %c80_i32_523 = arith.constant 80 : i32
    %1147 = tpu.dynamic_rotate %1129 by %c80_i32_523 dim 1 : vector<8x128xf32>, i32 -> vector<8x128xf32>
    %cst_524 = arith.constant 5.000000e-01 : f32
    %1148 = vector.broadcast %cst_524 : f32 to vector<8x128xf32>
    %1149 = arith.mulf %1148, %1147 : vector<8x128xf32>
    %1150 = math.tanh %1149 : vector<8x128xf32>
    %cst_525 = arith.constant 5.000000e-01 : f32
    %1151 = vector.broadcast %cst_525 : f32 to vector<8x128xf32>
    %1152 = arith.mulf %1151, %1150 : vector<8x128xf32>
    %cst_526 = arith.constant 5.000000e-01 : f32
    %1153 = vector.broadcast %cst_526 : f32 to vector<8x128xf32>
    %1154 = arith.addf %1152, %1153 : vector<8x128xf32>
    %1155 = arith.mulf %1144, %1084 : vector<8x128xf32>
    %1156 = arith.mulf %1136, %1146 : vector<8x128xf32>
    %1157 = arith.addf %1155, %1156 : vector<8x128xf32>
    %1158 = math.tanh %1157 : vector<8x128xf32>
    %1159 = arith.mulf %1154, %1158 : vector<8x128xf32>
    %cst_527 = arith.constant 0.000000e+00 : f32
    %1160 = vector.broadcast %cst_527 : f32 to vector<8x128xf32>
    %1161 = arith.select %23, %1159, %1160 : vector<8x128xi1>, vector<8x128xf32>
    %c48_528 = arith.constant 48 : index
    %c0_529 = arith.constant 0 : index
    %1162 = vector.load %arg13[%c48_528, %c0_529] : memref<64x128xf32, #tpu.memory_space<vmem>>, vector<8x128xf32>
    tpu.vector_store %arg13[%c48_528, %c0_529], %1161 {strides = array<i32>} : memref<64x128xf32, #tpu.memory_space<vmem>>, vector<8x128xf32>,
    %1163 = tpu.concatenate %1125, %1161 in 1 : vector<8x128xf32>, vector<8x128xf32> -> vector<8x256xf32>
    %c0_530 = arith.constant 0 : index
    %c0_531 = arith.constant 0 : index
    %1164 = vector.load %arg8[%c0_530, %c0_531] : memref<256x128xf32, #tpu.memory_space<vmem>>, vector<256x128xf32>
    %cst_532 = arith.constant dense<0.000000e+00> : vector<8x128xf32>
    %1165 = tpu.matmul %1163, %1164, %cst_532 {dimension_numbers = #tpu.dot_dimension_numbers<[1], [0], [0], [1], [0, 0, 1, 1], [], []>} : vector<8x256xf32>, vector<256x128xf32>, vector<8x128xf32> -> vector<8x128xf32>
    %1166 = arith.addf %1165, %11 : vector<8x128xf32>
    %cst_533 = arith.constant 5.000000e-01 : f32
    %1167 = vector.broadcast %cst_533 : f32 to vector<8x128xf32>
    %1168 = arith.mulf %1167, %1166 : vector<8x128xf32>
    %1169 = math.tanh %1168 : vector<8x128xf32>
    %cst_534 = arith.constant 5.000000e-01 : f32
    %1170 = vector.broadcast %cst_534 : f32 to vector<8x128xf32>
    %1171 = arith.mulf %1170, %1169 : vector<8x128xf32>
    %cst_535 = arith.constant 5.000000e-01 : f32
    %1172 = vector.broadcast %cst_535 : f32 to vector<8x128xf32>
    %1173 = arith.addf %1171, %1172 : vector<8x128xf32>
    %c112_i32_536 = arith.constant 112 : i32
    %1174 = tpu.dynamic_rotate %1166 by %c112_i32_536 dim 1 : vector<8x128xf32>, i32 -> vector<8x128xf32>
    %cst_537 = arith.constant 5.000000e-01 : f32
    %1175 = vector.broadcast %cst_537 : f32 to vector<8x128xf32>
    %1176 = arith.mulf %1175, %1174 : vector<8x128xf32>
    %1177 = math.tanh %1176 : vector<8x128xf32>
    %cst_538 = arith.constant 5.000000e-01 : f32
    %1178 = vector.broadcast %cst_538 : f32 to vector<8x128xf32>
    %1179 = arith.mulf %1178, %1177 : vector<8x128xf32>
    %cst_539 = arith.constant 5.000000e-01 : f32
    %1180 = vector.broadcast %cst_539 : f32 to vector<8x128xf32>
    %1181 = arith.addf %1179, %1180 : vector<8x128xf32>
    %c96_i32_540 = arith.constant 96 : i32
    %1182 = tpu.dynamic_rotate %1166 by %c96_i32_540 dim 1 : vector<8x128xf32>, i32 -> vector<8x128xf32>
    %1183 = math.tanh %1182 : vector<8x128xf32>
    %c80_i32_541 = arith.constant 80 : i32
    %1184 = tpu.dynamic_rotate %1166 by %c80_i32_541 dim 1 : vector<8x128xf32>, i32 -> vector<8x128xf32>
    %cst_542 = arith.constant 5.000000e-01 : f32
    %1185 = vector.broadcast %cst_542 : f32 to vector<8x128xf32>
    %1186 = arith.mulf %1185, %1184 : vector<8x128xf32>
    %1187 = math.tanh %1186 : vector<8x128xf32>
    %cst_543 = arith.constant 5.000000e-01 : f32
    %1188 = vector.broadcast %cst_543 : f32 to vector<8x128xf32>
    %1189 = arith.mulf %1188, %1187 : vector<8x128xf32>
    %cst_544 = arith.constant 5.000000e-01 : f32
    %1190 = vector.broadcast %cst_544 : f32 to vector<8x128xf32>
    %1191 = arith.addf %1189, %1190 : vector<8x128xf32>
    %1192 = arith.mulf %1181, %1157 : vector<8x128xf32>
    %1193 = arith.mulf %1173, %1183 : vector<8x128xf32>
    %1194 = arith.addf %1192, %1193 : vector<8x128xf32>
    %1195 = math.tanh %1194 : vector<8x128xf32>
    %1196 = arith.mulf %1191, %1195 : vector<8x128xf32>
    %cst_545 = arith.constant 0.000000e+00 : f32
    %1197 = vector.broadcast %cst_545 : f32 to vector<8x128xf32>
    %1198 = arith.select %23, %1196, %1197 : vector<8x128xi1>, vector<8x128xf32>
    %c56_546 = arith.constant 56 : index
    %c0_547 = arith.constant 0 : index
    %1199 = vector.load %arg13[%c56_546, %c0_547] : memref<64x128xf32, #tpu.memory_space<vmem>>, vector<8x128xf32>
    tpu.vector_store %arg13[%c56_546, %c0_547], %1198 {strides = array<i32>} : memref<64x128xf32, #tpu.memory_space<vmem>>, vector<8x128xf32>,
    %c0_548 = arith.constant 0 : index
    %c0_549 = arith.constant 0 : index
    %1200 = vector.load %arg13[%c0_548, %c0_549] : memref<64x128xf32, #tpu.memory_space<vmem>>, vector<64x128xf32>
    %c0_550 = arith.constant 0 : index
    %c0_551 = arith.constant 0 : index
    %1201 = vector.load %arg10[%c0_550, %c0_551] : memref<128x128xf32, #tpu.memory_space<vmem>>, vector<128x128xf32>
    %cst_552 = arith.constant dense<0.000000e+00> : vector<64x128xf32>
    %1202 = tpu.matmul %1200, %1201, %cst_552 {dimension_numbers = #tpu.dot_dimension_numbers<[1], [0], [0], [1], [0, 0, 1, 1], [], []>} : vector<64x128xf32>, vector<128x128xf32>, vector<64x128xf32> -> vector<64x128xf32>
    %c0_553 = arith.constant 0 : index
    %c0_554 = arith.constant 0 : index
    %1203 = vector.load %arg11[%c0_553, %c0_554] : memref<1x128xf32, #tpu.memory_space<vmem>>, vector<1x128xf32>
    %1204 = vector.broadcast %1203 : vector<1x128xf32> to vector<64x128xf32>
    %1205 = arith.addf %1202, %1204 : vector<64x128xf32>
    %c0_555 = arith.constant 0 : index
    %c0_556 = arith.constant 0 : index
    %1206 = vector.load %arg12[%c0_555, %c0_556] : memref<64x128xf32, #tpu.memory_space<vmem>>, vector<64x128xf32>
    tpu.vector_store %arg12[%c0_555, %c0_556], %1205 {strides = array<i32>} : memref<64x128xf32, #tpu.memory_space<vmem>>, vector<64x128xf32>,
    return
  }
  func.func @transform_0(%arg0: i32) -> (i32, i32) {
    %c0_i32 = arith.constant 0 : i32
    %c0_i32_0 = arith.constant 0 : i32
    %c0_i32_1 = arith.constant 0 : i32
    return %c0_i32, %c0_i32_0 : i32, i32
  }
  func.func @transform_1(%arg0: i32) -> (i32, i32) {
    %c0_i32 = arith.constant 0 : i32
    %c0_i32_0 = arith.constant 0 : i32
    %c0_i32_1 = arith.constant 0 : i32
    return %c0_i32, %c0_i32_0 : i32, i32
  }
  func.func @transform_2(%arg0: i32) -> (i32, i32) {
    %c0_i32 = arith.constant 0 : i32
    %c0_i32_0 = arith.constant 0 : i32
    %c0_i32_1 = arith.constant 0 : i32
    return %c0_i32, %c0_i32_0 : i32, i32
  }
  func.func @transform_3(%arg0: i32) -> (i32, i32) {
    %c0_i32 = arith.constant 0 : i32
    %c0_i32_0 = arith.constant 0 : i32
    %c0_i32_1 = arith.constant 0 : i32
    return %c0_i32, %c0_i32_0 : i32, i32
  }
  func.func @transform_4(%arg0: i32) -> (i32, i32) {
    %c0_i32 = arith.constant 0 : i32
    %c0_i32_0 = arith.constant 0 : i32
    %c0_i32_1 = arith.constant 0 : i32
    return %c0_i32, %c0_i32_0 : i32, i32
  }
  func.func @transform_5(%arg0: i32) -> (i32, i32) {
    %c0_i32 = arith.constant 0 : i32
    %c0_i32_0 = arith.constant 0 : i32
    %c0_i32_1 = arith.constant 0 : i32
    return %c0_i32, %c0_i32_0 : i32, i32
  }
  func.func @transform_6(%arg0: i32) -> (i32, i32) {
    %c0_i32 = arith.constant 0 : i32
    %c0_i32_0 = arith.constant 0 : i32
    %c0_i32_1 = arith.constant 0 : i32
    return %c0_i32, %c0_i32_0 : i32, i32
  }
  func.func @transform_7(%arg0: i32) -> (i32, i32) {
    %c0_i32 = arith.constant 0 : i32
    %c0_i32_0 = arith.constant 0 : i32
    %c0_i32_1 = arith.constant 0 : i32
    return %c0_i32, %c0_i32_0 : i32, i32
  }
  func.func @transform_8(%arg0: i32) -> (i32, i32) {
    %c0_i32 = arith.constant 0 : i32
    %c0_i32_0 = arith.constant 0 : i32
    %c0_i32_1 = arith.constant 0 : i32
    return %c0_i32, %c0_i32_0 : i32, i32
  }
  func.func @transform_9(%arg0: i32) -> (i32, i32) {
    %c0_i32 = arith.constant 0 : i32
    %c0_i32_0 = arith.constant 0 : i32
    %c0_i32_1 = arith.constant 0 : i32
    return %c0_i32, %c0_i32_0 : i32, i32
  }
  func.func @transform_10(%arg0: i32) -> (i32, i32) {
    %c0_i32 = arith.constant 0 : i32
    %c0_i32_0 = arith.constant 0 : i32
    %c0_i32_1 = arith.constant 0 : i32
    return %c0_i32, %c0_i32_0 : i32, i32
  }
  func.func @transform_11(%arg0: i32) -> (i32, i32) {
    %c0_i32 = arith.constant 0 : i32
    %c0_i32_0 = arith.constant 0 : i32
    %c0_i32_1 = arith.constant 0 : i32
    return %c0_i32, %c0_i32_0 : i32, i32
  }
}

</mosaic_0001>

<llo_original>
// kernel: _forward_padded.1
$region0: #{_forward_padded.1}
  #allocation0 [shape = 'u32[]', space=smem, size = 0x4, offset = 0x4, fixed_abs, tag = 'smem constant byte address 0x4 - core index']
  #allocation1 [shape = 'u32[144,128]{1,0:T(1,128)}', space=vmem, size = 0x12000, scoped, tag = 'internal scratch']
  #allocation2 [shape = 'f32[64,128]{1,0:T(8,128)}', space=vmem, size = 0x8000, scoped, tag = 'scratch operand']
  %s0 = inlined_call_operand.vmem [shape: f32[64,128], index: 0, kind: input, shape index: {}]
  %s1 = inlined_call_operand.hbm [shape: f32[256,128], index: 1, kind: input, shape index: {}]
  %s2 = inlined_call_operand.vmem [shape: f32[1,128], index: 2, kind: input, shape index: {}]
  %s3 = inlined_call_operand.hbm [shape: f32[256,128], index: 3, kind: input, shape index: {}]
  %s4 = inlined_call_operand.vmem [shape: f32[1,128], index: 4, kind: input, shape index: {}]
  %s5 = inlined_call_operand.hbm [shape: f32[256,128], index: 5, kind: input, shape index: {}]
  %s6 = inlined_call_operand.vmem [shape: f32[1,128], index: 6, kind: input, shape index: {}]
  %s7 = inlined_call_operand.hbm [shape: f32[256,128], index: 7, kind: input, shape index: {}]
  %s8 = inlined_call_operand.vmem [shape: f32[1,128], index: 8, kind: input, shape index: {}]
  %s9 = inlined_call_operand.vmem [shape: f32[128,128], index: 9, kind: input, shape index: {}]
  %s10 = inlined_call_operand.vmem [shape: f32[1,128], index: 10, kind: input, shape index: {}]
  %s11 = inlined_call_operand.vmem [shape: f32[64,128], index: 11, kind: output, shape index: {}]
  %s12 = sld [smem:[#allocation0]]
  $region70: #{_forward_padded.1} parent=0
    _
  %s14 = ssub.s32 1, %s12
  %s15 = scalar_select 0, %s14, %s12
  $region1: #{_forward_padded.1} parent=0
    #allocation3 [shape = 'u8[131072]{0}', space=vmem, size = 0x20000, scoped, tag = 'input window, operand 1, single buffered']
    #allocation4 [shape = 's32[1]{0}', space=sflag, size = 0x4, scoped, tag = 'scoped memory for _forward_padded.1']
    #allocation5 [shape = 'u8[131072]{0}', space=vmem, size = 0x20000, scoped, tag = 'input window, operand 3, single buffered']
    #allocation6 [shape = 's32[1]{0}', space=sflag, size = 0x4, scoped, tag = 'scoped memory for _forward_padded.1']
    #allocation7 [shape = 'u8[131072]{0}', space=vmem, size = 0x20000, scoped, tag = 'input window, operand 5, single buffered']
    #allocation8 [shape = 'u8[131072]{0}', space=vmem, size = 0x20000, scoped, tag = 'input window, operand 7, single buffered']
    #allocation9 [shape = 's32[1]{0}', space=sflag, size = 0x4, scoped, tag = 'scoped memory for _forward_padded.1']
    %16 = vsyncpa [#allocation4], 0
    %17 = vsyncpa [#allocation6], 0
    %18 = vsyncpa [#allocation9], 0
    // Predicated region
    $region2: #{_forward_padded.1} parent=1 // pred_check
      _
    $region3: #{_forward_padded.1} parent=1 // pred_check_branch
      %20 = sbr.rel (0) target = $region5
    $region4: #{_forward_padded.1} parent=1 // pred_region
      _
    $region5: #{_forward_padded.1} parent=1 // pred_fallthru
      _
    // Predicated region
    $region6: #{_forward_padded.1} parent=1 // pred_check
      _
    $region7: #{_forward_padded.1} parent=1 // pred_check_branch
      %22 = sbr.rel (0) target = $region9
    $region8: #{_forward_padded.1} parent=1 // pred_region
      %s24 = ssub.s32 4096, 4096
      %25 = vsyncadd [#allocation4], %s24
      %s26 = sshll.u32 [#allocation3], 4
      %s27 = int_to_ptr.vmem [resolvable:$true] %s26
      %32 = dma.hbm_to_vmem [thread:$0]  %s1, 4096, %s27, [#allocation4], 128, 128, 8
    $region9: #{_forward_padded.1} parent=1 // pred_fallthru
      _
    // Predicated region
    $region10: #{_forward_padded.1} parent=1 // pred_check
      _
    $region11: #{_forward_padded.1} parent=1 // pred_check_branch
      %34 = sbr.rel (0) target = $region13
    $region12: #{_forward_padded.1} parent=1 // pred_region
      _
    $region13: #{_forward_padded.1} parent=1 // pred_fallthru
      _
    // Predicated region
    $region14: #{_forward_padded.1} parent=1 // pred_check
      _
    $region15: #{_forward_padded.1} parent=1 // pred_check_branch
      %36 = sbr.rel (0) target = $region17
    $region16: #{_forward_padded.1} parent=1 // pred_region
      %s38 = ssub.s32 4096, 4096
      %39 = vsyncadd [#allocation6], %s38
      %s40 = sshll.u32 [#allocation5], 4
      %s41 = int_to_ptr.vmem [resolvable:$true] %s40
      %46 = dma.hbm_to_vmem [thread:$0]  %s3, 4096, %s41, [#allocation6], 128, 128, 8
    $region17: #{_forward_padded.1} parent=1 // pred_fallthru
      _
    // Predicated region
    $region18: #{_forward_padded.1} parent=1 // pred_check
      _
    $region19: #{_forward_padded.1} parent=1 // pred_check_branch
      %48 = sbr.rel (0) target = $region21
    $region20: #{_forward_padded.1} parent=1 // pred_region
      _
    $region21: #{_forward_padded.1} parent=1 // pred_fallthru
      _
    // Predicated region
    $region22: #{_forward_padded.1} parent=1 // pred_check
      _
    $region23: #{_forward_padded.1} parent=1 // pred_check_branch
      %50 = sbr.rel (0) target = $region25
    $region24: #{_forward_padded.1} parent=1 // pred_region
      %s52 = ssub.s32 4096, 4096
      %53 = vsyncadd [#allocation6], %s52
      %s54 = sshll.u32 [#allocation7], 4
      %s55 = int_to_ptr.vmem [resolvable:$true] %s54
      %60 = dma.hbm_to_vmem [thread:$0]  %s5, 4096, %s55, [#allocation6], 128, 128, 8
    $region25: #{_forward_padded.1} parent=1 // pred_fallthru
      _
    // Predicated region
    $region26: #{_forward_padded.1} parent=1 // pred_check
      _
    $region27: #{_forward_padded.1} parent=1 // pred_check_branch
      %62 = sbr.rel (0) target = $region29
    $region28: #{_forward_padded.1} parent=1 // pred_region
      _
    $region29: #{_forward_padded.1} parent=1 // pred_fallthru
      _
    // Predicated region
    $region30: #{_forward_padded.1} parent=1 // pred_check
      _
    $region31: #{_forward_padded.1} parent=1 // pred_check_branch
      %64 = sbr.rel (0) target = $region33
    $region32: #{_forward_padded.1} parent=1 // pred_region
      %s66 = ssub.s32 4096, 4096
      %67 = vsyncadd [#allocation9], %s66
      %s68 = sshll.u32 [#allocation8], 4
      %s69 = int_to_ptr.vmem [resolvable:$true] %s68
      %74 = dma.hbm_to_vmem [thread:$0]  %s7, 4096, %s69, [#allocation9], 128, 128, 8
    $region33: #{_forward_padded.1} parent=1 // pred_fallthru
      _
    // Predicated region
    $region34: #{_forward_padded.1} parent=1 // pred_check
      _
    $region35: #{_forward_padded.1} parent=1 // pred_check_branch
      %76 = sbr.rel (0) target = $region37
    $region36: #{_forward_padded.1} parent=1 // pred_region
      _
    $region37: #{_forward_padded.1} parent=1 // pred_fallthru
      _
    // Predicated region
    $region38: #{_forward_padded.1} parent=1 // pred_check
      _
    $region39: #{_forward_padded.1} parent=1 // pred_check_branch
      %78 = sbr.rel (0) target = $region41
    $region40: #{_forward_padded.1} parent=1 // pred_region
      _
    $region41: #{_forward_padded.1} parent=1 // pred_fallthru
      _
    // Predicated region
    $region42: #{_forward_padded.1} parent=1 // pred_check
      _
    $region43: #{_forward_padded.1} parent=1 // pred_check_branch
      %80 = sbr.rel (0) target = $region45
    $region44: #{_forward_padded.1} parent=1 // pred_region
      _
    $region45: #{_forward_padded.1} parent=1 // pred_fallthru
      _
    // Predicated region
    $region46: #{_forward_padded.1} parent=1 // pred_check
      _
    $region47: #{_forward_padded.1} parent=1 // pred_check_branch
      %82 = sbr.rel (0) target = $region49
    $region48: #{_forward_padded.1} parent=1 // pred_region
      %83 = dma.done [#allocation4], 4096
    $region49: #{_forward_padded.1} parent=1 // pred_fallthru
      _
    // Predicated region
    $region50: #{_forward_padded.1} parent=1 // pred_check
      _
    $region51: #{_forward_padded.1} parent=1 // pred_check_branch
      %85 = sbr.rel (0) target = $region53
    $region52: #{_forward_padded.1} parent=1 // pred_region
      %86 = dma.done [#allocation6], 4096
    $region53: #{_forward_padded.1} parent=1 // pred_fallthru
      _
    // Predicated region
    $region54: #{_forward_padded.1} parent=1 // pred_check
      _
    $region55: #{_forward_padded.1} parent=1 // pred_check_branch
      %88 = sbr.rel (0) target = $region57
    $region56: #{_forward_padded.1} parent=1 // pred_region
      %89 = dma.done [#allocation6], 4096
    $region57: #{_forward_padded.1} parent=1 // pred_fallthru
      _
    // Predicated region
    $region58: #{_forward_padded.1} parent=1 // pred_check
      _
    $region59: #{_forward_padded.1} parent=1 // pred_check_branch
      %91 = sbr.rel (0) target = $region61
    $region60: #{_forward_padded.1} parent=1 // pred_region
      %92 = dma.done [#allocation9], 4096
    $region61: #{_forward_padded.1} parent=1 // pred_fallthru
      _
    %v93 = vld [vmem:[%s2] sm:$0x1]
    %v95 = vlaneseq
    %v96 = vshrl.u32 %v95, 7
    %v97 = vsub.s32 0, %v96
    %v98 = vrot.slane %v93, %v97
    %v100 = vld [vmem:[%s4] sm:$0x1]
    %v102 = vlaneseq
    %v103 = vshrl.u32 %v102, 7
    %v104 = vsub.s32 0, %v103
    %v105 = vrot.slane %v100, %v104
    %v107 = vld [vmem:[%s6] sm:$0x1]
    %v109 = vlaneseq
    %v110 = vshrl.u32 %v109, 7
    %v111 = vsub.s32 0, %v110
    %v112 = vrot.slane %v107, %v111
    %v114 = vld [vmem:[%s8] sm:$0x1]
    %v116 = vlaneseq
    %v117 = vshrl.u32 %v116, 7
    %v118 = vsub.s32 0, %v117
    %v119 = vrot.slane %v114, %v118
    %v121 = vlaneseq
    %v122 = vand.u32 %v121, 127
    %vm123 = vcmp.lt.s32.totalorder %v122, 16
    %vm124 = vcmp.lt.s32.totalorder %v122, 8
    %v125 = vld [vmem:[%s0] sm:$0xff]
    %v126 = vld [vmem:[#allocation3] sm:$0xff]
    %v127 = vld [vmem:[#allocation3 + $0x8] sm:$0xff]
    %v128 = vld [vmem:[#allocation3 + $0x10] sm:$0xff]
    %v129 = vld [vmem:[#allocation3 + $0x18] sm:$0xff]
    %v130 = vld [vmem:[#allocation3 + $0x20] sm:$0xff]
    %v131 = vld [vmem:[#allocation3 + $0x28] sm:$0xff]
    %v132 = vld [vmem:[#allocation3 + $0x30] sm:$0xff]
    %v133 = vld [vmem:[#allocation3 + $0x38] sm:$0xff]
    %v134 = vld [vmem:[#allocation3 + $0x40] sm:$0xff]
    %v135 = vld [vmem:[#allocation3 + $0x48] sm:$0xff]
    %v136 = vld [vmem:[#allocation3 + $0x50] sm:$0xff]
    %v137 = vld [vmem:[#allocation3 + $0x58] sm:$0xff]
    %v138 = vld [vmem:[#allocation3 + $0x60] sm:$0xff]
    %v139 = vld [vmem:[#allocation3 + $0x68] sm:$0xff]
    %v140 = vld [vmem:[#allocation3 + $0x70] sm:$0xff]
    %v141 = vld [vmem:[#allocation3 + $0x78] sm:$0xff]
    %v142 = vld [vmem:[#allocation3 + $0x80] sm:$0xff]
    %v143 = vld [vmem:[#allocation3 + $0x88] sm:$0xff]
    %v144 = vld [vmem:[#allocation3 + $0x90] sm:$0xff]
    %v145 = vld [vmem:[#allocation3 + $0x98] sm:$0xff]
    %v146 = vld [vmem:[#allocation3 + $0xa0] sm:$0xff]
    %v147 = vld [vmem:[#allocation3 + $0xa8] sm:$0xff]
    %v148 = vld [vmem:[#allocation3 + $0xb0] sm:$0xff]
    %v149 = vld [vmem:[#allocation3 + $0xb8] sm:$0xff]
    %v150 = vld [vmem:[#allocation3 + $0xc0] sm:$0xff]
    %v151 = vld [vmem:[#allocation3 + $0xc8] sm:$0xff]
    %v152 = vld [vmem:[#allocation3 + $0xd0] sm:$0xff]
    %v153 = vld [vmem:[#allocation3 + $0xd8] sm:$0xff]
    %v154 = vld [vmem:[#allocation3 + $0xe0] sm:$0xff]
    %v155 = vld [vmem:[#allocation3 + $0xe8] sm:$0xff]
    %v156 = vld [vmem:[#allocation3 + $0xf0] sm:$0xff]
    %v157 = vld [vmem:[#allocation3 + $0xf8] sm:$0xff]
    %158 = vmatprep.subr.mxu0 0.0
    %159 = vmatpush1.msra.mxu0 %v126
    %160 = vmatprep.subr.mxu0 0.0
    %161 = vmatpush1.msra.mxu0 %v127
    %162 = vmatprep.subr.mxu0 0.0
    %163 = vmatpush1.msra.mxu0 %v128
    %164 = vmatprep.subr.mxu0 0.0
    %165 = vmatpush1.msra.mxu0 %v129
    %166 = vmatprep.subr.mxu0 0.0
    %167 = vmatpush1.msra.mxu0 %v130
    %168 = vmatprep.subr.mxu0 0.0
    %169 = vmatpush1.msra.mxu0 %v131
    %170 = vmatprep.subr.mxu0 0.0
    %171 = vmatpush1.msra.mxu0 %v132
    %172 = vmatprep.subr.mxu0 0.0
    %173 = vmatpush1.msra.mxu0 %v133
    %174 = vmatprep.subr.mxu0 0.0
    %175 = vmatpush1.msra.mxu0 %v134
    %176 = vmatprep.subr.mxu0 0.0
    %177 = vmatpush1.msra.mxu0 %v135
    %178 = vmatprep.subr.mxu0 0.0
    %179 = vmatpush1.msra.mxu0 %v136
    %180 = vmatprep.subr.mxu0 0.0
    %181 = vmatpush1.msra.mxu0 %v137
    %182 = vmatprep.subr.mxu0 0.0
    %183 = vmatpush1.msra.mxu0 %v138
    %184 = vmatprep.subr.mxu0 0.0
    %185 = vmatpush1.msra.mxu0 %v139
    %186 = vmatprep.subr.mxu0 0.0
    %187 = vmatpush1.msra.mxu0 %v140
    %188 = vmatprep.subr.mxu0 0.0
    %189 = vmatpush1.msra.mxu0 %v141
    %190 = vmatprep.subr.mxu0 0.0
    %191 = vmatpush1.msra.mxu0 %v142
    %192 = vmatprep.subr.mxu0 0.0
    %193 = vmatpush1.msra.mxu0 %v143
    %194 = vmatprep.subr.mxu0 0.0
    %195 = vmatpush1.msra.mxu0 %v144
    %196 = vmatprep.subr.mxu0 0.0
    %197 = vmatpush1.msra.mxu0 %v145
    %198 = vmatprep.subr.mxu0 0.0
    %199 = vmatpush1.msra.mxu0 %v146
    %200 = vmatprep.subr.mxu0 0.0
    %201 = vmatpush1.msra.mxu0 %v147
    %202 = vmatprep.subr.mxu0 0.0
    %203 = vmatpush1.msra.mxu0 %v148
    %204 = vmatprep.subr.mxu0 0.0
    %205 = vmatpush1.msra.mxu0 %v149
    %206 = vmatprep.subr.mxu0 0.0
    %207 = vmatpush1.msra.mxu0 %v150
    %208 = vmatprep.subr.mxu0 0.0
    %209 = vmatpush1.msra.mxu0 %v151
    %210 = vmatprep.subr.mxu0 0.0
    %211 = vmatpush1.msra.mxu0 %v152
    %212 = vmatprep.subr.mxu0 0.0
    %213 = vmatpush1.msra.mxu0 %v153
    %214 = vmatprep.subr.mxu0 0.0
    %215 = vmatpush1.msra.mxu0 %v154
    %216 = vmatprep.subr.mxu0 0.0
    %217 = vmatpush1.msra.mxu0 %v155
    %218 = vmatprep.subr.mxu0 0.0
    %219 = vmatpush1.msra.mxu0 %v156
    %220 = vmatprep.subr.mxu0 0.0
    %221 = vmatpush1.msra.mxu0 %v157
    %222 = vmatprep.mubr.f32.mxu0 0.0
    %223 = vmatmul.mubr.f32.gmra.mrb[0].mxu0 %v125
    %v224 = vpop.f32.mrb[0].mxu0
    %v225 = vadd.f32 %v98, %v224
    %v226 = vpop.f32.mrb[0].mxu0
    %227 = vdwg.mxu0
    %v228 = vmul.f32 %v225, 0.5
    %v229 = vtanh.pop %v228
    %v230 = vmul.f32 %v229, 0.5
    %v231 = vadd.f32 %v230, 0.5
    %232 = vrot.lane.b32.xlu0 %v225, 112
    %v233 = vpop.permute.xlu0 %232
    %v234 = vmul.f32 %v233, 0.5
    %v235 = vtanh.pop %v234
    %v236 = vmul.f32 %v235, 0.5
    %v237 = vadd.f32 %v236, 0.5
    %238 = vrot.lane.b32.xlu0 %v225, 96
    %v239 = vpop.permute.xlu0 %238
    %v240 = vtanh.pop %v239
    %241 = vrot.lane.b32.xlu0 %v225, 80
    %v242 = vpop.permute.xlu0 %241
    %v243 = vmul.f32 %v242, 0.5
    %v244 = vtanh.pop %v243
    %v245 = vmul.f32 %v244, 0.5
    %v246 = vadd.f32 %v245, 0.5
    %v247 = vmul.f32 %v237, 0.0
    %v248 = vmul.f32 %v231, %v240
    %v249 = vadd.f32 %v247, %v248
    %v250 = vtanh.pop %v249
    %v251 = vmul.f32 %v246, %v250
    %v252 = vsel %vm123, %v251, 0.0
    %v253 = vld [vmem:[%s0 + $0x8] sm:$0xff]
    %254 = vmatprep.subr.mxu0 0.0
    %255 = vmatpush1.msra.mxu0 %v126
    %256 = vmatprep.subr.mxu0 0.0
    %257 = vmatpush1.msra.mxu0 %v127
    %258 = vmatprep.subr.mxu0 0.0
    %259 = vmatpush1.msra.mxu0 %v128
    %260 = vmatprep.subr.mxu0 0.0
    %261 = vmatpush1.msra.mxu0 %v129
    %262 = vmatprep.subr.mxu0 0.0
    %263 = vmatpush1.msra.mxu0 %v130
    %264 = vmatprep.subr.mxu0 0.0
    %265 = vmatpush1.msra.mxu0 %v131
    %266 = vmatprep.subr.mxu0 0.0
    %267 = vmatpush1.msra.mxu0 %v132
    %268 = vmatprep.subr.mxu0 0.0
    %269 = vmatpush1.msra.mxu0 %v133
    %270 = vmatprep.subr.mxu0 0.0
    %271 = vmatpush1.msra.mxu0 %v134
    %272 = vmatprep.subr.mxu0 0.0
    %273 = vmatpush1.msra.mxu0 %v135
    %274 = vmatprep.subr.mxu0 0.0
    %275 = vmatpush1.msra.mxu0 %v136
    %276 = vmatprep.subr.mxu0 0.0
    %277 = vmatpush1.msra.mxu0 %v137
    %278 = vmatprep.subr.mxu0 0.0
    %279 = vmatpush1.msra.mxu0 %v138
    %280 = vmatprep.subr.mxu0 0.0
    %281 = vmatpush1.msra.mxu0 %v139
    %282 = vmatprep.subr.mxu0 0.0
    %283 = vmatpush1.msra.mxu0 %v140
    %284 = vmatprep.subr.mxu0 0.0
    %285 = vmatpush1.msra.mxu0 %v141
    %286 = vmatprep.subr.mxu0 0.0
    %287 = vmatpush1.msra.mxu0 %v142
    %288 = vmatprep.subr.mxu0 0.0
    %289 = vmatpush1.msra.mxu0 %v143
    %290 = vmatprep.subr.mxu0 0.0
    %291 = vmatpush1.msra.mxu0 %v144
    %292 = vmatprep.subr.mxu0 0.0
    %293 = vmatpush1.msra.mxu0 %v145
    %294 = vmatprep.subr.mxu0 0.0
    %295 = vmatpush1.msra.mxu0 %v146
    %296 = vmatprep.subr.mxu0 0.0
    %297 = vmatpush1.msra.mxu0 %v147
    %298 = vmatprep.subr.mxu0 0.0
    %299 = vmatpush1.msra.mxu0 %v148
    %300 = vmatprep.subr.mxu0 0.0
    %301 = vmatpush1.msra.mxu0 %v149
    %302 = vmatprep.subr.mxu0 0.0
    %303 = vmatpush1.msra.mxu0 %v150
    %304 = vmatprep.subr.mxu0 0.0
    %305 = vmatpush1.msra.mxu0 %v151
    %306 = vmatprep.subr.mxu0 0.0
    %307 = vmatpush1.msra.mxu0 %v152
    %308 = vmatprep.subr.mxu0 0.0
    %309 = vmatpush1.msra.mxu0 %v153
    %310 = vmatprep.subr.mxu0 0.0
    %311 = vmatpush1.msra.mxu0 %v154
    %312 = vmatprep.subr.mxu0 0.0
    %313 = vmatpush1.msra.mxu0 %v155
    %314 = vmatprep.subr.mxu0 0.0
    %315 = vmatpush1.msra.mxu0 %v156
    %316 = vmatprep.subr.mxu0 0.0
    %317 = vmatpush1.msra.mxu0 %v157
    %318 = vmatprep.mubr.f32.mxu0 %v252
    %319 = vmatmul.mubr.f32.gmra.mrb[0].mxu0 %v253
    %v320 = vpop.f32.mrb[0].mxu0
    %v321 = vadd.f32 %v98, %v320
    %v322 = vpop.f32.mrb[0].mxu0
    %323 = vdwg.mxu0
    %v324 = vmul.f32 %v321, 0.5
    %v325 = vtanh.pop %v324
    %v326 = vmul.f32 %v325, 0.5
    %v327 = vadd.f32 %v326, 0.5
    %328 = vrot.lane.b32.xlu0 %v321, 112
    %v329 = vpop.permute.xlu0 %328
    %v330 = vmul.f32 %v329, 0.5
    %v331 = vtanh.pop %v330
    %v332 = vmul.f32 %v331, 0.5
    %v333 = vadd.f32 %v332, 0.5
    %334 = vrot.lane.b32.xlu0 %v321, 96
    %v335 = vpop.permute.xlu0 %334
    %v336 = vtanh.pop %v335
    %337 = vrot.lane.b32.xlu0 %v321, 80
    %v338 = vpop.permute.xlu0 %337
    %v339 = vmul.f32 %v338, 0.5
    %v340 = vtanh.pop %v339
    %v341 = vmul.f32 %v340, 0.5
    %v342 = vadd.f32 %v341, 0.5
    %v343 = vmul.f32 %v333, %v249
    %v344 = vmul.f32 %v327, %v336
    %v345 = vadd.f32 %v343, %v344
    %v346 = vtanh.pop %v345
    %v347 = vmul.f32 %v342, %v346
    %v348 = vsel %vm123, %v347, 0.0
    %v349 = vld [vmem:[#allocation5] sm:$0xff]
    %v350 = vld [vmem:[#allocation5 + $0x8] sm:$0xff]
    %v351 = vld [vmem:[#allocation5 + $0x10] sm:$0xff]
    %v352 = vld [vmem:[#allocation5 + $0x18] sm:$0xff]
    %v353 = vld [vmem:[#allocation5 + $0x20] sm:$0xff]
    %v354 = vld [vmem:[#allocation5 + $0x28] sm:$0xff]
    %v355 = vld [vmem:[#allocation5 + $0x30] sm:$0xff]
    %v356 = vld [vmem:[#allocation5 + $0x38] sm:$0xff]
    %v357 = vld [vmem:[#allocation5 + $0x40] sm:$0xff]
    %v358 = vld [vmem:[#allocation5 + $0x48] sm:$0xff]
    %v359 = vld [vmem:[#allocation5 + $0x50] sm:$0xff]
    %v360 = vld [vmem:[#allocation5 + $0x58] sm:$0xff]
    %v361 = vld [vmem:[#allocation5 + $0x60] sm:$0xff]
    %v362 = vld [vmem:[#allocation5 + $0x68] sm:$0xff]
    %v363 = vld [vmem:[#allocation5 + $0x70] sm:$0xff]
    %v364 = vld [vmem:[#allocation5 + $0x78] sm:$0xff]
    %v365 = vld [vmem:[#allocation5 + $0x80] sm:$0xff]
    %v366 = vld [vmem:[#allocation5 + $0x88] sm:$0xff]
    %v367 = vld [vmem:[#allocation5 + $0x90] sm:$0xff]
    %v368 = vld [vmem:[#allocation5 + $0x98] sm:$0xff]
    %v369 = vld [vmem:[#allocation5 + $0xa0] sm:$0xff]
    %v370 = vld [vmem:[#allocation5 + $0xa8] sm:$0xff]
    %v371 = vld [vmem:[#allocation5 + $0xb0] sm:$0xff]
    %v372 = vld [vmem:[#allocation5 + $0xb8] sm:$0xff]
    %v373 = vld [vmem:[#allocation5 + $0xc0] sm:$0xff]
    %v374 = vld [vmem:[#allocation5 + $0xc8] sm:$0xff]
    %v375 = vld [vmem:[#allocation5 + $0xd0] sm:$0xff]
    %v376 = vld [vmem:[#allocation5 + $0xd8] sm:$0xff]
    %v377 = vld [vmem:[#allocation5 + $0xe0] sm:$0xff]
    %v378 = vld [vmem:[#allocation5 + $0xe8] sm:$0xff]
    %v379 = vld [vmem:[#allocation5 + $0xf0] sm:$0xff]
    %v380 = vld [vmem:[#allocation5 + $0xf8] sm:$0xff]
    %381 = vmatprep.subr.mxu0 0.0
    %382 = vmatpush1.msra.mxu0 %v349
    %383 = vmatprep.subr.mxu0 0.0
    %384 = vmatpush1.msra.mxu0 %v350
    %385 = vmatprep.subr.mxu0 0.0
    %386 = vmatpush1.msra.mxu0 %v351
    %387 = vmatprep.subr.mxu0 0.0
    %388 = vmatpush1.msra.mxu0 %v352
    %389 = vmatprep.subr.mxu0 0.0
    %390 = vmatpush1.msra.mxu0 %v353
    %391 = vmatprep.subr.mxu0 0.0
    %392 = vmatpush1.msra.mxu0 %v354
    %393 = vmatprep.subr.mxu0 0.0
    %394 = vmatpush1.msra.mxu0 %v355
    %395 = vmatprep.subr.mxu0 0.0
    %396 = vmatpush1.msra.mxu0 %v356
    %397 = vmatprep.subr.mxu0 0.0
    %398 = vmatpush1.msra.mxu0 %v357
    %399 = vmatprep.subr.mxu0 0.0
    %400 = vmatpush1.msra.mxu0 %v358
    %401 = vmatprep.subr.mxu0 0.0
    %402 = vmatpush1.msra.mxu0 %v359
    %403 = vmatprep.subr.mxu0 0.0
    %404 = vmatpush1.msra.mxu0 %v360
    %405 = vmatprep.subr.mxu0 0.0
    %406 = vmatpush1.msra.mxu0 %v361
    %407 = vmatprep.subr.mxu0 0.0
    %408 = vmatpush1.msra.mxu0 %v362
    %409 = vmatprep.subr.mxu0 0.0
    %410 = vmatpush1.msra.mxu0 %v363
    %411 = vmatprep.subr.mxu0 0.0
    %412 = vmatpush1.msra.mxu0 %v364
    %413 = vmatprep.subr.mxu0 0.0
    %414 = vmatpush1.msra.mxu0 %v365
    %415 = vmatprep.subr.mxu0 0.0
    %416 = vmatpush1.msra.mxu0 %v366
    %417 = vmatprep.subr.mxu0 0.0
    %418 = vmatpush1.msra.mxu0 %v367
    %419 = vmatprep.subr.mxu0 0.0
    %420 = vmatpush1.msra.mxu0 %v368
    %421 = vmatprep.subr.mxu0 0.0
    %422 = vmatpush1.msra.mxu0 %v369
    %423 = vmatprep.subr.mxu0 0.0
    %424 = vmatpush1.msra.mxu0 %v370
    %425 = vmatprep.subr.mxu0 0.0
    %426 = vmatpush1.msra.mxu0 %v371
    %427 = vmatprep.subr.mxu0 0.0
    %428 = vmatpush1.msra.mxu0 %v372
    %429 = vmatprep.subr.mxu0 0.0
    %430 = vmatpush1.msra.mxu0 %v373
    %431 = vmatprep.subr.mxu0 0.0
    %432 = vmatpush1.msra.mxu0 %v374
    %433 = vmatprep.subr.mxu0 0.0
    %434 = vmatpush1.msra.mxu0 %v375
    %435 = vmatprep.subr.mxu0 0.0
    %436 = vmatpush1.msra.mxu0 %v376
    %437 = vmatprep.subr.mxu0 0.0
    %438 = vmatpush1.msra.mxu0 %v377
    %439 = vmatprep.subr.mxu0 0.0
    %440 = vmatpush1.msra.mxu0 %v378
    %441 = vmatprep.subr.mxu0 0.0
    %442 = vmatpush1.msra.mxu0 %v379
    %443 = vmatprep.subr.mxu0 0.0
    %444 = vmatpush1.msra.mxu0 %v380
    %445 = vmatprep.mubr.f32.mxu0 0.0
    %446 = vmatmul.mubr.f32.gmra.mrb[0].mxu0 %v252
    %v447 = vpop.f32.mrb[0].mxu0
    %v448 = vadd.f32 %v105, %v447
    %v449 = vpop.f32.mrb[0].mxu0
    %450 = vdwg.mxu0
    %v451 = vmul.f32 %v448, 0.5
    %v452 = vtanh.pop %v451
    %v453 = vmul.f32 %v452, 0.5
    %v454 = vadd.f32 %v453, 0.5
    %455 = vrot.lane.b32.xlu0 %v448, 120
    %v456 = vpop.permute.xlu0 %455
    %v457 = vmul.f32 %v456, 0.5
    %v458 = vtanh.pop %v457
    %v459 = vmul.f32 %v458, 0.5
    %v460 = vadd.f32 %v459, 0.5
    %461 = vrot.lane.b32.xlu0 %v448, 112
    %v462 = vpop.permute.xlu0 %461
    %v463 = vtanh.pop %v462
    %464 = vrot.lane.b32.xlu0 %v448, 104
    %v465 = vpop.permute.xlu0 %464
    %v466 = vmul.f32 %v465, 0.5
    %v467 = vtanh.pop %v466
    %v468 = vmul.f32 %v467, 0.5
    %v469 = vadd.f32 %v468, 0.5
    %v470 = vmul.f32 %v460, 0.0
    %v471 = vmul.f32 %v454, %v463
    %v472 = vadd.f32 %v470, %v471
    %v473 = vtanh.pop %v472
    %v474 = vmul.f32 %v469, %v473
    %v475 = vsel %vm124, %v474, 0.0
    %v476 = vld [vmem:[%s0 + $0x10] sm:$0xff]
    %477 = vmatprep.subr.mxu0 0.0
    %478 = vmatpush1.msra.mxu0 %v126
    %479 = vmatprep.subr.mxu0 0.0
    %480 = vmatpush1.msra.mxu0 %v127
    %481 = vmatprep.subr.mxu0 0.0
    %482 = vmatpush1.msra.mxu0 %v128
    %483 = vmatprep.subr.mxu0 0.0
    %484 = vmatpush1.msra.mxu0 %v129
    %485 = vmatprep.subr.mxu0 0.0
    %486 = vmatpush1.msra.mxu0 %v130
    %487 = vmatprep.subr.mxu0 0.0
    %488 = vmatpush1.msra.mxu0 %v131
    %489 = vmatprep.subr.mxu0 0.0
    %490 = vmatpush1.msra.mxu0 %v132
    %491 = vmatprep.subr.mxu0 0.0
    %492 = vmatpush1.msra.mxu0 %v133
    %493 = vmatprep.subr.mxu0 0.0
    %494 = vmatpush1.msra.mxu0 %v134
    %495 = vmatprep.subr.mxu0 0.0
    %496 = vmatpush1.msra.mxu0 %v135
    %497 = vmatprep.subr.mxu0 0.0
    %498 = vmatpush1.msra.mxu0 %v136
    %499 = vmatprep.subr.mxu0 0.0
    %500 = vmatpush1.msra.mxu0 %v137
    %501 = vmatprep.subr.mxu0 0.0
    %502 = vmatpush1.msra.mxu0 %v138
    %503 = vmatprep.subr.mxu0 0.0
    %504 = vmatpush1.msra.mxu0 %v139
    %505 = vmatprep.subr.mxu0 0.0
    %506 = vmatpush1.msra.mxu0 %v140
    %507 = vmatprep.subr.mxu0 0.0
    %508 = vmatpush1.msra.mxu0 %v141
    %509 = vmatprep.subr.mxu0 0.0
    %510 = vmatpush1.msra.mxu0 %v142
    %511 = vmatprep.subr.mxu0 0.0
    %512 = vmatpush1.msra.mxu0 %v143
    %513 = vmatprep.subr.mxu0 0.0
    %514 = vmatpush1.msra.mxu0 %v144
    %515 = vmatprep.subr.mxu0 0.0
    %516 = vmatpush1.msra.mxu0 %v145
    %517 = vmatprep.subr.mxu0 0.0
    %518 = vmatpush1.msra.mxu0 %v146
    %519 = vmatprep.subr.mxu0 0.0
    %520 = vmatpush1.msra.mxu0 %v147
    %521 = vmatprep.subr.mxu0 0.0
    %522 = vmatpush1.msra.mxu0 %v148
    %523 = vmatprep.subr.mxu0 0.0
    %524 = vmatpush1.msra.mxu0 %v149
    %525 = vmatprep.subr.mxu0 0.0
    %526 = vmatpush1.msra.mxu0 %v150
    %527 = vmatprep.subr.mxu0 0.0
    %528 = vmatpush1.msra.mxu0 %v151
    %529 = vmatprep.subr.mxu0 0.0
    %530 = vmatpush1.msra.mxu0 %v152
    %531 = vmatprep.subr.mxu0 0.0
    %532 = vmatpush1.msra.mxu0 %v153
    %533 = vmatprep.subr.mxu0 0.0
    %534 = vmatpush1.msra.mxu0 %v154
    %535 = vmatprep.subr.mxu0 0.0
    %536 = vmatpush1.msra.mxu0 %v155
    %537 = vmatprep.subr.mxu0 0.0
    %538 = vmatpush1.msra.mxu0 %v156
    %539 = vmatprep.subr.mxu0 0.0
    %540 = vmatpush1.msra.mxu0 %v157
    %541 = vmatprep.mubr.f32.mxu0 %v348
    %542 = vmatmul.mubr.f32.gmra.mrb[0].mxu0 %v476
    %v543 = vpop.f32.mrb[0].mxu0
    %v544 = vadd.f32 %v98, %v543
    %v545 = vpop.f32.mrb[0].mxu0
    %546 = vdwg.mxu0
    %v547 = vmul.f32 %v544, 0.5
    %v548 = vtanh.pop %v547
    %v549 = vmul.f32 %v548, 0.5
    %v550 = vadd.f32 %v549, 0.5
    %551 = vrot.lane.b32.xlu0 %v544, 112
    %v552 = vpop.permute.xlu0 %551
    %v553 = vmul.f32 %v552, 0.5
    %v554 = vtanh.pop %v553
    %v555 = vmul.f32 %v554, 0.5
    %v556 = vadd.f32 %v555, 0.5
    %557 = vrot.lane.b32.xlu0 %v544, 96
    %v558 = vpop.permute.xlu0 %557
    %v559 = vtanh.pop %v558
    %560 = vrot.lane.b32.xlu0 %v544, 80
    %v561 = vpop.permute.xlu0 %560
    %v562 = vmul.f32 %v561, 0.5
    %v563 = vtanh.pop %v562
    %v564 = vmul.f32 %v563, 0.5
    %v565 = vadd.f32 %v564, 0.5
    %v566 = vmul.f32 %v556, %v345
    %v567 = vmul.f32 %v550, %v559
    %v568 = vadd.f32 %v566, %v567
    %v569 = vtanh.pop %v568
    %v570 = vmul.f32 %v565, %v569
    %v571 = vsel %vm123, %v570, 0.0
    %572 = vmatprep.subr.mxu0 0.0
    %573 = vmatpush1.msra.mxu0 %v349
    %574 = vmatprep.subr.mxu0 0.0
    %575 = vmatpush1.msra.mxu0 %v350
    %576 = vmatprep.subr.mxu0 0.0
    %577 = vmatpush1.msra.mxu0 %v351
    %578 = vmatprep.subr.mxu0 0.0
    %579 = vmatpush1.msra.mxu0 %v352
    %580 = vmatprep.subr.mxu0 0.0
    %581 = vmatpush1.msra.mxu0 %v353
    %582 = vmatprep.subr.mxu0 0.0
    %583 = vmatpush1.msra.mxu0 %v354
    %584 = vmatprep.subr.mxu0 0.0
    %585 = vmatpush1.msra.mxu0 %v355
    %586 = vmatprep.subr.mxu0 0.0
    %587 = vmatpush1.msra.mxu0 %v356
    %588 = vmatprep.subr.mxu0 0.0
    %589 = vmatpush1.msra.mxu0 %v357
    %590 = vmatprep.subr.mxu0 0.0
    %591 = vmatpush1.msra.mxu0 %v358
    %592 = vmatprep.subr.mxu0 0.0
    %593 = vmatpush1.msra.mxu0 %v359
    %594 = vmatprep.subr.mxu0 0.0
    %595 = vmatpush1.msra.mxu0 %v360
    %596 = vmatprep.subr.mxu0 0.0
    %597 = vmatpush1.msra.mxu0 %v361
    %598 = vmatprep.subr.mxu0 0.0
    %599 = vmatpush1.msra.mxu0 %v362
    %600 = vmatprep.subr.mxu0 0.0
    %601 = vmatpush1.msra.mxu0 %v363
    %602 = vmatprep.subr.mxu0 0.0
    %603 = vmatpush1.msra.mxu0 %v364
    %604 = vmatprep.subr.mxu0 0.0
    %605 = vmatpush1.msra.mxu0 %v365
    %606 = vmatprep.subr.mxu0 0.0
    %607 = vmatpush1.msra.mxu0 %v366
    %608 = vmatprep.subr.mxu0 0.0
    %609 = vmatpush1.msra.mxu0 %v367
    %610 = vmatprep.subr.mxu0 0.0
    %611 = vmatpush1.msra.mxu0 %v368
    %612 = vmatprep.subr.mxu0 0.0
    %613 = vmatpush1.msra.mxu0 %v369
    %614 = vmatprep.subr.mxu0 0.0
    %615 = vmatpush1.msra.mxu0 %v370
    %616 = vmatprep.subr.mxu0 0.0
    %617 = vmatpush1.msra.mxu0 %v371
    %618 = vmatprep.subr.mxu0 0.0
    %619 = vmatpush1.msra.mxu0 %v372
    %620 = vmatprep.subr.mxu0 0.0
    %621 = vmatpush1.msra.mxu0 %v373
    %622 = vmatprep.subr.mxu0 0.0
    %623 = vmatpush1.msra.mxu0 %v374
    %624 = vmatprep.subr.mxu0 0.0
    %625 = vmatpush1.msra.mxu0 %v375
    %626 = vmatprep.subr.mxu0 0.0
    %627 = vmatpush1.msra.mxu0 %v376
    %628 = vmatprep.subr.mxu0 0.0
    %629 = vmatpush1.msra.mxu0 %v377
    %630 = vmatprep.subr.mxu0 0.0
    %631 = vmatpush1.msra.mxu0 %v378
    %632 = vmatprep.subr.mxu0 0.0
    %633 = vmatpush1.msra.mxu0 %v379
    %634 = vmatprep.subr.mxu0 0.0
    %635 = vmatpush1.msra.mxu0 %v380
    %636 = vmatprep.mubr.f32.mxu0 %v475
    %637 = vmatmul.mubr.f32.gmra.mrb[0].mxu0 %v348
    %v638 = vpop.f32.mrb[0].mxu0
    %v639 = vadd.f32 %v105, %v638
    %v640 = vpop.f32.mrb[0].mxu0
    %641 = vdwg.mxu0
    %v642 = vmul.f32 %v639, 0.5
    %v643 = vtanh.pop %v642
    %v644 = vmul.f32 %v643, 0.5
    %v645 = vadd.f32 %v644, 0.5
    %646 = vrot.lane.b32.xlu0 %v639, 120
    %v647 = vpop.permute.xlu0 %646
    %v648 = vmul.f32 %v647, 0.5
    %v649 = vtanh.pop %v648
    %v650 = vmul.f32 %v649, 0.5
    %v651 = vadd.f32 %v650, 0.5
    %652 = vrot.lane.b32.xlu0 %v639, 112
    %v653 = vpop.permute.xlu0 %652
    %v654 = vtanh.pop %v653
    %655 = vrot.lane.b32.xlu0 %v639, 104
    %v656 = vpop.permute.xlu0 %655
    %v657 = vmul.f32 %v656, 0.5
    %v658 = vtanh.pop %v657
    %v659 = vmul.f32 %v658, 0.5
    %v660 = vadd.f32 %v659, 0.5
    %v661 = vmul.f32 %v651, %v472
    %v662 = vmul.f32 %v645, %v654
    %v663 = vadd.f32 %v661, %v662
    %v664 = vtanh.pop %v663
    %v665 = vmul.f32 %v660, %v664
    %v666 = vsel %vm124, %v665, 0.0
    %v667 = vld [vmem:[#allocation7] sm:$0xff]
    %v668 = vld [vmem:[#allocation7 + $0x8] sm:$0xff]
    %v669 = vld [vmem:[#allocation7 + $0x10] sm:$0xff]
    %v670 = vld [vmem:[#allocation7 + $0x18] sm:$0xff]
    %v671 = vld [vmem:[#allocation7 + $0x20] sm:$0xff]
    %v672 = vld [vmem:[#allocation7 + $0x28] sm:$0xff]
    %v673 = vld [vmem:[#allocation7 + $0x30] sm:$0xff]
    %v674 = vld [vmem:[#allocation7 + $0x38] sm:$0xff]
    %v675 = vld [vmem:[#allocation7 + $0x40] sm:$0xff]
    %v676 = vld [vmem:[#allocation7 + $0x48] sm:$0xff]
    %v677 = vld [vmem:[#allocation7 + $0x50] sm:$0xff]
    %v678 = vld [vmem:[#allocation7 + $0x58] sm:$0xff]
    %v679 = vld [vmem:[#allocation7 + $0x60] sm:$0xff]
    %v680 = vld [vmem:[#allocation7 + $0x68] sm:$0xff]
    %v681 = vld [vmem:[#allocation7 + $0x70] sm:$0xff]
    %v682 = vld [vmem:[#allocation7 + $0x78] sm:$0xff]
    %v683 = vld [vmem:[#allocation7 + $0x80] sm:$0xff]
    %v684 = vld [vmem:[#allocation7 + $0x88] sm:$0xff]
    %v685 = vld [vmem:[#allocation7 + $0x90] sm:$0xff]
    %v686 = vld [vmem:[#allocation7 + $0x98] sm:$0xff]
    %v687 = vld [vmem:[#allocation7 + $0xa0] sm:$0xff]
    %v688 = vld [vmem:[#allocation7 + $0xa8] sm:$0xff]
    %v689 = vld [vmem:[#allocation7 + $0xb0] sm:$0xff]
    %v690 = vld [vmem:[#allocation7 + $0xb8] sm:$0xff]
    %v691 = vld [vmem:[#allocation7 + $0xc0] sm:$0xff]
    %v692 = vld [vmem:[#allocation7 + $0xc8] sm:$0xff]
    %v693 = vld [vmem:[#allocation7 + $0xd0] sm:$0xff]
    %v694 = vld [vmem:[#allocation7 + $0xd8] sm:$0xff]
    %v695 = vld [vmem:[#allocation7 + $0xe0] sm:$0xff]
    %v696 = vld [vmem:[#allocation7 + $0xe8] sm:$0xff]
    %v697 = vld [vmem:[#allocation7 + $0xf0] sm:$0xff]
    %v698 = vld [vmem:[#allocation7 + $0xf8] sm:$0xff]
    %699 = vmatprep.subr.mxu0 0.0
    %700 = vmatpush1.msra.mxu0 %v667
    %701 = vmatprep.subr.mxu0 0.0
    %702 = vmatpush1.msra.mxu0 %v668
    %703 = vmatprep.subr.mxu0 0.0
    %704 = vmatpush1.msra.mxu0 %v669
    %705 = vmatprep.subr.mxu0 0.0
    %706 = vmatpush1.msra.mxu0 %v670
    %707 = vmatprep.subr.mxu0 0.0
    %708 = vmatpush1.msra.mxu0 %v671
    %709 = vmatprep.subr.mxu0 0.0
    %710 = vmatpush1.msra.mxu0 %v672
    %711 = vmatprep.subr.mxu0 0.0
    %712 = vmatpush1.msra.mxu0 %v673
    %713 = vmatprep.subr.mxu0 0.0
    %714 = vmatpush1.msra.mxu0 %v674
    %715 = vmatprep.subr.mxu0 0.0
    %716 = vmatpush1.msra.mxu0 %v675
    %717 = vmatprep.subr.mxu0 0.0
    %718 = vmatpush1.msra.mxu0 %v676
    %719 = vmatprep.subr.mxu0 0.0
    %720 = vmatpush1.msra.mxu0 %v677
    %721 = vmatprep.subr.mxu0 0.0
    %722 = vmatpush1.msra.mxu0 %v678
    %723 = vmatprep.subr.mxu0 0.0
    %724 = vmatpush1.msra.mxu0 %v679
    %725 = vmatprep.subr.mxu0 0.0
    %726 = vmatpush1.msra.mxu0 %v680
    %727 = vmatprep.subr.mxu0 0.0
    %728 = vmatpush1.msra.mxu0 %v681
    %729 = vmatprep.subr.mxu0 0.0
    %730 = vmatpush1.msra.mxu0 %v682
    %731 = vmatprep.subr.mxu0 0.0
    %732 = vmatpush1.msra.mxu0 %v683
    %733 = vmatprep.subr.mxu0 0.0
    %734 = vmatpush1.msra.mxu0 %v684
    %735 = vmatprep.subr.mxu0 0.0
    %736 = vmatpush1.msra.mxu0 %v685
    %737 = vmatprep.subr.mxu0 0.0
    %738 = vmatpush1.msra.mxu0 %v686
    %739 = vmatprep.subr.mxu0 0.0
    %740 = vmatpush1.msra.mxu0 %v687
    %741 = vmatprep.subr.mxu0 0.0
    %742 = vmatpush1.msra.mxu0 %v688
    %743 = vmatprep.subr.mxu0 0.0
    %744 = vmatpush1.msra.mxu0 %v689
    %745 = vmatprep.subr.mxu0 0.0
    %746 = vmatpush1.msra.mxu0 %v690
    %747 = vmatprep.subr.mxu0 0.0
    %748 = vmatpush1.msra.mxu0 %v691
    %749 = vmatprep.subr.mxu0 0.0
    %750 = vmatpush1.msra.mxu0 %v692
    %751 = vmatprep.subr.mxu0 0.0
    %752 = vmatpush1.msra.mxu0 %v693
    %753 = vmatprep.subr.mxu0 0.0
    %754 = vmatpush1.msra.mxu0 %v694
    %755 = vmatprep.subr.mxu0 0.0
    %756 = vmatpush1.msra.mxu0 %v695
    %757 = vmatprep.subr.mxu0 0.0
    %758 = vmatpush1.msra.mxu0 %v696
    %759 = vmatprep.subr.mxu0 0.0
    %760 = vmatpush1.msra.mxu0 %v697
    %761 = vmatprep.subr.mxu0 0.0
    %762 = vmatpush1.msra.mxu0 %v698
    %763 = vmatprep.mubr.f32.mxu0 0.0
    %764 = vmatmul.mubr.f32.gmra.mrb[0].mxu0 %v475
    %v765 = vpop.f32.mrb[0].mxu0
    %v766 = vadd.f32 %v112, %v765
    %v767 = vpop.f32.mrb[0].mxu0
    %768 = vdwg.mxu0
    %v769 = vmul.f32 %v766, 0.5
    %v770 = vtanh.pop %v769
    %v771 = vmul.f32 %v770, 0.5
    %v772 = vadd.f32 %v771, 0.5
    %773 = vrot.lane.b32.xlu0 %v766, 120
    %v774 = vpop.permute.xlu0 %773
    %v775 = vmul.f32 %v774, 0.5
    %v776 = vtanh.pop %v775
    %v777 = vmul.f32 %v776, 0.5
    %v778 = vadd.f32 %v777, 0.5
    %779 = vrot.lane.b32.xlu0 %v766, 112
    %v780 = vpop.permute.xlu0 %779
    %v781 = vtanh.pop %v780
    %782 = vrot.lane.b32.xlu0 %v766, 104
    %v783 = vpop.permute.xlu0 %782
    %v784 = vmul.f32 %v783, 0.5
    %v785 = vtanh.pop %v784
    %v786 = vmul.f32 %v785, 0.5
    %v787 = vadd.f32 %v786, 0.5
    %v788 = vmul.f32 %v778, 0.0
    %v789 = vmul.f32 %v772, %v781
    %v790 = vadd.f32 %v788, %v789
    %v791 = vtanh.pop %v790
    %v792 = vmul.f32 %v787, %v791
    %v793 = vsel %vm124, %v792, 0.0
    %v794 = vld [vmem:[%s0 + $0x18] sm:$0xff]
    %795 = vmatprep.subr.mxu0 0.0
    %796 = vmatpush1.msra.mxu0 %v126
    %797 = vmatprep.subr.mxu0 0.0
    %798 = vmatpush1.msra.mxu0 %v127
    %799 = vmatprep.subr.mxu0 0.0
    %800 = vmatpush1.msra.mxu0 %v128
    %801 = vmatprep.subr.mxu0 0.0
    %802 = vmatpush1.msra.mxu0 %v129
    %803 = vmatprep.subr.mxu0 0.0
    %804 = vmatpush1.msra.mxu0 %v130
    %805 = vmatprep.subr.mxu0 0.0
    %806 = vmatpush1.msra.mxu0 %v131
    %807 = vmatprep.subr.mxu0 0.0
    %808 = vmatpush1.msra.mxu0 %v132
    %809 = vmatprep.subr.mxu0 0.0
    %810 = vmatpush1.msra.mxu0 %v133
    %811 = vmatprep.subr.mxu0 0.0
    %812 = vmatpush1.msra.mxu0 %v134
    %813 = vmatprep.subr.mxu0 0.0
    %814 = vmatpush1.msra.mxu0 %v135
    %815 = vmatprep.subr.mxu0 0.0
    %816 = vmatpush1.msra.mxu0 %v136
    %817 = vmatprep.subr.mxu0 0.0
    %818 = vmatpush1.msra.mxu0 %v137
    %819 = vmatprep.subr.mxu0 0.0
    %820 = vmatpush1.msra.mxu0 %v138
    %821 = vmatprep.subr.mxu0 0.0
    %822 = vmatpush1.msra.mxu0 %v139
    %823 = vmatprep.subr.mxu0 0.0
    %824 = vmatpush1.msra.mxu0 %v140
    %825 = vmatprep.subr.mxu0 0.0
    %826 = vmatpush1.msra.mxu0 %v141
    %827 = vmatprep.subr.mxu0 0.0
    %828 = vmatpush1.msra.mxu0 %v142
    %829 = vmatprep.subr.mxu0 0.0
    %830 = vmatpush1.msra.mxu0 %v143
    %831 = vmatprep.subr.mxu0 0.0
    %832 = vmatpush1.msra.mxu0 %v144
    %833 = vmatprep.subr.mxu0 0.0
    %834 = vmatpush1.msra.mxu0 %v145
    %835 = vmatprep.subr.mxu0 0.0
    %836 = vmatpush1.msra.mxu0 %v146
    %837 = vmatprep.subr.mxu0 0.0
    %838 = vmatpush1.msra.mxu0 %v147
    %839 = vmatprep.subr.mxu0 0.0
    %840 = vmatpush1.msra.mxu0 %v148
    %841 = vmatprep.subr.mxu0 0.0
    %842 = vmatpush1.msra.mxu0 %v149
    %843 = vmatprep.subr.mxu0 0.0
    %844 = vmatpush1.msra.mxu0 %v150
    %845 = vmatprep.subr.mxu0 0.0
    %846 = vmatpush1.msra.mxu0 %v151
    %847 = vmatprep.subr.mxu0 0.0
    %848 = vmatpush1.msra.mxu0 %v152
    %849 = vmatprep.subr.mxu0 0.0
    %850 = vmatpush1.msra.mxu0 %v153
    %851 = vmatprep.subr.mxu0 0.0
    %852 = vmatpush1.msra.mxu0 %v154
    %853 = vmatprep.subr.mxu0 0.0
    %854 = vmatpush1.msra.mxu0 %v155
    %855 = vmatprep.subr.mxu0 0.0
    %856 = vmatpush1.msra.mxu0 %v156
    %857 = vmatprep.subr.mxu0 0.0
    %858 = vmatpush1.msra.mxu0 %v157
    %859 = vmatprep.mubr.f32.mxu0 %v571
    %860 = vmatmul.mubr.f32.gmra.mrb[0].mxu0 %v794
    %v861 = vpop.f32.mrb[0].mxu0
    %v862 = vadd.f32 %v98, %v861
    %v863 = vpop.f32.mrb[0].mxu0
    %864 = vdwg.mxu0
    %v865 = vmul.f32 %v862, 0.5
    %v866 = vtanh.pop %v865
    %v867 = vmul.f32 %v866, 0.5
    %v868 = vadd.f32 %v867, 0.5
    %869 = vrot.lane.b32.xlu0 %v862, 112
    %v870 = vpop.permute.xlu0 %869
    %v871 = vmul.f32 %v870, 0.5
    %v872 = vtanh.pop %v871
    %v873 = vmul.f32 %v872, 0.5
    %v874 = vadd.f32 %v873, 0.5
    %875 = vrot.lane.b32.xlu0 %v862, 96
    %v876 = vpop.permute.xlu0 %875
    %v877 = vtanh.pop %v876
    %878 = vrot.lane.b32.xlu0 %v862, 80
    %v879 = vpop.permute.xlu0 %878
    %v880 = vmul.f32 %v879, 0.5
    %v881 = vtanh.pop %v880
    %v882 = vmul.f32 %v881, 0.5
    %v883 = vadd.f32 %v882, 0.5
    %v884 = vmul.f32 %v874, %v568
    %v885 = vmul.f32 %v868, %v877
    %v886 = vadd.f32 %v884, %v885
    %v887 = vtanh.pop %v886
    %v888 = vmul.f32 %v883, %v887
    %v889 = vsel %vm123, %v888, 0.0
    %890 = vmatprep.subr.mxu0 0.0
    %891 = vmatpush1.msra.mxu0 %v349
    %892 = vmatprep.subr.mxu0 0.0
    %893 = vmatpush1.msra.mxu0 %v350
    %894 = vmatprep.subr.mxu0 0.0
    %895 = vmatpush1.msra.mxu0 %v351
    %896 = vmatprep.subr.mxu0 0.0
    %897 = vmatpush1.msra.mxu0 %v352
    %898 = vmatprep.subr.mxu0 0.0
    %899 = vmatpush1.msra.mxu0 %v353
    %900 = vmatprep.subr.mxu0 0.0
    %901 = vmatpush1.msra.mxu0 %v354
    %902 = vmatprep.subr.mxu0 0.0
    %903 = vmatpush1.msra.mxu0 %v355
    %904 = vmatprep.subr.mxu0 0.0
    %905 = vmatpush1.msra.mxu0 %v356
    %906 = vmatprep.subr.mxu0 0.0
    %907 = vmatpush1.msra.mxu0 %v357
    %908 = vmatprep.subr.mxu0 0.0
    %909 = vmatpush1.msra.mxu0 %v358
    %910 = vmatprep.subr.mxu0 0.0
    %911 = vmatpush1.msra.mxu0 %v359
    %912 = vmatprep.subr.mxu0 0.0
    %913 = vmatpush1.msra.mxu0 %v360
    %914 = vmatprep.subr.mxu0 0.0
    %915 = vmatpush1.msra.mxu0 %v361
    %916 = vmatprep.subr.mxu0 0.0
    %917 = vmatpush1.msra.mxu0 %v362
    %918 = vmatprep.subr.mxu0 0.0
    %919 = vmatpush1.msra.mxu0 %v363
    %920 = vmatprep.subr.mxu0 0.0
    %921 = vmatpush1.msra.mxu0 %v364
    %922 = vmatprep.subr.mxu0 0.0
    %923 = vmatpush1.msra.mxu0 %v365
    %924 = vmatprep.subr.mxu0 0.0
    %925 = vmatpush1.msra.mxu0 %v366
    %926 = vmatprep.subr.mxu0 0.0
    %927 = vmatpush1.msra.mxu0 %v367
    %928 = vmatprep.subr.mxu0 0.0
    %929 = vmatpush1.msra.mxu0 %v368
    %930 = vmatprep.subr.mxu0 0.0
    %931 = vmatpush1.msra.mxu0 %v369
    %932 = vmatprep.subr.mxu0 0.0
    %933 = vmatpush1.msra.mxu0 %v370
    %934 = vmatprep.subr.mxu0 0.0
    %935 = vmatpush1.msra.mxu0 %v371
    %936 = vmatprep.subr.mxu0 0.0
    %937 = vmatpush1.msra.mxu0 %v372
    %938 = vmatprep.subr.mxu0 0.0
    %939 = vmatpush1.msra.mxu0 %v373
    %940 = vmatprep.subr.mxu0 0.0
    %941 = vmatpush1.msra.mxu0 %v374
    %942 = vmatprep.subr.mxu0 0.0
    %943 = vmatpush1.msra.mxu0 %v375
    %944 = vmatprep.subr.mxu0 0.0
    %945 = vmatpush1.msra.mxu0 %v376
    %946 = vmatprep.subr.mxu0 0.0
    %947 = vmatpush1.msra.mxu0 %v377
    %948 = vmatprep.subr.mxu0 0.0
    %949 = vmatpush1.msra.mxu0 %v378
    %950 = vmatprep.subr.mxu0 0.0
    %951 = vmatpush1.msra.mxu0 %v379
    %952 = vmatprep.subr.mxu0 0.0
    %953 = vmatpush1.msra.mxu0 %v380
    %954 = vmatprep.mubr.f32.mxu0 %v666
    %955 = vmatmul.mubr.f32.gmra.mrb[0].mxu0 %v571
    %v956 = vpop.f32.mrb[0].mxu0
    %v957 = vadd.f32 %v105, %v956
    %v958 = vpop.f32.mrb[0].mxu0
    %959 = vdwg.mxu0
    %v960 = vmul.f32 %v957, 0.5
    %v961 = vtanh.pop %v960
    %v962 = vmul.f32 %v961, 0.5
    %v963 = vadd.f32 %v962, 0.5
    %964 = vrot.lane.b32.xlu0 %v957, 120
    %v965 = vpop.permute.xlu0 %964
    %v966 = vmul.f32 %v965, 0.5
    %v967 = vtanh.pop %v966
    %v968 = vmul.f32 %v967, 0.5
    %v969 = vadd.f32 %v968, 0.5
    %970 = vrot.lane.b32.xlu0 %v957, 112
    %v971 = vpop.permute.xlu0 %970
    %v972 = vtanh.pop %v971
    %973 = vrot.lane.b32.xlu0 %v957, 104
    %v974 = vpop.permute.xlu0 %973
    %v975 = vmul.f32 %v974, 0.5
    %v976 = vtanh.pop %v975
    %v977 = vmul.f32 %v976, 0.5
    %v978 = vadd.f32 %v977, 0.5
    %v979 = vmul.f32 %v969, %v663
    %v980 = vmul.f32 %v963, %v972
    %v981 = vadd.f32 %v979, %v980
    %v982 = vtanh.pop %v981
    %v983 = vmul.f32 %v978, %v982
    %v984 = vsel %vm124, %v983, 0.0
    %985 = vmatprep.subr.mxu0 0.0
    %986 = vmatpush1.msra.mxu0 %v667
    %987 = vmatprep.subr.mxu0 0.0
    %988 = vmatpush1.msra.mxu0 %v668
    %989 = vmatprep.subr.mxu0 0.0
    %990 = vmatpush1.msra.mxu0 %v669
    %991 = vmatprep.subr.mxu0 0.0
    %992 = vmatpush1.msra.mxu0 %v670
    %993 = vmatprep.subr.mxu0 0.0
    %994 = vmatpush1.msra.mxu0 %v671
    %995 = vmatprep.subr.mxu0 0.0
    %996 = vmatpush1.msra.mxu0 %v672
    %997 = vmatprep.subr.mxu0 0.0
    %998 = vmatpush1.msra.mxu0 %v673
    %999 = vmatprep.subr.mxu0 0.0
    %1000 = vmatpush1.msra.mxu0 %v674
    %1001 = vmatprep.subr.mxu0 0.0
    %1002 = vmatpush1.msra.mxu0 %v675
    %1003 = vmatprep.subr.mxu0 0.0
    %1004 = vmatpush1.msra.mxu0 %v676
    %1005 = vmatprep.subr.mxu0 0.0
    %1006 = vmatpush1.msra.mxu0 %v677
    %1007 = vmatprep.subr.mxu0 0.0
    %1008 = vmatpush1.msra.mxu0 %v678
    %1009 = vmatprep.subr.mxu0 0.0
    %1010 = vmatpush1.msra.mxu0 %v679
    %1011 = vmatprep.subr.mxu0 0.0
    %1012 = vmatpush1.msra.mxu0 %v680
    %1013 = vmatprep.subr.mxu0 0.0
    %1014 = vmatpush1.msra.mxu0 %v681
    %1015 = vmatprep.subr.mxu0 0.0
    %1016 = vmatpush1.msra.mxu0 %v682
    %1017 = vmatprep.subr.mxu0 0.0
    %1018 = vmatpush1.msra.mxu0 %v683
    %1019 = vmatprep.subr.mxu0 0.0
    %1020 = vmatpush1.msra.mxu0 %v684
    %1021 = vmatprep.subr.mxu0 0.0
    %1022 = vmatpush1.msra.mxu0 %v685
    %1023 = vmatprep.subr.mxu0 0.0
    %1024 = vmatpush1.msra.mxu0 %v686
    %1025 = vmatprep.subr.mxu0 0.0
    %1026 = vmatpush1.msra.mxu0 %v687
    %1027 = vmatprep.subr.mxu0 0.0
    %1028 = vmatpush1.msra.mxu0 %v688
    %1029 = vmatprep.subr.mxu0 0.0
    %1030 = vmatpush1.msra.mxu0 %v689
    %1031 = vmatprep.subr.mxu0 0.0
    %1032 = vmatpush1.msra.mxu0 %v690
    %1033 = vmatprep.subr.mxu0 0.0
    %1034 = vmatpush1.msra.mxu0 %v691
    %1035 = vmatprep.subr.mxu0 0.0
    %1036 = vmatpush1.msra.mxu0 %v692
    %1037 = vmatprep.subr.mxu0 0.0
    %1038 = vmatpush1.msra.mxu0 %v693
    %1039 = vmatprep.subr.mxu0 0.0
    %1040 = vmatpush1.msra.mxu0 %v694
    %1041 = vmatprep.subr.mxu0 0.0
    %1042 = vmatpush1.msra.mxu0 %v695
    %1043 = vmatprep.subr.mxu0 0.0
    %1044 = vmatpush1.msra.mxu0 %v696
    %1045 = vmatprep.subr.mxu0 0.0
    %1046 = vmatpush1.msra.mxu0 %v697
    %1047 = vmatprep.subr.mxu0 0.0
    %1048 = vmatpush1.msra.mxu0 %v698
    %1049 = vmatprep.mubr.f32.mxu0 %v793
    %1050 = vmatmul.mubr.f32.gmra.mrb[0].mxu0 %v666
    %v1051 = vpop.f32.mrb[0].mxu0
    %v1052 = vadd.f32 %v112, %v1051
    %v1053 = vpop.f32.mrb[0].mxu0
    %1054 = vdwg.mxu0
    %v1055 = vmul.f32 %v1052, 0.5
    %v1056 = vtanh.pop %v1055
    %v1057 = vmul.f32 %v1056, 0.5
    %v1058 = vadd.f32 %v1057, 0.5
    %1059 = vrot.lane.b32.xlu0 %v1052, 120
    %v1060 = vpop.permute.xlu0 %1059
    %v1061 = vmul.f32 %v1060, 0.5
    %v1062 = vtanh.pop %v1061
    %v1063 = vmul.f32 %v1062, 0.5
    %v1064 = vadd.f32 %v1063, 0.5
    %1065 = vrot.lane.b32.xlu0 %v1052, 112
    %v1066 = vpop.permute.xlu0 %1065
    %v1067 = vtanh.pop %v1066
    %1068 = vrot.lane.b32.xlu0 %v1052, 104
    %v1069 = vpop.permute.xlu0 %1068
    %v1070 = vmul.f32 %v1069, 0.5
    %v1071 = vtanh.pop %v1070
    %v1072 = vmul.f32 %v1071, 0.5
    %v1073 = vadd.f32 %v1072, 0.5
    %v1074 = vmul.f32 %v1064, %v790
    %v1075 = vmul.f32 %v1058, %v1067
    %v1076 = vadd.f32 %v1074, %v1075
    %v1077 = vtanh.pop %v1076
    %v1078 = vmul.f32 %v1073, %v1077
    %v1079 = vsel %vm124, %v1078, 0.0
    %v1080 = vld [vmem:[#allocation8] sm:$0xff]
    %v1081 = vld [vmem:[#allocation8 + $0x8] sm:$0xff]
    %v1082 = vld [vmem:[#allocation8 + $0x10] sm:$0xff]
    %v1083 = vld [vmem:[#allocation8 + $0x18] sm:$0xff]
    %v1084 = vld [vmem:[#allocation8 + $0x20] sm:$0xff]
    %v1085 = vld [vmem:[#allocation8 + $0x28] sm:$0xff]
    %v1086 = vld [vmem:[#allocation8 + $0x30] sm:$0xff]
    %v1087 = vld [vmem:[#allocation8 + $0x38] sm:$0xff]
    %v1088 = vld [vmem:[#allocation8 + $0x40] sm:$0xff]
    %v1089 = vld [vmem:[#allocation8 + $0x48] sm:$0xff]
    %v1090 = vld [vmem:[#allocation8 + $0x50] sm:$0xff]
    %v1091 = vld [vmem:[#allocation8 + $0x58] sm:$0xff]
    %v1092 = vld [vmem:[#allocation8 + $0x60] sm:$0xff]
    %v1093 = vld [vmem:[#allocation8 + $0x68] sm:$0xff]
    %v1094 = vld [vmem:[#allocation8 + $0x70] sm:$0xff]
    %v1095 = vld [vmem:[#allocation8 + $0x78] sm:$0xff]
    %v1096 = vld [vmem:[#allocation8 + $0x80] sm:$0xff]
    %v1097 = vld [vmem:[#allocation8 + $0x88] sm:$0xff]
    %v1098 = vld [vmem:[#allocation8 + $0x90] sm:$0xff]
    %v1099 = vld [vmem:[#allocation8 + $0x98] sm:$0xff]
    %v1100 = vld [vmem:[#allocation8 + $0xa0] sm:$0xff]
    %v1101 = vld [vmem:[#allocation8 + $0xa8] sm:$0xff]
    %v1102 = vld [vmem:[#allocation8 + $0xb0] sm:$0xff]
    %v1103 = vld [vmem:[#allocation8 + $0xb8] sm:$0xff]
    %v1104 = vld [vmem:[#allocation8 + $0xc0] sm:$0xff]
    %v1105 = vld [vmem:[#allocation8 + $0xc8] sm:$0xff]
    %v1106 = vld [vmem:[#allocation8 + $0xd0] sm:$0xff]
    %v1107 = vld [vmem:[#allocation8 + $0xd8] sm:$0xff]
    %v1108 = vld [vmem:[#allocation8 + $0xe0] sm:$0xff]
    %v1109 = vld [vmem:[#allocation8 + $0xe8] sm:$0xff]
    %v1110 = vld [vmem:[#allocation8 + $0xf0] sm:$0xff]
    %v1111 = vld [vmem:[#allocation8 + $0xf8] sm:$0xff]
    %1112 = vmatprep.subr.mxu0 0.0
    %1113 = vmatpush1.msra.mxu0 %v1080
    %1114 = vmatprep.subr.mxu0 0.0
    %1115 = vmatpush1.msra.mxu0 %v1081
    %1116 = vmatprep.subr.mxu0 0.0
    %1117 = vmatpush1.msra.mxu0 %v1082
    %1118 = vmatprep.subr.mxu0 0.0
    %1119 = vmatpush1.msra.mxu0 %v1083
    %1120 = vmatprep.subr.mxu0 0.0
    %1121 = vmatpush1.msra.mxu0 %v1084
    %1122 = vmatprep.subr.mxu0 0.0
    %1123 = vmatpush1.msra.mxu0 %v1085
    %1124 = vmatprep.subr.mxu0 0.0
    %1125 = vmatpush1.msra.mxu0 %v1086
    %1126 = vmatprep.subr.mxu0 0.0
    %1127 = vmatpush1.msra.mxu0 %v1087
    %1128 = vmatprep.subr.mxu0 0.0
    %1129 = vmatpush1.msra.mxu0 %v1088
    %1130 = vmatprep.subr.mxu0 0.0
    %1131 = vmatpush1.msra.mxu0 %v1089
    %1132 = vmatprep.subr.mxu0 0.0
    %1133 = vmatpush1.msra.mxu0 %v1090
    %1134 = vmatprep.subr.mxu0 0.0
    %1135 = vmatpush1.msra.mxu0 %v1091
    %1136 = vmatprep.subr.mxu0 0.0
    %1137 = vmatpush1.msra.mxu0 %v1092
    %1138 = vmatprep.subr.mxu0 0.0
    %1139 = vmatpush1.msra.mxu0 %v1093
    %1140 = vmatprep.subr.mxu0 0.0
    %1141 = vmatpush1.msra.mxu0 %v1094
    %1142 = vmatprep.subr.mxu0 0.0
    %1143 = vmatpush1.msra.mxu0 %v1095
    %1144 = vmatprep.subr.mxu0 0.0
    %1145 = vmatpush1.msra.mxu0 %v1096
    %1146 = vmatprep.subr.mxu0 0.0
    %1147 = vmatpush1.msra.mxu0 %v1097
    %1148 = vmatprep.subr.mxu0 0.0
    %1149 = vmatpush1.msra.mxu0 %v1098
    %1150 = vmatprep.subr.mxu0 0.0
    %1151 = vmatpush1.msra.mxu0 %v1099
    %1152 = vmatprep.subr.mxu0 0.0
    %1153 = vmatpush1.msra.mxu0 %v1100
    %1154 = vmatprep.subr.mxu0 0.0
    %1155 = vmatpush1.msra.mxu0 %v1101
    %1156 = vmatprep.subr.mxu0 0.0
    %1157 = vmatpush1.msra.mxu0 %v1102
    %1158 = vmatprep.subr.mxu0 0.0
    %1159 = vmatpush1.msra.mxu0 %v1103
    %1160 = vmatprep.subr.mxu0 0.0
    %1161 = vmatpush1.msra.mxu0 %v1104
    %1162 = vmatprep.subr.mxu0 0.0
    %1163 = vmatpush1.msra.mxu0 %v1105
    %1164 = vmatprep.subr.mxu0 0.0
    %1165 = vmatpush1.msra.mxu0 %v1106
    %1166 = vmatprep.subr.mxu0 0.0
    %1167 = vmatpush1.msra.mxu0 %v1107
    %1168 = vmatprep.subr.mxu0 0.0
    %1169 = vmatpush1.msra.mxu0 %v1108
    %1170 = vmatprep.subr.mxu0 0.0
    %1171 = vmatpush1.msra.mxu0 %v1109
    %1172 = vmatprep.subr.mxu0 0.0
    %1173 = vmatpush1.msra.mxu0 %v1110
    %1174 = vmatprep.subr.mxu0 0.0
    %1175 = vmatpush1.msra.mxu0 %v1111
    %1176 = vmatprep.mubr.f32.mxu0 0.0
    %1177 = vmatmul.mubr.f32.gmra.mrb[0].mxu0 %v793
    %v1178 = vpop.f32.mrb[0].mxu0
    %v1179 = vadd.f32 %v119, %v1178
    %v1180 = vpop.f32.mrb[0].mxu0
    %1181 = vdwg.mxu0
    %v1182 = vmul.f32 %v1179, 0.5
    %v1183 = vtanh.pop %v1182
    %v1184 = vmul.f32 %v1183, 0.5
    %v1185 = vadd.f32 %v1184, 0.5
    %1186 = vrot.lane.b32.xlu0 %v1179, 112
    %v1187 = vpop.permute.xlu0 %1186
    %v1188 = vmul.f32 %v1187, 0.5
    %v1189 = vtanh.pop %v1188
    %v1190 = vmul.f32 %v1189, 0.5
    %v1191 = vadd.f32 %v1190, 0.5
    %1192 = vrot.lane.b32.xlu0 %v1179, 96
    %v1193 = vpop.permute.xlu0 %1192
    %v1194 = vtanh.pop %v1193
    %1195 = vrot.lane.b32.xlu0 %v1179, 80
    %v1196 = vpop.permute.xlu0 %1195
    %v1197 = vmul.f32 %v1196, 0.5
    %v1198 = vtanh.pop %v1197
    %v1199 = vmul.f32 %v1198, 0.5
    %v1200 = vadd.f32 %v1199, 0.5
    %v1201 = vmul.f32 %v1191, 0.0
    %v1202 = vmul.f32 %v1185, %v1194
    %v1203 = vadd.f32 %v1201, %v1202
    %v1204 = vtanh.pop %v1203
    %v1205 = vmul.f32 %v1200, %v1204
    %v1206 = vsel %vm123, %v1205, 0.0
    %1207 = vst [vmem:[#allocation2] sm:$0xff] %v1206
    %v1208 = vld [vmem:[%s0 + $0x20] sm:$0xff]
    %v1209 = vld [vmem:[#allocation3] sm:$0xff]
    %v1210 = vld [vmem:[#allocation3 + $0x8] sm:$0xff]
    %v1211 = vld [vmem:[#allocation3 + $0x10] sm:$0xff]
    %v1212 = vld [vmem:[#allocation3 + $0x18] sm:$0xff]
    %v1213 = vld [vmem:[#allocation3 + $0x20] sm:$0xff]
    %v1214 = vld [vmem:[#allocation3 + $0x28] sm:$0xff]
    %v1215 = vld [vmem:[#allocation3 + $0x30] sm:$0xff]
    %v1216 = vld [vmem:[#allocation3 + $0x38] sm:$0xff]
    %v1217 = vld [vmem:[#allocation3 + $0x40] sm:$0xff]
    %v1218 = vld [vmem:[#allocation3 + $0x48] sm:$0xff]
    %v1219 = vld [vmem:[#allocation3 + $0x50] sm:$0xff]
    %v1220 = vld [vmem:[#allocation3 + $0x58] sm:$0xff]
    %v1221 = vld [vmem:[#allocation3 + $0x60] sm:$0xff]
    %v1222 = vld [vmem:[#allocation3 + $0x68] sm:$0xff]
    %v1223 = vld [vmem:[#allocation3 + $0x70] sm:$0xff]
    %v1224 = vld [vmem:[#allocation3 + $0x78] sm:$0xff]
    %v1225 = vld [vmem:[#allocation3 + $0x80] sm:$0xff]
    %v1226 = vld [vmem:[#allocation3 + $0x88] sm:$0xff]
    %v1227 = vld [vmem:[#allocation3 + $0x90] sm:$0xff]
    %v1228 = vld [vmem:[#allocation3 + $0x98] sm:$0xff]
    %v1229 = vld [vmem:[#allocation3 + $0xa0] sm:$0xff]
    %v1230 = vld [vmem:[#allocation3 + $0xa8] sm:$0xff]
    %v1231 = vld [vmem:[#allocation3 + $0xb0] sm:$0xff]
    %v1232 = vld [vmem:[#allocation3 + $0xb8] sm:$0xff]
    %v1233 = vld [vmem:[#allocation3 + $0xc0] sm:$0xff]
    %v1234 = vld [vmem:[#allocation3 + $0xc8] sm:$0xff]
    %v1235 = vld [vmem:[#allocation3 + $0xd0] sm:$0xff]
    %v1236 = vld [vmem:[#allocation3 + $0xd8] sm:$0xff]
    %v1237 = vld [vmem:[#allocation3 + $0xe0] sm:$0xff]
    %v1238 = vld [vmem:[#allocation3 + $0xe8] sm:$0xff]
    %v1239 = vld [vmem:[#allocation3 + $0xf0] sm:$0xff]
    %v1240 = vld [vmem:[#allocation3 + $0xf8] sm:$0xff]
    %1241 = vmatprep.subr.mxu0 0.0
    %1242 = vmatpush1.msra.mxu0 %v1209
    %1243 = vmatprep.subr.mxu0 0.0
    %1244 = vmatpush1.msra.mxu0 %v1210
    %1245 = vmatprep.subr.mxu0 0.0
    %1246 = vmatpush1.msra.mxu0 %v1211
    %1247 = vmatprep.subr.mxu0 0.0
    %1248 = vmatpush1.msra.mxu0 %v1212
    %1249 = vmatprep.subr.mxu0 0.0
    %1250 = vmatpush1.msra.mxu0 %v1213
    %1251 = vmatprep.subr.mxu0 0.0
    %1252 = vmatpush1.msra.mxu0 %v1214
    %1253 = vmatprep.subr.mxu0 0.0
    %1254 = vmatpush1.msra.mxu0 %v1215
    %1255 = vmatprep.subr.mxu0 0.0
    %1256 = vmatpush1.msra.mxu0 %v1216
    %1257 = vmatprep.subr.mxu0 0.0
    %1258 = vmatpush1.msra.mxu0 %v1217
    %1259 = vmatprep.subr.mxu0 0.0
    %1260 = vmatpush1.msra.mxu0 %v1218
    %1261 = vmatprep.subr.mxu0 0.0
    %1262 = vmatpush1.msra.mxu0 %v1219
    %1263 = vmatprep.subr.mxu0 0.0
    %1264 = vmatpush1.msra.mxu0 %v1220
    %1265 = vmatprep.subr.mxu0 0.0
    %1266 = vmatpush1.msra.mxu0 %v1221
    %1267 = vmatprep.subr.mxu0 0.0
    %1268 = vmatpush1.msra.mxu0 %v1222
    %1269 = vmatprep.subr.mxu0 0.0
    %1270 = vmatpush1.msra.mxu0 %v1223
    %1271 = vmatprep.subr.mxu0 0.0
    %1272 = vmatpush1.msra.mxu0 %v1224
    %1273 = vmatprep.subr.mxu0 0.0
    %1274 = vmatpush1.msra.mxu0 %v1225
    %1275 = vmatprep.subr.mxu0 0.0
    %1276 = vmatpush1.msra.mxu0 %v1226
    %1277 = vmatprep.subr.mxu0 0.0
    %1278 = vmatpush1.msra.mxu0 %v1227
    %1279 = vmatprep.subr.mxu0 0.0
    %1280 = vmatpush1.msra.mxu0 %v1228
    %1281 = vmatprep.subr.mxu0 0.0
    %1282 = vmatpush1.msra.mxu0 %v1229
    %1283 = vmatprep.subr.mxu0 0.0
    %1284 = vmatpush1.msra.mxu0 %v1230
    %1285 = vmatprep.subr.mxu0 0.0
    %1286 = vmatpush1.msra.mxu0 %v1231
    %1287 = vmatprep.subr.mxu0 0.0
    %1288 = vmatpush1.msra.mxu0 %v1232
    %1289 = vmatprep.subr.mxu0 0.0
    %1290 = vmatpush1.msra.mxu0 %v1233
    %1291 = vmatprep.subr.mxu0 0.0
    %1292 = vmatpush1.msra.mxu0 %v1234
    %1293 = vmatprep.subr.mxu0 0.0
    %1294 = vmatpush1.msra.mxu0 %v1235
    %1295 = vmatprep.subr.mxu0 0.0
    %1296 = vmatpush1.msra.mxu0 %v1236
    %1297 = vmatprep.subr.mxu0 0.0
    %1298 = vmatpush1.msra.mxu0 %v1237
    %1299 = vmatprep.subr.mxu0 0.0
    %1300 = vmatpush1.msra.mxu0 %v1238
    %1301 = vmatprep.subr.mxu0 0.0
    %1302 = vmatpush1.msra.mxu0 %v1239
    %1303 = vmatprep.subr.mxu0 0.0
    %1304 = vmatpush1.msra.mxu0 %v1240
    %1305 = vmatprep.mubr.f32.mxu0 %v889
    %1306 = vmatmul.mubr.f32.gmra.mrb[0].mxu0 %v1208
    %v1307 = vpop.f32.mrb[0].mxu0
    %v1308 = vadd.f32 %v98, %v1307
    %v1309 = vpop.f32.mrb[0].mxu0
    %1310 = vdwg.mxu0
    %v1311 = vmul.f32 %v1308, 0.5
    %v1312 = vtanh.pop %v1311
    %v1313 = vmul.f32 %v1312, 0.5
    %v1314 = vadd.f32 %v1313, 0.5
    %1315 = vrot.lane.b32.xlu0 %v1308, 112
    %v1316 = vpop.permute.xlu0 %1315
    %v1317 = vmul.f32 %v1316, 0.5
    %v1318 = vtanh.pop %v1317
    %v1319 = vmul.f32 %v1318, 0.5
    %v1320 = vadd.f32 %v1319, 0.5
    %1321 = vrot.lane.b32.xlu0 %v1308, 96
    %v1322 = vpop.permute.xlu0 %1321
    %v1323 = vtanh.pop %v1322
    %1324 = vrot.lane.b32.xlu0 %v1308, 80
    %v1325 = vpop.permute.xlu0 %1324
    %v1326 = vmul.f32 %v1325, 0.5
    %v1327 = vtanh.pop %v1326
    %v1328 = vmul.f32 %v1327, 0.5
    %v1329 = vadd.f32 %v1328, 0.5
    %v1330 = vmul.f32 %v1320, %v886
    %v1331 = vmul.f32 %v1314, %v1323
    %v1332 = vadd.f32 %v1330, %v1331
    %v1333 = vtanh.pop %v1332
    %v1334 = vmul.f32 %v1329, %v1333
    %v1335 = vsel %vm123, %v1334, 0.0
    %v1336 = vld [vmem:[#allocation5] sm:$0xff]
    %v1337 = vld [vmem:[#allocation5 + $0x8] sm:$0xff]
    %v1338 = vld [vmem:[#allocation5 + $0x10] sm:$0xff]
    %v1339 = vld [vmem:[#allocation5 + $0x18] sm:$0xff]
    %v1340 = vld [vmem:[#allocation5 + $0x20] sm:$0xff]
    %v1341 = vld [vmem:[#allocation5 + $0x28] sm:$0xff]
    %v1342 = vld [vmem:[#allocation5 + $0x30] sm:$0xff]
    %v1343 = vld [vmem:[#allocation5 + $0x38] sm:$0xff]
    %v1344 = vld [vmem:[#allocation5 + $0x40] sm:$0xff]
    %v1345 = vld [vmem:[#allocation5 + $0x48] sm:$0xff]
    %v1346 = vld [vmem:[#allocation5 + $0x50] sm:$0xff]
    %v1347 = vld [vmem:[#allocation5 + $0x58] sm:$0xff]
    %v1348 = vld [vmem:[#allocation5 + $0x60] sm:$0xff]
    %v1349 = vld [vmem:[#allocation5 + $0x68] sm:$0xff]
    %v1350 = vld [vmem:[#allocation5 + $0x70] sm:$0xff]
    %v1351 = vld [vmem:[#allocation5 + $0x78] sm:$0xff]
    %v1352 = vld [vmem:[#allocation5 + $0x80] sm:$0xff]
    %v1353 = vld [vmem:[#allocation5 + $0x88] sm:$0xff]
    %v1354 = vld [vmem:[#allocation5 + $0x90] sm:$0xff]
    %v1355 = vld [vmem:[#allocation5 + $0x98] sm:$0xff]
    %v1356 = vld [vmem:[#allocation5 + $0xa0] sm:$0xff]
    %v1357 = vld [vmem:[#allocation5 + $0xa8] sm:$0xff]
    %v1358 = vld [vmem:[#allocation5 + $0xb0] sm:$0xff]
    %v1359 = vld [vmem:[#allocation5 + $0xb8] sm:$0xff]
    %v1360 = vld [vmem:[#allocation5 + $0xc0] sm:$0xff]
    %v1361 = vld [vmem:[#allocation5 + $0xc8] sm:$0xff]
    %v1362 = vld [vmem:[#allocation5 + $0xd0] sm:$0xff]
    %v1363 = vld [vmem:[#allocation5 + $0xd8] sm:$0xff]
    %v1364 = vld [vmem:[#allocation5 + $0xe0] sm:$0xff]
    %v1365 = vld [vmem:[#allocation5 + $0xe8] sm:$0xff]
    %v1366 = vld [vmem:[#allocation5 + $0xf0] sm:$0xff]
    %v1367 = vld [vmem:[#allocation5 + $0xf8] sm:$0xff]
    %1368 = vmatprep.subr.mxu0 0.0
    %1369 = vmatpush1.msra.mxu0 %v1336
    %1370 = vmatprep.subr.mxu0 0.0
    %1371 = vmatpush1.msra.mxu0 %v1337
    %1372 = vmatprep.subr.mxu0 0.0
    %1373 = vmatpush1.msra.mxu0 %v1338
    %1374 = vmatprep.subr.mxu0 0.0
    %1375 = vmatpush1.msra.mxu0 %v1339
    %1376 = vmatprep.subr.mxu0 0.0
    %1377 = vmatpush1.msra.mxu0 %v1340
    %1378 = vmatprep.subr.mxu0 0.0
    %1379 = vmatpush1.msra.mxu0 %v1341
    %1380 = vmatprep.subr.mxu0 0.0
    %1381 = vmatpush1.msra.mxu0 %v1342
    %1382 = vmatprep.subr.mxu0 0.0
    %1383 = vmatpush1.msra.mxu0 %v1343
    %1384 = vmatprep.subr.mxu0 0.0
    %1385 = vmatpush1.msra.mxu0 %v1344
    %1386 = vmatprep.subr.mxu0 0.0
    %1387 = vmatpush1.msra.mxu0 %v1345
    %1388 = vmatprep.subr.mxu0 0.0
    %1389 = vmatpush1.msra.mxu0 %v1346
    %1390 = vmatprep.subr.mxu0 0.0
    %1391 = vmatpush1.msra.mxu0 %v1347
    %1392 = vmatprep.subr.mxu0 0.0
    %1393 = vmatpush1.msra.mxu0 %v1348
    %1394 = vmatprep.subr.mxu0 0.0
    %1395 = vmatpush1.msra.mxu0 %v1349
    %1396 = vmatprep.subr.mxu0 0.0
    %1397 = vmatpush1.msra.mxu0 %v1350
    %1398 = vmatprep.subr.mxu0 0.0
    %1399 = vmatpush1.msra.mxu0 %v1351
    %1400 = vmatprep.subr.mxu0 0.0
    %1401 = vmatpush1.msra.mxu0 %v1352
    %1402 = vmatprep.subr.mxu0 0.0
    %1403 = vmatpush1.msra.mxu0 %v1353
    %1404 = vmatprep.subr.mxu0 0.0
    %1405 = vmatpush1.msra.mxu0 %v1354
    %1406 = vmatprep.subr.mxu0 0.0
    %1407 = vmatpush1.msra.mxu0 %v1355
    %1408 = vmatprep.subr.mxu0 0.0
    %1409 = vmatpush1.msra.mxu0 %v1356
    %1410 = vmatprep.subr.mxu0 0.0
    %1411 = vmatpush1.msra.mxu0 %v1357
    %1412 = vmatprep.subr.mxu0 0.0
    %1413 = vmatpush1.msra.mxu0 %v1358
    %1414 = vmatprep.subr.mxu0 0.0
    %1415 = vmatpush1.msra.mxu0 %v1359
    %1416 = vmatprep.subr.mxu0 0.0
    %1417 = vmatpush1.msra.mxu0 %v1360
    %1418 = vmatprep.subr.mxu0 0.0
    %1419 = vmatpush1.msra.mxu0 %v1361
    %1420 = vmatprep.subr.mxu0 0.0
    %1421 = vmatpush1.msra.mxu0 %v1362
    %1422 = vmatprep.subr.mxu0 0.0
    %1423 = vmatpush1.msra.mxu0 %v1363
    %1424 = vmatprep.subr.mxu0 0.0
    %1425 = vmatpush1.msra.mxu0 %v1364
    %1426 = vmatprep.subr.mxu0 0.0
    %1427 = vmatpush1.msra.mxu0 %v1365
    %1428 = vmatprep.subr.mxu0 0.0
    %1429 = vmatpush1.msra.mxu0 %v1366
    %1430 = vmatprep.subr.mxu0 0.0
    %1431 = vmatpush1.msra.mxu0 %v1367
    %1432 = vmatprep.mubr.f32.mxu0 %v984
    %1433 = vmatmul.mubr.f32.gmra.mrb[0].mxu0 %v889
    %v1434 = vpop.f32.mrb[0].mxu0
    %v1435 = vadd.f32 %v105, %v1434
    %v1436 = vpop.f32.mrb[0].mxu0
    %1437 = vdwg.mxu0
    %v1438 = vmul.f32 %v1435, 0.5
    %v1439 = vtanh.pop %v1438
    %v1440 = vmul.f32 %v1439, 0.5
    %v1441 = vadd.f32 %v1440, 0.5
    %1442 = vrot.lane.b32.xlu0 %v1435, 120
    %v1443 = vpop.permute.xlu0 %1442
    %v1444 = vmul.f32 %v1443, 0.5
    %v1445 = vtanh.pop %v1444
    %v1446 = vmul.f32 %v1445, 0.5
    %v1447 = vadd.f32 %v1446, 0.5
    %1448 = vrot.lane.b32.xlu0 %v1435, 112
    %v1449 = vpop.permute.xlu0 %1448
    %v1450 = vtanh.pop %v1449
    %1451 = vrot.lane.b32.xlu0 %v1435, 104
    %v1452 = vpop.permute.xlu0 %1451
    %v1453 = vmul.f32 %v1452, 0.5
    %v1454 = vtanh.pop %v1453
    %v1455 = vmul.f32 %v1454, 0.5
    %v1456 = vadd.f32 %v1455, 0.5
    %v1457 = vmul.f32 %v1447, %v981
    %v1458 = vmul.f32 %v1441, %v1450
    %v1459 = vadd.f32 %v1457, %v1458
    %v1460 = vtanh.pop %v1459
    %v1461 = vmul.f32 %v1456, %v1460
    %v1462 = vsel %vm124, %v1461, 0.0
    %v1463 = vld [vmem:[#allocation7] sm:$0xff]
    %v1464 = vld [vmem:[#allocation7 + $0x8] sm:$0xff]
    %v1465 = vld [vmem:[#allocation7 + $0x10] sm:$0xff]
    %v1466 = vld [vmem:[#allocation7 + $0x18] sm:$0xff]
    %v1467 = vld [vmem:[#allocation7 + $0x20] sm:$0xff]
    %v1468 = vld [vmem:[#allocation7 + $0x28] sm:$0xff]
    %v1469 = vld [vmem:[#allocation7 + $0x30] sm:$0xff]
    %v1470 = vld [vmem:[#allocation7 + $0x38] sm:$0xff]
    %v1471 = vld [vmem:[#allocation7 + $0x40] sm:$0xff]
    %v1472 = vld [vmem:[#allocation7 + $0x48] sm:$0xff]
    %v1473 = vld [vmem:[#allocation7 + $0x50] sm:$0xff]
    %v1474 = vld [vmem:[#allocation7 + $0x58] sm:$0xff]
    %v1475 = vld [vmem:[#allocation7 + $0x60] sm:$0xff]
    %v1476 = vld [vmem:[#allocation7 + $0x68] sm:$0xff]
    %v1477 = vld [vmem:[#allocation7 + $0x70] sm:$0xff]
    %v1478 = vld [vmem:[#allocation7 + $0x78] sm:$0xff]
    %v1479 = vld [vmem:[#allocation7 + $0x80] sm:$0xff]
    %v1480 = vld [vmem:[#allocation7 + $0x88] sm:$0xff]
    %v1481 = vld [vmem:[#allocation7 + $0x90] sm:$0xff]
    %v1482 = vld [vmem:[#allocation7 + $0x98] sm:$0xff]
    %v1483 = vld [vmem:[#allocation7 + $0xa0] sm:$0xff]
    %v1484 = vld [vmem:[#allocation7 + $0xa8] sm:$0xff]
    %v1485 = vld [vmem:[#allocation7 + $0xb0] sm:$0xff]
    %v1486 = vld [vmem:[#allocation7 + $0xb8] sm:$0xff]
    %v1487 = vld [vmem:[#allocation7 + $0xc0] sm:$0xff]
    %v1488 = vld [vmem:[#allocation7 + $0xc8] sm:$0xff]
    %v1489 = vld [vmem:[#allocation7 + $0xd0] sm:$0xff]
    %v1490 = vld [vmem:[#allocation7 + $0xd8] sm:$0xff]
    %v1491 = vld [vmem:[#allocation7 + $0xe0] sm:$0xff]
    %v1492 = vld [vmem:[#allocation7 + $0xe8] sm:$0xff]
    %v1493 = vld [vmem:[#allocation7 + $0xf0] sm:$0xff]
    %v1494 = vld [vmem:[#allocation7 + $0xf8] sm:$0xff]
    %1495 = vmatprep.subr.mxu0 0.0
    %1496 = vmatpush1.msra.mxu0 %v1463
    %1497 = vmatprep.subr.mxu0 0.0
    %1498 = vmatpush1.msra.mxu0 %v1464
    %1499 = vmatprep.subr.mxu0 0.0
    %1500 = vmatpush1.msra.mxu0 %v1465
    %1501 = vmatprep.subr.mxu0 0.0
    %1502 = vmatpush1.msra.mxu0 %v1466
    %1503 = vmatprep.subr.mxu0 0.0
    %1504 = vmatpush1.msra.mxu0 %v1467
    %1505 = vmatprep.subr.mxu0 0.0
    %1506 = vmatpush1.msra.mxu0 %v1468
    %1507 = vmatprep.subr.mxu0 0.0
    %1508 = vmatpush1.msra.mxu0 %v1469
    %1509 = vmatprep.subr.mxu0 0.0
    %1510 = vmatpush1.msra.mxu0 %v1470
    %1511 = vmatprep.subr.mxu0 0.0
    %1512 = vmatpush1.msra.mxu0 %v1471
    %1513 = vmatprep.subr.mxu0 0.0
    %1514 = vmatpush1.msra.mxu0 %v1472
    %1515 = vmatprep.subr.mxu0 0.0
    %1516 = vmatpush1.msra.mxu0 %v1473
    %1517 = vmatprep.subr.mxu0 0.0
    %1518 = vmatpush1.msra.mxu0 %v1474
    %1519 = vmatprep.subr.mxu0 0.0
    %1520 = vmatpush1.msra.mxu0 %v1475
    %1521 = vmatprep.subr.mxu0 0.0
    %1522 = vmatpush1.msra.mxu0 %v1476
    %1523 = vmatprep.subr.mxu0 0.0
    %1524 = vmatpush1.msra.mxu0 %v1477
    %1525 = vmatprep.subr.mxu0 0.0
    %1526 = vmatpush1.msra.mxu0 %v1478
    %1527 = vmatprep.subr.mxu0 0.0
    %1528 = vmatpush1.msra.mxu0 %v1479
    %1529 = vmatprep.subr.mxu0 0.0
    %1530 = vmatpush1.msra.mxu0 %v1480
    %1531 = vmatprep.subr.mxu0 0.0
    %1532 = vmatpush1.msra.mxu0 %v1481
    %1533 = vmatprep.subr.mxu0 0.0
    %1534 = vmatpush1.msra.mxu0 %v1482
    %1535 = vmatprep.subr.mxu0 0.0
    %1536 = vmatpush1.msra.mxu0 %v1483
    %1537 = vmatprep.subr.mxu0 0.0
    %1538 = vmatpush1.msra.mxu0 %v1484
    %1539 = vmatprep.subr.mxu0 0.0
    %1540 = vmatpush1.msra.mxu0 %v1485
    %1541 = vmatprep.subr.mxu0 0.0
    %1542 = vmatpush1.msra.mxu0 %v1486
    %1543 = vmatprep.subr.mxu0 0.0
    %1544 = vmatpush1.msra.mxu0 %v1487
    %1545 = vmatprep.subr.mxu0 0.0
    %1546 = vmatpush1.msra.mxu0 %v1488
    %1547 = vmatprep.subr.mxu0 0.0
    %1548 = vmatpush1.msra.mxu0 %v1489
    %1549 = vmatprep.subr.mxu0 0.0
    %1550 = vmatpush1.msra.mxu0 %v1490
    %1551 = vmatprep.subr.mxu0 0.0
    %1552 = vmatpush1.msra.mxu0 %v1491
    %1553 = vmatprep.subr.mxu0 0.0
    %1554 = vmatpush1.msra.mxu0 %v1492
    %1555 = vmatprep.subr.mxu0 0.0
    %1556 = vmatpush1.msra.mxu0 %v1493
    %1557 = vmatprep.subr.mxu0 0.0
    %1558 = vmatpush1.msra.mxu0 %v1494
    %1559 = vmatprep.mubr.f32.mxu0 %v1079
    %1560 = vmatmul.mubr.f32.gmra.mrb[0].mxu0 %v984
    %v1561 = vpop.f32.mrb[0].mxu0
    %v1562 = vadd.f32 %v112, %v1561
    %v1563 = vpop.f32.mrb[0].mxu0
    %1564 = vdwg.mxu0
    %v1565 = vmul.f32 %v1562, 0.5
    %v1566 = vtanh.pop %v1565
    %v1567 = vmul.f32 %v1566, 0.5
    %v1568 = vadd.f32 %v1567, 0.5
    %1569 = vrot.lane.b32.xlu0 %v1562, 120
    %v1570 = vpop.permute.xlu0 %1569
    %v1571 = vmul.f32 %v1570, 0.5
    %v1572 = vtanh.pop %v1571
    %v1573 = vmul.f32 %v1572, 0.5
    %v1574 = vadd.f32 %v1573, 0.5
    %1575 = vrot.lane.b32.xlu0 %v1562, 112
    %v1576 = vpop.permute.xlu0 %1575
    %v1577 = vtanh.pop %v1576
    %1578 = vrot.lane.b32.xlu0 %v1562, 104
    %v1579 = vpop.permute.xlu0 %1578
    %v1580 = vmul.f32 %v1579, 0.5
    %v1581 = vtanh.pop %v1580
    %v1582 = vmul.f32 %v1581, 0.5
    %v1583 = vadd.f32 %v1582, 0.5
    %v1584 = vmul.f32 %v1574, %v1076
    %v1585 = vmul.f32 %v1568, %v1577
    %v1586 = vadd.f32 %v1584, %v1585
    %v1587 = vtanh.pop %v1586
    %v1588 = vmul.f32 %v1583, %v1587
    %v1589 = vsel %vm124, %v1588, 0.0
    %v1590 = vld [vmem:[#allocation8] sm:$0xff]
    %v1591 = vld [vmem:[#allocation8 + $0x8] sm:$0xff]
    %v1592 = vld [vmem:[#allocation8 + $0x10] sm:$0xff]
    %v1593 = vld [vmem:[#allocation8 + $0x18] sm:$0xff]
    %v1594 = vld [vmem:[#allocation8 + $0x20] sm:$0xff]
    %v1595 = vld [vmem:[#allocation8 + $0x28] sm:$0xff]
    %v1596 = vld [vmem:[#allocation8 + $0x30] sm:$0xff]
    %v1597 = vld [vmem:[#allocation8 + $0x38] sm:$0xff]
    %v1598 = vld [vmem:[#allocation8 + $0x40] sm:$0xff]
    %v1599 = vld [vmem:[#allocation8 + $0x48] sm:$0xff]
    %v1600 = vld [vmem:[#allocation8 + $0x50] sm:$0xff]
    %v1601 = vld [vmem:[#allocation8 + $0x58] sm:$0xff]
    %v1602 = vld [vmem:[#allocation8 + $0x60] sm:$0xff]
    %v1603 = vld [vmem:[#allocation8 + $0x68] sm:$0xff]
    %v1604 = vld [vmem:[#allocation8 + $0x70] sm:$0xff]
    %v1605 = vld [vmem:[#allocation8 + $0x78] sm:$0xff]
    %v1606 = vld [vmem:[#allocation8 + $0x80] sm:$0xff]
    %v1607 = vld [vmem:[#allocation8 + $0x88] sm:$0xff]
    %v1608 = vld [vmem:[#allocation8 + $0x90] sm:$0xff]
    %v1609 = vld [vmem:[#allocation8 + $0x98] sm:$0xff]
    %v1610 = vld [vmem:[#allocation8 + $0xa0] sm:$0xff]
    %v1611 = vld [vmem:[#allocation8 + $0xa8] sm:$0xff]
    %v1612 = vld [vmem:[#allocation8 + $0xb0] sm:$0xff]
    %v1613 = vld [vmem:[#allocation8 + $0xb8] sm:$0xff]
    %v1614 = vld [vmem:[#allocation8 + $0xc0] sm:$0xff]
    %v1615 = vld [vmem:[#allocation8 + $0xc8] sm:$0xff]
    %v1616 = vld [vmem:[#allocation8 + $0xd0] sm:$0xff]
    %v1617 = vld [vmem:[#allocation8 + $0xd8] sm:$0xff]
    %v1618 = vld [vmem:[#allocation8 + $0xe0] sm:$0xff]
    %v1619 = vld [vmem:[#allocation8 + $0xe8] sm:$0xff]
    %v1620 = vld [vmem:[#allocation8 + $0xf0] sm:$0xff]
    %v1621 = vld [vmem:[#allocation8 + $0xf8] sm:$0xff]
    %1622 = vmatprep.subr.mxu0 0.0
    %1623 = vmatpush1.msra.mxu0 %v1590
    %1624 = vmatprep.subr.mxu0 0.0
    %1625 = vmatpush1.msra.mxu0 %v1591
    %1626 = vmatprep.subr.mxu0 0.0
    %1627 = vmatpush1.msra.mxu0 %v1592
    %1628 = vmatprep.subr.mxu0 0.0
    %1629 = vmatpush1.msra.mxu0 %v1593
    %1630 = vmatprep.subr.mxu0 0.0
    %1631 = vmatpush1.msra.mxu0 %v1594
    %1632 = vmatprep.subr.mxu0 0.0
    %1633 = vmatpush1.msra.mxu0 %v1595
    %1634 = vmatprep.subr.mxu0 0.0
    %1635 = vmatpush1.msra.mxu0 %v1596
    %1636 = vmatprep.subr.mxu0 0.0
    %1637 = vmatpush1.msra.mxu0 %v1597
    %1638 = vmatprep.subr.mxu0 0.0
    %1639 = vmatpush1.msra.mxu0 %v1598
    %1640 = vmatprep.subr.mxu0 0.0
    %1641 = vmatpush1.msra.mxu0 %v1599
    %1642 = vmatprep.subr.mxu0 0.0
    %1643 = vmatpush1.msra.mxu0 %v1600
    %1644 = vmatprep.subr.mxu0 0.0
    %1645 = vmatpush1.msra.mxu0 %v1601
    %1646 = vmatprep.subr.mxu0 0.0
    %1647 = vmatpush1.msra.mxu0 %v1602
    %1648 = vmatprep.subr.mxu0 0.0
    %1649 = vmatpush1.msra.mxu0 %v1603
    %1650 = vmatprep.subr.mxu0 0.0
    %1651 = vmatpush1.msra.mxu0 %v1604
    %1652 = vmatprep.subr.mxu0 0.0
    %1653 = vmatpush1.msra.mxu0 %v1605
    %1654 = vmatprep.subr.mxu0 0.0
    %1655 = vmatpush1.msra.mxu0 %v1606
    %1656 = vmatprep.subr.mxu0 0.0
    %1657 = vmatpush1.msra.mxu0 %v1607
    %1658 = vmatprep.subr.mxu0 0.0
    %1659 = vmatpush1.msra.mxu0 %v1608
    %1660 = vmatprep.subr.mxu0 0.0
    %1661 = vmatpush1.msra.mxu0 %v1609
    %1662 = vmatprep.subr.mxu0 0.0
    %1663 = vmatpush1.msra.mxu0 %v1610
    %1664 = vmatprep.subr.mxu0 0.0
    %1665 = vmatpush1.msra.mxu0 %v1611
    %1666 = vmatprep.subr.mxu0 0.0
    %1667 = vmatpush1.msra.mxu0 %v1612
    %1668 = vmatprep.subr.mxu0 0.0
    %1669 = vmatpush1.msra.mxu0 %v1613
    %1670 = vmatprep.subr.mxu0 0.0
    %1671 = vmatpush1.msra.mxu0 %v1614
    %1672 = vmatprep.subr.mxu0 0.0
    %1673 = vmatpush1.msra.mxu0 %v1615
    %1674 = vmatprep.subr.mxu0 0.0
    %1675 = vmatpush1.msra.mxu0 %v1616
    %1676 = vmatprep.subr.mxu0 0.0
    %1677 = vmatpush1.msra.mxu0 %v1617
    %1678 = vmatprep.subr.mxu0 0.0
    %1679 = vmatpush1.msra.mxu0 %v1618
    %1680 = vmatprep.subr.mxu0 0.0
    %1681 = vmatpush1.msra.mxu0 %v1619
    %1682 = vmatprep.subr.mxu0 0.0
    %1683 = vmatpush1.msra.mxu0 %v1620
    %1684 = vmatprep.subr.mxu0 0.0
    %1685 = vmatpush1.msra.mxu0 %v1621
    %1686 = vmatprep.mubr.f32.mxu0 %v1206
    %1687 = vmatmul.mubr.f32.gmra.mrb[0].mxu0 %v1079
    %v1688 = vpop.f32.mrb[0].mxu0
    %v1689 = vadd.f32 %v119, %v1688
    %v1690 = vpop.f32.mrb[0].mxu0
    %1691 = vdwg.mxu0
    %v1692 = vmul.f32 %v1689, 0.5
    %v1693 = vtanh.pop %v1692
    %v1694 = vmul.f32 %v1693, 0.5
    %v1695 = vadd.f32 %v1694, 0.5
    %1696 = vrot.lane.b32.xlu0 %v1689, 112
    %v1697 = vpop.permute.xlu0 %1696
    %v1698 = vmul.f32 %v1697, 0.5
    %v1699 = vtanh.pop %v1698
    %v1700 = vmul.f32 %v1699, 0.5
    %v1701 = vadd.f32 %v1700, 0.5
    %1702 = vrot.lane.b32.xlu0 %v1689, 96
    %v1703 = vpop.permute.xlu0 %1702
    %v1704 = vtanh.pop %v1703
    %1705 = vrot.lane.b32.xlu0 %v1689, 80
    %v1706 = vpop.permute.xlu0 %1705
    %v1707 = vmul.f32 %v1706, 0.5
    %v1708 = vtanh.pop %v1707
    %v1709 = vmul.f32 %v1708, 0.5
    %v1710 = vadd.f32 %v1709, 0.5
    %v1711 = vmul.f32 %v1701, %v1203
    %v1712 = vmul.f32 %v1695, %v1704
    %v1713 = vadd.f32 %v1711, %v1712
    %v1714 = vtanh.pop %v1713
    %v1715 = vmul.f32 %v1710, %v1714
    %v1716 = vsel %vm123, %v1715, 0.0
    %1717 = vst [vmem:[#allocation2 + $0x8] sm:$0xff] %v1716
    %v1718 = vld [vmem:[%s0 + $0x28] sm:$0xff]
    %v1719 = vld [vmem:[#allocation3] sm:$0xff]
    %v1720 = vld [vmem:[#allocation3 + $0x8] sm:$0xff]
    %v1721 = vld [vmem:[#allocation3 + $0x10] sm:$0xff]
    %v1722 = vld [vmem:[#allocation3 + $0x18] sm:$0xff]
    %v1723 = vld [vmem:[#allocation3 + $0x20] sm:$0xff]
    %v1724 = vld [vmem:[#allocation3 + $0x28] sm:$0xff]
    %v1725 = vld [vmem:[#allocation3 + $0x30] sm:$0xff]
    %v1726 = vld [vmem:[#allocation3 + $0x38] sm:$0xff]
    %v1727 = vld [vmem:[#allocation3 + $0x40] sm:$0xff]
    %v1728 = vld [vmem:[#allocation3 + $0x48] sm:$0xff]
    %v1729 = vld [vmem:[#allocation3 + $0x50] sm:$0xff]
    %v1730 = vld [vmem:[#allocation3 + $0x58] sm:$0xff]
    %v1731 = vld [vmem:[#allocation3 + $0x60] sm:$0xff]
    %v1732 = vld [vmem:[#allocation3 + $0x68] sm:$0xff]
    %v1733 = vld [vmem:[#allocation3 + $0x70] sm:$0xff]
    %v1734 = vld [vmem:[#allocation3 + $0x78] sm:$0xff]
    %v1735 = vld [vmem:[#allocation3 + $0x80] sm:$0xff]
    %v1736 = vld [vmem:[#allocation3 + $0x88] sm:$0xff]
    %v1737 = vld [vmem:[#allocation3 + $0x90] sm:$0xff]
    %v1738 = vld [vmem:[#allocation3 + $0x98] sm:$0xff]
    %v1739 = vld [vmem:[#allocation3 + $0xa0] sm:$0xff]
    %v1740 = vld [vmem:[#allocation3 + $0xa8] sm:$0xff]
    %v1741 = vld [vmem:[#allocation3 + $0xb0] sm:$0xff]
    %v1742 = vld [vmem:[#allocation3 + $0xb8] sm:$0xff]
    %v1743 = vld [vmem:[#allocation3 + $0xc0] sm:$0xff]
    %v1744 = vld [vmem:[#allocation3 + $0xc8] sm:$0xff]
    %v1745 = vld [vmem:[#allocation3 + $0xd0] sm:$0xff]
    %v1746 = vld [vmem:[#allocation3 + $0xd8] sm:$0xff]
    %v1747 = vld [vmem:[#allocation3 + $0xe0] sm:$0xff]
    %v1748 = vld [vmem:[#allocation3 + $0xe8] sm:$0xff]
    %v1749 = vld [vmem:[#allocation3 + $0xf0] sm:$0xff]
    %v1750 = vld [vmem:[#allocation3 + $0xf8] sm:$0xff]
    %1751 = vmatprep.subr.mxu0 0.0
    %1752 = vmatpush1.msra.mxu0 %v1719
    %1753 = vmatprep.subr.mxu0 0.0
    %1754 = vmatpush1.msra.mxu0 %v1720
    %1755 = vmatprep.subr.mxu0 0.0
    %1756 = vmatpush1.msra.mxu0 %v1721
    %1757 = vmatprep.subr.mxu0 0.0
    %1758 = vmatpush1.msra.mxu0 %v1722
    %1759 = vmatprep.subr.mxu0 0.0
    %1760 = vmatpush1.msra.mxu0 %v1723
    %1761 = vmatprep.subr.mxu0 0.0
    %1762 = vmatpush1.msra.mxu0 %v1724
    %1763 = vmatprep.subr.mxu0 0.0
    %1764 = vmatpush1.msra.mxu0 %v1725
    %1765 = vmatprep.subr.mxu0 0.0
    %1766 = vmatpush1.msra.mxu0 %v1726
    %1767 = vmatprep.subr.mxu0 0.0
    %1768 = vmatpush1.msra.mxu0 %v1727
    %1769 = vmatprep.subr.mxu0 0.0
    %1770 = vmatpush1.msra.mxu0 %v1728
    %1771 = vmatprep.subr.mxu0 0.0
    %1772 = vmatpush1.msra.mxu0 %v1729
    %1773 = vmatprep.subr.mxu0 0.0
    %1774 = vmatpush1.msra.mxu0 %v1730
    %1775 = vmatprep.subr.mxu0 0.0
    %1776 = vmatpush1.msra.mxu0 %v1731
    %1777 = vmatprep.subr.mxu0 0.0
    %1778 = vmatpush1.msra.mxu0 %v1732
    %1779 = vmatprep.subr.mxu0 0.0
    %1780 = vmatpush1.msra.mxu0 %v1733
    %1781 = vmatprep.subr.mxu0 0.0
    %1782 = vmatpush1.msra.mxu0 %v1734
    %1783 = vmatprep.subr.mxu0 0.0
    %1784 = vmatpush1.msra.mxu0 %v1735
    %1785 = vmatprep.subr.mxu0 0.0
    %1786 = vmatpush1.msra.mxu0 %v1736
    %1787 = vmatprep.subr.mxu0 0.0
    %1788 = vmatpush1.msra.mxu0 %v1737
    %1789 = vmatprep.subr.mxu0 0.0
    %1790 = vmatpush1.msra.mxu0 %v1738
    %1791 = vmatprep.subr.mxu0 0.0
    %1792 = vmatpush1.msra.mxu0 %v1739
    %1793 = vmatprep.subr.mxu0 0.0
    %1794 = vmatpush1.msra.mxu0 %v1740
    %1795 = vmatprep.subr.mxu0 0.0
    %1796 = vmatpush1.msra.mxu0 %v1741
    %1797 = vmatprep.subr.mxu0 0.0
    %1798 = vmatpush1.msra.mxu0 %v1742
    %1799 = vmatprep.subr.mxu0 0.0
    %1800 = vmatpush1.msra.mxu0 %v1743
    %1801 = vmatprep.subr.mxu0 0.0
    %1802 = vmatpush1.msra.mxu0 %v1744
    %1803 = vmatprep.subr.mxu0 0.0
    %1804 = vmatpush1.msra.mxu0 %v1745
    %1805 = vmatprep.subr.mxu0 0.0
    %1806 = vmatpush1.msra.mxu0 %v1746
    %1807 = vmatprep.subr.mxu0 0.0
    %1808 = vmatpush1.msra.mxu0 %v1747
    %1809 = vmatprep.subr.mxu0 0.0
    %1810 = vmatpush1.msra.mxu0 %v1748
    %1811 = vmatprep.subr.mxu0 0.0
    %1812 = vmatpush1.msra.mxu0 %v1749
    %1813 = vmatprep.subr.mxu0 0.0
    %1814 = vmatpush1.msra.mxu0 %v1750
    %1815 = vmatprep.mubr.f32.mxu0 %v1335
    %1816 = vmatmul.mubr.f32.gmra.mrb[0].mxu0 %v1718
    %v1817 = vpop.f32.mrb[0].mxu0
    %v1818 = vadd.f32 %v98, %v1817
    %v1819 = vpop.f32.mrb[0].mxu0
    %1820 = vdwg.mxu0
    %v1821 = vmul.f32 %v1818, 0.5
    %v1822 = vtanh.pop %v1821
    %v1823 = vmul.f32 %v1822, 0.5
    %v1824 = vadd.f32 %v1823, 0.5
    %1825 = vrot.lane.b32.xlu0 %v1818, 112
    %v1826 = vpop.permute.xlu0 %1825
    %v1827 = vmul.f32 %v1826, 0.5
    %v1828 = vtanh.pop %v1827
    %v1829 = vmul.f32 %v1828, 0.5
    %v1830 = vadd.f32 %v1829, 0.5
    %1831 = vrot.lane.b32.xlu0 %v1818, 96
    %v1832 = vpop.permute.xlu0 %1831
    %v1833 = vtanh.pop %v1832
    %1834 = vrot.lane.b32.xlu0 %v1818, 80
    %v1835 = vpop.permute.xlu0 %1834
    %v1836 = vmul.f32 %v1835, 0.5
    %v1837 = vtanh.pop %v1836
    %v1838 = vmul.f32 %v1837, 0.5
    %v1839 = vadd.f32 %v1838, 0.5
    %v1840 = vmul.f32 %v1830, %v1332
    %v1841 = vmul.f32 %v1824, %v1833
    %v1842 = vadd.f32 %v1840, %v1841
    %v1843 = vtanh.pop %v1842
    %v1844 = vmul.f32 %v1839, %v1843
    %v1845 = vsel %vm123, %v1844, 0.0
    %v1846 = vld [vmem:[#allocation5] sm:$0xff]
    %v1847 = vld [vmem:[#allocation5 + $0x8] sm:$0xff]
    %v1848 = vld [vmem:[#allocation5 + $0x10] sm:$0xff]
    %v1849 = vld [vmem:[#allocation5 + $0x18] sm:$0xff]
    %v1850 = vld [vmem:[#allocation5 + $0x20] sm:$0xff]
    %v1851 = vld [vmem:[#allocation5 + $0x28] sm:$0xff]
    %v1852 = vld [vmem:[#allocation5 + $0x30] sm:$0xff]
    %v1853 = vld [vmem:[#allocation5 + $0x38] sm:$0xff]
    %v1854 = vld [vmem:[#allocation5 + $0x40] sm:$0xff]
    %v1855 = vld [vmem:[#allocation5 + $0x48] sm:$0xff]
    %v1856 = vld [vmem:[#allocation5 + $0x50] sm:$0xff]
    %v1857 = vld [vmem:[#allocation5 + $0x58] sm:$0xff]
    %v1858 = vld [vmem:[#allocation5 + $0x60] sm:$0xff]
    %v1859 = vld [vmem:[#allocation5 + $0x68] sm:$0xff]
    %v1860 = vld [vmem:[#allocation5 + $0x70] sm:$0xff]
    %v1861 = vld [vmem:[#allocation5 + $0x78] sm:$0xff]
    %v1862 = vld [vmem:[#allocation5 + $0x80] sm:$0xff]
    %v1863 = vld [vmem:[#allocation5 + $0x88] sm:$0xff]
    %v1864 = vld [vmem:[#allocation5 + $0x90] sm:$0xff]
    %v1865 = vld [vmem:[#allocation5 + $0x98] sm:$0xff]
    %v1866 = vld [vmem:[#allocation5 + $0xa0] sm:$0xff]
    %v1867 = vld [vmem:[#allocation5 + $0xa8] sm:$0xff]
    %v1868 = vld [vmem:[#allocation5 + $0xb0] sm:$0xff]
    %v1869 = vld [vmem:[#allocation5 + $0xb8] sm:$0xff]
    %v1870 = vld [vmem:[#allocation5 + $0xc0] sm:$0xff]
    %v1871 = vld [vmem:[#allocation5 + $0xc8] sm:$0xff]
    %v1872 = vld [vmem:[#allocation5 + $0xd0] sm:$0xff]
    %v1873 = vld [vmem:[#allocation5 + $0xd8] sm:$0xff]
    %v1874 = vld [vmem:[#allocation5 + $0xe0] sm:$0xff]
    %v1875 = vld [vmem:[#allocation5 + $0xe8] sm:$0xff]
    %v1876 = vld [vmem:[#allocation5 + $0xf0] sm:$0xff]
    %v1877 = vld [vmem:[#allocation5 + $0xf8] sm:$0xff]
    %1878 = vmatprep.subr.mxu0 0.0
    %1879 = vmatpush1.msra.mxu0 %v1846
    %1880 = vmatprep.subr.mxu0 0.0
    %1881 = vmatpush1.msra.mxu0 %v1847
    %1882 = vmatprep.subr.mxu0 0.0
    %1883 = vmatpush1.msra.mxu0 %v1848
    %1884 = vmatprep.subr.mxu0 0.0
    %1885 = vmatpush1.msra.mxu0 %v1849
    %1886 = vmatprep.subr.mxu0 0.0
    %1887 = vmatpush1.msra.mxu0 %v1850
    %1888 = vmatprep.subr.mxu0 0.0
    %1889 = vmatpush1.msra.mxu0 %v1851
    %1890 = vmatprep.subr.mxu0 0.0
    %1891 = vmatpush1.msra.mxu0 %v1852
    %1892 = vmatprep.subr.mxu0 0.0
    %1893 = vmatpush1.msra.mxu0 %v1853
    %1894 = vmatprep.subr.mxu0 0.0
    %1895 = vmatpush1.msra.mxu0 %v1854
    %1896 = vmatprep.subr.mxu0 0.0
    %1897 = vmatpush1.msra.mxu0 %v1855
    %1898 = vmatprep.subr.mxu0 0.0
    %1899 = vmatpush1.msra.mxu0 %v1856
    %1900 = vmatprep.subr.mxu0 0.0
    %1901 = vmatpush1.msra.mxu0 %v1857
    %1902 = vmatprep.subr.mxu0 0.0
    %1903 = vmatpush1.msra.mxu0 %v1858
    %1904 = vmatprep.subr.mxu0 0.0
    %1905 = vmatpush1.msra.mxu0 %v1859
    %1906 = vmatprep.subr.mxu0 0.0
    %1907 = vmatpush1.msra.mxu0 %v1860
    %1908 = vmatprep.subr.mxu0 0.0
    %1909 = vmatpush1.msra.mxu0 %v1861
    %1910 = vmatprep.subr.mxu0 0.0
    %1911 = vmatpush1.msra.mxu0 %v1862
    %1912 = vmatprep.subr.mxu0 0.0
    %1913 = vmatpush1.msra.mxu0 %v1863
    %1914 = vmatprep.subr.mxu0 0.0
    %1915 = vmatpush1.msra.mxu0 %v1864
    %1916 = vmatprep.subr.mxu0 0.0
    %1917 = vmatpush1.msra.mxu0 %v1865
    %1918 = vmatprep.subr.mxu0 0.0
    %1919 = vmatpush1.msra.mxu0 %v1866
    %1920 = vmatprep.subr.mxu0 0.0
    %1921 = vmatpush1.msra.mxu0 %v1867
    %1922 = vmatprep.subr.mxu0 0.0
    %1923 = vmatpush1.msra.mxu0 %v1868
    %1924 = vmatprep.subr.mxu0 0.0
    %1925 = vmatpush1.msra.mxu0 %v1869
    %1926 = vmatprep.subr.mxu0 0.0
    %1927 = vmatpush1.msra.mxu0 %v1870
    %1928 = vmatprep.subr.mxu0 0.0
    %1929 = vmatpush1.msra.mxu0 %v1871
    %1930 = vmatprep.subr.mxu0 0.0
    %1931 = vmatpush1.msra.mxu0 %v1872
    %1932 = vmatprep.subr.mxu0 0.0
    %1933 = vmatpush1.msra.mxu0 %v1873
    %1934 = vmatprep.subr.mxu0 0.0
    %1935 = vmatpush1.msra.mxu0 %v1874
    %1936 = vmatprep.subr.mxu0 0.0
    %1937 = vmatpush1.msra.mxu0 %v1875
    %1938 = vmatprep.subr.mxu0 0.0
    %1939 = vmatpush1.msra.mxu0 %v1876
    %1940 = vmatprep.subr.mxu0 0.0
    %1941 = vmatpush1.msra.mxu0 %v1877
    %1942 = vmatprep.mubr.f32.mxu0 %v1462
    %1943 = vmatmul.mubr.f32.gmra.mrb[0].mxu0 %v1335
    %v1944 = vpop.f32.mrb[0].mxu0
    %v1945 = vadd.f32 %v105, %v1944
    %v1946 = vpop.f32.mrb[0].mxu0
    %1947 = vdwg.mxu0
    %v1948 = vmul.f32 %v1945, 0.5
    %v1949 = vtanh.pop %v1948
    %v1950 = vmul.f32 %v1949, 0.5
    %v1951 = vadd.f32 %v1950, 0.5
    %1952 = vrot.lane.b32.xlu0 %v1945, 120
    %v1953 = vpop.permute.xlu0 %1952
    %v1954 = vmul.f32 %v1953, 0.5
    %v1955 = vtanh.pop %v1954
    %v1956 = vmul.f32 %v1955, 0.5
    %v1957 = vadd.f32 %v1956, 0.5
    %1958 = vrot.lane.b32.xlu0 %v1945, 112
    %v1959 = vpop.permute.xlu0 %1958
    %v1960 = vtanh.pop %v1959
    %1961 = vrot.lane.b32.xlu0 %v1945, 104
    %v1962 = vpop.permute.xlu0 %1961
    %v1963 = vmul.f32 %v1962, 0.5
    %v1964 = vtanh.pop %v1963
    %v1965 = vmul.f32 %v1964, 0.5
    %v1966 = vadd.f32 %v1965, 0.5
    %v1967 = vmul.f32 %v1957, %v1459
    %v1968 = vmul.f32 %v1951, %v1960
    %v1969 = vadd.f32 %v1967, %v1968
    %v1970 = vtanh.pop %v1969
    %v1971 = vmul.f32 %v1966, %v1970
    %v1972 = vsel %vm124, %v1971, 0.0
    %v1973 = vld [vmem:[#allocation7] sm:$0xff]
    %v1974 = vld [vmem:[#allocation7 + $0x8] sm:$0xff]
    %v1975 = vld [vmem:[#allocation7 + $0x10] sm:$0xff]
    %v1976 = vld [vmem:[#allocation7 + $0x18] sm:$0xff]
    %v1977 = vld [vmem:[#allocation7 + $0x20] sm:$0xff]
    %v1978 = vld [vmem:[#allocation7 + $0x28] sm:$0xff]
    %v1979 = vld [vmem:[#allocation7 + $0x30] sm:$0xff]
    %v1980 = vld [vmem:[#allocation7 + $0x38] sm:$0xff]
    %v1981 = vld [vmem:[#allocation7 + $0x40] sm:$0xff]
    %v1982 = vld [vmem:[#allocation7 + $0x48] sm:$0xff]
    %v1983 = vld [vmem:[#allocation7 + $0x50] sm:$0xff]
    %v1984 = vld [vmem:[#allocation7 + $0x58] sm:$0xff]
    %v1985 = vld [vmem:[#allocation7 + $0x60] sm:$0xff]
    %v1986 = vld [vmem:[#allocation7 + $0x68] sm:$0xff]
    %v1987 = vld [vmem:[#allocation7 + $0x70] sm:$0xff]
    %v1988 = vld [vmem:[#allocation7 + $0x78] sm:$0xff]
    %v1989 = vld [vmem:[#allocation7 + $0x80] sm:$0xff]
    %v1990 = vld [vmem:[#allocation7 + $0x88] sm:$0xff]
    %v1991 = vld [vmem:[#allocation7 + $0x90] sm:$0xff]
    %v1992 = vld [vmem:[#allocation7 + $0x98] sm:$0xff]
    %v1993 = vld [vmem:[#allocation7 + $0xa0] sm:$0xff]
    %v1994 = vld [vmem:[#allocation7 + $0xa8] sm:$0xff]
    %v1995 = vld [vmem:[#allocation7 + $0xb0] sm:$0xff]
    %v1996 = vld [vmem:[#allocation7 + $0xb8] sm:$0xff]
    %v1997 = vld [vmem:[#allocation7 + $0xc0] sm:$0xff]
    %v1998 = vld [vmem:[#allocation7 + $0xc8] sm:$0xff]
    %v1999 = vld [vmem:[#allocation7 + $0xd0] sm:$0xff]
    %v2000 = vld [vmem:[#allocation7 + $0xd8] sm:$0xff]
    %v2001 = vld [vmem:[#allocation7 + $0xe0] sm:$0xff]
    %v2002 = vld [vmem:[#allocation7 + $0xe8] sm:$0xff]
    %v2003 = vld [vmem:[#allocation7 + $0xf0] sm:$0xff]
    %v2004 = vld [vmem:[#allocation7 + $0xf8] sm:$0xff]
    %2005 = vmatprep.subr.mxu0 0.0
    %2006 = vmatpush1.msra.mxu0 %v1973
    %2007 = vmatprep.subr.mxu0 0.0
    %2008 = vmatpush1.msra.mxu0 %v1974
    %2009 = vmatprep.subr.mxu0 0.0
    %2010 = vmatpush1.msra.mxu0 %v1975
    %2011 = vmatprep.subr.mxu0 0.0
    %2012 = vmatpush1.msra.mxu0 %v1976
    %2013 = vmatprep.subr.mxu0 0.0
    %2014 = vmatpush1.msra.mxu0 %v1977
    %2015 = vmatprep.subr.mxu0 0.0
    %2016 = vmatpush1.msra.mxu0 %v1978
    %2017 = vmatprep.subr.mxu0 0.0
    %2018 = vmatpush1.msra.mxu0 %v1979
    %2019 = vmatprep.subr.mxu0 0.0
    %2020 = vmatpush1.msra.mxu0 %v1980
    %2021 = vmatprep.subr.mxu0 0.0
    %2022 = vmatpush1.msra.mxu0 %v1981
    %2023 = vmatprep.subr.mxu0 0.0
    %2024 = vmatpush1.msra.mxu0 %v1982
    %2025 = vmatprep.subr.mxu0 0.0
    %2026 = vmatpush1.msra.mxu0 %v1983
    %2027 = vmatprep.subr.mxu0 0.0
    %2028 = vmatpush1.msra.mxu0 %v1984
    %2029 = vmatprep.subr.mxu0 0.0
    %2030 = vmatpush1.msra.mxu0 %v1985
    %2031 = vmatprep.subr.mxu0 0.0
    %2032 = vmatpush1.msra.mxu0 %v1986
    %2033 = vmatprep.subr.mxu0 0.0
    %2034 = vmatpush1.msra.mxu0 %v1987
    %2035 = vmatprep.subr.mxu0 0.0
    %2036 = vmatpush1.msra.mxu0 %v1988
    %2037 = vmatprep.subr.mxu0 0.0
    %2038 = vmatpush1.msra.mxu0 %v1989
    %2039 = vmatprep.subr.mxu0 0.0
    %2040 = vmatpush1.msra.mxu0 %v1990
    %2041 = vmatprep.subr.mxu0 0.0
    %2042 = vmatpush1.msra.mxu0 %v1991
    %2043 = vmatprep.subr.mxu0 0.0
    %2044 = vmatpush1.msra.mxu0 %v1992
    %2045 = vmatprep.subr.mxu0 0.0
    %2046 = vmatpush1.msra.mxu0 %v1993
    %2047 = vmatprep.subr.mxu0 0.0
    %2048 = vmatpush1.msra.mxu0 %v1994
    %2049 = vmatprep.subr.mxu0 0.0
    %2050 = vmatpush1.msra.mxu0 %v1995
    %2051 = vmatprep.subr.mxu0 0.0
    %2052 = vmatpush1.msra.mxu0 %v1996
    %2053 = vmatprep.subr.mxu0 0.0
    %2054 = vmatpush1.msra.mxu0 %v1997
    %2055 = vmatprep.subr.mxu0 0.0
    %2056 = vmatpush1.msra.mxu0 %v1998
    %2057 = vmatprep.subr.mxu0 0.0
    %2058 = vmatpush1.msra.mxu0 %v1999
    %2059 = vmatprep.subr.mxu0 0.0
    %2060 = vmatpush1.msra.mxu0 %v2000
    %2061 = vmatprep.subr.mxu0 0.0
    %2062 = vmatpush1.msra.mxu0 %v2001
    %2063 = vmatprep.subr.mxu0 0.0
    %2064 = vmatpush1.msra.mxu0 %v2002
    %2065 = vmatprep.subr.mxu0 0.0
    %2066 = vmatpush1.msra.mxu0 %v2003
    %2067 = vmatprep.subr.mxu0 0.0
    %2068 = vmatpush1.msra.mxu0 %v2004
    %2069 = vmatprep.mubr.f32.mxu0 %v1589
    %2070 = vmatmul.mubr.f32.gmra.mrb[0].mxu0 %v1462
    %v2071 = vpop.f32.mrb[0].mxu0
    %v2072 = vadd.f32 %v112, %v2071
    %v2073 = vpop.f32.mrb[0].mxu0
    %2074 = vdwg.mxu0
    %v2075 = vmul.f32 %v2072, 0.5
    %v2076 = vtanh.pop %v2075
    %v2077 = vmul.f32 %v2076, 0.5
    %v2078 = vadd.f32 %v2077, 0.5
    %2079 = vrot.lane.b32.xlu0 %v2072, 120
    %v2080 = vpop.permute.xlu0 %2079
    %v2081 = vmul.f32 %v2080, 0.5
    %v2082 = vtanh.pop %v2081
    %v2083 = vmul.f32 %v2082, 0.5
    %v2084 = vadd.f32 %v2083, 0.5
    %2085 = vrot.lane.b32.xlu0 %v2072, 112
    %v2086 = vpop.permute.xlu0 %2085
    %v2087 = vtanh.pop %v2086
    %2088 = vrot.lane.b32.xlu0 %v2072, 104
    %v2089 = vpop.permute.xlu0 %2088
    %v2090 = vmul.f32 %v2089, 0.5
    %v2091 = vtanh.pop %v2090
    %v2092 = vmul.f32 %v2091, 0.5
    %v2093 = vadd.f32 %v2092, 0.5
    %v2094 = vmul.f32 %v2084, %v1586
    %v2095 = vmul.f32 %v2078, %v2087
    %v2096 = vadd.f32 %v2094, %v2095
    %v2097 = vtanh.pop %v2096
    %v2098 = vmul.f32 %v2093, %v2097
    %v2099 = vsel %vm124, %v2098, 0.0
    %v2100 = vld [vmem:[#allocation8] sm:$0xff]
    %v2101 = vld [vmem:[#allocation8 + $0x8] sm:$0xff]
    %v2102 = vld [vmem:[#allocation8 + $0x10] sm:$0xff]
    %v2103 = vld [vmem:[#allocation8 + $0x18] sm:$0xff]
    %v2104 = vld [vmem:[#allocation8 + $0x20] sm:$0xff]
    %v2105 = vld [vmem:[#allocation8 + $0x28] sm:$0xff]
    %v2106 = vld [vmem:[#allocation8 + $0x30] sm:$0xff]
    %v2107 = vld [vmem:[#allocation8 + $0x38] sm:$0xff]
    %v2108 = vld [vmem:[#allocation8 + $0x40] sm:$0xff]
    %v2109 = vld [vmem:[#allocation8 + $0x48] sm:$0xff]
    %v2110 = vld [vmem:[#allocation8 + $0x50] sm:$0xff]
    %v2111 = vld [vmem:[#allocation8 + $0x58] sm:$0xff]
    %v2112 = vld [vmem:[#allocation8 + $0x60] sm:$0xff]
    %v2113 = vld [vmem:[#allocation8 + $0x68] sm:$0xff]
    %v2114 = vld [vmem:[#allocation8 + $0x70] sm:$0xff]
    %v2115 = vld [vmem:[#allocation8 + $0x78] sm:$0xff]
    %v2116 = vld [vmem:[#allocation8 + $0x80] sm:$0xff]
    %v2117 = vld [vmem:[#allocation8 + $0x88] sm:$0xff]
    %v2118 = vld [vmem:[#allocation8 + $0x90] sm:$0xff]
    %v2119 = vld [vmem:[#allocation8 + $0x98] sm:$0xff]
    %v2120 = vld [vmem:[#allocation8 + $0xa0] sm:$0xff]
    %v2121 = vld [vmem:[#allocation8 + $0xa8] sm:$0xff]
    %v2122 = vld [vmem:[#allocation8 + $0xb0] sm:$0xff]
    %v2123 = vld [vmem:[#allocation8 + $0xb8] sm:$0xff]
    %v2124 = vld [vmem:[#allocation8 + $0xc0] sm:$0xff]
    %v2125 = vld [vmem:[#allocation8 + $0xc8] sm:$0xff]
    %v2126 = vld [vmem:[#allocation8 + $0xd0] sm:$0xff]
    %v2127 = vld [vmem:[#allocation8 + $0xd8] sm:$0xff]
    %v2128 = vld [vmem:[#allocation8 + $0xe0] sm:$0xff]
    %v2129 = vld [vmem:[#allocation8 + $0xe8] sm:$0xff]
    %v2130 = vld [vmem:[#allocation8 + $0xf0] sm:$0xff]
    %v2131 = vld [vmem:[#allocation8 + $0xf8] sm:$0xff]
    %2132 = vmatprep.subr.mxu0 0.0
    %2133 = vmatpush1.msra.mxu0 %v2100
    %2134 = vmatprep.subr.mxu0 0.0
    %2135 = vmatpush1.msra.mxu0 %v2101
    %2136 = vmatprep.subr.mxu0 0.0
    %2137 = vmatpush1.msra.mxu0 %v2102
    %2138 = vmatprep.subr.mxu0 0.0
    %2139 = vmatpush1.msra.mxu0 %v2103
    %2140 = vmatprep.subr.mxu0 0.0
    %2141 = vmatpush1.msra.mxu0 %v2104
    %2142 = vmatprep.subr.mxu0 0.0
    %2143 = vmatpush1.msra.mxu0 %v2105
    %2144 = vmatprep.subr.mxu0 0.0
    %2145 = vmatpush1.msra.mxu0 %v2106
    %2146 = vmatprep.subr.mxu0 0.0
    %2147 = vmatpush1.msra.mxu0 %v2107
    %2148 = vmatprep.subr.mxu0 0.0
    %2149 = vmatpush1.msra.mxu0 %v2108
    %2150 = vmatprep.subr.mxu0 0.0
    %2151 = vmatpush1.msra.mxu0 %v2109
    %2152 = vmatprep.subr.mxu0 0.0
    %2153 = vmatpush1.msra.mxu0 %v2110
    %2154 = vmatprep.subr.mxu0 0.0
    %2155 = vmatpush1.msra.mxu0 %v2111
    %2156 = vmatprep.subr.mxu0 0.0
    %2157 = vmatpush1.msra.mxu0 %v2112
    %2158 = vmatprep.subr.mxu0 0.0
    %2159 = vmatpush1.msra.mxu0 %v2113
    %2160 = vmatprep.subr.mxu0 0.0
    %2161 = vmatpush1.msra.mxu0 %v2114
    %2162 = vmatprep.subr.mxu0 0.0
    %2163 = vmatpush1.msra.mxu0 %v2115
    %2164 = vmatprep.subr.mxu0 0.0
    %2165 = vmatpush1.msra.mxu0 %v2116
    %2166 = vmatprep.subr.mxu0 0.0
    %2167 = vmatpush1.msra.mxu0 %v2117
    %2168 = vmatprep.subr.mxu0 0.0
    %2169 = vmatpush1.msra.mxu0 %v2118
    %2170 = vmatprep.subr.mxu0 0.0
    %2171 = vmatpush1.msra.mxu0 %v2119
    %2172 = vmatprep.subr.mxu0 0.0
    %2173 = vmatpush1.msra.mxu0 %v2120
    %2174 = vmatprep.subr.mxu0 0.0
    %2175 = vmatpush1.msra.mxu0 %v2121
    %2176 = vmatprep.subr.mxu0 0.0
    %2177 = vmatpush1.msra.mxu0 %v2122
    %2178 = vmatprep.subr.mxu0 0.0
    %2179 = vmatpush1.msra.mxu0 %v2123
    %2180 = vmatprep.subr.mxu0 0.0
    %2181 = vmatpush1.msra.mxu0 %v2124
    %2182 = vmatprep.subr.mxu0 0.0
    %2183 = vmatpush1.msra.mxu0 %v2125
    %2184 = vmatprep.subr.mxu0 0.0
    %2185 = vmatpush1.msra.mxu0 %v2126
    %2186 = vmatprep.subr.mxu0 0.0
    %2187 = vmatpush1.msra.mxu0 %v2127
    %2188 = vmatprep.subr.mxu0 0.0
    %2189 = vmatpush1.msra.mxu0 %v2128
    %2190 = vmatprep.subr.mxu0 0.0
    %2191 = vmatpush1.msra.mxu0 %v2129
    %2192 = vmatprep.subr.mxu0 0.0
    %2193 = vmatpush1.msra.mxu0 %v2130
    %2194 = vmatprep.subr.mxu0 0.0
    %2195 = vmatpush1.msra.mxu0 %v2131
    %2196 = vmatprep.mubr.f32.mxu0 %v1716
    %2197 = vmatmul.mubr.f32.gmra.mrb[0].mxu0 %v1589
    %v2198 = vpop.f32.mrb[0].mxu0
    %v2199 = vadd.f32 %v119, %v2198
    %v2200 = vpop.f32.mrb[0].mxu0
    %2201 = vdwg.mxu0
    %v2202 = vmul.f32 %v2199, 0.5
    %v2203 = vtanh.pop %v2202
    %v2204 = vmul.f32 %v2203, 0.5
    %v2205 = vadd.f32 %v2204, 0.5
    %2206 = vrot.lane.b32.xlu0 %v2199, 112
    %v2207 = vpop.permute.xlu0 %2206
    %v2208 = vmul.f32 %v2207, 0.5
    %v2209 = vtanh.pop %v2208
    %v2210 = vmul.f32 %v2209, 0.5
    %v2211 = vadd.f32 %v2210, 0.5
    %2212 = vrot.lane.b32.xlu0 %v2199, 96
    %v2213 = vpop.permute.xlu0 %2212
    %v2214 = vtanh.pop %v2213
    %2215 = vrot.lane.b32.xlu0 %v2199, 80
    %v2216 = vpop.permute.xlu0 %2215
    %v2217 = vmul.f32 %v2216, 0.5
    %v2218 = vtanh.pop %v2217
    %v2219 = vmul.f32 %v2218, 0.5
    %v2220 = vadd.f32 %v2219, 0.5
    %v2221 = vmul.f32 %v2211, %v1713
    %v2222 = vmul.f32 %v2205, %v2214
    %v2223 = vadd.f32 %v2221, %v2222
    %v2224 = vtanh.pop %v2223
    %v2225 = vmul.f32 %v2220, %v2224
    %v2226 = vsel %vm123, %v2225, 0.0
    %2227 = vst [vmem:[#allocation2 + $0x10] sm:$0xff] %v2226
    %v2228 = vld [vmem:[%s0 + $0x30] sm:$0xff]
    %v2229 = vld [vmem:[#allocation3] sm:$0xff]
    %v2230 = vld [vmem:[#allocation3 + $0x8] sm:$0xff]
    %v2231 = vld [vmem:[#allocation3 + $0x10] sm:$0xff]
    %v2232 = vld [vmem:[#allocation3 + $0x18] sm:$0xff]
    %v2233 = vld [vmem:[#allocation3 + $0x20] sm:$0xff]
    %v2234 = vld [vmem:[#allocation3 + $0x28] sm:$0xff]
    %v2235 = vld [vmem:[#allocation3 + $0x30] sm:$0xff]
    %v2236 = vld [vmem:[#allocation3 + $0x38] sm:$0xff]
    %v2237 = vld [vmem:[#allocation3 + $0x40] sm:$0xff]
    %v2238 = vld [vmem:[#allocation3 + $0x48] sm:$0xff]
    %v2239 = vld [vmem:[#allocation3 + $0x50] sm:$0xff]
    %v2240 = vld [vmem:[#allocation3 + $0x58] sm:$0xff]
    %v2241 = vld [vmem:[#allocation3 + $0x60] sm:$0xff]
    %v2242 = vld [vmem:[#allocation3 + $0x68] sm:$0xff]
    %v2243 = vld [vmem:[#allocation3 + $0x70] sm:$0xff]
    %v2244 = vld [vmem:[#allocation3 + $0x78] sm:$0xff]
    %v2245 = vld [vmem:[#allocation3 + $0x80] sm:$0xff]
    %v2246 = vld [vmem:[#allocation3 + $0x88] sm:$0xff]
    %v2247 = vld [vmem:[#allocation3 + $0x90] sm:$0xff]
    %v2248 = vld [vmem:[#allocation3 + $0x98] sm:$0xff]
    %v2249 = vld [vmem:[#allocation3 + $0xa0] sm:$0xff]
    %v2250 = vld [vmem:[#allocation3 + $0xa8] sm:$0xff]
    %v2251 = vld [vmem:[#allocation3 + $0xb0] sm:$0xff]
    %v2252 = vld [vmem:[#allocation3 + $0xb8] sm:$0xff]
    %v2253 = vld [vmem:[#allocation3 + $0xc0] sm:$0xff]
    %v2254 = vld [vmem:[#allocation3 + $0xc8] sm:$0xff]
    %v2255 = vld [vmem:[#allocation3 + $0xd0] sm:$0xff]
    %v2256 = vld [vmem:[#allocation3 + $0xd8] sm:$0xff]
    %v2257 = vld [vmem:[#allocation3 + $0xe0] sm:$0xff]
    %v2258 = vld [vmem:[#allocation3 + $0xe8] sm:$0xff]
    %v2259 = vld [vmem:[#allocation3 + $0xf0] sm:$0xff]
    %v2260 = vld [vmem:[#allocation3 + $0xf8] sm:$0xff]
    %2261 = vmatprep.subr.mxu0 0.0
    %2262 = vmatpush1.msra.mxu0 %v2229
    %2263 = vmatprep.subr.mxu0 0.0
    %2264 = vmatpush1.msra.mxu0 %v2230
    %2265 = vmatprep.subr.mxu0 0.0
    %2266 = vmatpush1.msra.mxu0 %v2231
    %2267 = vmatprep.subr.mxu0 0.0
    %2268 = vmatpush1.msra.mxu0 %v2232
    %2269 = vmatprep.subr.mxu0 0.0
    %2270 = vmatpush1.msra.mxu0 %v2233
    %2271 = vmatprep.subr.mxu0 0.0
    %2272 = vmatpush1.msra.mxu0 %v2234
    %2273 = vmatprep.subr.mxu0 0.0
    %2274 = vmatpush1.msra.mxu0 %v2235
    %2275 = vmatprep.subr.mxu0 0.0
    %2276 = vmatpush1.msra.mxu0 %v2236
    %2277 = vmatprep.subr.mxu0 0.0
    %2278 = vmatpush1.msra.mxu0 %v2237
    %2279 = vmatprep.subr.mxu0 0.0
    %2280 = vmatpush1.msra.mxu0 %v2238
    %2281 = vmatprep.subr.mxu0 0.0
    %2282 = vmatpush1.msra.mxu0 %v2239
    %2283 = vmatprep.subr.mxu0 0.0
    %2284 = vmatpush1.msra.mxu0 %v2240
    %2285 = vmatprep.subr.mxu0 0.0
    %2286 = vmatpush1.msra.mxu0 %v2241
    %2287 = vmatprep.subr.mxu0 0.0
    %2288 = vmatpush1.msra.mxu0 %v2242
    %2289 = vmatprep.subr.mxu0 0.0
    %2290 = vmatpush1.msra.mxu0 %v2243
    %2291 = vmatprep.subr.mxu0 0.0
    %2292 = vmatpush1.msra.mxu0 %v2244
    %2293 = vmatprep.subr.mxu0 0.0
    %2294 = vmatpush1.msra.mxu0 %v2245
    %2295 = vmatprep.subr.mxu0 0.0
    %2296 = vmatpush1.msra.mxu0 %v2246
    %2297 = vmatprep.subr.mxu0 0.0
    %2298 = vmatpush1.msra.mxu0 %v2247
    %2299 = vmatprep.subr.mxu0 0.0
    %2300 = vmatpush1.msra.mxu0 %v2248
    %2301 = vmatprep.subr.mxu0 0.0
    %2302 = vmatpush1.msra.mxu0 %v2249
    %2303 = vmatprep.subr.mxu0 0.0
    %2304 = vmatpush1.msra.mxu0 %v2250
    %2305 = vmatprep.subr.mxu0 0.0
    %2306 = vmatpush1.msra.mxu0 %v2251
    %2307 = vmatprep.subr.mxu0 0.0
    %2308 = vmatpush1.msra.mxu0 %v2252
    %2309 = vmatprep.subr.mxu0 0.0
    %2310 = vmatpush1.msra.mxu0 %v2253
    %2311 = vmatprep.subr.mxu0 0.0
    %2312 = vmatpush1.msra.mxu0 %v2254
    %2313 = vmatprep.subr.mxu0 0.0
    %2314 = vmatpush1.msra.mxu0 %v2255
    %2315 = vmatprep.subr.mxu0 0.0
    %2316 = vmatpush1.msra.mxu0 %v2256
    %2317 = vmatprep.subr.mxu0 0.0
    %2318 = vmatpush1.msra.mxu0 %v2257
    %2319 = vmatprep.subr.mxu0 0.0
    %2320 = vmatpush1.msra.mxu0 %v2258
    %2321 = vmatprep.subr.mxu0 0.0
    %2322 = vmatpush1.msra.mxu0 %v2259
    %2323 = vmatprep.subr.mxu0 0.0
    %2324 = vmatpush1.msra.mxu0 %v2260
    %2325 = vmatprep.mubr.f32.mxu0 %v1845
    %2326 = vmatmul.mubr.f32.gmra.mrb[0].mxu0 %v2228
    %v2327 = vpop.f32.mrb[0].mxu0
    %v2328 = vadd.f32 %v98, %v2327
    %v2329 = vpop.f32.mrb[0].mxu0
    %2330 = vdwg.mxu0
    %v2331 = vmul.f32 %v2328, 0.5
    %v2332 = vtanh.pop %v2331
    %v2333 = vmul.f32 %v2332, 0.5
    %v2334 = vadd.f32 %v2333, 0.5
    %2335 = vrot.lane.b32.xlu0 %v2328, 112
    %v2336 = vpop.permute.xlu0 %2335
    %v2337 = vmul.f32 %v2336, 0.5
    %v2338 = vtanh.pop %v2337
    %v2339 = vmul.f32 %v2338, 0.5
    %v2340 = vadd.f32 %v2339, 0.5
    %2341 = vrot.lane.b32.xlu0 %v2328, 96
    %v2342 = vpop.permute.xlu0 %2341
    %v2343 = vtanh.pop %v2342
    %2344 = vrot.lane.b32.xlu0 %v2328, 80
    %v2345 = vpop.permute.xlu0 %2344
    %v2346 = vmul.f32 %v2345, 0.5
    %v2347 = vtanh.pop %v2346
    %v2348 = vmul.f32 %v2347, 0.5
    %v2349 = vadd.f32 %v2348, 0.5
    %v2350 = vmul.f32 %v2340, %v1842
    %v2351 = vmul.f32 %v2334, %v2343
    %v2352 = vadd.f32 %v2350, %v2351
    %v2353 = vtanh.pop %v2352
    %v2354 = vmul.f32 %v2349, %v2353
    %v2355 = vsel %vm123, %v2354, 0.0
    %v2356 = vld [vmem:[#allocation5] sm:$0xff]
    %v2357 = vld [vmem:[#allocation5 + $0x8] sm:$0xff]
    %v2358 = vld [vmem:[#allocation5 + $0x10] sm:$0xff]
    %v2359 = vld [vmem:[#allocation5 + $0x18] sm:$0xff]
    %v2360 = vld [vmem:[#allocation5 + $0x20] sm:$0xff]
    %v2361 = vld [vmem:[#allocation5 + $0x28] sm:$0xff]
    %v2362 = vld [vmem:[#allocation5 + $0x30] sm:$0xff]
    %v2363 = vld [vmem:[#allocation5 + $0x38] sm:$0xff]
    %v2364 = vld [vmem:[#allocation5 + $0x40] sm:$0xff]
    %v2365 = vld [vmem:[#allocation5 + $0x48] sm:$0xff]
    %v2366 = vld [vmem:[#allocation5 + $0x50] sm:$0xff]
    %v2367 = vld [vmem:[#allocation5 + $0x58] sm:$0xff]
    %v2368 = vld [vmem:[#allocation5 + $0x60] sm:$0xff]
    %v2369 = vld [vmem:[#allocation5 + $0x68] sm:$0xff]
    %v2370 = vld [vmem:[#allocation5 + $0x70] sm:$0xff]
    %v2371 = vld [vmem:[#allocation5 + $0x78] sm:$0xff]
    %v2372 = vld [vmem:[#allocation5 + $0x80] sm:$0xff]
    %v2373 = vld [vmem:[#allocation5 + $0x88] sm:$0xff]
    %v2374 = vld [vmem:[#allocation5 + $0x90] sm:$0xff]
    %v2375 = vld [vmem:[#allocation5 + $0x98] sm:$0xff]
    %v2376 = vld [vmem:[#allocation5 + $0xa0] sm:$0xff]
    %v2377 = vld [vmem:[#allocation5 + $0xa8] sm:$0xff]
    %v2378 = vld [vmem:[#allocation5 + $0xb0] sm:$0xff]
    %v2379 = vld [vmem:[#allocation5 + $0xb8] sm:$0xff]
    %v2380 = vld [vmem:[#allocation5 + $0xc0] sm:$0xff]
    %v2381 = vld [vmem:[#allocation5 + $0xc8] sm:$0xff]
    %v2382 = vld [vmem:[#allocation5 + $0xd0] sm:$0xff]
    %v2383 = vld [vmem:[#allocation5 + $0xd8] sm:$0xff]
    %v2384 = vld [vmem:[#allocation5 + $0xe0] sm:$0xff]
    %v2385 = vld [vmem:[#allocation5 + $0xe8] sm:$0xff]
    %v2386 = vld [vmem:[#allocation5 + $0xf0] sm:$0xff]
    %v2387 = vld [vmem:[#allocation5 + $0xf8] sm:$0xff]
    %2388 = vmatprep.subr.mxu0 0.0
    %2389 = vmatpush1.msra.mxu0 %v2356
    %2390 = vmatprep.subr.mxu0 0.0
    %2391 = vmatpush1.msra.mxu0 %v2357
    %2392 = vmatprep.subr.mxu0 0.0
    %2393 = vmatpush1.msra.mxu0 %v2358
    %2394 = vmatprep.subr.mxu0 0.0
    %2395 = vmatpush1.msra.mxu0 %v2359
    %2396 = vmatprep.subr.mxu0 0.0
    %2397 = vmatpush1.msra.mxu0 %v2360
    %2398 = vmatprep.subr.mxu0 0.0
    %2399 = vmatpush1.msra.mxu0 %v2361
    %2400 = vmatprep.subr.mxu0 0.0
    %2401 = vmatpush1.msra.mxu0 %v2362
    %2402 = vmatprep.subr.mxu0 0.0
    %2403 = vmatpush1.msra.mxu0 %v2363
    %2404 = vmatprep.subr.mxu0 0.0
    %2405 = vmatpush1.msra.mxu0 %v2364
    %2406 = vmatprep.subr.mxu0 0.0
    %2407 = vmatpush1.msra.mxu0 %v2365
    %2408 = vmatprep.subr.mxu0 0.0
    %2409 = vmatpush1.msra.mxu0 %v2366
    %2410 = vmatprep.subr.mxu0 0.0
    %2411 = vmatpush1.msra.mxu0 %v2367
    %2412 = vmatprep.subr.mxu0 0.0
    %2413 = vmatpush1.msra.mxu0 %v2368
    %2414 = vmatprep.subr.mxu0 0.0
    %2415 = vmatpush1.msra.mxu0 %v2369
    %2416 = vmatprep.subr.mxu0 0.0
    %2417 = vmatpush1.msra.mxu0 %v2370
    %2418 = vmatprep.subr.mxu0 0.0
    %2419 = vmatpush1.msra.mxu0 %v2371
    %2420 = vmatprep.subr.mxu0 0.0
    %2421 = vmatpush1.msra.mxu0 %v2372
    %2422 = vmatprep.subr.mxu0 0.0
    %2423 = vmatpush1.msra.mxu0 %v2373
    %2424 = vmatprep.subr.mxu0 0.0
    %2425 = vmatpush1.msra.mxu0 %v2374
    %2426 = vmatprep.subr.mxu0 0.0
    %2427 = vmatpush1.msra.mxu0 %v2375
    %2428 = vmatprep.subr.mxu0 0.0
    %2429 = vmatpush1.msra.mxu0 %v2376
    %2430 = vmatprep.subr.mxu0 0.0
    %2431 = vmatpush1.msra.mxu0 %v2377
    %2432 = vmatprep.subr.mxu0 0.0
    %2433 = vmatpush1.msra.mxu0 %v2378
    %2434 = vmatprep.subr.mxu0 0.0
    %2435 = vmatpush1.msra.mxu0 %v2379
    %2436 = vmatprep.subr.mxu0 0.0
    %2437 = vmatpush1.msra.mxu0 %v2380
    %2438 = vmatprep.subr.mxu0 0.0
    %2439 = vmatpush1.msra.mxu0 %v2381
    %2440 = vmatprep.subr.mxu0 0.0
    %2441 = vmatpush1.msra.mxu0 %v2382
    %2442 = vmatprep.subr.mxu0 0.0
    %2443 = vmatpush1.msra.mxu0 %v2383
    %2444 = vmatprep.subr.mxu0 0.0
    %2445 = vmatpush1.msra.mxu0 %v2384
    %2446 = vmatprep.subr.mxu0 0.0
    %2447 = vmatpush1.msra.mxu0 %v2385
    %2448 = vmatprep.subr.mxu0 0.0
    %2449 = vmatpush1.msra.mxu0 %v2386
    %2450 = vmatprep.subr.mxu0 0.0
    %2451 = vmatpush1.msra.mxu0 %v2387
    %2452 = vmatprep.mubr.f32.mxu0 %v1972
    %2453 = vmatmul.mubr.f32.gmra.mrb[0].mxu0 %v1845
    %v2454 = vpop.f32.mrb[0].mxu0
    %v2455 = vadd.f32 %v105, %v2454
    %v2456 = vpop.f32.mrb[0].mxu0
    %2457 = vdwg.mxu0
    %v2458 = vmul.f32 %v2455, 0.5
    %v2459 = vtanh.pop %v2458
    %v2460 = vmul.f32 %v2459, 0.5
    %v2461 = vadd.f32 %v2460, 0.5
    %2462 = vrot.lane.b32.xlu0 %v2455, 120
    %v2463 = vpop.permute.xlu0 %2462
    %v2464 = vmul.f32 %v2463, 0.5
    %v2465 = vtanh.pop %v2464
    %v2466 = vmul.f32 %v2465, 0.5
    %v2467 = vadd.f32 %v2466, 0.5
    %2468 = vrot.lane.b32.xlu0 %v2455, 112
    %v2469 = vpop.permute.xlu0 %2468
    %v2470 = vtanh.pop %v2469
    %2471 = vrot.lane.b32.xlu0 %v2455, 104
    %v2472 = vpop.permute.xlu0 %2471
    %v2473 = vmul.f32 %v2472, 0.5
    %v2474 = vtanh.pop %v2473
    %v2475 = vmul.f32 %v2474, 0.5
    %v2476 = vadd.f32 %v2475, 0.5
    %v2477 = vmul.f32 %v2467, %v1969
    %v2478 = vmul.f32 %v2461, %v2470
    %v2479 = vadd.f32 %v2477, %v2478
    %v2480 = vtanh.pop %v2479
    %v2481 = vmul.f32 %v2476, %v2480
    %v2482 = vsel %vm124, %v2481, 0.0
    %v2483 = vld [vmem:[#allocation7] sm:$0xff]
    %v2484 = vld [vmem:[#allocation7 + $0x8] sm:$0xff]
    %v2485 = vld [vmem:[#allocation7 + $0x10] sm:$0xff]
    %v2486 = vld [vmem:[#allocation7 + $0x18] sm:$0xff]
    %v2487 = vld [vmem:[#allocation7 + $0x20] sm:$0xff]
    %v2488 = vld [vmem:[#allocation7 + $0x28] sm:$0xff]
    %v2489 = vld [vmem:[#allocation7 + $0x30] sm:$0xff]
    %v2490 = vld [vmem:[#allocation7 + $0x38] sm:$0xff]
    %v2491 = vld [vmem:[#allocation7 + $0x40] sm:$0xff]
    %v2492 = vld [vmem:[#allocation7 + $0x48] sm:$0xff]
    %v2493 = vld [vmem:[#allocation7 + $0x50] sm:$0xff]
    %v2494 = vld [vmem:[#allocation7 + $0x58] sm:$0xff]
    %v2495 = vld [vmem:[#allocation7 + $0x60] sm:$0xff]
    %v2496 = vld [vmem:[#allocation7 + $0x68] sm:$0xff]
    %v2497 = vld [vmem:[#allocation7 + $0x70] sm:$0xff]
    %v2498 = vld [vmem:[#allocation7 + $0x78] sm:$0xff]
    %v2499 = vld [vmem:[#allocation7 + $0x80] sm:$0xff]
    %v2500 = vld [vmem:[#allocation7 + $0x88] sm:$0xff]
    %v2501 = vld [vmem:[#allocation7 + $0x90] sm:$0xff]
    %v2502 = vld [vmem:[#allocation7 + $0x98] sm:$0xff]
    %v2503 = vld [vmem:[#allocation7 + $0xa0] sm:$0xff]
    %v2504 = vld [vmem:[#allocation7 + $0xa8] sm:$0xff]
    %v2505 = vld [vmem:[#allocation7 + $0xb0] sm:$0xff]
    %v2506 = vld [vmem:[#allocation7 + $0xb8] sm:$0xff]
    %v2507 = vld [vmem:[#allocation7 + $0xc0] sm:$0xff]
    %v2508 = vld [vmem:[#allocation7 + $0xc8] sm:$0xff]
    %v2509 = vld [vmem:[#allocation7 + $0xd0] sm:$0xff]
    %v2510 = vld [vmem:[#allocation7 + $0xd8] sm:$0xff]
    %v2511 = vld [vmem:[#allocation7 + $0xe0] sm:$0xff]
    %v2512 = vld [vmem:[#allocation7 + $0xe8] sm:$0xff]
    %v2513 = vld [vmem:[#allocation7 + $0xf0] sm:$0xff]
    %v2514 = vld [vmem:[#allocation7 + $0xf8] sm:$0xff]
    %2515 = vmatprep.subr.mxu0 0.0
    %2516 = vmatpush1.msra.mxu0 %v2483
    %2517 = vmatprep.subr.mxu0 0.0
    %2518 = vmatpush1.msra.mxu0 %v2484
    %2519 = vmatprep.subr.mxu0 0.0
    %2520 = vmatpush1.msra.mxu0 %v2485
    %2521 = vmatprep.subr.mxu0 0.0
    %2522 = vmatpush1.msra.mxu0 %v2486
    %2523 = vmatprep.subr.mxu0 0.0
    %2524 = vmatpush1.msra.mxu0 %v2487
    %2525 = vmatprep.subr.mxu0 0.0
    %2526 = vmatpush1.msra.mxu0 %v2488
    %2527 = vmatprep.subr.mxu0 0.0
    %2528 = vmatpush1.msra.mxu0 %v2489
    %2529 = vmatprep.subr.mxu0 0.0
    %2530 = vmatpush1.msra.mxu0 %v2490
    %2531 = vmatprep.subr.mxu0 0.0
    %2532 = vmatpush1.msra.mxu0 %v2491
    %2533 = vmatprep.subr.mxu0 0.0
    %2534 = vmatpush1.msra.mxu0 %v2492
    %2535 = vmatprep.subr.mxu0 0.0
    %2536 = vmatpush1.msra.mxu0 %v2493
    %2537 = vmatprep.subr.mxu0 0.0
    %2538 = vmatpush1.msra.mxu0 %v2494
    %2539 = vmatprep.subr.mxu0 0.0
    %2540 = vmatpush1.msra.mxu0 %v2495
    %2541 = vmatprep.subr.mxu0 0.0
    %2542 = vmatpush1.msra.mxu0 %v2496
    %2543 = vmatprep.subr.mxu0 0.0
    %2544 = vmatpush1.msra.mxu0 %v2497
    %2545 = vmatprep.subr.mxu0 0.0
    %2546 = vmatpush1.msra.mxu0 %v2498
    %2547 = vmatprep.subr.mxu0 0.0
    %2548 = vmatpush1.msra.mxu0 %v2499
    %2549 = vmatprep.subr.mxu0 0.0
    %2550 = vmatpush1.msra.mxu0 %v2500
    %2551 = vmatprep.subr.mxu0 0.0
    %2552 = vmatpush1.msra.mxu0 %v2501
    %2553 = vmatprep.subr.mxu0 0.0
    %2554 = vmatpush1.msra.mxu0 %v2502
    %2555 = vmatprep.subr.mxu0 0.0
    %2556 = vmatpush1.msra.mxu0 %v2503
    %2557 = vmatprep.subr.mxu0 0.0
    %2558 = vmatpush1.msra.mxu0 %v2504
    %2559 = vmatprep.subr.mxu0 0.0
    %2560 = vmatpush1.msra.mxu0 %v2505
    %2561 = vmatprep.subr.mxu0 0.0
    %2562 = vmatpush1.msra.mxu0 %v2506
    %2563 = vmatprep.subr.mxu0 0.0
    %2564 = vmatpush1.msra.mxu0 %v2507
    %2565 = vmatprep.subr.mxu0 0.0
    %2566 = vmatpush1.msra.mxu0 %v2508
    %2567 = vmatprep.subr.mxu0 0.0
    %2568 = vmatpush1.msra.mxu0 %v2509
    %2569 = vmatprep.subr.mxu0 0.0
    %2570 = vmatpush1.msra.mxu0 %v2510
    %2571 = vmatprep.subr.mxu0 0.0
    %2572 = vmatpush1.msra.mxu0 %v2511
    %2573 = vmatprep.subr.mxu0 0.0
    %2574 = vmatpush1.msra.mxu0 %v2512
    %2575 = vmatprep.subr.mxu0 0.0
    %2576 = vmatpush1.msra.mxu0 %v2513
    %2577 = vmatprep.subr.mxu0 0.0
    %2578 = vmatpush1.msra.mxu0 %v2514
    %2579 = vmatprep.mubr.f32.mxu0 %v2099
    %2580 = vmatmul.mubr.f32.gmra.mrb[0].mxu0 %v1972
    %v2581 = vpop.f32.mrb[0].mxu0
    %v2582 = vadd.f32 %v112, %v2581
    %v2583 = vpop.f32.mrb[0].mxu0
    %2584 = vdwg.mxu0
    %v2585 = vmul.f32 %v2582, 0.5
    %v2586 = vtanh.pop %v2585
    %v2587 = vmul.f32 %v2586, 0.5
    %v2588 = vadd.f32 %v2587, 0.5
    %2589 = vrot.lane.b32.xlu0 %v2582, 120
    %v2590 = vpop.permute.xlu0 %2589
    %v2591 = vmul.f32 %v2590, 0.5
    %v2592 = vtanh.pop %v2591
    %v2593 = vmul.f32 %v2592, 0.5
    %v2594 = vadd.f32 %v2593, 0.5
    %2595 = vrot.lane.b32.xlu0 %v2582, 112
    %v2596 = vpop.permute.xlu0 %2595
    %v2597 = vtanh.pop %v2596
    %2598 = vrot.lane.b32.xlu0 %v2582, 104
    %v2599 = vpop.permute.xlu0 %2598
    %v2600 = vmul.f32 %v2599, 0.5
    %v2601 = vtanh.pop %v2600
    %v2602 = vmul.f32 %v2601, 0.5
    %v2603 = vadd.f32 %v2602, 0.5
    %v2604 = vmul.f32 %v2594, %v2096
    %v2605 = vmul.f32 %v2588, %v2597
    %v2606 = vadd.f32 %v2604, %v2605
    %v2607 = vtanh.pop %v2606
    %v2608 = vmul.f32 %v2603, %v2607
    %v2609 = vsel %vm124, %v2608, 0.0
    %v2610 = vld [vmem:[#allocation8] sm:$0xff]
    %v2611 = vld [vmem:[#allocation8 + $0x8] sm:$0xff]
    %v2612 = vld [vmem:[#allocation8 + $0x10] sm:$0xff]
    %v2613 = vld [vmem:[#allocation8 + $0x18] sm:$0xff]
    %v2614 = vld [vmem:[#allocation8 + $0x20] sm:$0xff]
    %v2615 = vld [vmem:[#allocation8 + $0x28] sm:$0xff]
    %v2616 = vld [vmem:[#allocation8 + $0x30] sm:$0xff]
    %v2617 = vld [vmem:[#allocation8 + $0x38] sm:$0xff]
    %v2618 = vld [vmem:[#allocation8 + $0x40] sm:$0xff]
    %v2619 = vld [vmem:[#allocation8 + $0x48] sm:$0xff]
    %v2620 = vld [vmem:[#allocation8 + $0x50] sm:$0xff]
    %v2621 = vld [vmem:[#allocation8 + $0x58] sm:$0xff]
    %v2622 = vld [vmem:[#allocation8 + $0x60] sm:$0xff]
    %v2623 = vld [vmem:[#allocation8 + $0x68] sm:$0xff]
    %v2624 = vld [vmem:[#allocation8 + $0x70] sm:$0xff]
    %v2625 = vld [vmem:[#allocation8 + $0x78] sm:$0xff]
    %v2626 = vld [vmem:[#allocation8 + $0x80] sm:$0xff]
    %v2627 = vld [vmem:[#allocation8 + $0x88] sm:$0xff]
    %v2628 = vld [vmem:[#allocation8 + $0x90] sm:$0xff]
    %v2629 = vld [vmem:[#allocation8 + $0x98] sm:$0xff]
    %v2630 = vld [vmem:[#allocation8 + $0xa0] sm:$0xff]
    %v2631 = vld [vmem:[#allocation8 + $0xa8] sm:$0xff]
    %v2632 = vld [vmem:[#allocation8 + $0xb0] sm:$0xff]
    %v2633 = vld [vmem:[#allocation8 + $0xb8] sm:$0xff]
    %v2634 = vld [vmem:[#allocation8 + $0xc0] sm:$0xff]
    %v2635 = vld [vmem:[#allocation8 + $0xc8] sm:$0xff]
    %v2636 = vld [vmem:[#allocation8 + $0xd0] sm:$0xff]
    %v2637 = vld [vmem:[#allocation8 + $0xd8] sm:$0xff]
    %v2638 = vld [vmem:[#allocation8 + $0xe0] sm:$0xff]
    %v2639 = vld [vmem:[#allocation8 + $0xe8] sm:$0xff]
    %v2640 = vld [vmem:[#allocation8 + $0xf0] sm:$0xff]
    %v2641 = vld [vmem:[#allocation8 + $0xf8] sm:$0xff]
    %2642 = vmatprep.subr.mxu0 0.0
    %2643 = vmatpush1.msra.mxu0 %v2610
    %2644 = vmatprep.subr.mxu0 0.0
    %2645 = vmatpush1.msra.mxu0 %v2611
    %2646 = vmatprep.subr.mxu0 0.0
    %2647 = vmatpush1.msra.mxu0 %v2612
    %2648 = vmatprep.subr.mxu0 0.0
    %2649 = vmatpush1.msra.mxu0 %v2613
    %2650 = vmatprep.subr.mxu0 0.0
    %2651 = vmatpush1.msra.mxu0 %v2614
    %2652 = vmatprep.subr.mxu0 0.0
    %2653 = vmatpush1.msra.mxu0 %v2615
    %2654 = vmatprep.subr.mxu0 0.0
    %2655 = vmatpush1.msra.mxu0 %v2616
    %2656 = vmatprep.subr.mxu0 0.0
    %2657 = vmatpush1.msra.mxu0 %v2617
    %2658 = vmatprep.subr.mxu0 0.0
    %2659 = vmatpush1.msra.mxu0 %v2618
    %2660 = vmatprep.subr.mxu0 0.0
    %2661 = vmatpush1.msra.mxu0 %v2619
    %2662 = vmatprep.subr.mxu0 0.0
    %2663 = vmatpush1.msra.mxu0 %v2620
    %2664 = vmatprep.subr.mxu0 0.0
    %2665 = vmatpush1.msra.mxu0 %v2621
    %2666 = vmatprep.subr.mxu0 0.0
    %2667 = vmatpush1.msra.mxu0 %v2622
    %2668 = vmatprep.subr.mxu0 0.0
    %2669 = vmatpush1.msra.mxu0 %v2623
    %2670 = vmatprep.subr.mxu0 0.0
    %2671 = vmatpush1.msra.mxu0 %v2624
    %2672 = vmatprep.subr.mxu0 0.0
    %2673 = vmatpush1.msra.mxu0 %v2625
    %2674 = vmatprep.subr.mxu0 0.0
    %2675 = vmatpush1.msra.mxu0 %v2626
    %2676 = vmatprep.subr.mxu0 0.0
    %2677 = vmatpush1.msra.mxu0 %v2627
    %2678 = vmatprep.subr.mxu0 0.0
    %2679 = vmatpush1.msra.mxu0 %v2628
    %2680 = vmatprep.subr.mxu0 0.0
    %2681 = vmatpush1.msra.mxu0 %v2629
    %2682 = vmatprep.subr.mxu0 0.0
    %2683 = vmatpush1.msra.mxu0 %v2630
    %2684 = vmatprep.subr.mxu0 0.0
    %2685 = vmatpush1.msra.mxu0 %v2631
    %2686 = vmatprep.subr.mxu0 0.0
    %2687 = vmatpush1.msra.mxu0 %v2632
    %2688 = vmatprep.subr.mxu0 0.0
    %2689 = vmatpush1.msra.mxu0 %v2633
    %2690 = vmatprep.subr.mxu0 0.0
    %2691 = vmatpush1.msra.mxu0 %v2634
    %2692 = vmatprep.subr.mxu0 0.0
    %2693 = vmatpush1.msra.mxu0 %v2635
    %2694 = vmatprep.subr.mxu0 0.0
    %2695 = vmatpush1.msra.mxu0 %v2636
    %2696 = vmatprep.subr.mxu0 0.0
    %2697 = vmatpush1.msra.mxu0 %v2637
    %2698 = vmatprep.subr.mxu0 0.0
    %2699 = vmatpush1.msra.mxu0 %v2638
    %2700 = vmatprep.subr.mxu0 0.0
    %2701 = vmatpush1.msra.mxu0 %v2639
    %2702 = vmatprep.subr.mxu0 0.0
    %2703 = vmatpush1.msra.mxu0 %v2640
    %2704 = vmatprep.subr.mxu0 0.0
    %2705 = vmatpush1.msra.mxu0 %v2641
    %2706 = vmatprep.mubr.f32.mxu0 %v2226
    %2707 = vmatmul.mubr.f32.gmra.mrb[0].mxu0 %v2099
    %v2708 = vpop.f32.mrb[0].mxu0
    %v2709 = vadd.f32 %v119, %v2708
    %v2710 = vpop.f32.mrb[0].mxu0
    %2711 = vdwg.mxu0
    %v2712 = vmul.f32 %v2709, 0.5
    %v2713 = vtanh.pop %v2712
    %v2714 = vmul.f32 %v2713, 0.5
    %v2715 = vadd.f32 %v2714, 0.5
    %2716 = vrot.lane.b32.xlu0 %v2709, 112
    %v2717 = vpop.permute.xlu0 %2716
    %v2718 = vmul.f32 %v2717, 0.5
    %v2719 = vtanh.pop %v2718
    %v2720 = vmul.f32 %v2719, 0.5
    %v2721 = vadd.f32 %v2720, 0.5
    %2722 = vrot.lane.b32.xlu0 %v2709, 96
    %v2723 = vpop.permute.xlu0 %2722
    %v2724 = vtanh.pop %v2723
    %2725 = vrot.lane.b32.xlu0 %v2709, 80
    %v2726 = vpop.permute.xlu0 %2725
    %v2727 = vmul.f32 %v2726, 0.5
    %v2728 = vtanh.pop %v2727
    %v2729 = vmul.f32 %v2728, 0.5
    %v2730 = vadd.f32 %v2729, 0.5
    %v2731 = vmul.f32 %v2721, %v2223
    %v2732 = vmul.f32 %v2715, %v2724
    %v2733 = vadd.f32 %v2731, %v2732
    %v2734 = vtanh.pop %v2733
    %v2735 = vmul.f32 %v2730, %v2734
    %v2736 = vsel %vm123, %v2735, 0.0
    %2737 = vst [vmem:[#allocation2 + $0x18] sm:$0xff] %v2736
    %v2738 = vld [vmem:[%s0 + $0x38] sm:$0xff]
    %v2739 = vld [vmem:[#allocation3] sm:$0xff]
    %v2740 = vld [vmem:[#allocation3 + $0x8] sm:$0xff]
    %v2741 = vld [vmem:[#allocation3 + $0x10] sm:$0xff]
    %v2742 = vld [vmem:[#allocation3 + $0x18] sm:$0xff]
    %v2743 = vld [vmem:[#allocation3 + $0x20] sm:$0xff]
    %v2744 = vld [vmem:[#allocation3 + $0x28] sm:$0xff]
    %v2745 = vld [vmem:[#allocation3 + $0x30] sm:$0xff]
    %v2746 = vld [vmem:[#allocation3 + $0x38] sm:$0xff]
    %v2747 = vld [vmem:[#allocation3 + $0x40] sm:$0xff]
    %v2748 = vld [vmem:[#allocation3 + $0x48] sm:$0xff]
    %v2749 = vld [vmem:[#allocation3 + $0x50] sm:$0xff]
    %v2750 = vld [vmem:[#allocation3 + $0x58] sm:$0xff]
    %v2751 = vld [vmem:[#allocation3 + $0x60] sm:$0xff]
    %v2752 = vld [vmem:[#allocation3 + $0x68] sm:$0xff]
    %v2753 = vld [vmem:[#allocation3 + $0x70] sm:$0xff]
    %v2754 = vld [vmem:[#allocation3 + $0x78] sm:$0xff]
    %v2755 = vld [vmem:[#allocation3 + $0x80] sm:$0xff]
    %v2756 = vld [vmem:[#allocation3 + $0x88] sm:$0xff]
    %v2757 = vld [vmem:[#allocation3 + $0x90] sm:$0xff]
    %v2758 = vld [vmem:[#allocation3 + $0x98] sm:$0xff]
    %v2759 = vld [vmem:[#allocation3 + $0xa0] sm:$0xff]
    %v2760 = vld [vmem:[#allocation3 + $0xa8] sm:$0xff]
    %v2761 = vld [vmem:[#allocation3 + $0xb0] sm:$0xff]
    %v2762 = vld [vmem:[#allocation3 + $0xb8] sm:$0xff]
    %v2763 = vld [vmem:[#allocation3 + $0xc0] sm:$0xff]
    %v2764 = vld [vmem:[#allocation3 + $0xc8] sm:$0xff]
    %v2765 = vld [vmem:[#allocation3 + $0xd0] sm:$0xff]
    %v2766 = vld [vmem:[#allocation3 + $0xd8] sm:$0xff]
    %v2767 = vld [vmem:[#allocation3 + $0xe0] sm:$0xff]
    %v2768 = vld [vmem:[#allocation3 + $0xe8] sm:$0xff]
    %v2769 = vld [vmem:[#allocation3 + $0xf0] sm:$0xff]
    %v2770 = vld [vmem:[#allocation3 + $0xf8] sm:$0xff]
    %2771 = vmatprep.subr.mxu0 0.0
    %2772 = vmatpush1.msra.mxu0 %v2739
    %2773 = vmatprep.subr.mxu0 0.0
    %2774 = vmatpush1.msra.mxu0 %v2740
    %2775 = vmatprep.subr.mxu0 0.0
    %2776 = vmatpush1.msra.mxu0 %v2741
    %2777 = vmatprep.subr.mxu0 0.0
    %2778 = vmatpush1.msra.mxu0 %v2742
    %2779 = vmatprep.subr.mxu0 0.0
    %2780 = vmatpush1.msra.mxu0 %v2743
    %2781 = vmatprep.subr.mxu0 0.0
    %2782 = vmatpush1.msra.mxu0 %v2744
    %2783 = vmatprep.subr.mxu0 0.0
    %2784 = vmatpush1.msra.mxu0 %v2745
    %2785 = vmatprep.subr.mxu0 0.0
    %2786 = vmatpush1.msra.mxu0 %v2746
    %2787 = vmatprep.subr.mxu0 0.0
    %2788 = vmatpush1.msra.mxu0 %v2747
    %2789 = vmatprep.subr.mxu0 0.0
    %2790 = vmatpush1.msra.mxu0 %v2748
    %2791 = vmatprep.subr.mxu0 0.0
    %2792 = vmatpush1.msra.mxu0 %v2749
    %2793 = vmatprep.subr.mxu0 0.0
    %2794 = vmatpush1.msra.mxu0 %v2750
    %2795 = vmatprep.subr.mxu0 0.0
    %2796 = vmatpush1.msra.mxu0 %v2751
    %2797 = vmatprep.subr.mxu0 0.0
    %2798 = vmatpush1.msra.mxu0 %v2752
    %2799 = vmatprep.subr.mxu0 0.0
    %2800 = vmatpush1.msra.mxu0 %v2753
    %2801 = vmatprep.subr.mxu0 0.0
    %2802 = vmatpush1.msra.mxu0 %v2754
    %2803 = vmatprep.subr.mxu0 0.0
    %2804 = vmatpush1.msra.mxu0 %v2755
    %2805 = vmatprep.subr.mxu0 0.0
    %2806 = vmatpush1.msra.mxu0 %v2756
    %2807 = vmatprep.subr.mxu0 0.0
    %2808 = vmatpush1.msra.mxu0 %v2757
    %2809 = vmatprep.subr.mxu0 0.0
    %2810 = vmatpush1.msra.mxu0 %v2758
    %2811 = vmatprep.subr.mxu0 0.0
    %2812 = vmatpush1.msra.mxu0 %v2759
    %2813 = vmatprep.subr.mxu0 0.0
    %2814 = vmatpush1.msra.mxu0 %v2760
    %2815 = vmatprep.subr.mxu0 0.0
    %2816 = vmatpush1.msra.mxu0 %v2761
    %2817 = vmatprep.subr.mxu0 0.0
    %2818 = vmatpush1.msra.mxu0 %v2762
    %2819 = vmatprep.subr.mxu0 0.0
    %2820 = vmatpush1.msra.mxu0 %v2763
    %2821 = vmatprep.subr.mxu0 0.0
    %2822 = vmatpush1.msra.mxu0 %v2764
    %2823 = vmatprep.subr.mxu0 0.0
    %2824 = vmatpush1.msra.mxu0 %v2765
    %2825 = vmatprep.subr.mxu0 0.0
    %2826 = vmatpush1.msra.mxu0 %v2766
    %2827 = vmatprep.subr.mxu0 0.0
    %2828 = vmatpush1.msra.mxu0 %v2767
    %2829 = vmatprep.subr.mxu0 0.0
    %2830 = vmatpush1.msra.mxu0 %v2768
    %2831 = vmatprep.subr.mxu0 0.0
    %2832 = vmatpush1.msra.mxu0 %v2769
    %2833 = vmatprep.subr.mxu0 0.0
    %2834 = vmatpush1.msra.mxu0 %v2770
    %2835 = vmatprep.mubr.f32.mxu0 %v2355
    %2836 = vmatmul.mubr.f32.gmra.mrb[0].mxu0 %v2738
    %v2837 = vpop.f32.mrb[0].mxu0
    %v2838 = vadd.f32 %v98, %v2837
    %v2839 = vpop.f32.mrb[0].mxu0
    %2840 = vdwg.mxu0
    %v2841 = vmul.f32 %v2838, 0.5
    %v2842 = vtanh.pop %v2841
    %v2843 = vmul.f32 %v2842, 0.5
    %v2844 = vadd.f32 %v2843, 0.5
    %2845 = vrot.lane.b32.xlu0 %v2838, 112
    %v2846 = vpop.permute.xlu0 %2845
    %v2847 = vmul.f32 %v2846, 0.5
    %v2848 = vtanh.pop %v2847
    %v2849 = vmul.f32 %v2848, 0.5
    %v2850 = vadd.f32 %v2849, 0.5
    %2851 = vrot.lane.b32.xlu0 %v2838, 96
    %v2852 = vpop.permute.xlu0 %2851
    %v2853 = vtanh.pop %v2852
    %2854 = vrot.lane.b32.xlu0 %v2838, 80
    %v2855 = vpop.permute.xlu0 %2854
    %v2856 = vmul.f32 %v2855, 0.5
    %v2857 = vtanh.pop %v2856
    %v2858 = vmul.f32 %v2857, 0.5
    %v2859 = vadd.f32 %v2858, 0.5
    %v2860 = vmul.f32 %v2850, %v2352
    %v2861 = vmul.f32 %v2844, %v2853
    %v2862 = vadd.f32 %v2860, %v2861
    %v2863 = vtanh.pop %v2862
    %v2864 = vmul.f32 %v2859, %v2863
    %v2865 = vsel %vm123, %v2864, 0.0
    %v2866 = vld [vmem:[#allocation5] sm:$0xff]
    %v2867 = vld [vmem:[#allocation5 + $0x8] sm:$0xff]
    %v2868 = vld [vmem:[#allocation5 + $0x10] sm:$0xff]
    %v2869 = vld [vmem:[#allocation5 + $0x18] sm:$0xff]
    %v2870 = vld [vmem:[#allocation5 + $0x20] sm:$0xff]
    %v2871 = vld [vmem:[#allocation5 + $0x28] sm:$0xff]
    %v2872 = vld [vmem:[#allocation5 + $0x30] sm:$0xff]
    %v2873 = vld [vmem:[#allocation5 + $0x38] sm:$0xff]
    %v2874 = vld [vmem:[#allocation5 + $0x40] sm:$0xff]
    %v2875 = vld [vmem:[#allocation5 + $0x48] sm:$0xff]
    %v2876 = vld [vmem:[#allocation5 + $0x50] sm:$0xff]
    %v2877 = vld [vmem:[#allocation5 + $0x58] sm:$0xff]
    %v2878 = vld [vmem:[#allocation5 + $0x60] sm:$0xff]
    %v2879 = vld [vmem:[#allocation5 + $0x68] sm:$0xff]
    %v2880 = vld [vmem:[#allocation5 + $0x70] sm:$0xff]
    %v2881 = vld [vmem:[#allocation5 + $0x78] sm:$0xff]
    %v2882 = vld [vmem:[#allocation5 + $0x80] sm:$0xff]
    %v2883 = vld [vmem:[#allocation5 + $0x88] sm:$0xff]
    %v2884 = vld [vmem:[#allocation5 + $0x90] sm:$0xff]
    %v2885 = vld [vmem:[#allocation5 + $0x98] sm:$0xff]
    %v2886 = vld [vmem:[#allocation5 + $0xa0] sm:$0xff]
    %v2887 = vld [vmem:[#allocation5 + $0xa8] sm:$0xff]
    %v2888 = vld [vmem:[#allocation5 + $0xb0] sm:$0xff]
    %v2889 = vld [vmem:[#allocation5 + $0xb8] sm:$0xff]
    %v2890 = vld [vmem:[#allocation5 + $0xc0] sm:$0xff]
    %v2891 = vld [vmem:[#allocation5 + $0xc8] sm:$0xff]
    %v2892 = vld [vmem:[#allocation5 + $0xd0] sm:$0xff]
    %v2893 = vld [vmem:[#allocation5 + $0xd8] sm:$0xff]
    %v2894 = vld [vmem:[#allocation5 + $0xe0] sm:$0xff]
    %v2895 = vld [vmem:[#allocation5 + $0xe8] sm:$0xff]
    %v2896 = vld [vmem:[#allocation5 + $0xf0] sm:$0xff]
    %v2897 = vld [vmem:[#allocation5 + $0xf8] sm:$0xff]
    %2898 = vmatprep.subr.mxu0 0.0
    %2899 = vmatpush1.msra.mxu0 %v2866
    %2900 = vmatprep.subr.mxu0 0.0
    %2901 = vmatpush1.msra.mxu0 %v2867
    %2902 = vmatprep.subr.mxu0 0.0
    %2903 = vmatpush1.msra.mxu0 %v2868
    %2904 = vmatprep.subr.mxu0 0.0
    %2905 = vmatpush1.msra.mxu0 %v2869
    %2906 = vmatprep.subr.mxu0 0.0
    %2907 = vmatpush1.msra.mxu0 %v2870
    %2908 = vmatprep.subr.mxu0 0.0
    %2909 = vmatpush1.msra.mxu0 %v2871
    %2910 = vmatprep.subr.mxu0 0.0
    %2911 = vmatpush1.msra.mxu0 %v2872
    %2912 = vmatprep.subr.mxu0 0.0
    %2913 = vmatpush1.msra.mxu0 %v2873
    %2914 = vmatprep.subr.mxu0 0.0
    %2915 = vmatpush1.msra.mxu0 %v2874
    %2916 = vmatprep.subr.mxu0 0.0
    %2917 = vmatpush1.msra.mxu0 %v2875
    %2918 = vmatprep.subr.mxu0 0.0
    %2919 = vmatpush1.msra.mxu0 %v2876
    %2920 = vmatprep.subr.mxu0 0.0
    %2921 = vmatpush1.msra.mxu0 %v2877
    %2922 = vmatprep.subr.mxu0 0.0
    %2923 = vmatpush1.msra.mxu0 %v2878
    %2924 = vmatprep.subr.mxu0 0.0
    %2925 = vmatpush1.msra.mxu0 %v2879
    %2926 = vmatprep.subr.mxu0 0.0
    %2927 = vmatpush1.msra.mxu0 %v2880
    %2928 = vmatprep.subr.mxu0 0.0
    %2929 = vmatpush1.msra.mxu0 %v2881
    %2930 = vmatprep.subr.mxu0 0.0
    %2931 = vmatpush1.msra.mxu0 %v2882
    %2932 = vmatprep.subr.mxu0 0.0
    %2933 = vmatpush1.msra.mxu0 %v2883
    %2934 = vmatprep.subr.mxu0 0.0
    %2935 = vmatpush1.msra.mxu0 %v2884
    %2936 = vmatprep.subr.mxu0 0.0
    %2937 = vmatpush1.msra.mxu0 %v2885
    %2938 = vmatprep.subr.mxu0 0.0
    %2939 = vmatpush1.msra.mxu0 %v2886
    %2940 = vmatprep.subr.mxu0 0.0
    %2941 = vmatpush1.msra.mxu0 %v2887
    %2942 = vmatprep.subr.mxu0 0.0
    %2943 = vmatpush1.msra.mxu0 %v2888
    %2944 = vmatprep.subr.mxu0 0.0
    %2945 = vmatpush1.msra.mxu0 %v2889
    %2946 = vmatprep.subr.mxu0 0.0
    %2947 = vmatpush1.msra.mxu0 %v2890
    %2948 = vmatprep.subr.mxu0 0.0
    %2949 = vmatpush1.msra.mxu0 %v2891
    %2950 = vmatprep.subr.mxu0 0.0
    %2951 = vmatpush1.msra.mxu0 %v2892
    %2952 = vmatprep.subr.mxu0 0.0
    %2953 = vmatpush1.msra.mxu0 %v2893
    %2954 = vmatprep.subr.mxu0 0.0
    %2955 = vmatpush1.msra.mxu0 %v2894
    %2956 = vmatprep.subr.mxu0 0.0
    %2957 = vmatpush1.msra.mxu0 %v2895
    %2958 = vmatprep.subr.mxu0 0.0
    %2959 = vmatpush1.msra.mxu0 %v2896
    %2960 = vmatprep.subr.mxu0 0.0
    %2961 = vmatpush1.msra.mxu0 %v2897
    %2962 = vmatprep.mubr.f32.mxu0 %v2482
    %2963 = vmatmul.mubr.f32.gmra.mrb[0].mxu0 %v2355
    %v2964 = vpop.f32.mrb[0].mxu0
    %v2965 = vadd.f32 %v105, %v2964
    %v2966 = vpop.f32.mrb[0].mxu0
    %2967 = vdwg.mxu0
    %v2968 = vmul.f32 %v2965, 0.5
    %v2969 = vtanh.pop %v2968
    %v2970 = vmul.f32 %v2969, 0.5
    %v2971 = vadd.f32 %v2970, 0.5
    %2972 = vrot.lane.b32.xlu0 %v2965, 120
    %v2973 = vpop.permute.xlu0 %2972
    %v2974 = vmul.f32 %v2973, 0.5
    %v2975 = vtanh.pop %v2974
    %v2976 = vmul.f32 %v2975, 0.5
    %v2977 = vadd.f32 %v2976, 0.5
    %2978 = vrot.lane.b32.xlu0 %v2965, 112
    %v2979 = vpop.permute.xlu0 %2978
    %v2980 = vtanh.pop %v2979
    %2981 = vrot.lane.b32.xlu0 %v2965, 104
    %v2982 = vpop.permute.xlu0 %2981
    %v2983 = vmul.f32 %v2982, 0.5
    %v2984 = vtanh.pop %v2983
    %v2985 = vmul.f32 %v2984, 0.5
    %v2986 = vadd.f32 %v2985, 0.5
    %v2987 = vmul.f32 %v2977, %v2479
    %v2988 = vmul.f32 %v2971, %v2980
    %v2989 = vadd.f32 %v2987, %v2988
    %v2990 = vtanh.pop %v2989
    %v2991 = vmul.f32 %v2986, %v2990
    %v2992 = vsel %vm124, %v2991, 0.0
    %v2993 = vld [vmem:[#allocation7] sm:$0xff]
    %v2994 = vld [vmem:[#allocation7 + $0x8] sm:$0xff]
    %v2995 = vld [vmem:[#allocation7 + $0x10] sm:$0xff]
    %v2996 = vld [vmem:[#allocation7 + $0x18] sm:$0xff]
    %v2997 = vld [vmem:[#allocation7 + $0x20] sm:$0xff]
    %v2998 = vld [vmem:[#allocation7 + $0x28] sm:$0xff]
    %v2999 = vld [vmem:[#allocation7 + $0x30] sm:$0xff]
    %v3000 = vld [vmem:[#allocation7 + $0x38] sm:$0xff]
    %v3001 = vld [vmem:[#allocation7 + $0x40] sm:$0xff]
    %v3002 = vld [vmem:[#allocation7 + $0x48] sm:$0xff]
    %v3003 = vld [vmem:[#allocation7 + $0x50] sm:$0xff]
    %v3004 = vld [vmem:[#allocation7 + $0x58] sm:$0xff]
    %v3005 = vld [vmem:[#allocation7 + $0x60] sm:$0xff]
    %v3006 = vld [vmem:[#allocation7 + $0x68] sm:$0xff]
    %v3007 = vld [vmem:[#allocation7 + $0x70] sm:$0xff]
    %v3008 = vld [vmem:[#allocation7 + $0x78] sm:$0xff]
    %v3009 = vld [vmem:[#allocation7 + $0x80] sm:$0xff]
    %v3010 = vld [vmem:[#allocation7 + $0x88] sm:$0xff]
    %v3011 = vld [vmem:[#allocation7 + $0x90] sm:$0xff]
    %v3012 = vld [vmem:[#allocation7 + $0x98] sm:$0xff]
    %v3013 = vld [vmem:[#allocation7 + $0xa0] sm:$0xff]
    %v3014 = vld [vmem:[#allocation7 + $0xa8] sm:$0xff]
    %v3015 = vld [vmem:[#allocation7 + $0xb0] sm:$0xff]
    %v3016 = vld [vmem:[#allocation7 + $0xb8] sm:$0xff]
    %v3017 = vld [vmem:[#allocation7 + $0xc0] sm:$0xff]
    %v3018 = vld [vmem:[#allocation7 + $0xc8] sm:$0xff]
    %v3019 = vld [vmem:[#allocation7 + $0xd0] sm:$0xff]
    %v3020 = vld [vmem:[#allocation7 + $0xd8] sm:$0xff]
    %v3021 = vld [vmem:[#allocation7 + $0xe0] sm:$0xff]
    %v3022 = vld [vmem:[#allocation7 + $0xe8] sm:$0xff]
    %v3023 = vld [vmem:[#allocation7 + $0xf0] sm:$0xff]
    %v3024 = vld [vmem:[#allocation7 + $0xf8] sm:$0xff]
    %3025 = vmatprep.subr.mxu0 0.0
    %3026 = vmatpush1.msra.mxu0 %v2993
    %3027 = vmatprep.subr.mxu0 0.0
    %3028 = vmatpush1.msra.mxu0 %v2994
    %3029 = vmatprep.subr.mxu0 0.0
    %3030 = vmatpush1.msra.mxu0 %v2995
    %3031 = vmatprep.subr.mxu0 0.0
    %3032 = vmatpush1.msra.mxu0 %v2996
    %3033 = vmatprep.subr.mxu0 0.0
    %3034 = vmatpush1.msra.mxu0 %v2997
    %3035 = vmatprep.subr.mxu0 0.0
    %3036 = vmatpush1.msra.mxu0 %v2998
    %3037 = vmatprep.subr.mxu0 0.0
    %3038 = vmatpush1.msra.mxu0 %v2999
    %3039 = vmatprep.subr.mxu0 0.0
    %3040 = vmatpush1.msra.mxu0 %v3000
    %3041 = vmatprep.subr.mxu0 0.0
    %3042 = vmatpush1.msra.mxu0 %v3001
    %3043 = vmatprep.subr.mxu0 0.0
    %3044 = vmatpush1.msra.mxu0 %v3002
    %3045 = vmatprep.subr.mxu0 0.0
    %3046 = vmatpush1.msra.mxu0 %v3003
    %3047 = vmatprep.subr.mxu0 0.0
    %3048 = vmatpush1.msra.mxu0 %v3004
    %3049 = vmatprep.subr.mxu0 0.0
    %3050 = vmatpush1.msra.mxu0 %v3005
    %3051 = vmatprep.subr.mxu0 0.0
    %3052 = vmatpush1.msra.mxu0 %v3006
    %3053 = vmatprep.subr.mxu0 0.0
    %3054 = vmatpush1.msra.mxu0 %v3007
    %3055 = vmatprep.subr.mxu0 0.0
    %3056 = vmatpush1.msra.mxu0 %v3008
    %3057 = vmatprep.subr.mxu0 0.0
    %3058 = vmatpush1.msra.mxu0 %v3009
    %3059 = vmatprep.subr.mxu0 0.0
    %3060 = vmatpush1.msra.mxu0 %v3010
    %3061 = vmatprep.subr.mxu0 0.0
    %3062 = vmatpush1.msra.mxu0 %v3011
    %3063 = vmatprep.subr.mxu0 0.0
    %3064 = vmatpush1.msra.mxu0 %v3012
    %3065 = vmatprep.subr.mxu0 0.0
    %3066 = vmatpush1.msra.mxu0 %v3013
    %3067 = vmatprep.subr.mxu0 0.0
    %3068 = vmatpush1.msra.mxu0 %v3014
    %3069 = vmatprep.subr.mxu0 0.0
    %3070 = vmatpush1.msra.mxu0 %v3015
    %3071 = vmatprep.subr.mxu0 0.0
    %3072 = vmatpush1.msra.mxu0 %v3016
    %3073 = vmatprep.subr.mxu0 0.0
    %3074 = vmatpush1.msra.mxu0 %v3017
    %3075 = vmatprep.subr.mxu0 0.0
    %3076 = vmatpush1.msra.mxu0 %v3018
    %3077 = vmatprep.subr.mxu0 0.0
    %3078 = vmatpush1.msra.mxu0 %v3019
    %3079 = vmatprep.subr.mxu0 0.0
    %3080 = vmatpush1.msra.mxu0 %v3020
    %3081 = vmatprep.subr.mxu0 0.0
    %3082 = vmatpush1.msra.mxu0 %v3021
    %3083 = vmatprep.subr.mxu0 0.0
    %3084 = vmatpush1.msra.mxu0 %v3022
    %3085 = vmatprep.subr.mxu0 0.0
    %3086 = vmatpush1.msra.mxu0 %v3023
    %3087 = vmatprep.subr.mxu0 0.0
    %3088 = vmatpush1.msra.mxu0 %v3024
    %3089 = vmatprep.mubr.f32.mxu0 %v2609
    %3090 = vmatmul.mubr.f32.gmra.mrb[0].mxu0 %v2482
    %v3091 = vpop.f32.mrb[0].mxu0
    %v3092 = vadd.f32 %v112, %v3091
    %v3093 = vpop.f32.mrb[0].mxu0
    %3094 = vdwg.mxu0
    %v3095 = vmul.f32 %v3092, 0.5
    %v3096 = vtanh.pop %v3095
    %v3097 = vmul.f32 %v3096, 0.5
    %v3098 = vadd.f32 %v3097, 0.5
    %3099 = vrot.lane.b32.xlu0 %v3092, 120
    %v3100 = vpop.permute.xlu0 %3099
    %v3101 = vmul.f32 %v3100, 0.5
    %v3102 = vtanh.pop %v3101
    %v3103 = vmul.f32 %v3102, 0.5
    %v3104 = vadd.f32 %v3103, 0.5
    %3105 = vrot.lane.b32.xlu0 %v3092, 112
    %v3106 = vpop.permute.xlu0 %3105
    %v3107 = vtanh.pop %v3106
    %3108 = vrot.lane.b32.xlu0 %v3092, 104
    %v3109 = vpop.permute.xlu0 %3108
    %v3110 = vmul.f32 %v3109, 0.5
    %v3111 = vtanh.pop %v3110
    %v3112 = vmul.f32 %v3111, 0.5
    %v3113 = vadd.f32 %v3112, 0.5
    %v3114 = vmul.f32 %v3104, %v2606
    %v3115 = vmul.f32 %v3098, %v3107
    %v3116 = vadd.f32 %v3114, %v3115
    %v3117 = vtanh.pop %v3116
    %v3118 = vmul.f32 %v3113, %v3117
    %v3119 = vsel %vm124, %v3118, 0.0
    %v3120 = vld [vmem:[#allocation8] sm:$0xff]
    %v3121 = vld [vmem:[#allocation8 + $0x8] sm:$0xff]
    %v3122 = vld [vmem:[#allocation8 + $0x10] sm:$0xff]
    %v3123 = vld [vmem:[#allocation8 + $0x18] sm:$0xff]
    %v3124 = vld [vmem:[#allocation8 + $0x20] sm:$0xff]
    %v3125 = vld [vmem:[#allocation8 + $0x28] sm:$0xff]
    %v3126 = vld [vmem:[#allocation8 + $0x30] sm:$0xff]
    %v3127 = vld [vmem:[#allocation8 + $0x38] sm:$0xff]
    %v3128 = vld [vmem:[#allocation8 + $0x40] sm:$0xff]
    %v3129 = vld [vmem:[#allocation8 + $0x48] sm:$0xff]
    %v3130 = vld [vmem:[#allocation8 + $0x50] sm:$0xff]
    %v3131 = vld [vmem:[#allocation8 + $0x58] sm:$0xff]
    %v3132 = vld [vmem:[#allocation8 + $0x60] sm:$0xff]
    %v3133 = vld [vmem:[#allocation8 + $0x68] sm:$0xff]
    %v3134 = vld [vmem:[#allocation8 + $0x70] sm:$0xff]
    %v3135 = vld [vmem:[#allocation8 + $0x78] sm:$0xff]
    %v3136 = vld [vmem:[#allocation8 + $0x80] sm:$0xff]
    %v3137 = vld [vmem:[#allocation8 + $0x88] sm:$0xff]
    %v3138 = vld [vmem:[#allocation8 + $0x90] sm:$0xff]
    %v3139 = vld [vmem:[#allocation8 + $0x98] sm:$0xff]
    %v3140 = vld [vmem:[#allocation8 + $0xa0] sm:$0xff]
    %v3141 = vld [vmem:[#allocation8 + $0xa8] sm:$0xff]
    %v3142 = vld [vmem:[#allocation8 + $0xb0] sm:$0xff]
    %v3143 = vld [vmem:[#allocation8 + $0xb8] sm:$0xff]
    %v3144 = vld [vmem:[#allocation8 + $0xc0] sm:$0xff]
    %v3145 = vld [vmem:[#allocation8 + $0xc8] sm:$0xff]
    %v3146 = vld [vmem:[#allocation8 + $0xd0] sm:$0xff]
    %v3147 = vld [vmem:[#allocation8 + $0xd8] sm:$0xff]
    %v3148 = vld [vmem:[#allocation8 + $0xe0] sm:$0xff]
    %v3149 = vld [vmem:[#allocation8 + $0xe8] sm:$0xff]
    %v3150 = vld [vmem:[#allocation8 + $0xf0] sm:$0xff]
    %v3151 = vld [vmem:[#allocation8 + $0xf8] sm:$0xff]
    %3152 = vmatprep.subr.mxu0 0.0
    %3153 = vmatpush1.msra.mxu0 %v3120
    %3154 = vmatprep.subr.mxu0 0.0
    %3155 = vmatpush1.msra.mxu0 %v3121
    %3156 = vmatprep.subr.mxu0 0.0
    %3157 = vmatpush1.msra.mxu0 %v3122
    %3158 = vmatprep.subr.mxu0 0.0
    %3159 = vmatpush1.msra.mxu0 %v3123
    %3160 = vmatprep.subr.mxu0 0.0
    %3161 = vmatpush1.msra.mxu0 %v3124
    %3162 = vmatprep.subr.mxu0 0.0
    %3163 = vmatpush1.msra.mxu0 %v3125
    %3164 = vmatprep.subr.mxu0 0.0
    %3165 = vmatpush1.msra.mxu0 %v3126
    %3166 = vmatprep.subr.mxu0 0.0
    %3167 = vmatpush1.msra.mxu0 %v3127
    %3168 = vmatprep.subr.mxu0 0.0
    %3169 = vmatpush1.msra.mxu0 %v3128
    %3170 = vmatprep.subr.mxu0 0.0
    %3171 = vmatpush1.msra.mxu0 %v3129
    %3172 = vmatprep.subr.mxu0 0.0
    %3173 = vmatpush1.msra.mxu0 %v3130
    %3174 = vmatprep.subr.mxu0 0.0
    %3175 = vmatpush1.msra.mxu0 %v3131
    %3176 = vmatprep.subr.mxu0 0.0
    %3177 = vmatpush1.msra.mxu0 %v3132
    %3178 = vmatprep.subr.mxu0 0.0
    %3179 = vmatpush1.msra.mxu0 %v3133
    %3180 = vmatprep.subr.mxu0 0.0
    %3181 = vmatpush1.msra.mxu0 %v3134
    %3182 = vmatprep.subr.mxu0 0.0
    %3183 = vmatpush1.msra.mxu0 %v3135
    %3184 = vmatprep.subr.mxu0 0.0
    %3185 = vmatpush1.msra.mxu0 %v3136
    %3186 = vmatprep.subr.mxu0 0.0
    %3187 = vmatpush1.msra.mxu0 %v3137
    %3188 = vmatprep.subr.mxu0 0.0
    %3189 = vmatpush1.msra.mxu0 %v3138
    %3190 = vmatprep.subr.mxu0 0.0
    %3191 = vmatpush1.msra.mxu0 %v3139
    %3192 = vmatprep.subr.mxu0 0.0
    %3193 = vmatpush1.msra.mxu0 %v3140
    %3194 = vmatprep.subr.mxu0 0.0
    %3195 = vmatpush1.msra.mxu0 %v3141
    %3196 = vmatprep.subr.mxu0 0.0
    %3197 = vmatpush1.msra.mxu0 %v3142
    %3198 = vmatprep.subr.mxu0 0.0
    %3199 = vmatpush1.msra.mxu0 %v3143
    %3200 = vmatprep.subr.mxu0 0.0
    %3201 = vmatpush1.msra.mxu0 %v3144
    %3202 = vmatprep.subr.mxu0 0.0
    %3203 = vmatpush1.msra.mxu0 %v3145
    %3204 = vmatprep.subr.mxu0 0.0
    %3205 = vmatpush1.msra.mxu0 %v3146
    %3206 = vmatprep.subr.mxu0 0.0
    %3207 = vmatpush1.msra.mxu0 %v3147
    %3208 = vmatprep.subr.mxu0 0.0
    %3209 = vmatpush1.msra.mxu0 %v3148
    %3210 = vmatprep.subr.mxu0 0.0
    %3211 = vmatpush1.msra.mxu0 %v3149
    %3212 = vmatprep.subr.mxu0 0.0
    %3213 = vmatpush1.msra.mxu0 %v3150
    %3214 = vmatprep.subr.mxu0 0.0
    %3215 = vmatpush1.msra.mxu0 %v3151
    %3216 = vmatprep.mubr.f32.mxu0 %v2736
    %3217 = vmatmul.mubr.f32.gmra.mrb[0].mxu0 %v2609
    %v3218 = vpop.f32.mrb[0].mxu0
    %v3219 = vadd.f32 %v119, %v3218
    %v3220 = vpop.f32.mrb[0].mxu0
    %3221 = vdwg.mxu0
    %v3222 = vmul.f32 %v3219, 0.5
    %v3223 = vtanh.pop %v3222
    %v3224 = vmul.f32 %v3223, 0.5
    %v3225 = vadd.f32 %v3224, 0.5
    %3226 = vrot.lane.b32.xlu0 %v3219, 112
    %v3227 = vpop.permute.xlu0 %3226
    %v3228 = vmul.f32 %v3227, 0.5
    %v3229 = vtanh.pop %v3228
    %v3230 = vmul.f32 %v3229, 0.5
    %v3231 = vadd.f32 %v3230, 0.5
    %3232 = vrot.lane.b32.xlu0 %v3219, 96
    %v3233 = vpop.permute.xlu0 %3232
    %v3234 = vtanh.pop %v3233
    %3235 = vrot.lane.b32.xlu0 %v3219, 80
    %v3236 = vpop.permute.xlu0 %3235
    %v3237 = vmul.f32 %v3236, 0.5
    %v3238 = vtanh.pop %v3237
    %v3239 = vmul.f32 %v3238, 0.5
    %v3240 = vadd.f32 %v3239, 0.5
    %v3241 = vmul.f32 %v3231, %v2733
    %v3242 = vmul.f32 %v3225, %v3234
    %v3243 = vadd.f32 %v3241, %v3242
    %v3244 = vtanh.pop %v3243
    %v3245 = vmul.f32 %v3240, %v3244
    %v3246 = vsel %vm123, %v3245, 0.0
    %3247 = vst [vmem:[#allocation2 + $0x20] sm:$0xff] %v3246
    %v3248 = vld [vmem:[#allocation5] sm:$0xff]
    %v3249 = vld [vmem:[#allocation5 + $0x8] sm:$0xff]
    %v3250 = vld [vmem:[#allocation5 + $0x10] sm:$0xff]
    %v3251 = vld [vmem:[#allocation5 + $0x18] sm:$0xff]
    %v3252 = vld [vmem:[#allocation5 + $0x20] sm:$0xff]
    %v3253 = vld [vmem:[#allocation5 + $0x28] sm:$0xff]
    %v3254 = vld [vmem:[#allocation5 + $0x30] sm:$0xff]
    %v3255 = vld [vmem:[#allocation5 + $0x38] sm:$0xff]
    %v3256 = vld [vmem:[#allocation5 + $0x40] sm:$0xff]
    %v3257 = vld [vmem:[#allocation5 + $0x48] sm:$0xff]
    %v3258 = vld [vmem:[#allocation5 + $0x50] sm:$0xff]
    %v3259 = vld [vmem:[#allocation5 + $0x58] sm:$0xff]
    %v3260 = vld [vmem:[#allocation5 + $0x60] sm:$0xff]
    %v3261 = vld [vmem:[#allocation5 + $0x68] sm:$0xff]
    %v3262 = vld [vmem:[#allocation5 + $0x70] sm:$0xff]
    %v3263 = vld [vmem:[#allocation5 + $0x78] sm:$0xff]
    %v3264 = vld [vmem:[#allocation5 + $0x80] sm:$0xff]
    %v3265 = vld [vmem:[#allocation5 + $0x88] sm:$0xff]
    %v3266 = vld [vmem:[#allocation5 + $0x90] sm:$0xff]
    %v3267 = vld [vmem:[#allocation5 + $0x98] sm:$0xff]
    %v3268 = vld [vmem:[#allocation5 + $0xa0] sm:$0xff]
    %v3269 = vld [vmem:[#allocation5 + $0xa8] sm:$0xff]
    %v3270 = vld [vmem:[#allocation5 + $0xb0] sm:$0xff]
    %v3271 = vld [vmem:[#allocation5 + $0xb8] sm:$0xff]
    %v3272 = vld [vmem:[#allocation5 + $0xc0] sm:$0xff]
    %v3273 = vld [vmem:[#allocation5 + $0xc8] sm:$0xff]
    %v3274 = vld [vmem:[#allocation5 + $0xd0] sm:$0xff]
    %v3275 = vld [vmem:[#allocation5 + $0xd8] sm:$0xff]
    %v3276 = vld [vmem:[#allocation5 + $0xe0] sm:$0xff]
    %v3277 = vld [vmem:[#allocation5 + $0xe8] sm:$0xff]
    %v3278 = vld [vmem:[#allocation5 + $0xf0] sm:$0xff]
    %v3279 = vld [vmem:[#allocation5 + $0xf8] sm:$0xff]
    %3280 = vmatprep.subr.mxu0 0.0
    %3281 = vmatpush1.msra.mxu0 %v3248
    %3282 = vmatprep.subr.mxu0 0.0
    %3283 = vmatpush1.msra.mxu0 %v3249
    %3284 = vmatprep.subr.mxu0 0.0
    %3285 = vmatpush1.msra.mxu0 %v3250
    %3286 = vmatprep.subr.mxu0 0.0
    %3287 = vmatpush1.msra.mxu0 %v3251
    %3288 = vmatprep.subr.mxu0 0.0
    %3289 = vmatpush1.msra.mxu0 %v3252
    %3290 = vmatprep.subr.mxu0 0.0
    %3291 = vmatpush1.msra.mxu0 %v3253
    %3292 = vmatprep.subr.mxu0 0.0
    %3293 = vmatpush1.msra.mxu0 %v3254
    %3294 = vmatprep.subr.mxu0 0.0
    %3295 = vmatpush1.msra.mxu0 %v3255
    %3296 = vmatprep.subr.mxu0 0.0
    %3297 = vmatpush1.msra.mxu0 %v3256
    %3298 = vmatprep.subr.mxu0 0.0
    %3299 = vmatpush1.msra.mxu0 %v3257
    %3300 = vmatprep.subr.mxu0 0.0
    %3301 = vmatpush1.msra.mxu0 %v3258
    %3302 = vmatprep.subr.mxu0 0.0
    %3303 = vmatpush1.msra.mxu0 %v3259
    %3304 = vmatprep.subr.mxu0 0.0
    %3305 = vmatpush1.msra.mxu0 %v3260
    %3306 = vmatprep.subr.mxu0 0.0
    %3307 = vmatpush1.msra.mxu0 %v3261
    %3308 = vmatprep.subr.mxu0 0.0
    %3309 = vmatpush1.msra.mxu0 %v3262
    %3310 = vmatprep.subr.mxu0 0.0
    %3311 = vmatpush1.msra.mxu0 %v3263
    %3312 = vmatprep.subr.mxu0 0.0
    %3313 = vmatpush1.msra.mxu0 %v3264
    %3314 = vmatprep.subr.mxu0 0.0
    %3315 = vmatpush1.msra.mxu0 %v3265
    %3316 = vmatprep.subr.mxu0 0.0
    %3317 = vmatpush1.msra.mxu0 %v3266
    %3318 = vmatprep.subr.mxu0 0.0
    %3319 = vmatpush1.msra.mxu0 %v3267
    %3320 = vmatprep.subr.mxu0 0.0
    %3321 = vmatpush1.msra.mxu0 %v3268
    %3322 = vmatprep.subr.mxu0 0.0
    %3323 = vmatpush1.msra.mxu0 %v3269
    %3324 = vmatprep.subr.mxu0 0.0
    %3325 = vmatpush1.msra.mxu0 %v3270
    %3326 = vmatprep.subr.mxu0 0.0
    %3327 = vmatpush1.msra.mxu0 %v3271
    %3328 = vmatprep.subr.mxu0 0.0
    %3329 = vmatpush1.msra.mxu0 %v3272
    %3330 = vmatprep.subr.mxu0 0.0
    %3331 = vmatpush1.msra.mxu0 %v3273
    %3332 = vmatprep.subr.mxu0 0.0
    %3333 = vmatpush1.msra.mxu0 %v3274
    %3334 = vmatprep.subr.mxu0 0.0
    %3335 = vmatpush1.msra.mxu0 %v3275
    %3336 = vmatprep.subr.mxu0 0.0
    %3337 = vmatpush1.msra.mxu0 %v3276
    %3338 = vmatprep.subr.mxu0 0.0
    %3339 = vmatpush1.msra.mxu0 %v3277
    %3340 = vmatprep.subr.mxu0 0.0
    %3341 = vmatpush1.msra.mxu0 %v3278
    %3342 = vmatprep.subr.mxu0 0.0
    %3343 = vmatpush1.msra.mxu0 %v3279
    %3344 = vmatprep.mubr.f32.mxu0 %v2992
    %3345 = vmatmul.mubr.f32.gmra.mrb[0].mxu0 %v2865
    %v3346 = vpop.f32.mrb[0].mxu0
    %v3347 = vadd.f32 %v105, %v3346
    %v3348 = vpop.f32.mrb[0].mxu0
    %3349 = vdwg.mxu0
    %v3350 = vmul.f32 %v3347, 0.5
    %v3351 = vtanh.pop %v3350
    %v3352 = vmul.f32 %v3351, 0.5
    %v3353 = vadd.f32 %v3352, 0.5
    %3354 = vrot.lane.b32.xlu0 %v3347, 120
    %v3355 = vpop.permute.xlu0 %3354
    %v3356 = vmul.f32 %v3355, 0.5
    %v3357 = vtanh.pop %v3356
    %v3358 = vmul.f32 %v3357, 0.5
    %v3359 = vadd.f32 %v3358, 0.5
    %3360 = vrot.lane.b32.xlu0 %v3347, 112
    %v3361 = vpop.permute.xlu0 %3360
    %v3362 = vtanh.pop %v3361
    %3363 = vrot.lane.b32.xlu0 %v3347, 104
    %v3364 = vpop.permute.xlu0 %3363
    %v3365 = vmul.f32 %v3364, 0.5
    %v3366 = vtanh.pop %v3365
    %v3367 = vmul.f32 %v3366, 0.5
    %v3368 = vadd.f32 %v3367, 0.5
    %v3369 = vmul.f32 %v3359, %v2989
    %v3370 = vmul.f32 %v3353, %v3362
    %v3371 = vadd.f32 %v3369, %v3370
    %v3372 = vtanh.pop %v3371
    %v3373 = vmul.f32 %v3368, %v3372
    %v3374 = vsel %vm124, %v3373, 0.0
    %v3375 = vld [vmem:[#allocation7] sm:$0xff]
    %v3376 = vld [vmem:[#allocation7 + $0x8] sm:$0xff]
    %v3377 = vld [vmem:[#allocation7 + $0x10] sm:$0xff]
    %v3378 = vld [vmem:[#allocation7 + $0x18] sm:$0xff]
    %v3379 = vld [vmem:[#allocation7 + $0x20] sm:$0xff]
    %v3380 = vld [vmem:[#allocation7 + $0x28] sm:$0xff]
    %v3381 = vld [vmem:[#allocation7 + $0x30] sm:$0xff]
    %v3382 = vld [vmem:[#allocation7 + $0x38] sm:$0xff]
    %v3383 = vld [vmem:[#allocation7 + $0x40] sm:$0xff]
    %v3384 = vld [vmem:[#allocation7 + $0x48] sm:$0xff]
    %v3385 = vld [vmem:[#allocation7 + $0x50] sm:$0xff]
    %v3386 = vld [vmem:[#allocation7 + $0x58] sm:$0xff]
    %v3387 = vld [vmem:[#allocation7 + $0x60] sm:$0xff]
    %v3388 = vld [vmem:[#allocation7 + $0x68] sm:$0xff]
    %v3389 = vld [vmem:[#allocation7 + $0x70] sm:$0xff]
    %v3390 = vld [vmem:[#allocation7 + $0x78] sm:$0xff]
    %v3391 = vld [vmem:[#allocation7 + $0x80] sm:$0xff]
    %v3392 = vld [vmem:[#allocation7 + $0x88] sm:$0xff]
    %v3393 = vld [vmem:[#allocation7 + $0x90] sm:$0xff]
    %v3394 = vld [vmem:[#allocation7 + $0x98] sm:$0xff]
    %v3395 = vld [vmem:[#allocation7 + $0xa0] sm:$0xff]
    %v3396 = vld [vmem:[#allocation7 + $0xa8] sm:$0xff]
    %v3397 = vld [vmem:[#allocation7 + $0xb0] sm:$0xff]
    %v3398 = vld [vmem:[#allocation7 + $0xb8] sm:$0xff]
    %v3399 = vld [vmem:[#allocation7 + $0xc0] sm:$0xff]
    %v3400 = vld [vmem:[#allocation7 + $0xc8] sm:$0xff]
    %v3401 = vld [vmem:[#allocation7 + $0xd0] sm:$0xff]
    %v3402 = vld [vmem:[#allocation7 + $0xd8] sm:$0xff]
    %v3403 = vld [vmem:[#allocation7 + $0xe0] sm:$0xff]
    %v3404 = vld [vmem:[#allocation7 + $0xe8] sm:$0xff]
    %v3405 = vld [vmem:[#allocation7 + $0xf0] sm:$0xff]
    %v3406 = vld [vmem:[#allocation7 + $0xf8] sm:$0xff]
    %3407 = vmatprep.subr.mxu0 0.0
    %3408 = vmatpush1.msra.mxu0 %v3375
    %3409 = vmatprep.subr.mxu0 0.0
    %3410 = vmatpush1.msra.mxu0 %v3376
    %3411 = vmatprep.subr.mxu0 0.0
    %3412 = vmatpush1.msra.mxu0 %v3377
    %3413 = vmatprep.subr.mxu0 0.0
    %3414 = vmatpush1.msra.mxu0 %v3378
    %3415 = vmatprep.subr.mxu0 0.0
    %3416 = vmatpush1.msra.mxu0 %v3379
    %3417 = vmatprep.subr.mxu0 0.0
    %3418 = vmatpush1.msra.mxu0 %v3380
    %3419 = vmatprep.subr.mxu0 0.0
    %3420 = vmatpush1.msra.mxu0 %v3381
    %3421 = vmatprep.subr.mxu0 0.0
    %3422 = vmatpush1.msra.mxu0 %v3382
    %3423 = vmatprep.subr.mxu0 0.0
    %3424 = vmatpush1.msra.mxu0 %v3383
    %3425 = vmatprep.subr.mxu0 0.0
    %3426 = vmatpush1.msra.mxu0 %v3384
    %3427 = vmatprep.subr.mxu0 0.0
    %3428 = vmatpush1.msra.mxu0 %v3385
    %3429 = vmatprep.subr.mxu0 0.0
    %3430 = vmatpush1.msra.mxu0 %v3386
    %3431 = vmatprep.subr.mxu0 0.0
    %3432 = vmatpush1.msra.mxu0 %v3387
    %3433 = vmatprep.subr.mxu0 0.0
    %3434 = vmatpush1.msra.mxu0 %v3388
    %3435 = vmatprep.subr.mxu0 0.0
    %3436 = vmatpush1.msra.mxu0 %v3389
    %3437 = vmatprep.subr.mxu0 0.0
    %3438 = vmatpush1.msra.mxu0 %v3390
    %3439 = vmatprep.subr.mxu0 0.0
    %3440 = vmatpush1.msra.mxu0 %v3391
    %3441 = vmatprep.subr.mxu0 0.0
    %3442 = vmatpush1.msra.mxu0 %v3392
    %3443 = vmatprep.subr.mxu0 0.0
    %3444 = vmatpush1.msra.mxu0 %v3393
    %3445 = vmatprep.subr.mxu0 0.0
    %3446 = vmatpush1.msra.mxu0 %v3394
    %3447 = vmatprep.subr.mxu0 0.0
    %3448 = vmatpush1.msra.mxu0 %v3395
    %3449 = vmatprep.subr.mxu0 0.0
    %3450 = vmatpush1.msra.mxu0 %v3396
    %3451 = vmatprep.subr.mxu0 0.0
    %3452 = vmatpush1.msra.mxu0 %v3397
    %3453 = vmatprep.subr.mxu0 0.0
    %3454 = vmatpush1.msra.mxu0 %v3398
    %3455 = vmatprep.subr.mxu0 0.0
    %3456 = vmatpush1.msra.mxu0 %v3399
    %3457 = vmatprep.subr.mxu0 0.0
    %3458 = vmatpush1.msra.mxu0 %v3400
    %3459 = vmatprep.subr.mxu0 0.0
    %3460 = vmatpush1.msra.mxu0 %v3401
    %3461 = vmatprep.subr.mxu0 0.0
    %3462 = vmatpush1.msra.mxu0 %v3402
    %3463 = vmatprep.subr.mxu0 0.0
    %3464 = vmatpush1.msra.mxu0 %v3403
    %3465 = vmatprep.subr.mxu0 0.0
    %3466 = vmatpush1.msra.mxu0 %v3404
    %3467 = vmatprep.subr.mxu0 0.0
    %3468 = vmatpush1.msra.mxu0 %v3405
    %3469 = vmatprep.subr.mxu0 0.0
    %3470 = vmatpush1.msra.mxu0 %v3406
    %3471 = vmatprep.mubr.f32.mxu0 %v3119
    %3472 = vmatmul.mubr.f32.gmra.mrb[0].mxu0 %v2992
    %v3473 = vpop.f32.mrb[0].mxu0
    %v3474 = vadd.f32 %v112, %v3473
    %v3475 = vpop.f32.mrb[0].mxu0
    %3476 = vdwg.mxu0
    %v3477 = vmul.f32 %v3474, 0.5
    %v3478 = vtanh.pop %v3477
    %v3479 = vmul.f32 %v3478, 0.5
    %v3480 = vadd.f32 %v3479, 0.5
    %3481 = vrot.lane.b32.xlu0 %v3474, 120
    %v3482 = vpop.permute.xlu0 %3481
    %v3483 = vmul.f32 %v3482, 0.5
    %v3484 = vtanh.pop %v3483
    %v3485 = vmul.f32 %v3484, 0.5
    %v3486 = vadd.f32 %v3485, 0.5
    %3487 = vrot.lane.b32.xlu0 %v3474, 112
    %v3488 = vpop.permute.xlu0 %3487
    %v3489 = vtanh.pop %v3488
    %3490 = vrot.lane.b32.xlu0 %v3474, 104
    %v3491 = vpop.permute.xlu0 %3490
    %v3492 = vmul.f32 %v3491, 0.5
    %v3493 = vtanh.pop %v3492
    %v3494 = vmul.f32 %v3493, 0.5
    %v3495 = vadd.f32 %v3494, 0.5
    %v3496 = vmul.f32 %v3486, %v3116
    %v3497 = vmul.f32 %v3480, %v3489
    %v3498 = vadd.f32 %v3496, %v3497
    %v3499 = vtanh.pop %v3498
    %v3500 = vmul.f32 %v3495, %v3499
    %v3501 = vsel %vm124, %v3500, 0.0
    %v3502 = vld [vmem:[#allocation8] sm:$0xff]
    %v3503 = vld [vmem:[#allocation8 + $0x8] sm:$0xff]
    %v3504 = vld [vmem:[#allocation8 + $0x10] sm:$0xff]
    %v3505 = vld [vmem:[#allocation8 + $0x18] sm:$0xff]
    %v3506 = vld [vmem:[#allocation8 + $0x20] sm:$0xff]
    %v3507 = vld [vmem:[#allocation8 + $0x28] sm:$0xff]
    %v3508 = vld [vmem:[#allocation8 + $0x30] sm:$0xff]
    %v3509 = vld [vmem:[#allocation8 + $0x38] sm:$0xff]
    %v3510 = vld [vmem:[#allocation8 + $0x40] sm:$0xff]
    %v3511 = vld [vmem:[#allocation8 + $0x48] sm:$0xff]
    %v3512 = vld [vmem:[#allocation8 + $0x50] sm:$0xff]
    %v3513 = vld [vmem:[#allocation8 + $0x58] sm:$0xff]
    %v3514 = vld [vmem:[#allocation8 + $0x60] sm:$0xff]
    %v3515 = vld [vmem:[#allocation8 + $0x68] sm:$0xff]
    %v3516 = vld [vmem:[#allocation8 + $0x70] sm:$0xff]
    %v3517 = vld [vmem:[#allocation8 + $0x78] sm:$0xff]
    %v3518 = vld [vmem:[#allocation8 + $0x80] sm:$0xff]
    %v3519 = vld [vmem:[#allocation8 + $0x88] sm:$0xff]
    %v3520 = vld [vmem:[#allocation8 + $0x90] sm:$0xff]
    %v3521 = vld [vmem:[#allocation8 + $0x98] sm:$0xff]
    %v3522 = vld [vmem:[#allocation8 + $0xa0] sm:$0xff]
    %v3523 = vld [vmem:[#allocation8 + $0xa8] sm:$0xff]
    %v3524 = vld [vmem:[#allocation8 + $0xb0] sm:$0xff]
    %v3525 = vld [vmem:[#allocation8 + $0xb8] sm:$0xff]
    %v3526 = vld [vmem:[#allocation8 + $0xc0] sm:$0xff]
    %v3527 = vld [vmem:[#allocation8 + $0xc8] sm:$0xff]
    %v3528 = vld [vmem:[#allocation8 + $0xd0] sm:$0xff]
    %v3529 = vld [vmem:[#allocation8 + $0xd8] sm:$0xff]
    %v3530 = vld [vmem:[#allocation8 + $0xe0] sm:$0xff]
    %v3531 = vld [vmem:[#allocation8 + $0xe8] sm:$0xff]
    %v3532 = vld [vmem:[#allocation8 + $0xf0] sm:$0xff]
    %v3533 = vld [vmem:[#allocation8 + $0xf8] sm:$0xff]
    %3534 = vmatprep.subr.mxu0 0.0
    %3535 = vmatpush1.msra.mxu0 %v3502
    %3536 = vmatprep.subr.mxu0 0.0
    %3537 = vmatpush1.msra.mxu0 %v3503
    %3538 = vmatprep.subr.mxu0 0.0
    %3539 = vmatpush1.msra.mxu0 %v3504
    %3540 = vmatprep.subr.mxu0 0.0
    %3541 = vmatpush1.msra.mxu0 %v3505
    %3542 = vmatprep.subr.mxu0 0.0
    %3543 = vmatpush1.msra.mxu0 %v3506
    %3544 = vmatprep.subr.mxu0 0.0
    %3545 = vmatpush1.msra.mxu0 %v3507
    %3546 = vmatprep.subr.mxu0 0.0
    %3547 = vmatpush1.msra.mxu0 %v3508
    %3548 = vmatprep.subr.mxu0 0.0
    %3549 = vmatpush1.msra.mxu0 %v3509
    %3550 = vmatprep.subr.mxu0 0.0
    %3551 = vmatpush1.msra.mxu0 %v3510
    %3552 = vmatprep.subr.mxu0 0.0
    %3553 = vmatpush1.msra.mxu0 %v3511
    %3554 = vmatprep.subr.mxu0 0.0
    %3555 = vmatpush1.msra.mxu0 %v3512
    %3556 = vmatprep.subr.mxu0 0.0
    %3557 = vmatpush1.msra.mxu0 %v3513
    %3558 = vmatprep.subr.mxu0 0.0
    %3559 = vmatpush1.msra.mxu0 %v3514
    %3560 = vmatprep.subr.mxu0 0.0
    %3561 = vmatpush1.msra.mxu0 %v3515
    %3562 = vmatprep.subr.mxu0 0.0
    %3563 = vmatpush1.msra.mxu0 %v3516
    %3564 = vmatprep.subr.mxu0 0.0
    %3565 = vmatpush1.msra.mxu0 %v3517
    %3566 = vmatprep.subr.mxu0 0.0
    %3567 = vmatpush1.msra.mxu0 %v3518
    %3568 = vmatprep.subr.mxu0 0.0
    %3569 = vmatpush1.msra.mxu0 %v3519
    %3570 = vmatprep.subr.mxu0 0.0
    %3571 = vmatpush1.msra.mxu0 %v3520
    %3572 = vmatprep.subr.mxu0 0.0
    %3573 = vmatpush1.msra.mxu0 %v3521
    %3574 = vmatprep.subr.mxu0 0.0
    %3575 = vmatpush1.msra.mxu0 %v3522
    %3576 = vmatprep.subr.mxu0 0.0
    %3577 = vmatpush1.msra.mxu0 %v3523
    %3578 = vmatprep.subr.mxu0 0.0
    %3579 = vmatpush1.msra.mxu0 %v3524
    %3580 = vmatprep.subr.mxu0 0.0
    %3581 = vmatpush1.msra.mxu0 %v3525
    %3582 = vmatprep.subr.mxu0 0.0
    %3583 = vmatpush1.msra.mxu0 %v3526
    %3584 = vmatprep.subr.mxu0 0.0
    %3585 = vmatpush1.msra.mxu0 %v3527
    %3586 = vmatprep.subr.mxu0 0.0
    %3587 = vmatpush1.msra.mxu0 %v3528
    %3588 = vmatprep.subr.mxu0 0.0
    %3589 = vmatpush1.msra.mxu0 %v3529
    %3590 = vmatprep.subr.mxu0 0.0
    %3591 = vmatpush1.msra.mxu0 %v3530
    %3592 = vmatprep.subr.mxu0 0.0
    %3593 = vmatpush1.msra.mxu0 %v3531
    %3594 = vmatprep.subr.mxu0 0.0
    %3595 = vmatpush1.msra.mxu0 %v3532
    %3596 = vmatprep.subr.mxu0 0.0
    %3597 = vmatpush1.msra.mxu0 %v3533
    %3598 = vmatprep.mubr.f32.mxu0 %v3246
    %3599 = vmatmul.mubr.f32.gmra.mrb[0].mxu0 %v3119
    %v3600 = vpop.f32.mrb[0].mxu0
    %v3601 = vadd.f32 %v119, %v3600
    %v3602 = vpop.f32.mrb[0].mxu0
    %3603 = vdwg.mxu0
    %v3604 = vmul.f32 %v3601, 0.5
    %v3605 = vtanh.pop %v3604
    %v3606 = vmul.f32 %v3605, 0.5
    %v3607 = vadd.f32 %v3606, 0.5
    %3608 = vrot.lane.b32.xlu0 %v3601, 112
    %v3609 = vpop.permute.xlu0 %3608
    %v3610 = vmul.f32 %v3609, 0.5
    %v3611 = vtanh.pop %v3610
    %v3612 = vmul.f32 %v3611, 0.5
    %v3613 = vadd.f32 %v3612, 0.5
    %3614 = vrot.lane.b32.xlu0 %v3601, 96
    %v3615 = vpop.permute.xlu0 %3614
    %v3616 = vtanh.pop %v3615
    %3617 = vrot.lane.b32.xlu0 %v3601, 80
    %v3618 = vpop.permute.xlu0 %3617
    %v3619 = vmul.f32 %v3618, 0.5
    %v3620 = vtanh.pop %v3619
    %v3621 = vmul.f32 %v3620, 0.5
    %v3622 = vadd.f32 %v3621, 0.5
    %v3623 = vmul.f32 %v3613, %v3243
    %v3624 = vmul.f32 %v3607, %v3616
    %v3625 = vadd.f32 %v3623, %v3624
    %v3626 = vtanh.pop %v3625
    %v3627 = vmul.f32 %v3622, %v3626
    %v3628 = vsel %vm123, %v3627, 0.0
    %3629 = vst [vmem:[#allocation2 + $0x28] sm:$0xff] %v3628
    %v3630 = vld [vmem:[#allocation7] sm:$0xff]
    %v3631 = vld [vmem:[#allocation7 + $0x8] sm:$0xff]
    %v3632 = vld [vmem:[#allocation7 + $0x10] sm:$0xff]
    %v3633 = vld [vmem:[#allocation7 + $0x18] sm:$0xff]
    %v3634 = vld [vmem:[#allocation7 + $0x20] sm:$0xff]
    %v3635 = vld [vmem:[#allocation7 + $0x28] sm:$0xff]
    %v3636 = vld [vmem:[#allocation7 + $0x30] sm:$0xff]
    %v3637 = vld [vmem:[#allocation7 + $0x38] sm:$0xff]
    %v3638 = vld [vmem:[#allocation7 + $0x40] sm:$0xff]
    %v3639 = vld [vmem:[#allocation7 + $0x48] sm:$0xff]
    %v3640 = vld [vmem:[#allocation7 + $0x50] sm:$0xff]
    %v3641 = vld [vmem:[#allocation7 + $0x58] sm:$0xff]
    %v3642 = vld [vmem:[#allocation7 + $0x60] sm:$0xff]
    %v3643 = vld [vmem:[#allocation7 + $0x68] sm:$0xff]
    %v3644 = vld [vmem:[#allocation7 + $0x70] sm:$0xff]
    %v3645 = vld [vmem:[#allocation7 + $0x78] sm:$0xff]
    %v3646 = vld [vmem:[#allocation7 + $0x80] sm:$0xff]
    %v3647 = vld [vmem:[#allocation7 + $0x88] sm:$0xff]
    %v3648 = vld [vmem:[#allocation7 + $0x90] sm:$0xff]
    %v3649 = vld [vmem:[#allocation7 + $0x98] sm:$0xff]
    %v3650 = vld [vmem:[#allocation7 + $0xa0] sm:$0xff]
    %v3651 = vld [vmem:[#allocation7 + $0xa8] sm:$0xff]
    %v3652 = vld [vmem:[#allocation7 + $0xb0] sm:$0xff]
    %v3653 = vld [vmem:[#allocation7 + $0xb8] sm:$0xff]
    %v3654 = vld [vmem:[#allocation7 + $0xc0] sm:$0xff]
    %v3655 = vld [vmem:[#allocation7 + $0xc8] sm:$0xff]
    %v3656 = vld [vmem:[#allocation7 + $0xd0] sm:$0xff]
    %v3657 = vld [vmem:[#allocation7 + $0xd8] sm:$0xff]
    %v3658 = vld [vmem:[#allocation7 + $0xe0] sm:$0xff]
    %v3659 = vld [vmem:[#allocation7 + $0xe8] sm:$0xff]
    %v3660 = vld [vmem:[#allocation7 + $0xf0] sm:$0xff]
    %v3661 = vld [vmem:[#allocation7 + $0xf8] sm:$0xff]
    %3662 = vmatprep.subr.mxu0 0.0
    %3663 = vmatpush1.msra.mxu0 %v3630
    %3664 = vmatprep.subr.mxu0 0.0
    %3665 = vmatpush1.msra.mxu0 %v3631
    %3666 = vmatprep.subr.mxu0 0.0
    %3667 = vmatpush1.msra.mxu0 %v3632
    %3668 = vmatprep.subr.mxu0 0.0
    %3669 = vmatpush1.msra.mxu0 %v3633
    %3670 = vmatprep.subr.mxu0 0.0
    %3671 = vmatpush1.msra.mxu0 %v3634
    %3672 = vmatprep.subr.mxu0 0.0
    %3673 = vmatpush1.msra.mxu0 %v3635
    %3674 = vmatprep.subr.mxu0 0.0
    %3675 = vmatpush1.msra.mxu0 %v3636
    %3676 = vmatprep.subr.mxu0 0.0
    %3677 = vmatpush1.msra.mxu0 %v3637
    %3678 = vmatprep.subr.mxu0 0.0
    %3679 = vmatpush1.msra.mxu0 %v3638
    %3680 = vmatprep.subr.mxu0 0.0
    %3681 = vmatpush1.msra.mxu0 %v3639
    %3682 = vmatprep.subr.mxu0 0.0
    %3683 = vmatpush1.msra.mxu0 %v3640
    %3684 = vmatprep.subr.mxu0 0.0
    %3685 = vmatpush1.msra.mxu0 %v3641
    %3686 = vmatprep.subr.mxu0 0.0
    %3687 = vmatpush1.msra.mxu0 %v3642
    %3688 = vmatprep.subr.mxu0 0.0
    %3689 = vmatpush1.msra.mxu0 %v3643
    %3690 = vmatprep.subr.mxu0 0.0
    %3691 = vmatpush1.msra.mxu0 %v3644
    %3692 = vmatprep.subr.mxu0 0.0
    %3693 = vmatpush1.msra.mxu0 %v3645
    %3694 = vmatprep.subr.mxu0 0.0
    %3695 = vmatpush1.msra.mxu0 %v3646
    %3696 = vmatprep.subr.mxu0 0.0
    %3697 = vmatpush1.msra.mxu0 %v3647
    %3698 = vmatprep.subr.mxu0 0.0
    %3699 = vmatpush1.msra.mxu0 %v3648
    %3700 = vmatprep.subr.mxu0 0.0
    %3701 = vmatpush1.msra.mxu0 %v3649
    %3702 = vmatprep.subr.mxu0 0.0
    %3703 = vmatpush1.msra.mxu0 %v3650
    %3704 = vmatprep.subr.mxu0 0.0
    %3705 = vmatpush1.msra.mxu0 %v3651
    %3706 = vmatprep.subr.mxu0 0.0
    %3707 = vmatpush1.msra.mxu0 %v3652
    %3708 = vmatprep.subr.mxu0 0.0
    %3709 = vmatpush1.msra.mxu0 %v3653
    %3710 = vmatprep.subr.mxu0 0.0
    %3711 = vmatpush1.msra.mxu0 %v3654
    %3712 = vmatprep.subr.mxu0 0.0
    %3713 = vmatpush1.msra.mxu0 %v3655
    %3714 = vmatprep.subr.mxu0 0.0
    %3715 = vmatpush1.msra.mxu0 %v3656
    %3716 = vmatprep.subr.mxu0 0.0
    %3717 = vmatpush1.msra.mxu0 %v3657
    %3718 = vmatprep.subr.mxu0 0.0
    %3719 = vmatpush1.msra.mxu0 %v3658
    %3720 = vmatprep.subr.mxu0 0.0
    %3721 = vmatpush1.msra.mxu0 %v3659
    %3722 = vmatprep.subr.mxu0 0.0
    %3723 = vmatpush1.msra.mxu0 %v3660
    %3724 = vmatprep.subr.mxu0 0.0
    %3725 = vmatpush1.msra.mxu0 %v3661
    %3726 = vmatprep.mubr.f32.mxu0 %v3501
    %3727 = vmatmul.mubr.f32.gmra.mrb[0].mxu0 %v3374
    %v3728 = vpop.f32.mrb[0].mxu0
    %v3729 = vadd.f32 %v112, %v3728
    %v3730 = vpop.f32.mrb[0].mxu0
    %3731 = vdwg.mxu0
    %v3732 = vmul.f32 %v3729, 0.5
    %v3733 = vtanh.pop %v3732
    %v3734 = vmul.f32 %v3733, 0.5
    %v3735 = vadd.f32 %v3734, 0.5
    %3736 = vrot.lane.b32.xlu0 %v3729, 120
    %v3737 = vpop.permute.xlu0 %3736
    %v3738 = vmul.f32 %v3737, 0.5
    %v3739 = vtanh.pop %v3738
    %v3740 = vmul.f32 %v3739, 0.5
    %v3741 = vadd.f32 %v3740, 0.5
    %3742 = vrot.lane.b32.xlu0 %v3729, 112
    %v3743 = vpop.permute.xlu0 %3742
    %v3744 = vtanh.pop %v3743
    %3745 = vrot.lane.b32.xlu0 %v3729, 104
    %v3746 = vpop.permute.xlu0 %3745
    %v3747 = vmul.f32 %v3746, 0.5
    %v3748 = vtanh.pop %v3747
    %v3749 = vmul.f32 %v3748, 0.5
    %v3750 = vadd.f32 %v3749, 0.5
    %v3751 = vmul.f32 %v3741, %v3498
    %v3752 = vmul.f32 %v3735, %v3744
    %v3753 = vadd.f32 %v3751, %v3752
    %v3754 = vtanh.pop %v3753
    %v3755 = vmul.f32 %v3750, %v3754
    %v3756 = vsel %vm124, %v3755, 0.0
    %v3757 = vld [vmem:[#allocation8] sm:$0xff]
    %v3758 = vld [vmem:[#allocation8 + $0x8] sm:$0xff]
    %v3759 = vld [vmem:[#allocation8 + $0x10] sm:$0xff]
    %v3760 = vld [vmem:[#allocation8 + $0x18] sm:$0xff]
    %v3761 = vld [vmem:[#allocation8 + $0x20] sm:$0xff]
    %v3762 = vld [vmem:[#allocation8 + $0x28] sm:$0xff]
    %v3763 = vld [vmem:[#allocation8 + $0x30] sm:$0xff]
    %v3764 = vld [vmem:[#allocation8 + $0x38] sm:$0xff]
    %v3765 = vld [vmem:[#allocation8 + $0x40] sm:$0xff]
    %v3766 = vld [vmem:[#allocation8 + $0x48] sm:$0xff]
    %v3767 = vld [vmem:[#allocation8 + $0x50] sm:$0xff]
    %v3768 = vld [vmem:[#allocation8 + $0x58] sm:$0xff]
    %v3769 = vld [vmem:[#allocation8 + $0x60] sm:$0xff]
    %v3770 = vld [vmem:[#allocation8 + $0x68] sm:$0xff]
    %v3771 = vld [vmem:[#allocation8 + $0x70] sm:$0xff]
    %v3772 = vld [vmem:[#allocation8 + $0x78] sm:$0xff]
    %v3773 = vld [vmem:[#allocation8 + $0x80] sm:$0xff]
    %v3774 = vld [vmem:[#allocation8 + $0x88] sm:$0xff]
    %v3775 = vld [vmem:[#allocation8 + $0x90] sm:$0xff]
    %v3776 = vld [vmem:[#allocation8 + $0x98] sm:$0xff]
    %v3777 = vld [vmem:[#allocation8 + $0xa0] sm:$0xff]
    %v3778 = vld [vmem:[#allocation8 + $0xa8] sm:$0xff]
    %v3779 = vld [vmem:[#allocation8 + $0xb0] sm:$0xff]
    %v3780 = vld [vmem:[#allocation8 + $0xb8] sm:$0xff]
    %v3781 = vld [vmem:[#allocation8 + $0xc0] sm:$0xff]
    %v3782 = vld [vmem:[#allocation8 + $0xc8] sm:$0xff]
    %v3783 = vld [vmem:[#allocation8 + $0xd0] sm:$0xff]
    %v3784 = vld [vmem:[#allocation8 + $0xd8] sm:$0xff]
    %v3785 = vld [vmem:[#allocation8 + $0xe0] sm:$0xff]
    %v3786 = vld [vmem:[#allocation8 + $0xe8] sm:$0xff]
    %v3787 = vld [vmem:[#allocation8 + $0xf0] sm:$0xff]
    %v3788 = vld [vmem:[#allocation8 + $0xf8] sm:$0xff]
    %3789 = vmatprep.subr.mxu0 0.0
    %3790 = vmatpush1.msra.mxu0 %v3757
    %3791 = vmatprep.subr.mxu0 0.0
    %3792 = vmatpush1.msra.mxu0 %v3758
    %3793 = vmatprep.subr.mxu0 0.0
    %3794 = vmatpush1.msra.mxu0 %v3759
    %3795 = vmatprep.subr.mxu0 0.0
    %3796 = vmatpush1.msra.mxu0 %v3760
    %3797 = vmatprep.subr.mxu0 0.0
    %3798 = vmatpush1.msra.mxu0 %v3761
    %3799 = vmatprep.subr.mxu0 0.0
    %3800 = vmatpush1.msra.mxu0 %v3762
    %3801 = vmatprep.subr.mxu0 0.0
    %3802 = vmatpush1.msra.mxu0 %v3763
    %3803 = vmatprep.subr.mxu0 0.0
    %3804 = vmatpush1.msra.mxu0 %v3764
    %3805 = vmatprep.subr.mxu0 0.0
    %3806 = vmatpush1.msra.mxu0 %v3765
    %3807 = vmatprep.subr.mxu0 0.0
    %3808 = vmatpush1.msra.mxu0 %v3766
    %3809 = vmatprep.subr.mxu0 0.0
    %3810 = vmatpush1.msra.mxu0 %v3767
    %3811 = vmatprep.subr.mxu0 0.0
    %3812 = vmatpush1.msra.mxu0 %v3768
    %3813 = vmatprep.subr.mxu0 0.0
    %3814 = vmatpush1.msra.mxu0 %v3769
    %3815 = vmatprep.subr.mxu0 0.0
    %3816 = vmatpush1.msra.mxu0 %v3770
    %3817 = vmatprep.subr.mxu0 0.0
    %3818 = vmatpush1.msra.mxu0 %v3771
    %3819 = vmatprep.subr.mxu0 0.0
    %3820 = vmatpush1.msra.mxu0 %v3772
    %3821 = vmatprep.subr.mxu0 0.0
    %3822 = vmatpush1.msra.mxu0 %v3773
    %3823 = vmatprep.subr.mxu0 0.0
    %3824 = vmatpush1.msra.mxu0 %v3774
    %3825 = vmatprep.subr.mxu0 0.0
    %3826 = vmatpush1.msra.mxu0 %v3775
    %3827 = vmatprep.subr.mxu0 0.0
    %3828 = vmatpush1.msra.mxu0 %v3776
    %3829 = vmatprep.subr.mxu0 0.0
    %3830 = vmatpush1.msra.mxu0 %v3777
    %3831 = vmatprep.subr.mxu0 0.0
    %3832 = vmatpush1.msra.mxu0 %v3778
    %3833 = vmatprep.subr.mxu0 0.0
    %3834 = vmatpush1.msra.mxu0 %v3779
    %3835 = vmatprep.subr.mxu0 0.0
    %3836 = vmatpush1.msra.mxu0 %v3780
    %3837 = vmatprep.subr.mxu0 0.0
    %3838 = vmatpush1.msra.mxu0 %v3781
    %3839 = vmatprep.subr.mxu0 0.0
    %3840 = vmatpush1.msra.mxu0 %v3782
    %3841 = vmatprep.subr.mxu0 0.0
    %3842 = vmatpush1.msra.mxu0 %v3783
    %3843 = vmatprep.subr.mxu0 0.0
    %3844 = vmatpush1.msra.mxu0 %v3784
    %3845 = vmatprep.subr.mxu0 0.0
    %3846 = vmatpush1.msra.mxu0 %v3785
    %3847 = vmatprep.subr.mxu0 0.0
    %3848 = vmatpush1.msra.mxu0 %v3786
    %3849 = vmatprep.subr.mxu0 0.0
    %3850 = vmatpush1.msra.mxu0 %v3787
    %3851 = vmatprep.subr.mxu0 0.0
    %3852 = vmatpush1.msra.mxu0 %v3788
    %3853 = vmatprep.mubr.f32.mxu0 %v3628
    %3854 = vmatmul.mubr.f32.gmra.mrb[0].mxu0 %v3501
    %v3855 = vpop.f32.mrb[0].mxu0
    %v3856 = vadd.f32 %v119, %v3855
    %v3857 = vpop.f32.mrb[0].mxu0
    %3858 = vdwg.mxu0
    %v3859 = vmul.f32 %v3856, 0.5
    %v3860 = vtanh.pop %v3859
    %v3861 = vmul.f32 %v3860, 0.5
    %v3862 = vadd.f32 %v3861, 0.5
    %3863 = vrot.lane.b32.xlu0 %v3856, 112
    %v3864 = vpop.permute.xlu0 %3863
    %v3865 = vmul.f32 %v3864, 0.5
    %v3866 = vtanh.pop %v3865
    %v3867 = vmul.f32 %v3866, 0.5
    %v3868 = vadd.f32 %v3867, 0.5
    %3869 = vrot.lane.b32.xlu0 %v3856, 96
    %v3870 = vpop.permute.xlu0 %3869
    %v3871 = vtanh.pop %v3870
    %3872 = vrot.lane.b32.xlu0 %v3856, 80
    %v3873 = vpop.permute.xlu0 %3872
    %v3874 = vmul.f32 %v3873, 0.5
    %v3875 = vtanh.pop %v3874
    %v3876 = vmul.f32 %v3875, 0.5
    %v3877 = vadd.f32 %v3876, 0.5
    %v3878 = vmul.f32 %v3868, %v3625
    %v3879 = vmul.f32 %v3862, %v3871
    %v3880 = vadd.f32 %v3878, %v3879
    %v3881 = vtanh.pop %v3880
    %v3882 = vmul.f32 %v3877, %v3881
    %v3883 = vsel %vm123, %v3882, 0.0
    %3884 = vst [vmem:[#allocation2 + $0x30] sm:$0xff] %v3883
    %v3885 = vld [vmem:[#allocation8] sm:$0xff]
    %v3886 = vld [vmem:[#allocation8 + $0x8] sm:$0xff]
    %v3887 = vld [vmem:[#allocation8 + $0x10] sm:$0xff]
    %v3888 = vld [vmem:[#allocation8 + $0x18] sm:$0xff]
    %v3889 = vld [vmem:[#allocation8 + $0x20] sm:$0xff]
    %v3890 = vld [vmem:[#allocation8 + $0x28] sm:$0xff]
    %v3891 = vld [vmem:[#allocation8 + $0x30] sm:$0xff]
    %v3892 = vld [vmem:[#allocation8 + $0x38] sm:$0xff]
    %v3893 = vld [vmem:[#allocation8 + $0x40] sm:$0xff]
    %v3894 = vld [vmem:[#allocation8 + $0x48] sm:$0xff]
    %v3895 = vld [vmem:[#allocation8 + $0x50] sm:$0xff]
    %v3896 = vld [vmem:[#allocation8 + $0x58] sm:$0xff]
    %v3897 = vld [vmem:[#allocation8 + $0x60] sm:$0xff]
    %v3898 = vld [vmem:[#allocation8 + $0x68] sm:$0xff]
    %v3899 = vld [vmem:[#allocation8 + $0x70] sm:$0xff]
    %v3900 = vld [vmem:[#allocation8 + $0x78] sm:$0xff]
    %v3901 = vld [vmem:[#allocation8 + $0x80] sm:$0xff]
    %v3902 = vld [vmem:[#allocation8 + $0x88] sm:$0xff]
    %v3903 = vld [vmem:[#allocation8 + $0x90] sm:$0xff]
    %v3904 = vld [vmem:[#allocation8 + $0x98] sm:$0xff]
    %v3905 = vld [vmem:[#allocation8 + $0xa0] sm:$0xff]
    %v3906 = vld [vmem:[#allocation8 + $0xa8] sm:$0xff]
    %v3907 = vld [vmem:[#allocation8 + $0xb0] sm:$0xff]
    %v3908 = vld [vmem:[#allocation8 + $0xb8] sm:$0xff]
    %v3909 = vld [vmem:[#allocation8 + $0xc0] sm:$0xff]
    %v3910 = vld [vmem:[#allocation8 + $0xc8] sm:$0xff]
    %v3911 = vld [vmem:[#allocation8 + $0xd0] sm:$0xff]
    %v3912 = vld [vmem:[#allocation8 + $0xd8] sm:$0xff]
    %v3913 = vld [vmem:[#allocation8 + $0xe0] sm:$0xff]
    %v3914 = vld [vmem:[#allocation8 + $0xe8] sm:$0xff]
    %v3915 = vld [vmem:[#allocation8 + $0xf0] sm:$0xff]
    %v3916 = vld [vmem:[#allocation8 + $0xf8] sm:$0xff]
    %3917 = vmatprep.subr.mxu0 0.0
    %3918 = vmatpush1.msra.mxu0 %v3885
    %3919 = vmatprep.subr.mxu0 0.0
    %3920 = vmatpush1.msra.mxu0 %v3886
    %3921 = vmatprep.subr.mxu0 0.0
    %3922 = vmatpush1.msra.mxu0 %v3887
    %3923 = vmatprep.subr.mxu0 0.0
    %3924 = vmatpush1.msra.mxu0 %v3888
    %3925 = vmatprep.subr.mxu0 0.0
    %3926 = vmatpush1.msra.mxu0 %v3889
    %3927 = vmatprep.subr.mxu0 0.0
    %3928 = vmatpush1.msra.mxu0 %v3890
    %3929 = vmatprep.subr.mxu0 0.0
    %3930 = vmatpush1.msra.mxu0 %v3891
    %3931 = vmatprep.subr.mxu0 0.0
    %3932 = vmatpush1.msra.mxu0 %v3892
    %3933 = vmatprep.subr.mxu0 0.0
    %3934 = vmatpush1.msra.mxu0 %v3893
    %3935 = vmatprep.subr.mxu0 0.0
    %3936 = vmatpush1.msra.mxu0 %v3894
    %3937 = vmatprep.subr.mxu0 0.0
    %3938 = vmatpush1.msra.mxu0 %v3895
    %3939 = vmatprep.subr.mxu0 0.0
    %3940 = vmatpush1.msra.mxu0 %v3896
    %3941 = vmatprep.subr.mxu0 0.0
    %3942 = vmatpush1.msra.mxu0 %v3897
    %3943 = vmatprep.subr.mxu0 0.0
    %3944 = vmatpush1.msra.mxu0 %v3898
    %3945 = vmatprep.subr.mxu0 0.0
    %3946 = vmatpush1.msra.mxu0 %v3899
    %3947 = vmatprep.subr.mxu0 0.0
    %3948 = vmatpush1.msra.mxu0 %v3900
    %3949 = vmatprep.subr.mxu0 0.0
    %3950 = vmatpush1.msra.mxu0 %v3901
    %3951 = vmatprep.subr.mxu0 0.0
    %3952 = vmatpush1.msra.mxu0 %v3902
    %3953 = vmatprep.subr.mxu0 0.0
    %3954 = vmatpush1.msra.mxu0 %v3903
    %3955 = vmatprep.subr.mxu0 0.0
    %3956 = vmatpush1.msra.mxu0 %v3904
    %3957 = vmatprep.subr.mxu0 0.0
    %3958 = vmatpush1.msra.mxu0 %v3905
    %3959 = vmatprep.subr.mxu0 0.0
    %3960 = vmatpush1.msra.mxu0 %v3906
    %3961 = vmatprep.subr.mxu0 0.0
    %3962 = vmatpush1.msra.mxu0 %v3907
    %3963 = vmatprep.subr.mxu0 0.0
    %3964 = vmatpush1.msra.mxu0 %v3908
    %3965 = vmatprep.subr.mxu0 0.0
    %3966 = vmatpush1.msra.mxu0 %v3909
    %3967 = vmatprep.subr.mxu0 0.0
    %3968 = vmatpush1.msra.mxu0 %v3910
    %3969 = vmatprep.subr.mxu0 0.0
    %3970 = vmatpush1.msra.mxu0 %v3911
    %3971 = vmatprep.subr.mxu0 0.0
    %3972 = vmatpush1.msra.mxu0 %v3912
    %3973 = vmatprep.subr.mxu0 0.0
    %3974 = vmatpush1.msra.mxu0 %v3913
    %3975 = vmatprep.subr.mxu0 0.0
    %3976 = vmatpush1.msra.mxu0 %v3914
    %3977 = vmatprep.subr.mxu0 0.0
    %3978 = vmatpush1.msra.mxu0 %v3915
    %3979 = vmatprep.subr.mxu0 0.0
    %3980 = vmatpush1.msra.mxu0 %v3916
    %3981 = vmatprep.mubr.f32.mxu0 %v3883
    %3982 = vmatmul.mubr.f32.gmra.mrb[0].mxu0 %v3756
    %v3983 = vpop.f32.mrb[0].mxu0
    %v3984 = vadd.f32 %v119, %v3983
    %v3985 = vpop.f32.mrb[0].mxu0
    %3986 = vdwg.mxu0
    %v3987 = vmul.f32 %v3984, 0.5
    %v3988 = vtanh.pop %v3987
    %v3989 = vmul.f32 %v3988, 0.5
    %v3990 = vadd.f32 %v3989, 0.5
    %3991 = vrot.lane.b32.xlu0 %v3984, 112
    %v3992 = vpop.permute.xlu0 %3991
    %v3993 = vmul.f32 %v3992, 0.5
    %v3994 = vtanh.pop %v3993
    %v3995 = vmul.f32 %v3994, 0.5
    %v3996 = vadd.f32 %v3995, 0.5
    %3997 = vrot.lane.b32.xlu0 %v3984, 96
    %v3998 = vpop.permute.xlu0 %3997
    %v3999 = vtanh.pop %v3998
    %4000 = vrot.lane.b32.xlu0 %v3984, 80
    %v4001 = vpop.permute.xlu0 %4000
    %v4002 = vmul.f32 %v4001, 0.5
    %v4003 = vtanh.pop %v4002
    %v4004 = vmul.f32 %v4003, 0.5
    %v4005 = vadd.f32 %v4004, 0.5
    %v4006 = vmul.f32 %v3996, %v3880
    %v4007 = vmul.f32 %v3990, %v3999
    %v4008 = vadd.f32 %v4006, %v4007
    %v4009 = vtanh.pop %v4008
    %v4010 = vmul.f32 %v4005, %v4009
    %v4011 = vsel %vm123, %v4010, 0.0
    %4012 = vst [vmem:[#allocation2 + $0x38] sm:$0xff] %v4011
    %v4013 = vld [vmem:[#allocation2] sm:$0xff]
    %v4014 = vld [vmem:[#allocation2 + $0x8] sm:$0xff]
    %v4015 = vld [vmem:[#allocation2 + $0x10] sm:$0xff]
    %v4016 = vld [vmem:[#allocation2 + $0x18] sm:$0xff]
    %v4017 = vld [vmem:[#allocation2 + $0x20] sm:$0xff]
    %v4018 = vld [vmem:[#allocation2 + $0x28] sm:$0xff]
    %v4019 = vld [vmem:[#allocation2 + $0x30] sm:$0xff]
    %v4020 = vld [vmem:[#allocation2 + $0x38] sm:$0xff]
    %v4021 = vld [vmem:[%s9] sm:$0xff]
    %v4022 = vld [vmem:[%s9 + $0x8] sm:$0xff]
    %v4023 = vld [vmem:[%s9 + $0x10] sm:$0xff]
    %v4024 = vld [vmem:[%s9 + $0x18] sm:$0xff]
    %v4025 = vld [vmem:[%s9 + $0x20] sm:$0xff]
    %v4026 = vld [vmem:[%s9 + $0x28] sm:$0xff]
    %v4027 = vld [vmem:[%s9 + $0x30] sm:$0xff]
    %v4028 = vld [vmem:[%s9 + $0x38] sm:$0xff]
    %v4029 = vld [vmem:[%s9 + $0x40] sm:$0xff]
    %v4030 = vld [vmem:[%s9 + $0x48] sm:$0xff]
    %v4031 = vld [vmem:[%s9 + $0x50] sm:$0xff]
    %v4032 = vld [vmem:[%s9 + $0x58] sm:$0xff]
    %v4033 = vld [vmem:[%s9 + $0x60] sm:$0xff]
    %v4034 = vld [vmem:[%s9 + $0x68] sm:$0xff]
    %v4035 = vld [vmem:[%s9 + $0x70] sm:$0xff]
    %v4036 = vld [vmem:[%s9 + $0x78] sm:$0xff]
    %v4037 = vld [vmem:[%s10] sm:$0x1]
    %v4039 = vlaneseq
    %v4040 = vshrl.u32 %v4039, 7
    %v4041 = vsub.s32 0, %v4040
    %v4042 = vrot.slane %v4037, %v4041
    %4044 = vmatprep.subr.mxu0 0.0
    %4045 = vmatpush1.msra.mxu0 %v4021
    %4046 = vmatprep.subr.mxu0 0.0
    %4047 = vmatpush1.msra.mxu0 %v4022
    %4048 = vmatprep.subr.mxu0 0.0
    %4049 = vmatpush1.msra.mxu0 %v4023
    %4050 = vmatprep.subr.mxu0 0.0
    %4051 = vmatpush1.msra.mxu0 %v4024
    %4052 = vmatprep.subr.mxu0 0.0
    %4053 = vmatpush1.msra.mxu0 %v4025
    %4054 = vmatprep.subr.mxu0 0.0
    %4055 = vmatpush1.msra.mxu0 %v4026
    %4056 = vmatprep.subr.mxu0 0.0
    %4057 = vmatpush1.msra.mxu0 %v4027
    %4058 = vmatprep.subr.mxu0 0.0
    %4059 = vmatpush1.msra.mxu0 %v4028
    %4060 = vmatprep.subr.mxu0 0.0
    %4061 = vmatpush1.msra.mxu0 %v4029
    %4062 = vmatprep.subr.mxu0 0.0
    %4063 = vmatpush1.msra.mxu0 %v4030
    %4064 = vmatprep.subr.mxu0 0.0
    %4065 = vmatpush1.msra.mxu0 %v4031
    %4066 = vmatprep.subr.mxu0 0.0
    %4067 = vmatpush1.msra.mxu0 %v4032
    %4068 = vmatprep.subr.mxu0 0.0
    %4069 = vmatpush1.msra.mxu0 %v4033
    %4070 = vmatprep.subr.mxu0 0.0
    %4071 = vmatpush1.msra.mxu0 %v4034
    %4072 = vmatprep.subr.mxu0 0.0
    %4073 = vmatpush1.msra.mxu0 %v4035
    %4074 = vmatprep.subr.mxu0 0.0
    %4075 = vmatpush1.msra.mxu0 %v4036
    %4076 = vmatprep.subr.mxu0 0.0
    %4077 = vmatpush1.msra.mxu0 0.0
    %4078 = vmatprep.subr.mxu0 0.0
    %4079 = vmatpush1.msra.mxu0 0.0
    %4080 = vmatprep.subr.mxu0 0.0
    %4081 = vmatpush1.msra.mxu0 0.0
    %4082 = vmatprep.subr.mxu0 0.0
    %4083 = vmatpush1.msra.mxu0 0.0
    %4084 = vmatprep.subr.mxu0 0.0
    %4085 = vmatpush1.msra.mxu0 0.0
    %4086 = vmatprep.subr.mxu0 0.0
    %4087 = vmatpush1.msra.mxu0 0.0
    %4088 = vmatprep.subr.mxu0 0.0
    %4089 = vmatpush1.msra.mxu0 0.0
    %4090 = vmatprep.subr.mxu0 0.0
    %4091 = vmatpush1.msra.mxu0 0.0
    %4092 = vmatprep.subr.mxu0 0.0
    %4093 = vmatpush1.msra.mxu0 0.0
    %4094 = vmatprep.subr.mxu0 0.0
    %4095 = vmatpush1.msra.mxu0 0.0
    %4096 = vmatprep.subr.mxu0 0.0
    %4097 = vmatpush1.msra.mxu0 0.0
    %4098 = vmatprep.subr.mxu0 0.0
    %4099 = vmatpush1.msra.mxu0 0.0
    %4100 = vmatprep.subr.mxu0 0.0
    %4101 = vmatpush1.msra.mxu0 0.0
    %4102 = vmatprep.subr.mxu0 0.0
    %4103 = vmatpush1.msra.mxu0 0.0
    %4104 = vmatprep.subr.mxu0 0.0
    %4105 = vmatpush1.msra.mxu0 0.0
    %4106 = vmatprep.subr.mxu0 0.0
    %4107 = vmatpush1.msra.mxu0 0.0
    %4108 = vmatprep.mubr.f32.mxu0 0.0
    %4109 = vmatmul.mubr.f32.gmra.mrb[0].mxu0 %v4013
    %v4110 = vpop.f32.mrb[0].mxu0
    %v4111 = vadd.f32 %v4042, %v4110
    %v4112 = vpop.f32.mrb[0].mxu0
    %4113 = vmatprep.mubr.f32.mxu0 0.0
    %4114 = vmatmul.mubr.f32.gmra.mrb[0].mxu0 %v4014
    %v4115 = vpop.f32.mrb[0].mxu0
    %v4116 = vadd.f32 %v4042, %v4115
    %v4117 = vpop.f32.mrb[0].mxu0
    %4118 = vmatprep.mubr.f32.mxu0 0.0
    %4119 = vmatmul.mubr.f32.gmra.mrb[0].mxu0 %v4015
    %v4120 = vpop.f32.mrb[0].mxu0
    %v4121 = vadd.f32 %v4042, %v4120
    %v4122 = vpop.f32.mrb[0].mxu0
    %4123 = vmatprep.mubr.f32.mxu0 0.0
    %4124 = vmatmul.mubr.f32.gmra.mrb[0].mxu0 %v4016
    %v4125 = vpop.f32.mrb[0].mxu0
    %v4126 = vadd.f32 %v4042, %v4125
    %v4127 = vpop.f32.mrb[0].mxu0
    %4128 = vmatprep.mubr.f32.mxu0 0.0
    %4129 = vmatmul.mubr.f32.gmra.mrb[0].mxu0 %v4017
    %v4130 = vpop.f32.mrb[0].mxu0
    %v4131 = vadd.f32 %v4042, %v4130
    %v4132 = vpop.f32.mrb[0].mxu0
    %4133 = vmatprep.mubr.f32.mxu0 0.0
    %4134 = vmatmul.mubr.f32.gmra.mrb[0].mxu0 %v4018
    %v4135 = vpop.f32.mrb[0].mxu0
    %v4136 = vadd.f32 %v4042, %v4135
    %v4137 = vpop.f32.mrb[0].mxu0
    %4138 = vmatprep.mubr.f32.mxu0 0.0
    %4139 = vmatmul.mubr.f32.gmra.mrb[0].mxu0 %v4019
    %v4140 = vpop.f32.mrb[0].mxu0
    %v4141 = vadd.f32 %v4042, %v4140
    %v4142 = vpop.f32.mrb[0].mxu0
    %4143 = vmatprep.mubr.f32.mxu0 0.0
    %4144 = vmatmul.mubr.f32.gmra.mrb[0].mxu0 %v4020
    %v4145 = vpop.f32.mrb[0].mxu0
    %v4146 = vadd.f32 %v4042, %v4145
    %v4147 = vpop.f32.mrb[0].mxu0
    %4148 = vdwg.mxu0
    %4149 = vst [vmem:[%s11] sm:$0xff] %v4111
    %4150 = vst [vmem:[%s11 + $0x8] sm:$0xff] %v4116
    %4151 = vst [vmem:[%s11 + $0x10] sm:$0xff] %v4121
    %4152 = vst [vmem:[%s11 + $0x18] sm:$0xff] %v4126
    %4153 = vst [vmem:[%s11 + $0x20] sm:$0xff] %v4131
    %4154 = vst [vmem:[%s11 + $0x28] sm:$0xff] %v4136
    %4155 = vst [vmem:[%s11 + $0x30] sm:$0xff] %v4141
    %4156 = vst [vmem:[%s11 + $0x38] sm:$0xff] %v4146
    // Predicated region
    $region62: #{_forward_padded.1} parent=1 // pred_check
      _
    $region63: #{_forward_padded.1} parent=1 // pred_check_branch
      %4158 = sbr.rel (0) target = $region65
    $region64: #{_forward_padded.1} parent=1 // pred_region
      _
    $region65: #{_forward_padded.1} parent=1 // pred_fallthru
      _
    // Predicated region
    $region66: #{_forward_padded.1} parent=1 // pred_check
      _
    $region67: #{_forward_padded.1} parent=1 // pred_check_branch
      %4160 = sbr.rel (0) target = $region69
    $region68: #{_forward_padded.1} parent=1 // pred_region
      _
    $region69: #{_forward_padded.1} parent=1 // pred_fallthru
      _
    %4161 = vsyncpa [#allocation4], 1
    %4162 = vsyncpa [#allocation6], 1
    %4163 = vsyncpa [#allocation9], 1

</llo_original>
